<compile_context>
chip_gen: v7x
topology: tpu7x:2x2x1
jax: 0.10.0
libtpu: 0.0.40
codegen_flags: <defaults>
</compile_context>

<pallas_src>
import functools

import jax
import jax.numpy as jnp
from jax.experimental import pallas as pl
from jax.experimental.pallas import tpu as pltpu

EPS = 1e-5
LEAKY_SLOPE = 0.2


# ------------------------------ Pallas kernels ------------------------------ #
def _conv_bn_lrelu_kernel(x_ref, w_ref, g_ref, b_ref, o_ref, *, inv_count):
    """Fused 4x4/stride-2/pad-1 conv + BatchNorm2d (batch stats) + LeakyReLU(0.2).

    x_ref : (16*Cin, L) bf16   im2col patches, L = N*OH*OW (valid positions only)
    w_ref : (Cout, 16*Cin) bf16
    g_ref, b_ref : (Cout, 1) f32   BN gamma / beta
    o_ref : (Cout, L) bf16
    """
    # Conv: one merged K = 16*Cin matmul, bf16 x bf16 -> f32 acc.
    acc = jnp.dot(w_ref[...], x_ref[...], preferred_element_type=jnp.float32)
    # NOTE: conv bias intentionally omitted -- exactly cancelled by BN.

    # One-pass batch stats (biased var), f32 reductions.
    mean = jnp.sum(acc, axis=1, keepdims=True) * inv_count
    ex2 = jnp.sum(acc * acc, axis=1, keepdims=True) * inv_count
    var = ex2 - mean * mean

    # BN folded to per-channel affine: one FMA pass + one select pass over the slab.
    scale = g_ref[...] * jax.lax.rsqrt(var + EPS)
    shift = b_ref[...] - mean * scale
    y = acc * scale + shift
    y = jnp.where(y > 0, y, LEAKY_SLOPE * y)          # LeakyReLU(0.2)
    o_ref[...] = y.astype(o_ref.dtype)


def _dense_bn_tanh_kernel(x_ref, w_ref, g_ref, b_ref, o_ref, *, inv_count):
    """Final Conv2d(., ., 4, 1, 0) on a 4x4 map (dense contraction) + BN + Tanh."""
    acc = jnp.dot(w_ref[...], x_ref[...], preferred_element_type=jnp.float32)
    mean = jnp.sum(acc, axis=1, keepdims=True) * inv_count
    ex2 = jnp.sum(acc * acc, axis=1, keepdims=True) * inv_count
    var = ex2 - mean * mean
    scale = g_ref[...] * jax.lax.rsqrt(var + EPS)
    shift = b_ref[...] - mean * scale
    o_ref[...] = jnp.tanh(acc * scale + shift)


# ------------------------------ JAX glue / layers --------------------------- #
def _vmem_spec():
    return pl.BlockSpec(memory_space=pltpu.MemorySpace.VMEM)


def _quad_weight(w):
    """(4, 4, Cin, Cout) -> (Cout, 16*Cin), contraction ordered (ky, kx, cin)."""
    cout = w.shape[-1]
    return w.transpose(3, 0, 1, 2).reshape(cout, -1).astype(jnp.bfloat16)


def _conv_patches(a, oh, ow):
    """a: (Cin, N, H, W) -> (16*Cin, N*OH*OW) bf16, rows ordered (ky, kx, cin)."""
    c, n, _, _ = a.shape
    ap = jnp.pad(a, ((0, 0), (0, 0), (1, 1), (1, 1)))
    taps = [ap[:, :, ky:ky + 2 * oh - 1:2, kx:kx + 2 * ow - 1:2]
            for ky in range(4) for kx in range(4)]
    xp = jnp.stack(taps, axis=0)                       # (16, Cin, N, OH, OW)
    return xp.reshape(16 * c, n * oh * ow).astype(jnp.bfloat16)


def dcgan_conv_layer(a, w, gamma, beta):
    """One dcgan_conv block.  a: (Cin, N, H, W) -> (Cout, N, H//2, W//2) bf16."""
    _, n, h, wd = a.shape
    cout = w.shape[-1]
    oh, ow = h // 2, wd // 2
    l_out = n * oh * ow

    x_p = _conv_patches(a, oh, ow)                     # (16*Cin, L)
    w_m = _quad_weight(w)                              # (Cout, 16*Cin)

    out = pl.pallas_call(
        functools.partial(_conv_bn_lrelu_kernel, inv_count=1.0 / l_out),
        out_shape=jax.ShapeDtypeStruct((cout, l_out), jnp.bfloat16),
        in_specs=[_vmem_spec() for _ in range(4)],
        out_specs=_vmem_spec(),
    )(x_p, w_m, gamma.reshape(cout, 1), beta.reshape(cout, 1))
    # (Cout, L) is already the next layer's channel-major layout.
    return out.reshape(cout, n, oh, ow)


def head_layer(a, w, gamma, beta):
    """Final Conv2d(8nf, cdim, 4, 1, 0) + BN + Tanh.  a: (Cin, N, 4, 4)."""
    c_in, n, h, wd = a.shape
    cout = w.shape[-1]
    # rows ordered (ky, kx, cin) to match _quad_weight.
    x_t = a.transpose(2, 3, 0, 1).reshape(h * wd * c_in, n).astype(jnp.bfloat16)
    w_t = _quad_weight(w)
    out = pl.pallas_call(
        functools.partial(_dense_bn_tanh_kernel, inv_count=1.0 / n),
        out_shape=jax.ShapeDtypeStruct((cout, n), jnp.float32),
        in_specs=[_vmem_spec() for _ in range(4)],
        out_specs=_vmem_spec(),
    )(x_t, w_t, gamma.reshape(cout, 1), beta.reshape(cout, 1))
    return jnp.transpose(out).reshape(n, cout, 1, 1)


def content_encoder_forward(x_nchw, params):
    a = jnp.transpose(x_nchw, (1, 0, 2, 3))            # (C, N, H, W)
    for i in range(5):                                 # 5x dcgan_conv blocks
        w, _b, g, beta = params[i]                     # conv bias unused (BN cancels it)
        a = dcgan_conv_layer(a, w, g, beta)
    w, _b, g, beta = params[5]                         # final conv + BN + tanh
    return head_layer(a, w, g, beta)


def init_params(key, nc, nf, content_dim):
    chans = [(nc, nf), (nf, 2 * nf), (2 * nf, 4 * nf),
             (4 * nf, 8 * nf), (8 * nf, 8 * nf), (8 * nf, content_dim)]
    params = []
    for cin, cout in chans:
        key, k1, k2, k3, k4 = jax.random.split(key, 5)
        w = 0.02 * jax.random.normal(k1, (4, 4, cin, cout), jnp.float32)
        b = 0.02 * jax.random.normal(k2, (cout,), jnp.float32)
        g = 1.0 + 0.1 * jax.random.normal(k3, (cout,), jnp.float32)
        beta = 0.1 * jax.random.normal(k4, (cout,), jnp.float32)
        params.append((w, b, g, beta))
    return params


# ------------------------------ pure-JAX reference --------------------------- #
def ref_forward(x_nchw, params):
    x = x_nchw
    specs = [(2, 1, "leaky")] * 5 + [(1, 0, "tanh")]
    for (w, b, g, beta), (stride, pad, act) in zip(params, specs):
        w_oihw = jnp.transpose(w, (3, 2, 0, 1))
        x = jax.lax.conv_general_dilated(
            x, w_oihw, (stride, stride), [(pad, pad), (pad, pad)],
            dimension_numbers=("NCHW", "OIHW", "NCHW"))
        x = x + b[None, :, None, None]
        mean = jnp.mean(x, axis=(0, 2, 3), keepdims=True)
        var = jnp.mean((x - mean) ** 2, axis=(0, 2, 3), keepdims=True)
        x = (x - mean) * jax.lax.rsqrt(var + EPS)
        x = x * g[None, :, None, None] + beta[None, :, None, None]
        x = jnp.where(x > 0, x, LEAKY_SLOPE * x) if act == "leaky" else jnp.tanh(x)
    return x


if __name__ == "__main__":
    # dcgan_128 architecture needs 128x128 spatial input (5 stride-2 convs +
    # final valid 4x4 conv -> 1x1).  Channels kept small: nc=1, nf=8, cdim=16.
    N, NC, NF, CONTENT_DIM, HW = 4, 1, 8, 16, 128

    key = jax.random.PRNGKey(0)
    kx, kp = jax.random.split(key)
    x = jax.random.normal(kx, (N, NC, HW, HW), jnp.float32)
    params = init_params(kp, NC, NF, CONTENT_DIM)

    fwd = jax.jit(content_encoder_forward)
    out = jax.block_until_ready(fwd(x, params))
    assert out.shape == (N, CONTENT_DIM, 1, 1), out.shape

    ref = jax.block_until_ready(ref_forward(x, params))
    assert jnp.all(jnp.isfinite(out))
    # bf16 MXU operands (f32 accumulation / BN / activations) vs. pure-f32 ref.
    max_err = float(jnp.max(jnp.abs(out - ref)))
    assert jnp.allclose(out, ref, rtol=3e-2, atol=3e-2), max_err

    print("KERNEL_OK")
</pallas_src>

<mosaic_0001>
module attributes {stable_mosaic.version = 11 : i64} {
  func.func @_conv_bn_lrelu_kernel(%arg0: memref<16x16384xbf16, #tpu.memory_space<vmem>>, %arg1: memref<8x16xbf16, #tpu.memory_space<vmem>>, %arg2: memref<8x1xf32, #tpu.memory_space<vmem>>, %arg3: memref<8x1xf32, #tpu.memory_space<vmem>>, %arg4: memref<8x16384xbf16, #tpu.memory_space<vmem>>) attributes {dimension_semantics = [], scalar_prefetch = 0 : i64, scratch_operands = 0 : i64, tpu.core_type = #tpu.core_type<tc>} {
    %c0 = arith.constant 0 : index
    %c0_0 = arith.constant 0 : index
    %0 = vector.load %arg1[%c0, %c0_0] : memref<8x16xbf16, #tpu.memory_space<vmem>>, vector<8x16xbf16>
    %c0_1 = arith.constant 0 : index
    %c0_2 = arith.constant 0 : index
    %1 = vector.load %arg0[%c0_1, %c0_2] : memref<16x16384xbf16, #tpu.memory_space<vmem>>, vector<16x16384xbf16>
    %cst = arith.constant dense<0.000000e+00> : vector<8x16384xf32>
    %2 = tpu.matmul %0, %1, %cst {dimension_numbers = #tpu.dot_dimension_numbers<[1], [0], [0], [1], [0, 0, 1, 1], [], []>} : vector<8x16xbf16>, vector<16x16384xbf16>, vector<8x16384xf32> -> vector<8x16384xf32>
    %cst_3 = arith.constant dense<0.000000e+00> : vector<8xf32>
    %3 = vector.multi_reduction <add>, %2, %cst_3 [1] : vector<8x16384xf32> to vector<8xf32>
    %4 = vector.shape_cast %3 : vector<8xf32> to vector<8x1xf32>
    %cst_4 = arith.constant 6.10351563E-5 : f32
    %5 = vector.broadcast %cst_4 : f32 to vector<8x1xf32>
    %6 = arith.mulf %4, %5 : vector<8x1xf32>
    %7 = arith.mulf %2, %2 : vector<8x16384xf32>
    %cst_5 = arith.constant dense<0.000000e+00> : vector<8xf32>
    %8 = vector.multi_reduction <add>, %7, %cst_5 [1] : vector<8x16384xf32> to vector<8xf32>
    %9 = vector.shape_cast %8 : vector<8xf32> to vector<8x1xf32>
    %cst_6 = arith.constant 6.10351563E-5 : f32
    %10 = vector.broadcast %cst_6 : f32 to vector<8x1xf32>
    %11 = arith.mulf %9, %10 : vector<8x1xf32>
    %12 = arith.mulf %6, %6 : vector<8x1xf32>
    %13 = arith.subf %11, %12 : vector<8x1xf32>
    %c0_7 = arith.constant 0 : index
    %c0_8 = arith.constant 0 : index
    %14 = vector.load %arg2[%c0_7, %c0_8] : memref<8x1xf32, #tpu.memory_space<vmem>>, vector<8x1xf32>
    %cst_9 = arith.constant 9.99999974E-6 : f32
    %15 = vector.broadcast %cst_9 : f32 to vector<8x1xf32>
    %16 = arith.addf %13, %15 : vector<8x1xf32>
    %17 = math.rsqrt %16 : vector<8x1xf32>
    %18 = arith.mulf %14, %17 : vector<8x1xf32>
    %c0_10 = arith.constant 0 : index
    %c0_11 = arith.constant 0 : index
    %19 = vector.load %arg3[%c0_10, %c0_11] : memref<8x1xf32, #tpu.memory_space<vmem>>, vector<8x1xf32>
    %20 = arith.mulf %6, %18 : vector<8x1xf32>
    %21 = arith.subf %19, %20 : vector<8x1xf32>
    %22 = vector.broadcast %18 : vector<8x1xf32> to vector<8x16384xf32>
    %23 = arith.mulf %2, %22 : vector<8x16384xf32>
    %24 = vector.broadcast %21 : vector<8x1xf32> to vector<8x16384xf32>
    %25 = arith.addf %23, %24 : vector<8x16384xf32>
    %cst_12 = arith.constant 0.000000e+00 : f32
    %26 = vector.broadcast %cst_12 : f32 to vector<8x16384xf32>
    %27 = arith.cmpf ogt, %25, %26 : vector<8x16384xf32>
    %cst_13 = arith.constant 2.000000e-01 : f32
    %28 = vector.broadcast %cst_13 : f32 to vector<8x16384xf32>
    %29 = arith.mulf %28, %25 : vector<8x16384xf32>
    %30 = arith.select %27, %25, %29 : vector<8x16384xi1>, vector<8x16384xf32>
    %31 = arith.truncf %30 : vector<8x16384xf32> to vector<8x16384xbf16>
    %c0_14 = arith.constant 0 : index
    %c0_15 = arith.constant 0 : index
    %32 = vector.load %arg4[%c0_14, %c0_15] : memref<8x16384xbf16, #tpu.memory_space<vmem>>, vector<8x16384xbf16>
    tpu.vector_store %arg4[%c0_14, %c0_15], %31 {strides = array<i32>} : memref<8x16384xbf16, #tpu.memory_space<vmem>>, vector<8x16384xbf16>,
    return
  }
}

module attributes {stable_mosaic.version = 11 : i64} {
  func.func @_conv_bn_lrelu_kernel(%arg0: memref<128x4096xbf16, #tpu.memory_space<vmem>>, %arg1: memref<16x128xbf16, #tpu.memory_space<vmem>>, %arg2: memref<16x1xf32, #tpu.memory_space<vmem>>, %arg3: memref<16x1xf32, #tpu.memory_space<vmem>>, %arg4: memref<16x4096xbf16, #tpu.memory_space<vmem>>) attributes {dimension_semantics = [], scalar_prefetch = 0 : i64, scratch_operands = 0 : i64, tpu.core_type = #tpu.core_type<tc>} {
    %c0 = arith.constant 0 : index
    %c0_0 = arith.constant 0 : index
    %0 = vector.load %arg1[%c0, %c0_0] : memref<16x128xbf16, #tpu.memory_space<vmem>>, vector<16x128xbf16>
    %c0_1 = arith.constant 0 : index
    %c0_2 = arith.constant 0 : index
    %1 = vector.load %arg0[%c0_1, %c0_2] : memref<128x4096xbf16, #tpu.memory_space<vmem>>, vector<128x4096xbf16>
    %cst = arith.constant dense<0.000000e+00> : vector<16x4096xf32>
    %2 = tpu.matmul %0, %1, %cst {dimension_numbers = #tpu.dot_dimension_numbers<[1], [0], [0], [1], [0, 0, 1, 1], [], []>} : vector<16x128xbf16>, vector<128x4096xbf16>, vector<16x4096xf32> -> vector<16x4096xf32>
    %cst_3 = arith.constant dense<0.000000e+00> : vector<16xf32>
    %3 = vector.multi_reduction <add>, %2, %cst_3 [1] : vector<16x4096xf32> to vector<16xf32>
    %4 = vector.shape_cast %3 : vector<16xf32> to vector<16x1xf32>
    %cst_4 = arith.constant 2.44140625E-4 : f32
    %5 = vector.broadcast %cst_4 : f32 to vector<16x1xf32>
    %6 = arith.mulf %4, %5 : vector<16x1xf32>
    %7 = arith.mulf %2, %2 : vector<16x4096xf32>
    %cst_5 = arith.constant dense<0.000000e+00> : vector<16xf32>
    %8 = vector.multi_reduction <add>, %7, %cst_5 [1] : vector<16x4096xf32> to vector<16xf32>
    %9 = vector.shape_cast %8 : vector<16xf32> to vector<16x1xf32>
    %cst_6 = arith.constant 2.44140625E-4 : f32
    %10 = vector.broadcast %cst_6 : f32 to vector<16x1xf32>
    %11 = arith.mulf %9, %10 : vector<16x1xf32>
    %12 = arith.mulf %6, %6 : vector<16x1xf32>
    %13 = arith.subf %11, %12 : vector<16x1xf32>
    %c0_7 = arith.constant 0 : index
    %c0_8 = arith.constant 0 : index
    %14 = vector.load %arg2[%c0_7, %c0_8] : memref<16x1xf32, #tpu.memory_space<vmem>>, vector<16x1xf32>
    %cst_9 = arith.constant 9.99999974E-6 : f32
    %15 = vector.broadcast %cst_9 : f32 to vector<16x1xf32>
    %16 = arith.addf %13, %15 : vector<16x1xf32>
    %17 = math.rsqrt %16 : vector<16x1xf32>
    %18 = arith.mulf %14, %17 : vector<16x1xf32>
    %c0_10 = arith.constant 0 : index
    %c0_11 = arith.constant 0 : index
    %19 = vector.load %arg3[%c0_10, %c0_11] : memref<16x1xf32, #tpu.memory_space<vmem>>, vector<16x1xf32>
    %20 = arith.mulf %6, %18 : vector<16x1xf32>
    %21 = arith.subf %19, %20 : vector<16x1xf32>
    %22 = vector.broadcast %18 : vector<16x1xf32> to vector<16x4096xf32>
    %23 = arith.mulf %2, %22 : vector<16x4096xf32>
    %24 = vector.broadcast %21 : vector<16x1xf32> to vector<16x4096xf32>
    %25 = arith.addf %23, %24 : vector<16x4096xf32>
    %cst_12 = arith.constant 0.000000e+00 : f32
    %26 = vector.broadcast %cst_12 : f32 to vector<16x4096xf32>
    %27 = arith.cmpf ogt, %25, %26 : vector<16x4096xf32>
    %cst_13 = arith.constant 2.000000e-01 : f32
    %28 = vector.broadcast %cst_13 : f32 to vector<16x4096xf32>
    %29 = arith.mulf %28, %25 : vector<16x4096xf32>
    %30 = arith.select %27, %25, %29 : vector<16x4096xi1>, vector<16x4096xf32>
    %31 = arith.truncf %30 : vector<16x4096xf32> to vector<16x4096xbf16>
    %c0_14 = arith.constant 0 : index
    %c0_15 = arith.constant 0 : index
    %32 = vector.load %arg4[%c0_14, %c0_15] : memref<16x4096xbf16, #tpu.memory_space<vmem>>, vector<16x4096xbf16>
    tpu.vector_store %arg4[%c0_14, %c0_15], %31 {strides = array<i32>} : memref<16x4096xbf16, #tpu.memory_space<vmem>>, vector<16x4096xbf16>,
    return
  }
}

module attributes {stable_mosaic.version = 11 : i64} {
  func.func @_conv_bn_lrelu_kernel(%arg0: memref<256x1024xbf16, #tpu.memory_space<vmem>>, %arg1: memref<32x256xbf16, #tpu.memory_space<vmem>>, %arg2: memref<32x1xf32, #tpu.memory_space<vmem>>, %arg3: memref<32x1xf32, #tpu.memory_space<vmem>>, %arg4: memref<32x1024xbf16, #tpu.memory_space<vmem>>) attributes {dimension_semantics = [], scalar_prefetch = 0 : i64, scratch_operands = 0 : i64, tpu.core_type = #tpu.core_type<tc>} {
    %c0 = arith.constant 0 : index
    %c0_0 = arith.constant 0 : index
    %0 = vector.load %arg1[%c0, %c0_0] : memref<32x256xbf16, #tpu.memory_space<vmem>>, vector<32x256xbf16>
    %c0_1 = arith.constant 0 : index
    %c0_2 = arith.constant 0 : index
    %1 = vector.load %arg0[%c0_1, %c0_2] : memref<256x1024xbf16, #tpu.memory_space<vmem>>, vector<256x1024xbf16>
    %cst = arith.constant dense<0.000000e+00> : vector<32x1024xf32>
    %2 = tpu.matmul %0, %1, %cst {dimension_numbers = #tpu.dot_dimension_numbers<[1], [0], [0], [1], [0, 0, 1, 1], [], []>} : vector<32x256xbf16>, vector<256x1024xbf16>, vector<32x1024xf32> -> vector<32x1024xf32>
    %cst_3 = arith.constant dense<0.000000e+00> : vector<32xf32>
    %3 = vector.multi_reduction <add>, %2, %cst_3 [1] : vector<32x1024xf32> to vector<32xf32>
    %4 = vector.shape_cast %3 : vector<32xf32> to vector<32x1xf32>
    %cst_4 = arith.constant 9.765625E-4 : f32
    %5 = vector.broadcast %cst_4 : f32 to vector<32x1xf32>
    %6 = arith.mulf %4, %5 : vector<32x1xf32>
    %7 = arith.mulf %2, %2 : vector<32x1024xf32>
    %cst_5 = arith.constant dense<0.000000e+00> : vector<32xf32>
    %8 = vector.multi_reduction <add>, %7, %cst_5 [1] : vector<32x1024xf32> to vector<32xf32>
    %9 = vector.shape_cast %8 : vector<32xf32> to vector<32x1xf32>
    %cst_6 = arith.constant 9.765625E-4 : f32
    %10 = vector.broadcast %cst_6 : f32 to vector<32x1xf32>
    %11 = arith.mulf %9, %10 : vector<32x1xf32>
    %12 = arith.mulf %6, %6 : vector<32x1xf32>
    %13 = arith.subf %11, %12 : vector<32x1xf32>
    %c0_7 = arith.constant 0 : index
    %c0_8 = arith.constant 0 : index
    %14 = vector.load %arg2[%c0_7, %c0_8] : memref<32x1xf32, #tpu.memory_space<vmem>>, vector<32x1xf32>
    %cst_9 = arith.constant 9.99999974E-6 : f32
    %15 = vector.broadcast %cst_9 : f32 to vector<32x1xf32>
    %16 = arith.addf %13, %15 : vector<32x1xf32>
    %17 = math.rsqrt %16 : vector<32x1xf32>
    %18 = arith.mulf %14, %17 : vector<32x1xf32>
    %c0_10 = arith.constant 0 : index
    %c0_11 = arith.constant 0 : index
    %19 = vector.load %arg3[%c0_10, %c0_11] : memref<32x1xf32, #tpu.memory_space<vmem>>, vector<32x1xf32>
    %20 = arith.mulf %6, %18 : vector<32x1xf32>
    %21 = arith.subf %19, %20 : vector<32x1xf32>
    %22 = vector.broadcast %18 : vector<32x1xf32> to vector<32x1024xf32>
    %23 = arith.mulf %2, %22 : vector<32x1024xf32>
    %24 = vector.broadcast %21 : vector<32x1xf32> to vector<32x1024xf32>
    %25 = arith.addf %23, %24 : vector<32x1024xf32>
    %cst_12 = arith.constant 0.000000e+00 : f32
    %26 = vector.broadcast %cst_12 : f32 to vector<32x1024xf32>
    %27 = arith.cmpf ogt, %25, %26 : vector<32x1024xf32>
    %cst_13 = arith.constant 2.000000e-01 : f32
    %28 = vector.broadcast %cst_13 : f32 to vector<32x1024xf32>
    %29 = arith.mulf %28, %25 : vector<32x1024xf32>
    %30 = arith.select %27, %25, %29 : vector<32x1024xi1>, vector<32x1024xf32>
    %31 = arith.truncf %30 : vector<32x1024xf32> to vector<32x1024xbf16>
    %c0_14 = arith.constant 0 : index
    %c0_15 = arith.constant 0 : index
    %32 = vector.load %arg4[%c0_14, %c0_15] : memref<32x1024xbf16, #tpu.memory_space<vmem>>, vector<32x1024xbf16>
    tpu.vector_store %arg4[%c0_14, %c0_15], %31 {strides = array<i32>} : memref<32x1024xbf16, #tpu.memory_space<vmem>>, vector<32x1024xbf16>,
    return
  }
}

module attributes {stable_mosaic.version = 11 : i64} {
  func.func @_conv_bn_lrelu_kernel(%arg0: memref<512x256xbf16, #tpu.memory_space<vmem>>, %arg1: memref<64x512xbf16, #tpu.memory_space<vmem>>, %arg2: memref<64x1xf32, #tpu.memory_space<vmem>>, %arg3: memref<64x1xf32, #tpu.memory_space<vmem>>, %arg4: memref<64x256xbf16, #tpu.memory_space<vmem>>) attributes {dimension_semantics = [], scalar_prefetch = 0 : i64, scratch_operands = 0 : i64, tpu.core_type = #tpu.core_type<tc>} {
    %c0 = arith.constant 0 : index
    %c0_0 = arith.constant 0 : index
    %0 = vector.load %arg1[%c0, %c0_0] : memref<64x512xbf16, #tpu.memory_space<vmem>>, vector<64x512xbf16>
    %c0_1 = arith.constant 0 : index
    %c0_2 = arith.constant 0 : index
    %1 = vector.load %arg0[%c0_1, %c0_2] : memref<512x256xbf16, #tpu.memory_space<vmem>>, vector<512x256xbf16>
    %cst = arith.constant dense<0.000000e+00> : vector<64x256xf32>
    %2 = tpu.matmul %0, %1, %cst {dimension_numbers = #tpu.dot_dimension_numbers<[1], [0], [0], [1], [0, 0, 1, 1], [], []>} : vector<64x512xbf16>, vector<512x256xbf16>, vector<64x256xf32> -> vector<64x256xf32>
    %cst_3 = arith.constant dense<0.000000e+00> : vector<64xf32>
    %3 = vector.multi_reduction <add>, %2, %cst_3 [1] : vector<64x256xf32> to vector<64xf32>
    %4 = vector.shape_cast %3 : vector<64xf32> to vector<64x1xf32>
    %cst_4 = arith.constant 3.906250e-03 : f32
    %5 = vector.broadcast %cst_4 : f32 to vector<64x1xf32>
    %6 = arith.mulf %4, %5 : vector<64x1xf32>
    %7 = arith.mulf %2, %2 : vector<64x256xf32>
    %cst_5 = arith.constant dense<0.000000e+00> : vector<64xf32>
    %8 = vector.multi_reduction <add>, %7, %cst_5 [1] : vector<64x256xf32> to vector<64xf32>
    %9 = vector.shape_cast %8 : vector<64xf32> to vector<64x1xf32>
    %cst_6 = arith.constant 3.906250e-03 : f32
    %10 = vector.broadcast %cst_6 : f32 to vector<64x1xf32>
    %11 = arith.mulf %9, %10 : vector<64x1xf32>
    %12 = arith.mulf %6, %6 : vector<64x1xf32>
    %13 = arith.subf %11, %12 : vector<64x1xf32>
    %c0_7 = arith.constant 0 : index
    %c0_8 = arith.constant 0 : index
    %14 = vector.load %arg2[%c0_7, %c0_8] : memref<64x1xf32, #tpu.memory_space<vmem>>, vector<64x1xf32>
    %cst_9 = arith.constant 9.99999974E-6 : f32
    %15 = vector.broadcast %cst_9 : f32 to vector<64x1xf32>
    %16 = arith.addf %13, %15 : vector<64x1xf32>
    %17 = math.rsqrt %16 : vector<64x1xf32>
    %18 = arith.mulf %14, %17 : vector<64x1xf32>
    %c0_10 = arith.constant 0 : index
    %c0_11 = arith.constant 0 : index
    %19 = vector.load %arg3[%c0_10, %c0_11] : memref<64x1xf32, #tpu.memory_space<vmem>>, vector<64x1xf32>
    %20 = arith.mulf %6, %18 : vector<64x1xf32>
    %21 = arith.subf %19, %20 : vector<64x1xf32>
    %22 = vector.broadcast %18 : vector<64x1xf32> to vector<64x256xf32>
    %23 = arith.mulf %2, %22 : vector<64x256xf32>
    %24 = vector.broadcast %21 : vector<64x1xf32> to vector<64x256xf32>
    %25 = arith.addf %23, %24 : vector<64x256xf32>
    %cst_12 = arith.constant 0.000000e+00 : f32
    %26 = vector.broadcast %cst_12 : f32 to vector<64x256xf32>
    %27 = arith.cmpf ogt, %25, %26 : vector<64x256xf32>
    %cst_13 = arith.constant 2.000000e-01 : f32
    %28 = vector.broadcast %cst_13 : f32 to vector<64x256xf32>
    %29 = arith.mulf %28, %25 : vector<64x256xf32>
    %30 = arith.select %27, %25, %29 : vector<64x256xi1>, vector<64x256xf32>
    %31 = arith.truncf %30 : vector<64x256xf32> to vector<64x256xbf16>
    %c0_14 = arith.constant 0 : index
    %c0_15 = arith.constant 0 : index
    %32 = vector.load %arg4[%c0_14, %c0_15] : memref<64x256xbf16, #tpu.memory_space<vmem>>, vector<64x256xbf16>
    tpu.vector_store %arg4[%c0_14, %c0_15], %31 {strides = array<i32>} : memref<64x256xbf16, #tpu.memory_space<vmem>>, vector<64x256xbf16>,
    return
  }
}

module attributes {stable_mosaic.version = 11 : i64} {
  func.func @_conv_bn_lrelu_kernel(%arg0: memref<1024x64xbf16, #tpu.memory_space<vmem>>, %arg1: memref<64x1024xbf16, #tpu.memory_space<vmem>>, %arg2: memref<64x1xf32, #tpu.memory_space<vmem>>, %arg3: memref<64x1xf32, #tpu.memory_space<vmem>>, %arg4: memref<64x64xbf16, #tpu.memory_space<vmem>>) attributes {dimension_semantics = [], scalar_prefetch = 0 : i64, scratch_operands = 0 : i64, tpu.core_type = #tpu.core_type<tc>} {
    %c0 = arith.constant 0 : index
    %c0_0 = arith.constant 0 : index
    %0 = vector.load %arg1[%c0, %c0_0] : memref<64x1024xbf16, #tpu.memory_space<vmem>>, vector<64x1024xbf16>
    %c0_1 = arith.constant 0 : index
    %c0_2 = arith.constant 0 : index
    %1 = vector.load %arg0[%c0_1, %c0_2] : memref<1024x64xbf16, #tpu.memory_space<vmem>>, vector<1024x64xbf16>
    %cst = arith.constant dense<0.000000e+00> : vector<64x64xf32>
    %2 = tpu.matmul %0, %1, %cst {dimension_numbers = #tpu.dot_dimension_numbers<[1], [0], [0], [1], [0, 0, 1, 1], [], []>} : vector<64x1024xbf16>, vector<1024x64xbf16>, vector<64x64xf32> -> vector<64x64xf32>
    %cst_3 = arith.constant dense<0.000000e+00> : vector<64xf32>
    %3 = vector.multi_reduction <add>, %2, %cst_3 [1] : vector<64x64xf32> to vector<64xf32>
    %4 = vector.shape_cast %3 : vector<64xf32> to vector<64x1xf32>
    %cst_4 = arith.constant 1.562500e-02 : f32
    %5 = vector.broadcast %cst_4 : f32 to vector<64x1xf32>
    %6 = arith.mulf %4, %5 : vector<64x1xf32>
    %7 = arith.mulf %2, %2 : vector<64x64xf32>
    %cst_5 = arith.constant dense<0.000000e+00> : vector<64xf32>
    %8 = vector.multi_reduction <add>, %7, %cst_5 [1] : vector<64x64xf32> to vector<64xf32>
    %9 = vector.shape_cast %8 : vector<64xf32> to vector<64x1xf32>
    %cst_6 = arith.constant 1.562500e-02 : f32
    %10 = vector.broadcast %cst_6 : f32 to vector<64x1xf32>
    %11 = arith.mulf %9, %10 : vector<64x1xf32>
    %12 = arith.mulf %6, %6 : vector<64x1xf32>
    %13 = arith.subf %11, %12 : vector<64x1xf32>
    %c0_7 = arith.constant 0 : index
    %c0_8 = arith.constant 0 : index
    %14 = vector.load %arg2[%c0_7, %c0_8] : memref<64x1xf32, #tpu.memory_space<vmem>>, vector<64x1xf32>
    %cst_9 = arith.constant 9.99999974E-6 : f32
    %15 = vector.broadcast %cst_9 : f32 to vector<64x1xf32>
    %16 = arith.addf %13, %15 : vector<64x1xf32>
    %17 = math.rsqrt %16 : vector<64x1xf32>
    %18 = arith.mulf %14, %17 : vector<64x1xf32>
    %c0_10 = arith.constant 0 : index
    %c0_11 = arith.constant 0 : index
    %19 = vector.load %arg3[%c0_10, %c0_11] : memref<64x1xf32, #tpu.memory_space<vmem>>, vector<64x1xf32>
    %20 = arith.mulf %6, %18 : vector<64x1xf32>
    %21 = arith.subf %19, %20 : vector<64x1xf32>
    %22 = vector.broadcast %18 : vector<64x1xf32> to vector<64x64xf32>
    %23 = arith.mulf %2, %22 : vector<64x64xf32>
    %24 = vector.broadcast %21 : vector<64x1xf32> to vector<64x64xf32>
    %25 = arith.addf %23, %24 : vector<64x64xf32>
    %cst_12 = arith.constant 0.000000e+00 : f32
    %26 = vector.broadcast %cst_12 : f32 to vector<64x64xf32>
    %27 = arith.cmpf ogt, %25, %26 : vector<64x64xf32>
    %cst_13 = arith.constant 2.000000e-01 : f32
    %28 = vector.broadcast %cst_13 : f32 to vector<64x64xf32>
    %29 = arith.mulf %28, %25 : vector<64x64xf32>
    %30 = arith.select %27, %25, %29 : vector<64x64xi1>, vector<64x64xf32>
    %31 = arith.truncf %30 : vector<64x64xf32> to vector<64x64xbf16>
    %c0_14 = arith.constant 0 : index
    %c0_15 = arith.constant 0 : index
    %32 = vector.load %arg4[%c0_14, %c0_15] : memref<64x64xbf16, #tpu.memory_space<vmem>>, vector<64x64xbf16>
    tpu.vector_store %arg4[%c0_14, %c0_15], %31 {strides = array<i32>} : memref<64x64xbf16, #tpu.memory_space<vmem>>, vector<64x64xbf16>,
    return
  }
}

module attributes {stable_mosaic.version = 11 : i64} {
  func.func @_dense_bn_tanh_kernel(%arg0: memref<1024x4xbf16, #tpu.memory_space<vmem>>, %arg1: memref<16x1024xbf16, #tpu.memory_space<vmem>>, %arg2: memref<16x1xf32, #tpu.memory_space<vmem>>, %arg3: memref<16x1xf32, #tpu.memory_space<vmem>>, %arg4: memref<16x4xf32, #tpu.memory_space<vmem>>) attributes {dimension_semantics = [], scalar_prefetch = 0 : i64, scratch_operands = 0 : i64, tpu.core_type = #tpu.core_type<tc>} {
    %c0 = arith.constant 0 : index
    %c0_0 = arith.constant 0 : index
    %0 = vector.load %arg1[%c0, %c0_0] : memref<16x1024xbf16, #tpu.memory_space<vmem>>, vector<16x1024xbf16>
    %c0_1 = arith.constant 0 : index
    %c0_2 = arith.constant 0 : index
    %1 = vector.load %arg0[%c0_1, %c0_2] : memref<1024x4xbf16, #tpu.memory_space<vmem>>, vector<1024x4xbf16>
    %cst = arith.constant dense<0.000000e+00> : vector<16x4xf32>
    %2 = tpu.matmul %0, %1, %cst {dimension_numbers = #tpu.dot_dimension_numbers<[1], [0], [0], [1], [0, 0, 1, 1], [], []>} : vector<16x1024xbf16>, vector<1024x4xbf16>, vector<16x4xf32> -> vector<16x4xf32>
    %cst_3 = arith.constant dense<0.000000e+00> : vector<16xf32>
    %3 = vector.multi_reduction <add>, %2, %cst_3 [1] : vector<16x4xf32> to vector<16xf32>
    %4 = vector.shape_cast %3 : vector<16xf32> to vector<16x1xf32>
    %cst_4 = arith.constant 2.500000e-01 : f32
    %5 = vector.broadcast %cst_4 : f32 to vector<16x1xf32>
    %6 = arith.mulf %4, %5 : vector<16x1xf32>
    %7 = arith.mulf %2, %2 : vector<16x4xf32>
    %cst_5 = arith.constant dense<0.000000e+00> : vector<16xf32>
    %8 = vector.multi_reduction <add>, %7, %cst_5 [1] : vector<16x4xf32> to vector<16xf32>
    %9 = vector.shape_cast %8 : vector<16xf32> to vector<16x1xf32>
    %cst_6 = arith.constant 2.500000e-01 : f32
    %10 = vector.broadcast %cst_6 : f32 to vector<16x1xf32>
    %11 = arith.mulf %9, %10 : vector<16x1xf32>
    %12 = arith.mulf %6, %6 : vector<16x1xf32>
    %13 = arith.subf %11, %12 : vector<16x1xf32>
    %c0_7 = arith.constant 0 : index
    %c0_8 = arith.constant 0 : index
    %14 = vector.load %arg2[%c0_7, %c0_8] : memref<16x1xf32, #tpu.memory_space<vmem>>, vector<16x1xf32>
    %cst_9 = arith.constant 9.99999974E-6 : f32
    %15 = vector.broadcast %cst_9 : f32 to vector<16x1xf32>
    %16 = arith.addf %13, %15 : vector<16x1xf32>
    %17 = math.rsqrt %16 : vector<16x1xf32>
    %18 = arith.mulf %14, %17 : vector<16x1xf32>
    %c0_10 = arith.constant 0 : index
    %c0_11 = arith.constant 0 : index
    %19 = vector.load %arg3[%c0_10, %c0_11] : memref<16x1xf32, #tpu.memory_space<vmem>>, vector<16x1xf32>
    %20 = arith.mulf %6, %18 : vector<16x1xf32>
    %21 = arith.subf %19, %20 : vector<16x1xf32>
    %22 = vector.broadcast %18 : vector<16x1xf32> to vector<16x4xf32>
    %23 = arith.mulf %2, %22 : vector<16x4xf32>
    %24 = vector.broadcast %21 : vector<16x1xf32> to vector<16x4xf32>
    %25 = arith.addf %23, %24 : vector<16x4xf32>
    %26 = math.tanh %25 : vector<16x4xf32>
    %c0_12 = arith.constant 0 : index
    %c0_13 = arith.constant 0 : index
    %27 = vector.load %arg4[%c0_12, %c0_13] : memref<16x4xf32, #tpu.memory_space<vmem>>, vector<16x4xf32>
    tpu.vector_store %arg4[%c0_12, %c0_13], %26 {strides = array<i32>} : memref<16x4xf32, #tpu.memory_space<vmem>>, vector<16x4xf32>,
    return
  }
}

</mosaic_0001>

<llo_original>
// kernel: content_encoder_forward.6
$region0: #{content_encoder_forward.6}
  #allocation0 [shape = 'u32[]', space=smem, size = 0x4, offset = 0x4, fixed_abs, tag = 'smem constant byte address 0x4 - core index']
  #allocation1 [shape = 'u32[144,128]{1,0:T(1,128)}', space=vmem, size = 0x12000, scoped, tag = 'internal scratch']
  %s0 = inlined_call_operand.vmem [shape: bf16[16,16384], index: 0, kind: input, shape index: {}]
  %s1 = inlined_call_operand.vmem [shape: bf16[8,16], index: 1, kind: input, shape index: {}]
  %s2 = inlined_call_operand.vmem [shape: f32[8,1], index: 2, kind: input, shape index: {}]
  %s3 = inlined_call_operand.vmem [shape: f32[8,1], index: 3, kind: input, shape index: {}]
  %s4 = inlined_call_operand.vmem [shape: bf16[8,16384], index: 4, kind: output, shape index: {}]
  %s5 = sld [smem:[#allocation0]]
  $region26: #{content_encoder_forward.6} parent=0
    _
  %s7 = ssub.s32 1, %s5
  %s8 = scalar_select 0, %s7, %s5
  // Predicated region
  $region2: #{content_encoder_forward.6} parent=0 // pred_check
    _
  $region3: #{content_encoder_forward.6} parent=0 // pred_check_branch
    %10 = sbr.rel (0) target = $region5
  $region4: #{content_encoder_forward.6} parent=0 // pred_region
    _
  $region5: #{content_encoder_forward.6} parent=0 // pred_fallthru
    _
  // Predicated region
  $region6: #{content_encoder_forward.6} parent=0 // pred_check
    _
  $region7: #{content_encoder_forward.6} parent=0 // pred_check_branch
    %12 = sbr.rel (0) target = $region9
  $region8: #{content_encoder_forward.6} parent=0 // pred_region
    _
  $region9: #{content_encoder_forward.6} parent=0 // pred_fallthru
    _
  // Predicated region
  $region10: #{content_encoder_forward.6} parent=0 // pred_check
    _
  $region11: #{content_encoder_forward.6} parent=0 // pred_check_branch
    %14 = sbr.rel (0) target = $region13
  $region12: #{content_encoder_forward.6} parent=0 // pred_region
    _
  $region13: #{content_encoder_forward.6} parent=0 // pred_fallthru
    _
  // Predicated region
  $region14: #{content_encoder_forward.6} parent=0 // pred_check
    _
  $region15: #{content_encoder_forward.6} parent=0 // pred_check_branch
    %16 = sbr.rel (0) target = $region17
  $region16: #{content_encoder_forward.6} parent=0 // pred_region
    _
  $region17: #{content_encoder_forward.6} parent=0 // pred_fallthru
    _
  %v18 = vld [vmem:[%s1] sm:$0xf]
  %v19 = vld [vmem:[%s0] sm:$0xff]
  %v20 = vld [vmem:[%s0 + $0x8] sm:$0xff]
  %v21 = vld [vmem:[%s0 + $0x10] sm:$0xff]
  %v22 = vld [vmem:[%s0 + $0x18] sm:$0xff]
  %v23 = vld [vmem:[%s0 + $0x20] sm:$0xff]
  %v24 = vld [vmem:[%s0 + $0x28] sm:$0xff]
  %v25 = vld [vmem:[%s0 + $0x30] sm:$0xff]
  %v26 = vld [vmem:[%s0 + $0x38] sm:$0xff]
  %v27 = vld [vmem:[%s0 + $0x40] sm:$0xff]
  %v28 = vld [vmem:[%s0 + $0x48] sm:$0xff]
  %v29 = vld [vmem:[%s0 + $0x50] sm:$0xff]
  %v30 = vld [vmem:[%s0 + $0x58] sm:$0xff]
  %v31 = vld [vmem:[%s0 + $0x60] sm:$0xff]
  %v32 = vld [vmem:[%s0 + $0x68] sm:$0xff]
  %v33 = vld [vmem:[%s0 + $0x70] sm:$0xff]
  %v34 = vld [vmem:[%s0 + $0x78] sm:$0xff]
  %v35 = vld [vmem:[%s0 + $0x80] sm:$0xff]
  %v36 = vld [vmem:[%s0 + $0x88] sm:$0xff]
  %v37 = vld [vmem:[%s0 + $0x90] sm:$0xff]
  %v38 = vld [vmem:[%s0 + $0x98] sm:$0xff]
  %v39 = vld [vmem:[%s0 + $0xa0] sm:$0xff]
  %v40 = vld [vmem:[%s0 + $0xa8] sm:$0xff]
  %v41 = vld [vmem:[%s0 + $0xb0] sm:$0xff]
  %v42 = vld [vmem:[%s0 + $0xb8] sm:$0xff]
  %v43 = vld [vmem:[%s0 + $0xc0] sm:$0xff]
  %v44 = vld [vmem:[%s0 + $0xc8] sm:$0xff]
  %v45 = vld [vmem:[%s0 + $0xd0] sm:$0xff]
  %v46 = vld [vmem:[%s0 + $0xd8] sm:$0xff]
  %v47 = vld [vmem:[%s0 + $0xe0] sm:$0xff]
  %v48 = vld [vmem:[%s0 + $0xe8] sm:$0xff]
  %v49 = vld [vmem:[%s0 + $0xf0] sm:$0xff]
  %v50 = vld [vmem:[%s0 + $0xf8] sm:$0xff]
  %v51 = vld [vmem:[%s0 + $0x100] sm:$0xff]
  %v52 = vld [vmem:[%s0 + $0x108] sm:$0xff]
  %v53 = vld [vmem:[%s0 + $0x110] sm:$0xff]
  %v54 = vld [vmem:[%s0 + $0x118] sm:$0xff]
  %v55 = vld [vmem:[%s0 + $0x120] sm:$0xff]
  %v56 = vld [vmem:[%s0 + $0x128] sm:$0xff]
  %v57 = vld [vmem:[%s0 + $0x130] sm:$0xff]
  %v58 = vld [vmem:[%s0 + $0x138] sm:$0xff]
  %v59 = vld [vmem:[%s0 + $0x140] sm:$0xff]
  %v60 = vld [vmem:[%s0 + $0x148] sm:$0xff]
  %v61 = vld [vmem:[%s0 + $0x150] sm:$0xff]
  %v62 = vld [vmem:[%s0 + $0x158] sm:$0xff]
  %v63 = vld [vmem:[%s0 + $0x160] sm:$0xff]
  %v64 = vld [vmem:[%s0 + $0x168] sm:$0xff]
  %v65 = vld [vmem:[%s0 + $0x170] sm:$0xff]
  %v66 = vld [vmem:[%s0 + $0x178] sm:$0xff]
  %v67 = vld [vmem:[%s0 + $0x180] sm:$0xff]
  %v68 = vld [vmem:[%s0 + $0x188] sm:$0xff]
  %v69 = vld [vmem:[%s0 + $0x190] sm:$0xff]
  %v70 = vld [vmem:[%s0 + $0x198] sm:$0xff]
  %v71 = vld [vmem:[%s0 + $0x1a0] sm:$0xff]
  %v72 = vld [vmem:[%s0 + $0x1a8] sm:$0xff]
  %v73 = vld [vmem:[%s0 + $0x1b0] sm:$0xff]
  %v74 = vld [vmem:[%s0 + $0x1b8] sm:$0xff]
  %v75 = vld [vmem:[%s0 + $0x1c0] sm:$0xff]
  %v76 = vld [vmem:[%s0 + $0x1c8] sm:$0xff]
  %v77 = vld [vmem:[%s0 + $0x1d0] sm:$0xff]
  %v78 = vld [vmem:[%s0 + $0x1d8] sm:$0xff]
  %v79 = vld [vmem:[%s0 + $0x1e0] sm:$0xff]
  %v80 = vld [vmem:[%s0 + $0x1e8] sm:$0xff]
  %v81 = vld [vmem:[%s0 + $0x1f0] sm:$0xff]
  %v82 = vld [vmem:[%s0 + $0x1f8] sm:$0xff]
  %v83 = vld [vmem:[%s0 + $0x200] sm:$0xff]
  %v84 = vld [vmem:[%s0 + $0x208] sm:$0xff]
  %v85 = vld [vmem:[%s0 + $0x210] sm:$0xff]
  %v86 = vld [vmem:[%s0 + $0x218] sm:$0xff]
  %v87 = vld [vmem:[%s0 + $0x220] sm:$0xff]
  %v88 = vld [vmem:[%s0 + $0x228] sm:$0xff]
  %v89 = vld [vmem:[%s0 + $0x230] sm:$0xff]
  %v90 = vld [vmem:[%s0 + $0x238] sm:$0xff]
  %v91 = vld [vmem:[%s0 + $0x240] sm:$0xff]
  %v92 = vld [vmem:[%s0 + $0x248] sm:$0xff]
  %v93 = vld [vmem:[%s0 + $0x250] sm:$0xff]
  %v94 = vld [vmem:[%s0 + $0x258] sm:$0xff]
  %v95 = vld [vmem:[%s0 + $0x260] sm:$0xff]
  %v96 = vld [vmem:[%s0 + $0x268] sm:$0xff]
  %v97 = vld [vmem:[%s0 + $0x270] sm:$0xff]
  %v98 = vld [vmem:[%s0 + $0x278] sm:$0xff]
  %v99 = vld [vmem:[%s0 + $0x280] sm:$0xff]
  %v100 = vld [vmem:[%s0 + $0x288] sm:$0xff]
  %v101 = vld [vmem:[%s0 + $0x290] sm:$0xff]
  %v102 = vld [vmem:[%s0 + $0x298] sm:$0xff]
  %v103 = vld [vmem:[%s0 + $0x2a0] sm:$0xff]
  %v104 = vld [vmem:[%s0 + $0x2a8] sm:$0xff]
  %v105 = vld [vmem:[%s0 + $0x2b0] sm:$0xff]
  %v106 = vld [vmem:[%s0 + $0x2b8] sm:$0xff]
  %v107 = vld [vmem:[%s0 + $0x2c0] sm:$0xff]
  %v108 = vld [vmem:[%s0 + $0x2c8] sm:$0xff]
  %v109 = vld [vmem:[%s0 + $0x2d0] sm:$0xff]
  %v110 = vld [vmem:[%s0 + $0x2d8] sm:$0xff]
  %v111 = vld [vmem:[%s0 + $0x2e0] sm:$0xff]
  %v112 = vld [vmem:[%s0 + $0x2e8] sm:$0xff]
  %v113 = vld [vmem:[%s0 + $0x2f0] sm:$0xff]
  %v114 = vld [vmem:[%s0 + $0x2f8] sm:$0xff]
  %v115 = vld [vmem:[%s0 + $0x300] sm:$0xff]
  %v116 = vld [vmem:[%s0 + $0x308] sm:$0xff]
  %v117 = vld [vmem:[%s0 + $0x310] sm:$0xff]
  %v118 = vld [vmem:[%s0 + $0x318] sm:$0xff]
  %v119 = vld [vmem:[%s0 + $0x320] sm:$0xff]
  %v120 = vld [vmem:[%s0 + $0x328] sm:$0xff]
  %v121 = vld [vmem:[%s0 + $0x330] sm:$0xff]
  %v122 = vld [vmem:[%s0 + $0x338] sm:$0xff]
  %v123 = vld [vmem:[%s0 + $0x340] sm:$0xff]
  %v124 = vld [vmem:[%s0 + $0x348] sm:$0xff]
  %v125 = vld [vmem:[%s0 + $0x350] sm:$0xff]
  %v126 = vld [vmem:[%s0 + $0x358] sm:$0xff]
  %v127 = vld [vmem:[%s0 + $0x360] sm:$0xff]
  %v128 = vld [vmem:[%s0 + $0x368] sm:$0xff]
  %v129 = vld [vmem:[%s0 + $0x370] sm:$0xff]
  %v130 = vld [vmem:[%s0 + $0x378] sm:$0xff]
  %v131 = vld [vmem:[%s0 + $0x380] sm:$0xff]
  %v132 = vld [vmem:[%s0 + $0x388] sm:$0xff]
  %v133 = vld [vmem:[%s0 + $0x390] sm:$0xff]
  %v134 = vld [vmem:[%s0 + $0x398] sm:$0xff]
  %v135 = vld [vmem:[%s0 + $0x3a0] sm:$0xff]
  %v136 = vld [vmem:[%s0 + $0x3a8] sm:$0xff]
  %v137 = vld [vmem:[%s0 + $0x3b0] sm:$0xff]
  %v138 = vld [vmem:[%s0 + $0x3b8] sm:$0xff]
  %v139 = vld [vmem:[%s0 + $0x3c0] sm:$0xff]
  %v140 = vld [vmem:[%s0 + $0x3c8] sm:$0xff]
  %v141 = vld [vmem:[%s0 + $0x3d0] sm:$0xff]
  %v142 = vld [vmem:[%s0 + $0x3d8] sm:$0xff]
  %v143 = vld [vmem:[%s0 + $0x3e0] sm:$0xff]
  %v144 = vld [vmem:[%s0 + $0x3e8] sm:$0xff]
  %v145 = vld [vmem:[%s0 + $0x3f0] sm:$0xff]
  %v146 = vld [vmem:[%s0 + $0x3f8] sm:$0xff]
  %v275 = vunpack.c.l.b16 %v19
  %v276 = vunpack.c.h.b16 %v19
  %v277 = vunpack.c.l.b16 %v20
  %v278 = vunpack.c.h.b16 %v20
  %v279 = vunpack.c.l.b16 %v21
  %v280 = vunpack.c.h.b16 %v21
  %v281 = vunpack.c.l.b16 %v22
  %v282 = vunpack.c.h.b16 %v22
  %v283 = vunpack.c.l.b16 %v23
  %v284 = vunpack.c.h.b16 %v23
  %v285 = vunpack.c.l.b16 %v24
  %v286 = vunpack.c.h.b16 %v24
  %v287 = vunpack.c.l.b16 %v25
  %v288 = vunpack.c.h.b16 %v25
  %v289 = vunpack.c.l.b16 %v26
  %v290 = vunpack.c.h.b16 %v26
  %v291 = vunpack.c.l.b16 %v27
  %v292 = vunpack.c.h.b16 %v27
  %v293 = vunpack.c.l.b16 %v28
  %v294 = vunpack.c.h.b16 %v28
  %v295 = vunpack.c.l.b16 %v29
  %v296 = vunpack.c.h.b16 %v29
  %v297 = vunpack.c.l.b16 %v30
  %v298 = vunpack.c.h.b16 %v30
  %v299 = vunpack.c.l.b16 %v31
  %v300 = vunpack.c.h.b16 %v31
  %v301 = vunpack.c.l.b16 %v32
  %v302 = vunpack.c.h.b16 %v32
  %v303 = vunpack.c.l.b16 %v33
  %v304 = vunpack.c.h.b16 %v33
  %v305 = vunpack.c.l.b16 %v34
  %v306 = vunpack.c.h.b16 %v34
  %v307 = vunpack.c.l.b16 %v35
  %v308 = vunpack.c.h.b16 %v35
  %v309 = vunpack.c.l.b16 %v36
  %v310 = vunpack.c.h.b16 %v36
  %v311 = vunpack.c.l.b16 %v37
  %v312 = vunpack.c.h.b16 %v37
  %v313 = vunpack.c.l.b16 %v38
  %v314 = vunpack.c.h.b16 %v38
  %v315 = vunpack.c.l.b16 %v39
  %v316 = vunpack.c.h.b16 %v39
  %v317 = vunpack.c.l.b16 %v40
  %v318 = vunpack.c.h.b16 %v40
  %v319 = vunpack.c.l.b16 %v41
  %v320 = vunpack.c.h.b16 %v41
  %v321 = vunpack.c.l.b16 %v42
  %v322 = vunpack.c.h.b16 %v42
  %v323 = vunpack.c.l.b16 %v43
  %v324 = vunpack.c.h.b16 %v43
  %v325 = vunpack.c.l.b16 %v44
  %v326 = vunpack.c.h.b16 %v44
  %v327 = vunpack.c.l.b16 %v45
  %v328 = vunpack.c.h.b16 %v45
  %v329 = vunpack.c.l.b16 %v46
  %v330 = vunpack.c.h.b16 %v46
  %v331 = vunpack.c.l.b16 %v47
  %v332 = vunpack.c.h.b16 %v47
  %v333 = vunpack.c.l.b16 %v48
  %v334 = vunpack.c.h.b16 %v48
  %v335 = vunpack.c.l.b16 %v49
  %v336 = vunpack.c.h.b16 %v49
  %v337 = vunpack.c.l.b16 %v50
  %v338 = vunpack.c.h.b16 %v50
  %v339 = vunpack.c.l.b16 %v51
  %v340 = vunpack.c.h.b16 %v51
  %v341 = vunpack.c.l.b16 %v52
  %v342 = vunpack.c.h.b16 %v52
  %v343 = vunpack.c.l.b16 %v53
  %v344 = vunpack.c.h.b16 %v53
  %v345 = vunpack.c.l.b16 %v54
  %v346 = vunpack.c.h.b16 %v54
  %v347 = vunpack.c.l.b16 %v55
  %v348 = vunpack.c.h.b16 %v55
  %v349 = vunpack.c.l.b16 %v56
  %v350 = vunpack.c.h.b16 %v56
  %v351 = vunpack.c.l.b16 %v57
  %v352 = vunpack.c.h.b16 %v57
  %v353 = vunpack.c.l.b16 %v58
  %v354 = vunpack.c.h.b16 %v58
  %v355 = vunpack.c.l.b16 %v59
  %v356 = vunpack.c.h.b16 %v59
  %v357 = vunpack.c.l.b16 %v60
  %v358 = vunpack.c.h.b16 %v60
  %v359 = vunpack.c.l.b16 %v61
  %v360 = vunpack.c.h.b16 %v61
  %v361 = vunpack.c.l.b16 %v62
  %v362 = vunpack.c.h.b16 %v62
  %v363 = vunpack.c.l.b16 %v63
  %v364 = vunpack.c.h.b16 %v63
  %v365 = vunpack.c.l.b16 %v64
  %v366 = vunpack.c.h.b16 %v64
  %v367 = vunpack.c.l.b16 %v65
  %v368 = vunpack.c.h.b16 %v65
  %v369 = vunpack.c.l.b16 %v66
  %v370 = vunpack.c.h.b16 %v66
  %v371 = vunpack.c.l.b16 %v67
  %v372 = vunpack.c.h.b16 %v67
  %v373 = vunpack.c.l.b16 %v68
  %v374 = vunpack.c.h.b16 %v68
  %v375 = vunpack.c.l.b16 %v69
  %v376 = vunpack.c.h.b16 %v69
  %v377 = vunpack.c.l.b16 %v70
  %v378 = vunpack.c.h.b16 %v70
  %v379 = vunpack.c.l.b16 %v71
  %v380 = vunpack.c.h.b16 %v71
  %v381 = vunpack.c.l.b16 %v72
  %v382 = vunpack.c.h.b16 %v72
  %v383 = vunpack.c.l.b16 %v73
  %v384 = vunpack.c.h.b16 %v73
  %v385 = vunpack.c.l.b16 %v74
  %v386 = vunpack.c.h.b16 %v74
  %v387 = vunpack.c.l.b16 %v75
  %v388 = vunpack.c.h.b16 %v75
  %v389 = vunpack.c.l.b16 %v76
  %v390 = vunpack.c.h.b16 %v76
  %v391 = vunpack.c.l.b16 %v77
  %v392 = vunpack.c.h.b16 %v77
  %v393 = vunpack.c.l.b16 %v78
  %v394 = vunpack.c.h.b16 %v78
  %v395 = vunpack.c.l.b16 %v79
  %v396 = vunpack.c.h.b16 %v79
  %v397 = vunpack.c.l.b16 %v80
  %v398 = vunpack.c.h.b16 %v80
  %v399 = vunpack.c.l.b16 %v81
  %v400 = vunpack.c.h.b16 %v81
  %v401 = vunpack.c.l.b16 %v82
  %v402 = vunpack.c.h.b16 %v82
  %v403 = vunpack.c.l.b16 %v83
  %v404 = vunpack.c.h.b16 %v83
  %v405 = vunpack.c.l.b16 %v84
  %v406 = vunpack.c.h.b16 %v84
  %v407 = vunpack.c.l.b16 %v85
  %v408 = vunpack.c.h.b16 %v85
  %v409 = vunpack.c.l.b16 %v86
  %v410 = vunpack.c.h.b16 %v86
  %v411 = vunpack.c.l.b16 %v87
  %v412 = vunpack.c.h.b16 %v87
  %v413 = vunpack.c.l.b16 %v88
  %v414 = vunpack.c.h.b16 %v88
  %v415 = vunpack.c.l.b16 %v89
  %v416 = vunpack.c.h.b16 %v89
  %v417 = vunpack.c.l.b16 %v90
  %v418 = vunpack.c.h.b16 %v90
  %v419 = vunpack.c.l.b16 %v91
  %v420 = vunpack.c.h.b16 %v91
  %v421 = vunpack.c.l.b16 %v92
  %v422 = vunpack.c.h.b16 %v92
  %v423 = vunpack.c.l.b16 %v93
  %v424 = vunpack.c.h.b16 %v93
  %v425 = vunpack.c.l.b16 %v94
  %v426 = vunpack.c.h.b16 %v94
  %v427 = vunpack.c.l.b16 %v95
  %v428 = vunpack.c.h.b16 %v95
  %v429 = vunpack.c.l.b16 %v96
  %v430 = vunpack.c.h.b16 %v96
  %v431 = vunpack.c.l.b16 %v97
  %v432 = vunpack.c.h.b16 %v97
  %v433 = vunpack.c.l.b16 %v98
  %v434 = vunpack.c.h.b16 %v98
  %v435 = vunpack.c.l.b16 %v99
  %v436 = vunpack.c.h.b16 %v99
  %v437 = vunpack.c.l.b16 %v100
  %v438 = vunpack.c.h.b16 %v100
  %v439 = vunpack.c.l.b16 %v101
  %v440 = vunpack.c.h.b16 %v101
  %v441 = vunpack.c.l.b16 %v102
  %v442 = vunpack.c.h.b16 %v102
  %v443 = vunpack.c.l.b16 %v103
  %v444 = vunpack.c.h.b16 %v103
  %v445 = vunpack.c.l.b16 %v104
  %v446 = vunpack.c.h.b16 %v104
  %v447 = vunpack.c.l.b16 %v105
  %v448 = vunpack.c.h.b16 %v105
  %v449 = vunpack.c.l.b16 %v106
  %v450 = vunpack.c.h.b16 %v106
  %v451 = vunpack.c.l.b16 %v107
  %v452 = vunpack.c.h.b16 %v107
  %v453 = vunpack.c.l.b16 %v108
  %v454 = vunpack.c.h.b16 %v108
  %v455 = vunpack.c.l.b16 %v109
  %v456 = vunpack.c.h.b16 %v109
  %v457 = vunpack.c.l.b16 %v110
  %v458 = vunpack.c.h.b16 %v110
  %v459 = vunpack.c.l.b16 %v111
  %v460 = vunpack.c.h.b16 %v111
  %v461 = vunpack.c.l.b16 %v112
  %v462 = vunpack.c.h.b16 %v112
  %v463 = vunpack.c.l.b16 %v113
  %v464 = vunpack.c.h.b16 %v113
  %v465 = vunpack.c.l.b16 %v114
  %v466 = vunpack.c.h.b16 %v114
  %v467 = vunpack.c.l.b16 %v115
  %v468 = vunpack.c.h.b16 %v115
  %v469 = vunpack.c.l.b16 %v116
  %v470 = vunpack.c.h.b16 %v116
  %v471 = vunpack.c.l.b16 %v117
  %v472 = vunpack.c.h.b16 %v117
  %v473 = vunpack.c.l.b16 %v118
  %v474 = vunpack.c.h.b16 %v118
  %v475 = vunpack.c.l.b16 %v119
  %v476 = vunpack.c.h.b16 %v119
  %v477 = vunpack.c.l.b16 %v120
  %v478 = vunpack.c.h.b16 %v120
  %v479 = vunpack.c.l.b16 %v121
  %v480 = vunpack.c.h.b16 %v121
  %v481 = vunpack.c.l.b16 %v122
  %v482 = vunpack.c.h.b16 %v122
  %v483 = vunpack.c.l.b16 %v123
  %v484 = vunpack.c.h.b16 %v123
  %v485 = vunpack.c.l.b16 %v124
  %v486 = vunpack.c.h.b16 %v124
  %v487 = vunpack.c.l.b16 %v125
  %v488 = vunpack.c.h.b16 %v125
  %v489 = vunpack.c.l.b16 %v126
  %v490 = vunpack.c.h.b16 %v126
  %v491 = vunpack.c.l.b16 %v127
  %v492 = vunpack.c.h.b16 %v127
  %v493 = vunpack.c.l.b16 %v128
  %v494 = vunpack.c.h.b16 %v128
  %v495 = vunpack.c.l.b16 %v129
  %v496 = vunpack.c.h.b16 %v129
  %v497 = vunpack.c.l.b16 %v130
  %v498 = vunpack.c.h.b16 %v130
  %v499 = vunpack.c.l.b16 %v131
  %v500 = vunpack.c.h.b16 %v131
  %v501 = vunpack.c.l.b16 %v132
  %v502 = vunpack.c.h.b16 %v132
  %v503 = vunpack.c.l.b16 %v133
  %v504 = vunpack.c.h.b16 %v133
  %v505 = vunpack.c.l.b16 %v134
  %v506 = vunpack.c.h.b16 %v134
  %v507 = vunpack.c.l.b16 %v135
  %v508 = vunpack.c.h.b16 %v135
  %v509 = vunpack.c.l.b16 %v136
  %v510 = vunpack.c.h.b16 %v136
  %v511 = vunpack.c.l.b16 %v137
  %v512 = vunpack.c.h.b16 %v137
  %v513 = vunpack.c.l.b16 %v138
  %v514 = vunpack.c.h.b16 %v138
  %v515 = vunpack.c.l.b16 %v139
  %v516 = vunpack.c.h.b16 %v139
  %v517 = vunpack.c.l.b16 %v140
  %v518 = vunpack.c.h.b16 %v140
  %v519 = vunpack.c.l.b16 %v141
  %v520 = vunpack.c.h.b16 %v141
  %v521 = vunpack.c.l.b16 %v142
  %v522 = vunpack.c.h.b16 %v142
  %v523 = vunpack.c.l.b16 %v143
  %v524 = vunpack.c.h.b16 %v143
  %v525 = vunpack.c.l.b16 %v144
  %v526 = vunpack.c.h.b16 %v144
  %v527 = vunpack.c.l.b16 %v145
  %v528 = vunpack.c.h.b16 %v145
  %v529 = vunpack.c.l.b16 %v146
  %v530 = vunpack.c.h.b16 %v146
  %v531 = vpack.c.b16 %v403, %v275
  %v532 = vpack.c.b16 %v404, %v276
  %v533 = vpack.c.b16 %v405, %v277
  %v534 = vpack.c.b16 %v406, %v278
  %v535 = vpack.c.b16 %v407, %v279
  %v536 = vpack.c.b16 %v408, %v280
  %v537 = vpack.c.b16 %v409, %v281
  %v538 = vpack.c.b16 %v410, %v282
  %v539 = vpack.c.b16 %v411, %v283
  %v540 = vpack.c.b16 %v412, %v284
  %v541 = vpack.c.b16 %v413, %v285
  %v542 = vpack.c.b16 %v414, %v286
  %v543 = vpack.c.b16 %v415, %v287
  %v544 = vpack.c.b16 %v416, %v288
  %v545 = vpack.c.b16 %v417, %v289
  %v546 = vpack.c.b16 %v418, %v290
  %v547 = vpack.c.b16 %v419, %v291
  %v548 = vpack.c.b16 %v420, %v292
  %v549 = vpack.c.b16 %v421, %v293
  %v550 = vpack.c.b16 %v422, %v294
  %v551 = vpack.c.b16 %v423, %v295
  %v552 = vpack.c.b16 %v424, %v296
  %v553 = vpack.c.b16 %v425, %v297
  %v554 = vpack.c.b16 %v426, %v298
  %v555 = vpack.c.b16 %v427, %v299
  %v556 = vpack.c.b16 %v428, %v300
  %v557 = vpack.c.b16 %v429, %v301
  %v558 = vpack.c.b16 %v430, %v302
  %v559 = vpack.c.b16 %v431, %v303
  %v560 = vpack.c.b16 %v432, %v304
  %v561 = vpack.c.b16 %v433, %v305
  %v562 = vpack.c.b16 %v434, %v306
  %v563 = vpack.c.b16 %v435, %v307
  %v564 = vpack.c.b16 %v436, %v308
  %v565 = vpack.c.b16 %v437, %v309
  %v566 = vpack.c.b16 %v438, %v310
  %v567 = vpack.c.b16 %v439, %v311
  %v568 = vpack.c.b16 %v440, %v312
  %v569 = vpack.c.b16 %v441, %v313
  %v570 = vpack.c.b16 %v442, %v314
  %v571 = vpack.c.b16 %v443, %v315
  %v572 = vpack.c.b16 %v444, %v316
  %v573 = vpack.c.b16 %v445, %v317
  %v574 = vpack.c.b16 %v446, %v318
  %v575 = vpack.c.b16 %v447, %v319
  %v576 = vpack.c.b16 %v448, %v320
  %v577 = vpack.c.b16 %v449, %v321
  %v578 = vpack.c.b16 %v450, %v322
  %v579 = vpack.c.b16 %v451, %v323
  %v580 = vpack.c.b16 %v452, %v324
  %v581 = vpack.c.b16 %v453, %v325
  %v582 = vpack.c.b16 %v454, %v326
  %v583 = vpack.c.b16 %v455, %v327
  %v584 = vpack.c.b16 %v456, %v328
  %v585 = vpack.c.b16 %v457, %v329
  %v586 = vpack.c.b16 %v458, %v330
  %v587 = vpack.c.b16 %v459, %v331
  %v588 = vpack.c.b16 %v460, %v332
  %v589 = vpack.c.b16 %v461, %v333
  %v590 = vpack.c.b16 %v462, %v334
  %v591 = vpack.c.b16 %v463, %v335
  %v592 = vpack.c.b16 %v464, %v336
  %v593 = vpack.c.b16 %v465, %v337
  %v594 = vpack.c.b16 %v466, %v338
  %v595 = vpack.c.b16 %v467, %v339
  %v596 = vpack.c.b16 %v468, %v340
  %v597 = vpack.c.b16 %v469, %v341
  %v598 = vpack.c.b16 %v470, %v342
  %v599 = vpack.c.b16 %v471, %v343
  %v600 = vpack.c.b16 %v472, %v344
  %v601 = vpack.c.b16 %v473, %v345
  %v602 = vpack.c.b16 %v474, %v346
  %v603 = vpack.c.b16 %v475, %v347
  %v604 = vpack.c.b16 %v476, %v348
  %v605 = vpack.c.b16 %v477, %v349
  %v606 = vpack.c.b16 %v478, %v350
  %v607 = vpack.c.b16 %v479, %v351
  %v608 = vpack.c.b16 %v480, %v352
  %v609 = vpack.c.b16 %v481, %v353
  %v610 = vpack.c.b16 %v482, %v354
  %v611 = vpack.c.b16 %v483, %v355
  %v612 = vpack.c.b16 %v484, %v356
  %v613 = vpack.c.b16 %v485, %v357
  %v614 = vpack.c.b16 %v486, %v358
  %v615 = vpack.c.b16 %v487, %v359
  %v616 = vpack.c.b16 %v488, %v360
  %v617 = vpack.c.b16 %v489, %v361
  %v618 = vpack.c.b16 %v490, %v362
  %v619 = vpack.c.b16 %v491, %v363
  %v620 = vpack.c.b16 %v492, %v364
  %v621 = vpack.c.b16 %v493, %v365
  %v622 = vpack.c.b16 %v494, %v366
  %v623 = vpack.c.b16 %v495, %v367
  %v624 = vpack.c.b16 %v496, %v368
  %v625 = vpack.c.b16 %v497, %v369
  %v626 = vpack.c.b16 %v498, %v370
  %v627 = vpack.c.b16 %v499, %v371
  %v628 = vpack.c.b16 %v500, %v372
  %v629 = vpack.c.b16 %v501, %v373
  %v630 = vpack.c.b16 %v502, %v374
  %v631 = vpack.c.b16 %v503, %v375
  %v632 = vpack.c.b16 %v504, %v376
  %v633 = vpack.c.b16 %v505, %v377
  %v634 = vpack.c.b16 %v506, %v378
  %v635 = vpack.c.b16 %v507, %v379
  %v636 = vpack.c.b16 %v508, %v380
  %v637 = vpack.c.b16 %v509, %v381
  %v638 = vpack.c.b16 %v510, %v382
  %v639 = vpack.c.b16 %v511, %v383
  %v640 = vpack.c.b16 %v512, %v384
  %v641 = vpack.c.b16 %v513, %v385
  %v642 = vpack.c.b16 %v514, %v386
  %v643 = vpack.c.b16 %v515, %v387
  %v644 = vpack.c.b16 %v516, %v388
  %v645 = vpack.c.b16 %v517, %v389
  %v646 = vpack.c.b16 %v518, %v390
  %v647 = vpack.c.b16 %v519, %v391
  %v648 = vpack.c.b16 %v520, %v392
  %v649 = vpack.c.b16 %v521, %v393
  %v650 = vpack.c.b16 %v522, %v394
  %v651 = vpack.c.b16 %v523, %v395
  %v652 = vpack.c.b16 %v524, %v396
  %v653 = vpack.c.b16 %v525, %v397
  %v654 = vpack.c.b16 %v526, %v398
  %v655 = vpack.c.b16 %v527, %v399
  %v656 = vpack.c.b16 %v528, %v400
  %v657 = vpack.c.b16 %v529, %v401
  %v658 = vpack.c.b16 %v530, %v402
  %vm787 = vcmask 130048
  %v789 = vsel %vm787, %v18, 0
  %791 = vmatprep.subr.bf16.mxu0 %v532
  %792 = vmatpush1.bf16.msra.mxu0 %v531
  %793 = vmatprep.subr.bf16.mxu0 0
  %794 = vmatpush1.bf16.msra.mxu0 0
  %795 = vmatprep.subr.bf16.mxu0 0
  %796 = vmatpush1.bf16.msra.mxu0 0
  %797 = vmatprep.subr.bf16.mxu0 0
  %798 = vmatpush1.bf16.msra.mxu0 0
  %799 = vmatprep.subr.bf16.mxu0 0
  %800 = vmatpush1.bf16.msra.mxu0 0
  %801 = vmatprep.subr.bf16.mxu0 0
  %802 = vmatpush1.bf16.msra.mxu0 0
  %803 = vmatprep.subr.bf16.mxu0 0
  %804 = vmatpush1.bf16.msra.mxu0 0
  %805 = vmatprep.subr.bf16.mxu0 0
  %806 = vmatpush1.bf16.msra.mxu0 0
  %807 = vmatprep.subr.bf16.mxu0 0
  %808 = vmatpush1.bf16.msra.mxu0 0
  %809 = vmatprep.subr.bf16.mxu0 0
  %810 = vmatpush1.bf16.msra.mxu0 0
  %811 = vmatprep.subr.bf16.mxu0 0
  %812 = vmatpush1.bf16.msra.mxu0 0
  %813 = vmatprep.subr.bf16.mxu0 0
  %814 = vmatpush1.bf16.msra.mxu0 0
  %815 = vmatprep.subr.bf16.mxu0 0
  %816 = vmatpush1.bf16.msra.mxu0 0
  %817 = vmatprep.subr.bf16.mxu0 0
  %818 = vmatpush1.bf16.msra.mxu0 0
  %819 = vmatprep.subr.bf16.mxu0 0
  %820 = vmatpush1.bf16.msra.mxu0 0
  %821 = vmatprep.subr.bf16.mxu0 0
  %822 = vmatpush1.bf16.msra.mxu0 0
  %823 = vmatprep.mubr.bf16.mxu0 0
  %824 = vmatmul.mubr.bf16.gmra.mrb[0].mxu0 %v789
  %v825 = vpop.f32.mrb[0].mxu0
  %v826 = vadd.f32 0.0, %v825
  %v827 = vpop.f32.mrb[0].mxu0
  %v828 = vadd.f32 0.0, %v827
  %v829 = vpop.f32.mrb[0].mxu0
  %v830 = vpop.f32.mrb[0].mxu0
  %831 = vdwg.mxu0
  %832 = vmatprep.subr.bf16.mxu0 %v534
  %833 = vmatpush1.bf16.msra.mxu0 %v533
  %834 = vmatprep.subr.bf16.mxu0 0
  %835 = vmatpush1.bf16.msra.mxu0 0
  %836 = vmatprep.subr.bf16.mxu0 0
  %837 = vmatpush1.bf16.msra.mxu0 0
  %838 = vmatprep.subr.bf16.mxu0 0
  %839 = vmatpush1.bf16.msra.mxu0 0
  %840 = vmatprep.subr.bf16.mxu0 0
  %841 = vmatpush1.bf16.msra.mxu0 0
  %842 = vmatprep.subr.bf16.mxu0 0
  %843 = vmatpush1.bf16.msra.mxu0 0
  %844 = vmatprep.subr.bf16.mxu0 0
  %845 = vmatpush1.bf16.msra.mxu0 0
  %846 = vmatprep.subr.bf16.mxu0 0
  %847 = vmatpush1.bf16.msra.mxu0 0
  %848 = vmatprep.subr.bf16.mxu0 0
  %849 = vmatpush1.bf16.msra.mxu0 0
  %850 = vmatprep.subr.bf16.mxu0 0
  %851 = vmatpush1.bf16.msra.mxu0 0
  %852 = vmatprep.subr.bf16.mxu0 0
  %853 = vmatpush1.bf16.msra.mxu0 0
  %854 = vmatprep.subr.bf16.mxu0 0
  %855 = vmatpush1.bf16.msra.mxu0 0
  %856 = vmatprep.subr.bf16.mxu0 0
  %857 = vmatpush1.bf16.msra.mxu0 0
  %858 = vmatprep.subr.bf16.mxu0 0
  %859 = vmatpush1.bf16.msra.mxu0 0
  %860 = vmatprep.subr.bf16.mxu0 0
  %861 = vmatpush1.bf16.msra.mxu0 0
  %862 = vmatprep.subr.bf16.mxu0 0
  %863 = vmatpush1.bf16.msra.mxu0 0
  %864 = vmatprep.mubr.bf16.mxu0 0
  %865 = vmatmul.mubr.bf16.gmra.mrb[0].mxu0 %v789
  %v866 = vpop.f32.mrb[0].mxu0
  %v867 = vadd.f32 0.0, %v866
  %v868 = vpop.f32.mrb[0].mxu0
  %v869 = vadd.f32 0.0, %v868
  %v870 = vpop.f32.mrb[0].mxu0
  %v871 = vpop.f32.mrb[0].mxu0
  %872 = vdwg.mxu0
  %873 = vmatprep.subr.bf16.mxu0 %v536
  %874 = vmatpush1.bf16.msra.mxu0 %v535
  %875 = vmatprep.subr.bf16.mxu0 0
  %876 = vmatpush1.bf16.msra.mxu0 0
  %877 = vmatprep.subr.bf16.mxu0 0
  %878 = vmatpush1.bf16.msra.mxu0 0
  %879 = vmatprep.subr.bf16.mxu0 0
  %880 = vmatpush1.bf16.msra.mxu0 0
  %881 = vmatprep.subr.bf16.mxu0 0
  %882 = vmatpush1.bf16.msra.mxu0 0
  %883 = vmatprep.subr.bf16.mxu0 0
  %884 = vmatpush1.bf16.msra.mxu0 0
  %885 = vmatprep.subr.bf16.mxu0 0
  %886 = vmatpush1.bf16.msra.mxu0 0
  %887 = vmatprep.subr.bf16.mxu0 0
  %888 = vmatpush1.bf16.msra.mxu0 0
  %889 = vmatprep.subr.bf16.mxu0 0
  %890 = vmatpush1.bf16.msra.mxu0 0
  %891 = vmatprep.subr.bf16.mxu0 0
  %892 = vmatpush1.bf16.msra.mxu0 0
  %893 = vmatprep.subr.bf16.mxu0 0
  %894 = vmatpush1.bf16.msra.mxu0 0
  %895 = vmatprep.subr.bf16.mxu0 0
  %896 = vmatpush1.bf16.msra.mxu0 0
  %897 = vmatprep.subr.bf16.mxu0 0
  %898 = vmatpush1.bf16.msra.mxu0 0
  %899 = vmatprep.subr.bf16.mxu0 0
  %900 = vmatpush1.bf16.msra.mxu0 0
  %901 = vmatprep.subr.bf16.mxu0 0
  %902 = vmatpush1.bf16.msra.mxu0 0
  %903 = vmatprep.subr.bf16.mxu0 0
  %904 = vmatpush1.bf16.msra.mxu0 0
  %905 = vmatprep.mubr.bf16.mxu0 0
  %906 = vmatmul.mubr.bf16.gmra.mrb[0].mxu0 %v789
  %v907 = vpop.f32.mrb[0].mxu0
  %v908 = vadd.f32 0.0, %v907
  %v909 = vpop.f32.mrb[0].mxu0
  %v910 = vadd.f32 0.0, %v909
  %v911 = vpop.f32.mrb[0].mxu0
  %v912 = vpop.f32.mrb[0].mxu0
  %913 = vdwg.mxu0
  %914 = vmatprep.subr.bf16.mxu0 %v538
  %915 = vmatpush1.bf16.msra.mxu0 %v537
  %916 = vmatprep.subr.bf16.mxu0 0
  %917 = vmatpush1.bf16.msra.mxu0 0
  %918 = vmatprep.subr.bf16.mxu0 0
  %919 = vmatpush1.bf16.msra.mxu0 0
  %920 = vmatprep.subr.bf16.mxu0 0
  %921 = vmatpush1.bf16.msra.mxu0 0
  %922 = vmatprep.subr.bf16.mxu0 0
  %923 = vmatpush1.bf16.msra.mxu0 0
  %924 = vmatprep.subr.bf16.mxu0 0
  %925 = vmatpush1.bf16.msra.mxu0 0
  %926 = vmatprep.subr.bf16.mxu0 0
  %927 = vmatpush1.bf16.msra.mxu0 0
  %928 = vmatprep.subr.bf16.mxu0 0
  %929 = vmatpush1.bf16.msra.mxu0 0
  %930 = vmatprep.subr.bf16.mxu0 0
  %931 = vmatpush1.bf16.msra.mxu0 0
  %932 = vmatprep.subr.bf16.mxu0 0
  %933 = vmatpush1.bf16.msra.mxu0 0
  %934 = vmatprep.subr.bf16.mxu0 0
  %935 = vmatpush1.bf16.msra.mxu0 0
  %936 = vmatprep.subr.bf16.mxu0 0
  %937 = vmatpush1.bf16.msra.mxu0 0
  %938 = vmatprep.subr.bf16.mxu0 0
  %939 = vmatpush1.bf16.msra.mxu0 0
  %940 = vmatprep.subr.bf16.mxu0 0
  %941 = vmatpush1.bf16.msra.mxu0 0
  %942 = vmatprep.subr.bf16.mxu0 0
  %943 = vmatpush1.bf16.msra.mxu0 0
  %944 = vmatprep.subr.bf16.mxu0 0
  %945 = vmatpush1.bf16.msra.mxu0 0
  %946 = vmatprep.mubr.bf16.mxu0 0
  %947 = vmatmul.mubr.bf16.gmra.mrb[0].mxu0 %v789
  %v948 = vpop.f32.mrb[0].mxu0
  %v949 = vadd.f32 0.0, %v948
  %v950 = vpop.f32.mrb[0].mxu0
  %v951 = vadd.f32 0.0, %v950
  %v952 = vpop.f32.mrb[0].mxu0
  %v953 = vpop.f32.mrb[0].mxu0
  %954 = vdwg.mxu0
  %955 = vmatprep.subr.bf16.mxu0 %v540
  %956 = vmatpush1.bf16.msra.mxu0 %v539
  %957 = vmatprep.subr.bf16.mxu0 0
  %958 = vmatpush1.bf16.msra.mxu0 0
  %959 = vmatprep.subr.bf16.mxu0 0
  %960 = vmatpush1.bf16.msra.mxu0 0
  %961 = vmatprep.subr.bf16.mxu0 0
  %962 = vmatpush1.bf16.msra.mxu0 0
  %963 = vmatprep.subr.bf16.mxu0 0
  %964 = vmatpush1.bf16.msra.mxu0 0
  %965 = vmatprep.subr.bf16.mxu0 0
  %966 = vmatpush1.bf16.msra.mxu0 0
  %967 = vmatprep.subr.bf16.mxu0 0
  %968 = vmatpush1.bf16.msra.mxu0 0
  %969 = vmatprep.subr.bf16.mxu0 0
  %970 = vmatpush1.bf16.msra.mxu0 0
  %971 = vmatprep.subr.bf16.mxu0 0
  %972 = vmatpush1.bf16.msra.mxu0 0
  %973 = vmatprep.subr.bf16.mxu0 0
  %974 = vmatpush1.bf16.msra.mxu0 0
  %975 = vmatprep.subr.bf16.mxu0 0
  %976 = vmatpush1.bf16.msra.mxu0 0
  %977 = vmatprep.subr.bf16.mxu0 0
  %978 = vmatpush1.bf16.msra.mxu0 0
  %979 = vmatprep.subr.bf16.mxu0 0
  %980 = vmatpush1.bf16.msra.mxu0 0
  %981 = vmatprep.subr.bf16.mxu0 0
  %982 = vmatpush1.bf16.msra.mxu0 0
  %983 = vmatprep.subr.bf16.mxu0 0
  %984 = vmatpush1.bf16.msra.mxu0 0
  %985 = vmatprep.subr.bf16.mxu0 0
  %986 = vmatpush1.bf16.msra.mxu0 0
  %987 = vmatprep.mubr.bf16.mxu0 0
  %988 = vmatmul.mubr.bf16.gmra.mrb[0].mxu0 %v789
  %v989 = vpop.f32.mrb[0].mxu0
  %v990 = vadd.f32 0.0, %v989
  %v991 = vpop.f32.mrb[0].mxu0
  %v992 = vadd.f32 0.0, %v991
  %v993 = vpop.f32.mrb[0].mxu0
  %v994 = vpop.f32.mrb[0].mxu0
  %995 = vdwg.mxu0
  %996 = vmatprep.subr.bf16.mxu0 %v542
  %997 = vmatpush1.bf16.msra.mxu0 %v541
  %998 = vmatprep.subr.bf16.mxu0 0
  %999 = vmatpush1.bf16.msra.mxu0 0
  %1000 = vmatprep.subr.bf16.mxu0 0
  %1001 = vmatpush1.bf16.msra.mxu0 0
  %1002 = vmatprep.subr.bf16.mxu0 0
  %1003 = vmatpush1.bf16.msra.mxu0 0
  %1004 = vmatprep.subr.bf16.mxu0 0
  %1005 = vmatpush1.bf16.msra.mxu0 0
  %1006 = vmatprep.subr.bf16.mxu0 0
  %1007 = vmatpush1.bf16.msra.mxu0 0
  %1008 = vmatprep.subr.bf16.mxu0 0
  %1009 = vmatpush1.bf16.msra.mxu0 0
  %1010 = vmatprep.subr.bf16.mxu0 0
  %1011 = vmatpush1.bf16.msra.mxu0 0
  %1012 = vmatprep.subr.bf16.mxu0 0
  %1013 = vmatpush1.bf16.msra.mxu0 0
  %1014 = vmatprep.subr.bf16.mxu0 0
  %1015 = vmatpush1.bf16.msra.mxu0 0
  %1016 = vmatprep.subr.bf16.mxu0 0
  %1017 = vmatpush1.bf16.msra.mxu0 0
  %1018 = vmatprep.subr.bf16.mxu0 0
  %1019 = vmatpush1.bf16.msra.mxu0 0
  %1020 = vmatprep.subr.bf16.mxu0 0
  %1021 = vmatpush1.bf16.msra.mxu0 0
  %1022 = vmatprep.subr.bf16.mxu0 0
  %1023 = vmatpush1.bf16.msra.mxu0 0
  %1024 = vmatprep.subr.bf16.mxu0 0
  %1025 = vmatpush1.bf16.msra.mxu0 0
  %1026 = vmatprep.subr.bf16.mxu0 0
  %1027 = vmatpush1.bf16.msra.mxu0 0
  %1028 = vmatprep.mubr.bf16.mxu0 0
  %1029 = vmatmul.mubr.bf16.gmra.mrb[0].mxu0 %v789
  %v1030 = vpop.f32.mrb[0].mxu0
  %v1031 = vadd.f32 0.0, %v1030
  %v1032 = vpop.f32.mrb[0].mxu0
  %v1033 = vadd.f32 0.0, %v1032
  %v1034 = vpop.f32.mrb[0].mxu0
  %v1035 = vpop.f32.mrb[0].mxu0
  %1036 = vdwg.mxu0
  %1037 = vmatprep.subr.bf16.mxu0 %v544
  %1038 = vmatpush1.bf16.msra.mxu0 %v543
  %1039 = vmatprep.subr.bf16.mxu0 0
  %1040 = vmatpush1.bf16.msra.mxu0 0
  %1041 = vmatprep.subr.bf16.mxu0 0
  %1042 = vmatpush1.bf16.msra.mxu0 0
  %1043 = vmatprep.subr.bf16.mxu0 0
  %1044 = vmatpush1.bf16.msra.mxu0 0
  %1045 = vmatprep.subr.bf16.mxu0 0
  %1046 = vmatpush1.bf16.msra.mxu0 0
  %1047 = vmatprep.subr.bf16.mxu0 0
  %1048 = vmatpush1.bf16.msra.mxu0 0
  %1049 = vmatprep.subr.bf16.mxu0 0
  %1050 = vmatpush1.bf16.msra.mxu0 0
  %1051 = vmatprep.subr.bf16.mxu0 0
  %1052 = vmatpush1.bf16.msra.mxu0 0
  %1053 = vmatprep.subr.bf16.mxu0 0
  %1054 = vmatpush1.bf16.msra.mxu0 0
  %1055 = vmatprep.subr.bf16.mxu0 0
  %1056 = vmatpush1.bf16.msra.mxu0 0
  %1057 = vmatprep.subr.bf16.mxu0 0
  %1058 = vmatpush1.bf16.msra.mxu0 0
  %1059 = vmatprep.subr.bf16.mxu0 0
  %1060 = vmatpush1.bf16.msra.mxu0 0
  %1061 = vmatprep.subr.bf16.mxu0 0
  %1062 = vmatpush1.bf16.msra.mxu0 0
  %1063 = vmatprep.subr.bf16.mxu0 0
  %1064 = vmatpush1.bf16.msra.mxu0 0
  %1065 = vmatprep.subr.bf16.mxu0 0
  %1066 = vmatpush1.bf16.msra.mxu0 0
  %1067 = vmatprep.subr.bf16.mxu0 0
  %1068 = vmatpush1.bf16.msra.mxu0 0
  %1069 = vmatprep.mubr.bf16.mxu0 0
  %1070 = vmatmul.mubr.bf16.gmra.mrb[0].mxu0 %v789
  %v1071 = vpop.f32.mrb[0].mxu0
  %v1072 = vadd.f32 0.0, %v1071
  %v1073 = vpop.f32.mrb[0].mxu0
  %v1074 = vadd.f32 0.0, %v1073
  %v1075 = vpop.f32.mrb[0].mxu0
  %v1076 = vpop.f32.mrb[0].mxu0
  %1077 = vdwg.mxu0
  %1078 = vmatprep.subr.bf16.mxu0 %v546
  %1079 = vmatpush1.bf16.msra.mxu0 %v545
  %1080 = vmatprep.subr.bf16.mxu0 0
  %1081 = vmatpush1.bf16.msra.mxu0 0
  %1082 = vmatprep.subr.bf16.mxu0 0
  %1083 = vmatpush1.bf16.msra.mxu0 0
  %1084 = vmatprep.subr.bf16.mxu0 0
  %1085 = vmatpush1.bf16.msra.mxu0 0
  %1086 = vmatprep.subr.bf16.mxu0 0
  %1087 = vmatpush1.bf16.msra.mxu0 0
  %1088 = vmatprep.subr.bf16.mxu0 0
  %1089 = vmatpush1.bf16.msra.mxu0 0
  %1090 = vmatprep.subr.bf16.mxu0 0
  %1091 = vmatpush1.bf16.msra.mxu0 0
  %1092 = vmatprep.subr.bf16.mxu0 0
  %1093 = vmatpush1.bf16.msra.mxu0 0
  %1094 = vmatprep.subr.bf16.mxu0 0
  %1095 = vmatpush1.bf16.msra.mxu0 0
  %1096 = vmatprep.subr.bf16.mxu0 0
  %1097 = vmatpush1.bf16.msra.mxu0 0
  %1098 = vmatprep.subr.bf16.mxu0 0
  %1099 = vmatpush1.bf16.msra.mxu0 0
  %1100 = vmatprep.subr.bf16.mxu0 0
  %1101 = vmatpush1.bf16.msra.mxu0 0
  %1102 = vmatprep.subr.bf16.mxu0 0
  %1103 = vmatpush1.bf16.msra.mxu0 0
  %1104 = vmatprep.subr.bf16.mxu0 0
  %1105 = vmatpush1.bf16.msra.mxu0 0
  %1106 = vmatprep.subr.bf16.mxu0 0
  %1107 = vmatpush1.bf16.msra.mxu0 0
  %1108 = vmatprep.subr.bf16.mxu0 0
  %1109 = vmatpush1.bf16.msra.mxu0 0
  %1110 = vmatprep.mubr.bf16.mxu0 0
  %1111 = vmatmul.mubr.bf16.gmra.mrb[0].mxu0 %v789
  %v1112 = vpop.f32.mrb[0].mxu0
  %v1113 = vadd.f32 0.0, %v1112
  %v1114 = vpop.f32.mrb[0].mxu0
  %v1115 = vadd.f32 0.0, %v1114
  %v1116 = vpop.f32.mrb[0].mxu0
  %v1117 = vpop.f32.mrb[0].mxu0
  %1118 = vdwg.mxu0
  %1119 = vmatprep.subr.bf16.mxu0 %v548
  %1120 = vmatpush1.bf16.msra.mxu0 %v547
  %1121 = vmatprep.subr.bf16.mxu0 0
  %1122 = vmatpush1.bf16.msra.mxu0 0
  %1123 = vmatprep.subr.bf16.mxu0 0
  %1124 = vmatpush1.bf16.msra.mxu0 0
  %1125 = vmatprep.subr.bf16.mxu0 0
  %1126 = vmatpush1.bf16.msra.mxu0 0
  %1127 = vmatprep.subr.bf16.mxu0 0
  %1128 = vmatpush1.bf16.msra.mxu0 0
  %1129 = vmatprep.subr.bf16.mxu0 0
  %1130 = vmatpush1.bf16.msra.mxu0 0
  %1131 = vmatprep.subr.bf16.mxu0 0
  %1132 = vmatpush1.bf16.msra.mxu0 0
  %1133 = vmatprep.subr.bf16.mxu0 0
  %1134 = vmatpush1.bf16.msra.mxu0 0
  %1135 = vmatprep.subr.bf16.mxu0 0
  %1136 = vmatpush1.bf16.msra.mxu0 0
  %1137 = vmatprep.subr.bf16.mxu0 0
  %1138 = vmatpush1.bf16.msra.mxu0 0
  %1139 = vmatprep.subr.bf16.mxu0 0
  %1140 = vmatpush1.bf16.msra.mxu0 0
  %1141 = vmatprep.subr.bf16.mxu0 0
  %1142 = vmatpush1.bf16.msra.mxu0 0
  %1143 = vmatprep.subr.bf16.mxu0 0
  %1144 = vmatpush1.bf16.msra.mxu0 0
  %1145 = vmatprep.subr.bf16.mxu0 0
  %1146 = vmatpush1.bf16.msra.mxu0 0
  %1147 = vmatprep.subr.bf16.mxu0 0
  %1148 = vmatpush1.bf16.msra.mxu0 0
  %1149 = vmatprep.subr.bf16.mxu0 0
  %1150 = vmatpush1.bf16.msra.mxu0 0
  %1151 = vmatprep.mubr.bf16.mxu0 0
  %1152 = vmatmul.mubr.bf16.gmra.mrb[0].mxu0 %v789
  %v1153 = vpop.f32.mrb[0].mxu0
  %v1154 = vadd.f32 0.0, %v1153
  %v1155 = vpop.f32.mrb[0].mxu0
  %v1156 = vadd.f32 0.0, %v1155
  %v1157 = vpop.f32.mrb[0].mxu0
  %v1158 = vpop.f32.mrb[0].mxu0
  %1159 = vdwg.mxu0
  %1160 = vmatprep.subr.bf16.mxu0 %v550
  %1161 = vmatpush1.bf16.msra.mxu0 %v549
  %1162 = vmatprep.subr.bf16.mxu0 0
  %1163 = vmatpush1.bf16.msra.mxu0 0
  %1164 = vmatprep.subr.bf16.mxu0 0
  %1165 = vmatpush1.bf16.msra.mxu0 0
  %1166 = vmatprep.subr.bf16.mxu0 0
  %1167 = vmatpush1.bf16.msra.mxu0 0
  %1168 = vmatprep.subr.bf16.mxu0 0
  %1169 = vmatpush1.bf16.msra.mxu0 0
  %1170 = vmatprep.subr.bf16.mxu0 0
  %1171 = vmatpush1.bf16.msra.mxu0 0
  %1172 = vmatprep.subr.bf16.mxu0 0
  %1173 = vmatpush1.bf16.msra.mxu0 0
  %1174 = vmatprep.subr.bf16.mxu0 0
  %1175 = vmatpush1.bf16.msra.mxu0 0
  %1176 = vmatprep.subr.bf16.mxu0 0
  %1177 = vmatpush1.bf16.msra.mxu0 0
  %1178 = vmatprep.subr.bf16.mxu0 0
  %1179 = vmatpush1.bf16.msra.mxu0 0
  %1180 = vmatprep.subr.bf16.mxu0 0
  %1181 = vmatpush1.bf16.msra.mxu0 0
  %1182 = vmatprep.subr.bf16.mxu0 0
  %1183 = vmatpush1.bf16.msra.mxu0 0
  %1184 = vmatprep.subr.bf16.mxu0 0
  %1185 = vmatpush1.bf16.msra.mxu0 0
  %1186 = vmatprep.subr.bf16.mxu0 0
  %1187 = vmatpush1.bf16.msra.mxu0 0
  %1188 = vmatprep.subr.bf16.mxu0 0
  %1189 = vmatpush1.bf16.msra.mxu0 0
  %1190 = vmatprep.subr.bf16.mxu0 0
  %1191 = vmatpush1.bf16.msra.mxu0 0
  %1192 = vmatprep.mubr.bf16.mxu0 0
  %1193 = vmatmul.mubr.bf16.gmra.mrb[0].mxu0 %v789
  %v1194 = vpop.f32.mrb[0].mxu0
  %v1195 = vadd.f32 0.0, %v1194
  %v1196 = vpop.f32.mrb[0].mxu0
  %v1197 = vadd.f32 0.0, %v1196
  %v1198 = vpop.f32.mrb[0].mxu0
  %v1199 = vpop.f32.mrb[0].mxu0
  %1200 = vdwg.mxu0
  %1201 = vmatprep.subr.bf16.mxu0 %v552
  %1202 = vmatpush1.bf16.msra.mxu0 %v551
  %1203 = vmatprep.subr.bf16.mxu0 0
  %1204 = vmatpush1.bf16.msra.mxu0 0
  %1205 = vmatprep.subr.bf16.mxu0 0
  %1206 = vmatpush1.bf16.msra.mxu0 0
  %1207 = vmatprep.subr.bf16.mxu0 0
  %1208 = vmatpush1.bf16.msra.mxu0 0
  %1209 = vmatprep.subr.bf16.mxu0 0
  %1210 = vmatpush1.bf16.msra.mxu0 0
  %1211 = vmatprep.subr.bf16.mxu0 0
  %1212 = vmatpush1.bf16.msra.mxu0 0
  %1213 = vmatprep.subr.bf16.mxu0 0
  %1214 = vmatpush1.bf16.msra.mxu0 0
  %1215 = vmatprep.subr.bf16.mxu0 0
  %1216 = vmatpush1.bf16.msra.mxu0 0
  %1217 = vmatprep.subr.bf16.mxu0 0
  %1218 = vmatpush1.bf16.msra.mxu0 0
  %1219 = vmatprep.subr.bf16.mxu0 0
  %1220 = vmatpush1.bf16.msra.mxu0 0
  %1221 = vmatprep.subr.bf16.mxu0 0
  %1222 = vmatpush1.bf16.msra.mxu0 0
  %1223 = vmatprep.subr.bf16.mxu0 0
  %1224 = vmatpush1.bf16.msra.mxu0 0
  %1225 = vmatprep.subr.bf16.mxu0 0
  %1226 = vmatpush1.bf16.msra.mxu0 0
  %1227 = vmatprep.subr.bf16.mxu0 0
  %1228 = vmatpush1.bf16.msra.mxu0 0
  %1229 = vmatprep.subr.bf16.mxu0 0
  %1230 = vmatpush1.bf16.msra.mxu0 0
  %1231 = vmatprep.subr.bf16.mxu0 0
  %1232 = vmatpush1.bf16.msra.mxu0 0
  %1233 = vmatprep.mubr.bf16.mxu0 0
  %1234 = vmatmul.mubr.bf16.gmra.mrb[0].mxu0 %v789
  %v1235 = vpop.f32.mrb[0].mxu0
  %v1236 = vadd.f32 0.0, %v1235
  %v1237 = vpop.f32.mrb[0].mxu0
  %v1238 = vadd.f32 0.0, %v1237
  %v1239 = vpop.f32.mrb[0].mxu0
  %v1240 = vpop.f32.mrb[0].mxu0
  %1241 = vdwg.mxu0
  %1242 = vmatprep.subr.bf16.mxu0 %v554
  %1243 = vmatpush1.bf16.msra.mxu0 %v553
  %1244 = vmatprep.subr.bf16.mxu0 0
  %1245 = vmatpush1.bf16.msra.mxu0 0
  %1246 = vmatprep.subr.bf16.mxu0 0
  %1247 = vmatpush1.bf16.msra.mxu0 0
  %1248 = vmatprep.subr.bf16.mxu0 0
  %1249 = vmatpush1.bf16.msra.mxu0 0
  %1250 = vmatprep.subr.bf16.mxu0 0
  %1251 = vmatpush1.bf16.msra.mxu0 0
  %1252 = vmatprep.subr.bf16.mxu0 0
  %1253 = vmatpush1.bf16.msra.mxu0 0
  %1254 = vmatprep.subr.bf16.mxu0 0
  %1255 = vmatpush1.bf16.msra.mxu0 0
  %1256 = vmatprep.subr.bf16.mxu0 0
  %1257 = vmatpush1.bf16.msra.mxu0 0
  %1258 = vmatprep.subr.bf16.mxu0 0
  %1259 = vmatpush1.bf16.msra.mxu0 0
  %1260 = vmatprep.subr.bf16.mxu0 0
  %1261 = vmatpush1.bf16.msra.mxu0 0
  %1262 = vmatprep.subr.bf16.mxu0 0
  %1263 = vmatpush1.bf16.msra.mxu0 0
  %1264 = vmatprep.subr.bf16.mxu0 0
  %1265 = vmatpush1.bf16.msra.mxu0 0
  %1266 = vmatprep.subr.bf16.mxu0 0
  %1267 = vmatpush1.bf16.msra.mxu0 0
  %1268 = vmatprep.subr.bf16.mxu0 0
  %1269 = vmatpush1.bf16.msra.mxu0 0
  %1270 = vmatprep.subr.bf16.mxu0 0
  %1271 = vmatpush1.bf16.msra.mxu0 0
  %1272 = vmatprep.subr.bf16.mxu0 0
  %1273 = vmatpush1.bf16.msra.mxu0 0
  %1274 = vmatprep.mubr.bf16.mxu0 0
  %1275 = vmatmul.mubr.bf16.gmra.mrb[0].mxu0 %v789
  %v1276 = vpop.f32.mrb[0].mxu0
  %v1277 = vadd.f32 0.0, %v1276
  %v1278 = vpop.f32.mrb[0].mxu0
  %v1279 = vadd.f32 0.0, %v1278
  %v1280 = vpop.f32.mrb[0].mxu0
  %v1281 = vpop.f32.mrb[0].mxu0
  %1282 = vdwg.mxu0
  %1283 = vmatprep.subr.bf16.mxu0 %v556
  %1284 = vmatpush1.bf16.msra.mxu0 %v555
  %1285 = vmatprep.subr.bf16.mxu0 0
  %1286 = vmatpush1.bf16.msra.mxu0 0
  %1287 = vmatprep.subr.bf16.mxu0 0
  %1288 = vmatpush1.bf16.msra.mxu0 0
  %1289 = vmatprep.subr.bf16.mxu0 0
  %1290 = vmatpush1.bf16.msra.mxu0 0
  %1291 = vmatprep.subr.bf16.mxu0 0
  %1292 = vmatpush1.bf16.msra.mxu0 0
  %1293 = vmatprep.subr.bf16.mxu0 0
  %1294 = vmatpush1.bf16.msra.mxu0 0
  %1295 = vmatprep.subr.bf16.mxu0 0
  %1296 = vmatpush1.bf16.msra.mxu0 0
  %1297 = vmatprep.subr.bf16.mxu0 0
  %1298 = vmatpush1.bf16.msra.mxu0 0
  %1299 = vmatprep.subr.bf16.mxu0 0
  %1300 = vmatpush1.bf16.msra.mxu0 0
  %1301 = vmatprep.subr.bf16.mxu0 0
  %1302 = vmatpush1.bf16.msra.mxu0 0
  %1303 = vmatprep.subr.bf16.mxu0 0
  %1304 = vmatpush1.bf16.msra.mxu0 0
  %1305 = vmatprep.subr.bf16.mxu0 0
  %1306 = vmatpush1.bf16.msra.mxu0 0
  %1307 = vmatprep.subr.bf16.mxu0 0
  %1308 = vmatpush1.bf16.msra.mxu0 0
  %1309 = vmatprep.subr.bf16.mxu0 0
  %1310 = vmatpush1.bf16.msra.mxu0 0
  %1311 = vmatprep.subr.bf16.mxu0 0
  %1312 = vmatpush1.bf16.msra.mxu0 0
  %1313 = vmatprep.subr.bf16.mxu0 0
  %1314 = vmatpush1.bf16.msra.mxu0 0
  %1315 = vmatprep.mubr.bf16.mxu0 0
  %1316 = vmatmul.mubr.bf16.gmra.mrb[0].mxu0 %v789
  %v1317 = vpop.f32.mrb[0].mxu0
  %v1318 = vadd.f32 0.0, %v1317
  %v1319 = vpop.f32.mrb[0].mxu0
  %v1320 = vadd.f32 0.0, %v1319
  %v1321 = vpop.f32.mrb[0].mxu0
  %v1322 = vpop.f32.mrb[0].mxu0
  %1323 = vdwg.mxu0
  %1324 = vmatprep.subr.bf16.mxu0 %v558
  %1325 = vmatpush1.bf16.msra.mxu0 %v557
  %1326 = vmatprep.subr.bf16.mxu0 0
  %1327 = vmatpush1.bf16.msra.mxu0 0
  %1328 = vmatprep.subr.bf16.mxu0 0
  %1329 = vmatpush1.bf16.msra.mxu0 0
  %1330 = vmatprep.subr.bf16.mxu0 0
  %1331 = vmatpush1.bf16.msra.mxu0 0
  %1332 = vmatprep.subr.bf16.mxu0 0
  %1333 = vmatpush1.bf16.msra.mxu0 0
  %1334 = vmatprep.subr.bf16.mxu0 0
  %1335 = vmatpush1.bf16.msra.mxu0 0
  %1336 = vmatprep.subr.bf16.mxu0 0
  %1337 = vmatpush1.bf16.msra.mxu0 0
  %1338 = vmatprep.subr.bf16.mxu0 0
  %1339 = vmatpush1.bf16.msra.mxu0 0
  %1340 = vmatprep.subr.bf16.mxu0 0
  %1341 = vmatpush1.bf16.msra.mxu0 0
  %1342 = vmatprep.subr.bf16.mxu0 0
  %1343 = vmatpush1.bf16.msra.mxu0 0
  %1344 = vmatprep.subr.bf16.mxu0 0
  %1345 = vmatpush1.bf16.msra.mxu0 0
  %1346 = vmatprep.subr.bf16.mxu0 0
  %1347 = vmatpush1.bf16.msra.mxu0 0
  %1348 = vmatprep.subr.bf16.mxu0 0
  %1349 = vmatpush1.bf16.msra.mxu0 0
  %1350 = vmatprep.subr.bf16.mxu0 0
  %1351 = vmatpush1.bf16.msra.mxu0 0
  %1352 = vmatprep.subr.bf16.mxu0 0
  %1353 = vmatpush1.bf16.msra.mxu0 0
  %1354 = vmatprep.subr.bf16.mxu0 0
  %1355 = vmatpush1.bf16.msra.mxu0 0
  %1356 = vmatprep.mubr.bf16.mxu0 0
  %1357 = vmatmul.mubr.bf16.gmra.mrb[0].mxu0 %v789
  %v1358 = vpop.f32.mrb[0].mxu0
  %v1359 = vadd.f32 0.0, %v1358
  %v1360 = vpop.f32.mrb[0].mxu0
  %v1361 = vadd.f32 0.0, %v1360
  %v1362 = vpop.f32.mrb[0].mxu0
  %v1363 = vpop.f32.mrb[0].mxu0
  %1364 = vdwg.mxu0
  %1365 = vmatprep.subr.bf16.mxu0 %v560
  %1366 = vmatpush1.bf16.msra.mxu0 %v559
  %1367 = vmatprep.subr.bf16.mxu0 0
  %1368 = vmatpush1.bf16.msra.mxu0 0
  %1369 = vmatprep.subr.bf16.mxu0 0
  %1370 = vmatpush1.bf16.msra.mxu0 0
  %1371 = vmatprep.subr.bf16.mxu0 0
  %1372 = vmatpush1.bf16.msra.mxu0 0
  %1373 = vmatprep.subr.bf16.mxu0 0
  %1374 = vmatpush1.bf16.msra.mxu0 0
  %1375 = vmatprep.subr.bf16.mxu0 0
  %1376 = vmatpush1.bf16.msra.mxu0 0
  %1377 = vmatprep.subr.bf16.mxu0 0
  %1378 = vmatpush1.bf16.msra.mxu0 0
  %1379 = vmatprep.subr.bf16.mxu0 0
  %1380 = vmatpush1.bf16.msra.mxu0 0
  %1381 = vmatprep.subr.bf16.mxu0 0
  %1382 = vmatpush1.bf16.msra.mxu0 0
  %1383 = vmatprep.subr.bf16.mxu0 0
  %1384 = vmatpush1.bf16.msra.mxu0 0
  %1385 = vmatprep.subr.bf16.mxu0 0
  %1386 = vmatpush1.bf16.msra.mxu0 0
  %1387 = vmatprep.subr.bf16.mxu0 0
  %1388 = vmatpush1.bf16.msra.mxu0 0
  %1389 = vmatprep.subr.bf16.mxu0 0
  %1390 = vmatpush1.bf16.msra.mxu0 0
  %1391 = vmatprep.subr.bf16.mxu0 0
  %1392 = vmatpush1.bf16.msra.mxu0 0
  %1393 = vmatprep.subr.bf16.mxu0 0
  %1394 = vmatpush1.bf16.msra.mxu0 0
  %1395 = vmatprep.subr.bf16.mxu0 0
  %1396 = vmatpush1.bf16.msra.mxu0 0
  %1397 = vmatprep.mubr.bf16.mxu0 0
  %1398 = vmatmul.mubr.bf16.gmra.mrb[0].mxu0 %v789
  %v1399 = vpop.f32.mrb[0].mxu0
  %v1400 = vadd.f32 0.0, %v1399
  %v1401 = vpop.f32.mrb[0].mxu0
  %v1402 = vadd.f32 0.0, %v1401
  %v1403 = vpop.f32.mrb[0].mxu0
  %v1404 = vpop.f32.mrb[0].mxu0
  %1405 = vdwg.mxu0
  %1406 = vmatprep.subr.bf16.mxu0 %v562
  %1407 = vmatpush1.bf16.msra.mxu0 %v561
  %1408 = vmatprep.subr.bf16.mxu0 0
  %1409 = vmatpush1.bf16.msra.mxu0 0
  %1410 = vmatprep.subr.bf16.mxu0 0
  %1411 = vmatpush1.bf16.msra.mxu0 0
  %1412 = vmatprep.subr.bf16.mxu0 0
  %1413 = vmatpush1.bf16.msra.mxu0 0
  %1414 = vmatprep.subr.bf16.mxu0 0
  %1415 = vmatpush1.bf16.msra.mxu0 0
  %1416 = vmatprep.subr.bf16.mxu0 0
  %1417 = vmatpush1.bf16.msra.mxu0 0
  %1418 = vmatprep.subr.bf16.mxu0 0
  %1419 = vmatpush1.bf16.msra.mxu0 0
  %1420 = vmatprep.subr.bf16.mxu0 0
  %1421 = vmatpush1.bf16.msra.mxu0 0
  %1422 = vmatprep.subr.bf16.mxu0 0
  %1423 = vmatpush1.bf16.msra.mxu0 0
  %1424 = vmatprep.subr.bf16.mxu0 0
  %1425 = vmatpush1.bf16.msra.mxu0 0
  %1426 = vmatprep.subr.bf16.mxu0 0
  %1427 = vmatpush1.bf16.msra.mxu0 0
  %1428 = vmatprep.subr.bf16.mxu0 0
  %1429 = vmatpush1.bf16.msra.mxu0 0
  %1430 = vmatprep.subr.bf16.mxu0 0
  %1431 = vmatpush1.bf16.msra.mxu0 0
  %1432 = vmatprep.subr.bf16.mxu0 0
  %1433 = vmatpush1.bf16.msra.mxu0 0
  %1434 = vmatprep.subr.bf16.mxu0 0
  %1435 = vmatpush1.bf16.msra.mxu0 0
  %1436 = vmatprep.subr.bf16.mxu0 0
  %1437 = vmatpush1.bf16.msra.mxu0 0
  %1438 = vmatprep.mubr.bf16.mxu0 0
  %1439 = vmatmul.mubr.bf16.gmra.mrb[0].mxu0 %v789
  %v1440 = vpop.f32.mrb[0].mxu0
  %v1441 = vadd.f32 0.0, %v1440
  %v1442 = vpop.f32.mrb[0].mxu0
  %v1443 = vadd.f32 0.0, %v1442
  %v1444 = vpop.f32.mrb[0].mxu0
  %v1445 = vpop.f32.mrb[0].mxu0
  %1446 = vdwg.mxu0
  %1447 = vmatprep.subr.bf16.mxu0 %v564
  %1448 = vmatpush1.bf16.msra.mxu0 %v563
  %1449 = vmatprep.subr.bf16.mxu0 0
  %1450 = vmatpush1.bf16.msra.mxu0 0
  %1451 = vmatprep.subr.bf16.mxu0 0
  %1452 = vmatpush1.bf16.msra.mxu0 0
  %1453 = vmatprep.subr.bf16.mxu0 0
  %1454 = vmatpush1.bf16.msra.mxu0 0
  %1455 = vmatprep.subr.bf16.mxu0 0
  %1456 = vmatpush1.bf16.msra.mxu0 0
  %1457 = vmatprep.subr.bf16.mxu0 0
  %1458 = vmatpush1.bf16.msra.mxu0 0
  %1459 = vmatprep.subr.bf16.mxu0 0
  %1460 = vmatpush1.bf16.msra.mxu0 0
  %1461 = vmatprep.subr.bf16.mxu0 0
  %1462 = vmatpush1.bf16.msra.mxu0 0
  %1463 = vmatprep.subr.bf16.mxu0 0
  %1464 = vmatpush1.bf16.msra.mxu0 0
  %1465 = vmatprep.subr.bf16.mxu0 0
  %1466 = vmatpush1.bf16.msra.mxu0 0
  %1467 = vmatprep.subr.bf16.mxu0 0
  %1468 = vmatpush1.bf16.msra.mxu0 0
  %1469 = vmatprep.subr.bf16.mxu0 0
  %1470 = vmatpush1.bf16.msra.mxu0 0
  %1471 = vmatprep.subr.bf16.mxu0 0
  %1472 = vmatpush1.bf16.msra.mxu0 0
  %1473 = vmatprep.subr.bf16.mxu0 0
  %1474 = vmatpush1.bf16.msra.mxu0 0
  %1475 = vmatprep.subr.bf16.mxu0 0
  %1476 = vmatpush1.bf16.msra.mxu0 0
  %1477 = vmatprep.subr.bf16.mxu0 0
  %1478 = vmatpush1.bf16.msra.mxu0 0
  %1479 = vmatprep.mubr.bf16.mxu0 0
  %1480 = vmatmul.mubr.bf16.gmra.mrb[0].mxu0 %v789
  %v1481 = vpop.f32.mrb[0].mxu0
  %v1482 = vadd.f32 0.0, %v1481
  %v1483 = vpop.f32.mrb[0].mxu0
  %v1484 = vadd.f32 0.0, %v1483
  %v1485 = vpop.f32.mrb[0].mxu0
  %v1486 = vpop.f32.mrb[0].mxu0
  %1487 = vdwg.mxu0
  %1488 = vmatprep.subr.bf16.mxu0 %v566
  %1489 = vmatpush1.bf16.msra.mxu0 %v565
  %1490 = vmatprep.subr.bf16.mxu0 0
  %1491 = vmatpush1.bf16.msra.mxu0 0
  %1492 = vmatprep.subr.bf16.mxu0 0
  %1493 = vmatpush1.bf16.msra.mxu0 0
  %1494 = vmatprep.subr.bf16.mxu0 0
  %1495 = vmatpush1.bf16.msra.mxu0 0
  %1496 = vmatprep.subr.bf16.mxu0 0
  %1497 = vmatpush1.bf16.msra.mxu0 0
  %1498 = vmatprep.subr.bf16.mxu0 0
  %1499 = vmatpush1.bf16.msra.mxu0 0
  %1500 = vmatprep.subr.bf16.mxu0 0
  %1501 = vmatpush1.bf16.msra.mxu0 0
  %1502 = vmatprep.subr.bf16.mxu0 0
  %1503 = vmatpush1.bf16.msra.mxu0 0
  %1504 = vmatprep.subr.bf16.mxu0 0
  %1505 = vmatpush1.bf16.msra.mxu0 0
  %1506 = vmatprep.subr.bf16.mxu0 0
  %1507 = vmatpush1.bf16.msra.mxu0 0
  %1508 = vmatprep.subr.bf16.mxu0 0
  %1509 = vmatpush1.bf16.msra.mxu0 0
  %1510 = vmatprep.subr.bf16.mxu0 0
  %1511 = vmatpush1.bf16.msra.mxu0 0
  %1512 = vmatprep.subr.bf16.mxu0 0
  %1513 = vmatpush1.bf16.msra.mxu0 0
  %1514 = vmatprep.subr.bf16.mxu0 0
  %1515 = vmatpush1.bf16.msra.mxu0 0
  %1516 = vmatprep.subr.bf16.mxu0 0
  %1517 = vmatpush1.bf16.msra.mxu0 0
  %1518 = vmatprep.subr.bf16.mxu0 0
  %1519 = vmatpush1.bf16.msra.mxu0 0
  %1520 = vmatprep.mubr.bf16.mxu0 0
  %1521 = vmatmul.mubr.bf16.gmra.mrb[0].mxu0 %v789
  %v1522 = vpop.f32.mrb[0].mxu0
  %v1523 = vadd.f32 0.0, %v1522
  %v1524 = vpop.f32.mrb[0].mxu0
  %v1525 = vadd.f32 0.0, %v1524
  %v1526 = vpop.f32.mrb[0].mxu0
  %v1527 = vpop.f32.mrb[0].mxu0
  %1528 = vdwg.mxu0
  %1529 = vmatprep.subr.bf16.mxu0 %v568
  %1530 = vmatpush1.bf16.msra.mxu0 %v567
  %1531 = vmatprep.subr.bf16.mxu0 0
  %1532 = vmatpush1.bf16.msra.mxu0 0
  %1533 = vmatprep.subr.bf16.mxu0 0
  %1534 = vmatpush1.bf16.msra.mxu0 0
  %1535 = vmatprep.subr.bf16.mxu0 0
  %1536 = vmatpush1.bf16.msra.mxu0 0
  %1537 = vmatprep.subr.bf16.mxu0 0
  %1538 = vmatpush1.bf16.msra.mxu0 0
  %1539 = vmatprep.subr.bf16.mxu0 0
  %1540 = vmatpush1.bf16.msra.mxu0 0
  %1541 = vmatprep.subr.bf16.mxu0 0
  %1542 = vmatpush1.bf16.msra.mxu0 0
  %1543 = vmatprep.subr.bf16.mxu0 0
  %1544 = vmatpush1.bf16.msra.mxu0 0
  %1545 = vmatprep.subr.bf16.mxu0 0
  %1546 = vmatpush1.bf16.msra.mxu0 0
  %1547 = vmatprep.subr.bf16.mxu0 0
  %1548 = vmatpush1.bf16.msra.mxu0 0
  %1549 = vmatprep.subr.bf16.mxu0 0
  %1550 = vmatpush1.bf16.msra.mxu0 0
  %1551 = vmatprep.subr.bf16.mxu0 0
  %1552 = vmatpush1.bf16.msra.mxu0 0
  %1553 = vmatprep.subr.bf16.mxu0 0
  %1554 = vmatpush1.bf16.msra.mxu0 0
  %1555 = vmatprep.subr.bf16.mxu0 0
  %1556 = vmatpush1.bf16.msra.mxu0 0
  %1557 = vmatprep.subr.bf16.mxu0 0
  %1558 = vmatpush1.bf16.msra.mxu0 0
  %1559 = vmatprep.subr.bf16.mxu0 0
  %1560 = vmatpush1.bf16.msra.mxu0 0
  %1561 = vmatprep.mubr.bf16.mxu0 0
  %1562 = vmatmul.mubr.bf16.gmra.mrb[0].mxu0 %v789
  %v1563 = vpop.f32.mrb[0].mxu0
  %v1564 = vadd.f32 0.0, %v1563
  %v1565 = vpop.f32.mrb[0].mxu0
  %v1566 = vadd.f32 0.0, %v1565
  %v1567 = vpop.f32.mrb[0].mxu0
  %v1568 = vpop.f32.mrb[0].mxu0
  %1569 = vdwg.mxu0
  %1570 = vmatprep.subr.bf16.mxu0 %v570
  %1571 = vmatpush1.bf16.msra.mxu0 %v569
  %1572 = vmatprep.subr.bf16.mxu0 0
  %1573 = vmatpush1.bf16.msra.mxu0 0
  %1574 = vmatprep.subr.bf16.mxu0 0
  %1575 = vmatpush1.bf16.msra.mxu0 0
  %1576 = vmatprep.subr.bf16.mxu0 0
  %1577 = vmatpush1.bf16.msra.mxu0 0
  %1578 = vmatprep.subr.bf16.mxu0 0
  %1579 = vmatpush1.bf16.msra.mxu0 0
  %1580 = vmatprep.subr.bf16.mxu0 0
  %1581 = vmatpush1.bf16.msra.mxu0 0
  %1582 = vmatprep.subr.bf16.mxu0 0
  %1583 = vmatpush1.bf16.msra.mxu0 0
  %1584 = vmatprep.subr.bf16.mxu0 0
  %1585 = vmatpush1.bf16.msra.mxu0 0
  %1586 = vmatprep.subr.bf16.mxu0 0
  %1587 = vmatpush1.bf16.msra.mxu0 0
  %1588 = vmatprep.subr.bf16.mxu0 0
  %1589 = vmatpush1.bf16.msra.mxu0 0
  %1590 = vmatprep.subr.bf16.mxu0 0
  %1591 = vmatpush1.bf16.msra.mxu0 0
  %1592 = vmatprep.subr.bf16.mxu0 0
  %1593 = vmatpush1.bf16.msra.mxu0 0
  %1594 = vmatprep.subr.bf16.mxu0 0
  %1595 = vmatpush1.bf16.msra.mxu0 0
  %1596 = vmatprep.subr.bf16.mxu0 0
  %1597 = vmatpush1.bf16.msra.mxu0 0
  %1598 = vmatprep.subr.bf16.mxu0 0
  %1599 = vmatpush1.bf16.msra.mxu0 0
  %1600 = vmatprep.subr.bf16.mxu0 0
  %1601 = vmatpush1.bf16.msra.mxu0 0
  %1602 = vmatprep.mubr.bf16.mxu0 0
  %1603 = vmatmul.mubr.bf16.gmra.mrb[0].mxu0 %v789
  %v1604 = vpop.f32.mrb[0].mxu0
  %v1605 = vadd.f32 0.0, %v1604
  %v1606 = vpop.f32.mrb[0].mxu0
  %v1607 = vadd.f32 0.0, %v1606
  %v1608 = vpop.f32.mrb[0].mxu0
  %v1609 = vpop.f32.mrb[0].mxu0
  %1610 = vdwg.mxu0
  %1611 = vmatprep.subr.bf16.mxu0 %v572
  %1612 = vmatpush1.bf16.msra.mxu0 %v571
  %1613 = vmatprep.subr.bf16.mxu0 0
  %1614 = vmatpush1.bf16.msra.mxu0 0
  %1615 = vmatprep.subr.bf16.mxu0 0
  %1616 = vmatpush1.bf16.msra.mxu0 0
  %1617 = vmatprep.subr.bf16.mxu0 0
  %1618 = vmatpush1.bf16.msra.mxu0 0
  %1619 = vmatprep.subr.bf16.mxu0 0
  %1620 = vmatpush1.bf16.msra.mxu0 0
  %1621 = vmatprep.subr.bf16.mxu0 0
  %1622 = vmatpush1.bf16.msra.mxu0 0
  %1623 = vmatprep.subr.bf16.mxu0 0
  %1624 = vmatpush1.bf16.msra.mxu0 0
  %1625 = vmatprep.subr.bf16.mxu0 0
  %1626 = vmatpush1.bf16.msra.mxu0 0
  %1627 = vmatprep.subr.bf16.mxu0 0
  %1628 = vmatpush1.bf16.msra.mxu0 0
  %1629 = vmatprep.subr.bf16.mxu0 0
  %1630 = vmatpush1.bf16.msra.mxu0 0
  %1631 = vmatprep.subr.bf16.mxu0 0
  %1632 = vmatpush1.bf16.msra.mxu0 0
  %1633 = vmatprep.subr.bf16.mxu0 0
  %1634 = vmatpush1.bf16.msra.mxu0 0
  %1635 = vmatprep.subr.bf16.mxu0 0
  %1636 = vmatpush1.bf16.msra.mxu0 0
  %1637 = vmatprep.subr.bf16.mxu0 0
  %1638 = vmatpush1.bf16.msra.mxu0 0
  %1639 = vmatprep.subr.bf16.mxu0 0
  %1640 = vmatpush1.bf16.msra.mxu0 0
  %1641 = vmatprep.subr.bf16.mxu0 0
  %1642 = vmatpush1.bf16.msra.mxu0 0
  %1643 = vmatprep.mubr.bf16.mxu0 0
  %1644 = vmatmul.mubr.bf16.gmra.mrb[0].mxu0 %v789
  %v1645 = vpop.f32.mrb[0].mxu0
  %v1646 = vadd.f32 0.0, %v1645
  %v1647 = vpop.f32.mrb[0].mxu0
  %v1648 = vadd.f32 0.0, %v1647
  %v1649 = vpop.f32.mrb[0].mxu0
  %v1650 = vpop.f32.mrb[0].mxu0
  %1651 = vdwg.mxu0
  %1652 = vmatprep.subr.bf16.mxu0 %v574
  %1653 = vmatpush1.bf16.msra.mxu0 %v573
  %1654 = vmatprep.subr.bf16.mxu0 0
  %1655 = vmatpush1.bf16.msra.mxu0 0
  %1656 = vmatprep.subr.bf16.mxu0 0
  %1657 = vmatpush1.bf16.msra.mxu0 0
  %1658 = vmatprep.subr.bf16.mxu0 0
  %1659 = vmatpush1.bf16.msra.mxu0 0
  %1660 = vmatprep.subr.bf16.mxu0 0
  %1661 = vmatpush1.bf16.msra.mxu0 0
  %1662 = vmatprep.subr.bf16.mxu0 0
  %1663 = vmatpush1.bf16.msra.mxu0 0
  %1664 = vmatprep.subr.bf16.mxu0 0
  %1665 = vmatpush1.bf16.msra.mxu0 0
  %1666 = vmatprep.subr.bf16.mxu0 0
  %1667 = vmatpush1.bf16.msra.mxu0 0
  %1668 = vmatprep.subr.bf16.mxu0 0
  %1669 = vmatpush1.bf16.msra.mxu0 0
  %1670 = vmatprep.subr.bf16.mxu0 0
  %1671 = vmatpush1.bf16.msra.mxu0 0
  %1672 = vmatprep.subr.bf16.mxu0 0
  %1673 = vmatpush1.bf16.msra.mxu0 0
  %1674 = vmatprep.subr.bf16.mxu0 0
  %1675 = vmatpush1.bf16.msra.mxu0 0
  %1676 = vmatprep.subr.bf16.mxu0 0
  %1677 = vmatpush1.bf16.msra.mxu0 0
  %1678 = vmatprep.subr.bf16.mxu0 0
  %1679 = vmatpush1.bf16.msra.mxu0 0
  %1680 = vmatprep.subr.bf16.mxu0 0
  %1681 = vmatpush1.bf16.msra.mxu0 0
  %1682 = vmatprep.subr.bf16.mxu0 0
  %1683 = vmatpush1.bf16.msra.mxu0 0
  %1684 = vmatprep.mubr.bf16.mxu0 0
  %1685 = vmatmul.mubr.bf16.gmra.mrb[0].mxu0 %v789
  %v1686 = vpop.f32.mrb[0].mxu0
  %v1687 = vadd.f32 0.0, %v1686
  %v1688 = vpop.f32.mrb[0].mxu0
  %v1689 = vadd.f32 0.0, %v1688
  %v1690 = vpop.f32.mrb[0].mxu0
  %v1691 = vpop.f32.mrb[0].mxu0
  %1692 = vdwg.mxu0
  %1693 = vmatprep.subr.bf16.mxu0 %v576
  %1694 = vmatpush1.bf16.msra.mxu0 %v575
  %1695 = vmatprep.subr.bf16.mxu0 0
  %1696 = vmatpush1.bf16.msra.mxu0 0
  %1697 = vmatprep.subr.bf16.mxu0 0
  %1698 = vmatpush1.bf16.msra.mxu0 0
  %1699 = vmatprep.subr.bf16.mxu0 0
  %1700 = vmatpush1.bf16.msra.mxu0 0
  %1701 = vmatprep.subr.bf16.mxu0 0
  %1702 = vmatpush1.bf16.msra.mxu0 0
  %1703 = vmatprep.subr.bf16.mxu0 0
  %1704 = vmatpush1.bf16.msra.mxu0 0
  %1705 = vmatprep.subr.bf16.mxu0 0
  %1706 = vmatpush1.bf16.msra.mxu0 0
  %1707 = vmatprep.subr.bf16.mxu0 0
  %1708 = vmatpush1.bf16.msra.mxu0 0
  %1709 = vmatprep.subr.bf16.mxu0 0
  %1710 = vmatpush1.bf16.msra.mxu0 0
  %1711 = vmatprep.subr.bf16.mxu0 0
  %1712 = vmatpush1.bf16.msra.mxu0 0
  %1713 = vmatprep.subr.bf16.mxu0 0
  %1714 = vmatpush1.bf16.msra.mxu0 0
  %1715 = vmatprep.subr.bf16.mxu0 0
  %1716 = vmatpush1.bf16.msra.mxu0 0
  %1717 = vmatprep.subr.bf16.mxu0 0
  %1718 = vmatpush1.bf16.msra.mxu0 0
  %1719 = vmatprep.subr.bf16.mxu0 0
  %1720 = vmatpush1.bf16.msra.mxu0 0
  %1721 = vmatprep.subr.bf16.mxu0 0
  %1722 = vmatpush1.bf16.msra.mxu0 0
  %1723 = vmatprep.subr.bf16.mxu0 0
  %1724 = vmatpush1.bf16.msra.mxu0 0
  %1725 = vmatprep.mubr.bf16.mxu0 0
  %1726 = vmatmul.mubr.bf16.gmra.mrb[0].mxu0 %v789
  %v1727 = vpop.f32.mrb[0].mxu0
  %v1728 = vadd.f32 0.0, %v1727
  %v1729 = vpop.f32.mrb[0].mxu0
  %v1730 = vadd.f32 0.0, %v1729
  %v1731 = vpop.f32.mrb[0].mxu0
  %v1732 = vpop.f32.mrb[0].mxu0
  %1733 = vdwg.mxu0
  %1734 = vmatprep.subr.bf16.mxu0 %v578
  %1735 = vmatpush1.bf16.msra.mxu0 %v577
  %1736 = vmatprep.subr.bf16.mxu0 0
  %1737 = vmatpush1.bf16.msra.mxu0 0
  %1738 = vmatprep.subr.bf16.mxu0 0
  %1739 = vmatpush1.bf16.msra.mxu0 0
  %1740 = vmatprep.subr.bf16.mxu0 0
  %1741 = vmatpush1.bf16.msra.mxu0 0
  %1742 = vmatprep.subr.bf16.mxu0 0
  %1743 = vmatpush1.bf16.msra.mxu0 0
  %1744 = vmatprep.subr.bf16.mxu0 0
  %1745 = vmatpush1.bf16.msra.mxu0 0
  %1746 = vmatprep.subr.bf16.mxu0 0
  %1747 = vmatpush1.bf16.msra.mxu0 0
  %1748 = vmatprep.subr.bf16.mxu0 0
  %1749 = vmatpush1.bf16.msra.mxu0 0
  %1750 = vmatprep.subr.bf16.mxu0 0
  %1751 = vmatpush1.bf16.msra.mxu0 0
  %1752 = vmatprep.subr.bf16.mxu0 0
  %1753 = vmatpush1.bf16.msra.mxu0 0
  %1754 = vmatprep.subr.bf16.mxu0 0
  %1755 = vmatpush1.bf16.msra.mxu0 0
  %1756 = vmatprep.subr.bf16.mxu0 0
  %1757 = vmatpush1.bf16.msra.mxu0 0
  %1758 = vmatprep.subr.bf16.mxu0 0
  %1759 = vmatpush1.bf16.msra.mxu0 0
  %1760 = vmatprep.subr.bf16.mxu0 0
  %1761 = vmatpush1.bf16.msra.mxu0 0
  %1762 = vmatprep.subr.bf16.mxu0 0
  %1763 = vmatpush1.bf16.msra.mxu0 0
  %1764 = vmatprep.subr.bf16.mxu0 0
  %1765 = vmatpush1.bf16.msra.mxu0 0
  %1766 = vmatprep.mubr.bf16.mxu0 0
  %1767 = vmatmul.mubr.bf16.gmra.mrb[0].mxu0 %v789
  %v1768 = vpop.f32.mrb[0].mxu0
  %v1769 = vadd.f32 0.0, %v1768
  %v1770 = vpop.f32.mrb[0].mxu0
  %v1771 = vadd.f32 0.0, %v1770
  %v1772 = vpop.f32.mrb[0].mxu0
  %v1773 = vpop.f32.mrb[0].mxu0
  %1774 = vdwg.mxu0
  %1775 = vmatprep.subr.bf16.mxu0 %v580
  %1776 = vmatpush1.bf16.msra.mxu0 %v579
  %1777 = vmatprep.subr.bf16.mxu0 0
  %1778 = vmatpush1.bf16.msra.mxu0 0
  %1779 = vmatprep.subr.bf16.mxu0 0
  %1780 = vmatpush1.bf16.msra.mxu0 0
  %1781 = vmatprep.subr.bf16.mxu0 0
  %1782 = vmatpush1.bf16.msra.mxu0 0
  %1783 = vmatprep.subr.bf16.mxu0 0
  %1784 = vmatpush1.bf16.msra.mxu0 0
  %1785 = vmatprep.subr.bf16.mxu0 0
  %1786 = vmatpush1.bf16.msra.mxu0 0
  %1787 = vmatprep.subr.bf16.mxu0 0
  %1788 = vmatpush1.bf16.msra.mxu0 0
  %1789 = vmatprep.subr.bf16.mxu0 0
  %1790 = vmatpush1.bf16.msra.mxu0 0
  %1791 = vmatprep.subr.bf16.mxu0 0
  %1792 = vmatpush1.bf16.msra.mxu0 0
  %1793 = vmatprep.subr.bf16.mxu0 0
  %1794 = vmatpush1.bf16.msra.mxu0 0
  %1795 = vmatprep.subr.bf16.mxu0 0
  %1796 = vmatpush1.bf16.msra.mxu0 0
  %1797 = vmatprep.subr.bf16.mxu0 0
  %1798 = vmatpush1.bf16.msra.mxu0 0
  %1799 = vmatprep.subr.bf16.mxu0 0
  %1800 = vmatpush1.bf16.msra.mxu0 0
  %1801 = vmatprep.subr.bf16.mxu0 0
  %1802 = vmatpush1.bf16.msra.mxu0 0
  %1803 = vmatprep.subr.bf16.mxu0 0
  %1804 = vmatpush1.bf16.msra.mxu0 0
  %1805 = vmatprep.subr.bf16.mxu0 0
  %1806 = vmatpush1.bf16.msra.mxu0 0
  %1807 = vmatprep.mubr.bf16.mxu0 0
  %1808 = vmatmul.mubr.bf16.gmra.mrb[0].mxu0 %v789
  %v1809 = vpop.f32.mrb[0].mxu0
  %v1810 = vadd.f32 0.0, %v1809
  %v1811 = vpop.f32.mrb[0].mxu0
  %v1812 = vadd.f32 0.0, %v1811
  %v1813 = vpop.f32.mrb[0].mxu0
  %v1814 = vpop.f32.mrb[0].mxu0
  %1815 = vdwg.mxu0
  %1816 = vmatprep.subr.bf16.mxu0 %v582
  %1817 = vmatpush1.bf16.msra.mxu0 %v581
  %1818 = vmatprep.subr.bf16.mxu0 0
  %1819 = vmatpush1.bf16.msra.mxu0 0
  %1820 = vmatprep.subr.bf16.mxu0 0
  %1821 = vmatpush1.bf16.msra.mxu0 0
  %1822 = vmatprep.subr.bf16.mxu0 0
  %1823 = vmatpush1.bf16.msra.mxu0 0
  %1824 = vmatprep.subr.bf16.mxu0 0
  %1825 = vmatpush1.bf16.msra.mxu0 0
  %1826 = vmatprep.subr.bf16.mxu0 0
  %1827 = vmatpush1.bf16.msra.mxu0 0
  %1828 = vmatprep.subr.bf16.mxu0 0
  %1829 = vmatpush1.bf16.msra.mxu0 0
  %1830 = vmatprep.subr.bf16.mxu0 0
  %1831 = vmatpush1.bf16.msra.mxu0 0
  %1832 = vmatprep.subr.bf16.mxu0 0
  %1833 = vmatpush1.bf16.msra.mxu0 0
  %1834 = vmatprep.subr.bf16.mxu0 0
  %1835 = vmatpush1.bf16.msra.mxu0 0
  %1836 = vmatprep.subr.bf16.mxu0 0
  %1837 = vmatpush1.bf16.msra.mxu0 0
  %1838 = vmatprep.subr.bf16.mxu0 0
  %1839 = vmatpush1.bf16.msra.mxu0 0
  %1840 = vmatprep.subr.bf16.mxu0 0
  %1841 = vmatpush1.bf16.msra.mxu0 0
  %1842 = vmatprep.subr.bf16.mxu0 0
  %1843 = vmatpush1.bf16.msra.mxu0 0
  %1844 = vmatprep.subr.bf16.mxu0 0
  %1845 = vmatpush1.bf16.msra.mxu0 0
  %1846 = vmatprep.subr.bf16.mxu0 0
  %1847 = vmatpush1.bf16.msra.mxu0 0
  %1848 = vmatprep.mubr.bf16.mxu0 0
  %1849 = vmatmul.mubr.bf16.gmra.mrb[0].mxu0 %v789
  %v1850 = vpop.f32.mrb[0].mxu0
  %v1851 = vadd.f32 0.0, %v1850
  %v1852 = vpop.f32.mrb[0].mxu0
  %v1853 = vadd.f32 0.0, %v1852
  %v1854 = vpop.f32.mrb[0].mxu0
  %v1855 = vpop.f32.mrb[0].mxu0
  %1856 = vdwg.mxu0
  %1857 = vmatprep.subr.bf16.mxu0 %v584
  %1858 = vmatpush1.bf16.msra.mxu0 %v583
  %1859 = vmatprep.subr.bf16.mxu0 0
  %1860 = vmatpush1.bf16.msra.mxu0 0
  %1861 = vmatprep.subr.bf16.mxu0 0
  %1862 = vmatpush1.bf16.msra.mxu0 0
  %1863 = vmatprep.subr.bf16.mxu0 0
  %1864 = vmatpush1.bf16.msra.mxu0 0
  %1865 = vmatprep.subr.bf16.mxu0 0
  %1866 = vmatpush1.bf16.msra.mxu0 0
  %1867 = vmatprep.subr.bf16.mxu0 0
  %1868 = vmatpush1.bf16.msra.mxu0 0
  %1869 = vmatprep.subr.bf16.mxu0 0
  %1870 = vmatpush1.bf16.msra.mxu0 0
  %1871 = vmatprep.subr.bf16.mxu0 0
  %1872 = vmatpush1.bf16.msra.mxu0 0
  %1873 = vmatprep.subr.bf16.mxu0 0
  %1874 = vmatpush1.bf16.msra.mxu0 0
  %1875 = vmatprep.subr.bf16.mxu0 0
  %1876 = vmatpush1.bf16.msra.mxu0 0
  %1877 = vmatprep.subr.bf16.mxu0 0
  %1878 = vmatpush1.bf16.msra.mxu0 0
  %1879 = vmatprep.subr.bf16.mxu0 0
  %1880 = vmatpush1.bf16.msra.mxu0 0
  %1881 = vmatprep.subr.bf16.mxu0 0
  %1882 = vmatpush1.bf16.msra.mxu0 0
  %1883 = vmatprep.subr.bf16.mxu0 0
  %1884 = vmatpush1.bf16.msra.mxu0 0
  %1885 = vmatprep.subr.bf16.mxu0 0
  %1886 = vmatpush1.bf16.msra.mxu0 0
  %1887 = vmatprep.subr.bf16.mxu0 0
  %1888 = vmatpush1.bf16.msra.mxu0 0
  %1889 = vmatprep.mubr.bf16.mxu0 0
  %1890 = vmatmul.mubr.bf16.gmra.mrb[0].mxu0 %v789
  %v1891 = vpop.f32.mrb[0].mxu0
  %v1892 = vadd.f32 0.0, %v1891
  %v1893 = vpop.f32.mrb[0].mxu0
  %v1894 = vadd.f32 0.0, %v1893
  %v1895 = vpop.f32.mrb[0].mxu0
  %v1896 = vpop.f32.mrb[0].mxu0
  %1897 = vdwg.mxu0
  %1898 = vmatprep.subr.bf16.mxu0 %v586
  %1899 = vmatpush1.bf16.msra.mxu0 %v585
  %1900 = vmatprep.subr.bf16.mxu0 0
  %1901 = vmatpush1.bf16.msra.mxu0 0
  %1902 = vmatprep.subr.bf16.mxu0 0
  %1903 = vmatpush1.bf16.msra.mxu0 0
  %1904 = vmatprep.subr.bf16.mxu0 0
  %1905 = vmatpush1.bf16.msra.mxu0 0
  %1906 = vmatprep.subr.bf16.mxu0 0
  %1907 = vmatpush1.bf16.msra.mxu0 0
  %1908 = vmatprep.subr.bf16.mxu0 0
  %1909 = vmatpush1.bf16.msra.mxu0 0
  %1910 = vmatprep.subr.bf16.mxu0 0
  %1911 = vmatpush1.bf16.msra.mxu0 0
  %1912 = vmatprep.subr.bf16.mxu0 0
  %1913 = vmatpush1.bf16.msra.mxu0 0
  %1914 = vmatprep.subr.bf16.mxu0 0
  %1915 = vmatpush1.bf16.msra.mxu0 0
  %1916 = vmatprep.subr.bf16.mxu0 0
  %1917 = vmatpush1.bf16.msra.mxu0 0
  %1918 = vmatprep.subr.bf16.mxu0 0
  %1919 = vmatpush1.bf16.msra.mxu0 0
  %1920 = vmatprep.subr.bf16.mxu0 0
  %1921 = vmatpush1.bf16.msra.mxu0 0
  %1922 = vmatprep.subr.bf16.mxu0 0
  %1923 = vmatpush1.bf16.msra.mxu0 0
  %1924 = vmatprep.subr.bf16.mxu0 0
  %1925 = vmatpush1.bf16.msra.mxu0 0
  %1926 = vmatprep.subr.bf16.mxu0 0
  %1927 = vmatpush1.bf16.msra.mxu0 0
  %1928 = vmatprep.subr.bf16.mxu0 0
  %1929 = vmatpush1.bf16.msra.mxu0 0
  %1930 = vmatprep.mubr.bf16.mxu0 0
  %1931 = vmatmul.mubr.bf16.gmra.mrb[0].mxu0 %v789
  %v1932 = vpop.f32.mrb[0].mxu0
  %v1933 = vadd.f32 0.0, %v1932
  %v1934 = vpop.f32.mrb[0].mxu0
  %v1935 = vadd.f32 0.0, %v1934
  %v1936 = vpop.f32.mrb[0].mxu0
  %v1937 = vpop.f32.mrb[0].mxu0
  %1938 = vdwg.mxu0
  %1939 = vmatprep.subr.bf16.mxu0 %v588
  %1940 = vmatpush1.bf16.msra.mxu0 %v587
  %1941 = vmatprep.subr.bf16.mxu0 0
  %1942 = vmatpush1.bf16.msra.mxu0 0
  %1943 = vmatprep.subr.bf16.mxu0 0
  %1944 = vmatpush1.bf16.msra.mxu0 0
  %1945 = vmatprep.subr.bf16.mxu0 0
  %1946 = vmatpush1.bf16.msra.mxu0 0
  %1947 = vmatprep.subr.bf16.mxu0 0
  %1948 = vmatpush1.bf16.msra.mxu0 0
  %1949 = vmatprep.subr.bf16.mxu0 0
  %1950 = vmatpush1.bf16.msra.mxu0 0
  %1951 = vmatprep.subr.bf16.mxu0 0
  %1952 = vmatpush1.bf16.msra.mxu0 0
  %1953 = vmatprep.subr.bf16.mxu0 0
  %1954 = vmatpush1.bf16.msra.mxu0 0
  %1955 = vmatprep.subr.bf16.mxu0 0
  %1956 = vmatpush1.bf16.msra.mxu0 0
  %1957 = vmatprep.subr.bf16.mxu0 0
  %1958 = vmatpush1.bf16.msra.mxu0 0
  %1959 = vmatprep.subr.bf16.mxu0 0
  %1960 = vmatpush1.bf16.msra.mxu0 0
  %1961 = vmatprep.subr.bf16.mxu0 0
  %1962 = vmatpush1.bf16.msra.mxu0 0
  %1963 = vmatprep.subr.bf16.mxu0 0
  %1964 = vmatpush1.bf16.msra.mxu0 0
  %1965 = vmatprep.subr.bf16.mxu0 0
  %1966 = vmatpush1.bf16.msra.mxu0 0
  %1967 = vmatprep.subr.bf16.mxu0 0
  %1968 = vmatpush1.bf16.msra.mxu0 0
  %1969 = vmatprep.subr.bf16.mxu0 0
  %1970 = vmatpush1.bf16.msra.mxu0 0
  %1971 = vmatprep.mubr.bf16.mxu0 0
  %1972 = vmatmul.mubr.bf16.gmra.mrb[0].mxu0 %v789
  %v1973 = vpop.f32.mrb[0].mxu0
  %v1974 = vadd.f32 0.0, %v1973
  %v1975 = vpop.f32.mrb[0].mxu0
  %v1976 = vadd.f32 0.0, %v1975
  %v1977 = vpop.f32.mrb[0].mxu0
  %v1978 = vpop.f32.mrb[0].mxu0
  %1979 = vdwg.mxu0
  %1980 = vmatprep.subr.bf16.mxu0 %v590
  %1981 = vmatpush1.bf16.msra.mxu0 %v589
  %1982 = vmatprep.subr.bf16.mxu0 0
  %1983 = vmatpush1.bf16.msra.mxu0 0
  %1984 = vmatprep.subr.bf16.mxu0 0
  %1985 = vmatpush1.bf16.msra.mxu0 0
  %1986 = vmatprep.subr.bf16.mxu0 0
  %1987 = vmatpush1.bf16.msra.mxu0 0
  %1988 = vmatprep.subr.bf16.mxu0 0
  %1989 = vmatpush1.bf16.msra.mxu0 0
  %1990 = vmatprep.subr.bf16.mxu0 0
  %1991 = vmatpush1.bf16.msra.mxu0 0
  %1992 = vmatprep.subr.bf16.mxu0 0
  %1993 = vmatpush1.bf16.msra.mxu0 0
  %1994 = vmatprep.subr.bf16.mxu0 0
  %1995 = vmatpush1.bf16.msra.mxu0 0
  %1996 = vmatprep.subr.bf16.mxu0 0
  %1997 = vmatpush1.bf16.msra.mxu0 0
  %1998 = vmatprep.subr.bf16.mxu0 0
  %1999 = vmatpush1.bf16.msra.mxu0 0
  %2000 = vmatprep.subr.bf16.mxu0 0
  %2001 = vmatpush1.bf16.msra.mxu0 0
  %2002 = vmatprep.subr.bf16.mxu0 0
  %2003 = vmatpush1.bf16.msra.mxu0 0
  %2004 = vmatprep.subr.bf16.mxu0 0
  %2005 = vmatpush1.bf16.msra.mxu0 0
  %2006 = vmatprep.subr.bf16.mxu0 0
  %2007 = vmatpush1.bf16.msra.mxu0 0
  %2008 = vmatprep.subr.bf16.mxu0 0
  %2009 = vmatpush1.bf16.msra.mxu0 0
  %2010 = vmatprep.subr.bf16.mxu0 0
  %2011 = vmatpush1.bf16.msra.mxu0 0
  %2012 = vmatprep.mubr.bf16.mxu0 0
  %2013 = vmatmul.mubr.bf16.gmra.mrb[0].mxu0 %v789
  %v2014 = vpop.f32.mrb[0].mxu0
  %v2015 = vadd.f32 0.0, %v2014
  %v2016 = vpop.f32.mrb[0].mxu0
  %v2017 = vadd.f32 0.0, %v2016
  %v2018 = vpop.f32.mrb[0].mxu0
  %v2019 = vpop.f32.mrb[0].mxu0
  %2020 = vdwg.mxu0
  %2021 = vmatprep.subr.bf16.mxu0 %v592
  %2022 = vmatpush1.bf16.msra.mxu0 %v591
  %2023 = vmatprep.subr.bf16.mxu0 0
  %2024 = vmatpush1.bf16.msra.mxu0 0
  %2025 = vmatprep.subr.bf16.mxu0 0
  %2026 = vmatpush1.bf16.msra.mxu0 0
  %2027 = vmatprep.subr.bf16.mxu0 0
  %2028 = vmatpush1.bf16.msra.mxu0 0
  %2029 = vmatprep.subr.bf16.mxu0 0
  %2030 = vmatpush1.bf16.msra.mxu0 0
  %2031 = vmatprep.subr.bf16.mxu0 0
  %2032 = vmatpush1.bf16.msra.mxu0 0
  %2033 = vmatprep.subr.bf16.mxu0 0
  %2034 = vmatpush1.bf16.msra.mxu0 0
  %2035 = vmatprep.subr.bf16.mxu0 0
  %2036 = vmatpush1.bf16.msra.mxu0 0
  %2037 = vmatprep.subr.bf16.mxu0 0
  %2038 = vmatpush1.bf16.msra.mxu0 0
  %2039 = vmatprep.subr.bf16.mxu0 0
  %2040 = vmatpush1.bf16.msra.mxu0 0
  %2041 = vmatprep.subr.bf16.mxu0 0
  %2042 = vmatpush1.bf16.msra.mxu0 0
  %2043 = vmatprep.subr.bf16.mxu0 0
  %2044 = vmatpush1.bf16.msra.mxu0 0
  %2045 = vmatprep.subr.bf16.mxu0 0
  %2046 = vmatpush1.bf16.msra.mxu0 0
  %2047 = vmatprep.subr.bf16.mxu0 0
  %2048 = vmatpush1.bf16.msra.mxu0 0
  %2049 = vmatprep.subr.bf16.mxu0 0
  %2050 = vmatpush1.bf16.msra.mxu0 0
  %2051 = vmatprep.subr.bf16.mxu0 0
  %2052 = vmatpush1.bf16.msra.mxu0 0
  %2053 = vmatprep.mubr.bf16.mxu0 0
  %2054 = vmatmul.mubr.bf16.gmra.mrb[0].mxu0 %v789
  %v2055 = vpop.f32.mrb[0].mxu0
  %v2056 = vadd.f32 0.0, %v2055
  %v2057 = vpop.f32.mrb[0].mxu0
  %v2058 = vadd.f32 0.0, %v2057
  %v2059 = vpop.f32.mrb[0].mxu0
  %v2060 = vpop.f32.mrb[0].mxu0
  %2061 = vdwg.mxu0
  %2062 = vmatprep.subr.bf16.mxu0 %v594
  %2063 = vmatpush1.bf16.msra.mxu0 %v593
  %2064 = vmatprep.subr.bf16.mxu0 0
  %2065 = vmatpush1.bf16.msra.mxu0 0
  %2066 = vmatprep.subr.bf16.mxu0 0
  %2067 = vmatpush1.bf16.msra.mxu0 0
  %2068 = vmatprep.subr.bf16.mxu0 0
  %2069 = vmatpush1.bf16.msra.mxu0 0
  %2070 = vmatprep.subr.bf16.mxu0 0
  %2071 = vmatpush1.bf16.msra.mxu0 0
  %2072 = vmatprep.subr.bf16.mxu0 0
  %2073 = vmatpush1.bf16.msra.mxu0 0
  %2074 = vmatprep.subr.bf16.mxu0 0
  %2075 = vmatpush1.bf16.msra.mxu0 0
  %2076 = vmatprep.subr.bf16.mxu0 0
  %2077 = vmatpush1.bf16.msra.mxu0 0
  %2078 = vmatprep.subr.bf16.mxu0 0
  %2079 = vmatpush1.bf16.msra.mxu0 0
  %2080 = vmatprep.subr.bf16.mxu0 0
  %2081 = vmatpush1.bf16.msra.mxu0 0
  %2082 = vmatprep.subr.bf16.mxu0 0
  %2083 = vmatpush1.bf16.msra.mxu0 0
  %2084 = vmatprep.subr.bf16.mxu0 0
  %2085 = vmatpush1.bf16.msra.mxu0 0
  %2086 = vmatprep.subr.bf16.mxu0 0
  %2087 = vmatpush1.bf16.msra.mxu0 0
  %2088 = vmatprep.subr.bf16.mxu0 0
  %2089 = vmatpush1.bf16.msra.mxu0 0
  %2090 = vmatprep.subr.bf16.mxu0 0
  %2091 = vmatpush1.bf16.msra.mxu0 0
  %2092 = vmatprep.subr.bf16.mxu0 0
  %2093 = vmatpush1.bf16.msra.mxu0 0
  %2094 = vmatprep.mubr.bf16.mxu0 0
  %2095 = vmatmul.mubr.bf16.gmra.mrb[0].mxu0 %v789
  %v2096 = vpop.f32.mrb[0].mxu0
  %v2097 = vadd.f32 0.0, %v2096
  %v2098 = vpop.f32.mrb[0].mxu0
  %v2099 = vadd.f32 0.0, %v2098
  %v2100 = vpop.f32.mrb[0].mxu0
  %v2101 = vpop.f32.mrb[0].mxu0
  %2102 = vdwg.mxu0
  %2103 = vmatprep.subr.bf16.mxu0 %v596
  %2104 = vmatpush1.bf16.msra.mxu0 %v595
  %2105 = vmatprep.subr.bf16.mxu0 0
  %2106 = vmatpush1.bf16.msra.mxu0 0
  %2107 = vmatprep.subr.bf16.mxu0 0
  %2108 = vmatpush1.bf16.msra.mxu0 0
  %2109 = vmatprep.subr.bf16.mxu0 0
  %2110 = vmatpush1.bf16.msra.mxu0 0
  %2111 = vmatprep.subr.bf16.mxu0 0
  %2112 = vmatpush1.bf16.msra.mxu0 0
  %2113 = vmatprep.subr.bf16.mxu0 0
  %2114 = vmatpush1.bf16.msra.mxu0 0
  %2115 = vmatprep.subr.bf16.mxu0 0
  %2116 = vmatpush1.bf16.msra.mxu0 0
  %2117 = vmatprep.subr.bf16.mxu0 0
  %2118 = vmatpush1.bf16.msra.mxu0 0
  %2119 = vmatprep.subr.bf16.mxu0 0
  %2120 = vmatpush1.bf16.msra.mxu0 0
  %2121 = vmatprep.subr.bf16.mxu0 0
  %2122 = vmatpush1.bf16.msra.mxu0 0
  %2123 = vmatprep.subr.bf16.mxu0 0
  %2124 = vmatpush1.bf16.msra.mxu0 0
  %2125 = vmatprep.subr.bf16.mxu0 0
  %2126 = vmatpush1.bf16.msra.mxu0 0
  %2127 = vmatprep.subr.bf16.mxu0 0
  %2128 = vmatpush1.bf16.msra.mxu0 0
  %2129 = vmatprep.subr.bf16.mxu0 0
  %2130 = vmatpush1.bf16.msra.mxu0 0
  %2131 = vmatprep.subr.bf16.mxu0 0
  %2132 = vmatpush1.bf16.msra.mxu0 0
  %2133 = vmatprep.subr.bf16.mxu0 0
  %2134 = vmatpush1.bf16.msra.mxu0 0
  %2135 = vmatprep.mubr.bf16.mxu0 0
  %2136 = vmatmul.mubr.bf16.gmra.mrb[0].mxu0 %v789
  %v2137 = vpop.f32.mrb[0].mxu0
  %v2138 = vadd.f32 0.0, %v2137
  %v2139 = vpop.f32.mrb[0].mxu0
  %v2140 = vadd.f32 0.0, %v2139
  %v2141 = vpop.f32.mrb[0].mxu0
  %v2142 = vpop.f32.mrb[0].mxu0
  %2143 = vdwg.mxu0
  %2144 = vmatprep.subr.bf16.mxu0 %v598
  %2145 = vmatpush1.bf16.msra.mxu0 %v597
  %2146 = vmatprep.subr.bf16.mxu0 0
  %2147 = vmatpush1.bf16.msra.mxu0 0
  %2148 = vmatprep.subr.bf16.mxu0 0
  %2149 = vmatpush1.bf16.msra.mxu0 0
  %2150 = vmatprep.subr.bf16.mxu0 0
  %2151 = vmatpush1.bf16.msra.mxu0 0
  %2152 = vmatprep.subr.bf16.mxu0 0
  %2153 = vmatpush1.bf16.msra.mxu0 0
  %2154 = vmatprep.subr.bf16.mxu0 0
  %2155 = vmatpush1.bf16.msra.mxu0 0
  %2156 = vmatprep.subr.bf16.mxu0 0
  %2157 = vmatpush1.bf16.msra.mxu0 0
  %2158 = vmatprep.subr.bf16.mxu0 0
  %2159 = vmatpush1.bf16.msra.mxu0 0
  %2160 = vmatprep.subr.bf16.mxu0 0
  %2161 = vmatpush1.bf16.msra.mxu0 0
  %2162 = vmatprep.subr.bf16.mxu0 0
  %2163 = vmatpush1.bf16.msra.mxu0 0
  %2164 = vmatprep.subr.bf16.mxu0 0
  %2165 = vmatpush1.bf16.msra.mxu0 0
  %2166 = vmatprep.subr.bf16.mxu0 0
  %2167 = vmatpush1.bf16.msra.mxu0 0
  %2168 = vmatprep.subr.bf16.mxu0 0
  %2169 = vmatpush1.bf16.msra.mxu0 0
  %2170 = vmatprep.subr.bf16.mxu0 0
  %2171 = vmatpush1.bf16.msra.mxu0 0
  %2172 = vmatprep.subr.bf16.mxu0 0
  %2173 = vmatpush1.bf16.msra.mxu0 0
  %2174 = vmatprep.subr.bf16.mxu0 0
  %2175 = vmatpush1.bf16.msra.mxu0 0
  %2176 = vmatprep.mubr.bf16.mxu0 0
  %2177 = vmatmul.mubr.bf16.gmra.mrb[0].mxu0 %v789
  %v2178 = vpop.f32.mrb[0].mxu0
  %v2179 = vadd.f32 0.0, %v2178
  %v2180 = vpop.f32.mrb[0].mxu0
  %v2181 = vadd.f32 0.0, %v2180
  %v2182 = vpop.f32.mrb[0].mxu0
  %v2183 = vpop.f32.mrb[0].mxu0
  %2184 = vdwg.mxu0
  %2185 = vmatprep.subr.bf16.mxu0 %v600
  %2186 = vmatpush1.bf16.msra.mxu0 %v599
  %2187 = vmatprep.subr.bf16.mxu0 0
  %2188 = vmatpush1.bf16.msra.mxu0 0
  %2189 = vmatprep.subr.bf16.mxu0 0
  %2190 = vmatpush1.bf16.msra.mxu0 0
  %2191 = vmatprep.subr.bf16.mxu0 0
  %2192 = vmatpush1.bf16.msra.mxu0 0
  %2193 = vmatprep.subr.bf16.mxu0 0
  %2194 = vmatpush1.bf16.msra.mxu0 0
  %2195 = vmatprep.subr.bf16.mxu0 0
  %2196 = vmatpush1.bf16.msra.mxu0 0
  %2197 = vmatprep.subr.bf16.mxu0 0
  %2198 = vmatpush1.bf16.msra.mxu0 0
  %2199 = vmatprep.subr.bf16.mxu0 0
  %2200 = vmatpush1.bf16.msra.mxu0 0
  %2201 = vmatprep.subr.bf16.mxu0 0
  %2202 = vmatpush1.bf16.msra.mxu0 0
  %2203 = vmatprep.subr.bf16.mxu0 0
  %2204 = vmatpush1.bf16.msra.mxu0 0
  %2205 = vmatprep.subr.bf16.mxu0 0
  %2206 = vmatpush1.bf16.msra.mxu0 0
  %2207 = vmatprep.subr.bf16.mxu0 0
  %2208 = vmatpush1.bf16.msra.mxu0 0
  %2209 = vmatprep.subr.bf16.mxu0 0
  %2210 = vmatpush1.bf16.msra.mxu0 0
  %2211 = vmatprep.subr.bf16.mxu0 0
  %2212 = vmatpush1.bf16.msra.mxu0 0
  %2213 = vmatprep.subr.bf16.mxu0 0
  %2214 = vmatpush1.bf16.msra.mxu0 0
  %2215 = vmatprep.subr.bf16.mxu0 0
  %2216 = vmatpush1.bf16.msra.mxu0 0
  %2217 = vmatprep.mubr.bf16.mxu0 0
  %2218 = vmatmul.mubr.bf16.gmra.mrb[0].mxu0 %v789
  %v2219 = vpop.f32.mrb[0].mxu0
  %v2220 = vadd.f32 0.0, %v2219
  %v2221 = vpop.f32.mrb[0].mxu0
  %v2222 = vadd.f32 0.0, %v2221
  %v2223 = vpop.f32.mrb[0].mxu0
  %v2224 = vpop.f32.mrb[0].mxu0
  %2225 = vdwg.mxu0
  %2226 = vmatprep.subr.bf16.mxu0 %v602
  %2227 = vmatpush1.bf16.msra.mxu0 %v601
  %2228 = vmatprep.subr.bf16.mxu0 0
  %2229 = vmatpush1.bf16.msra.mxu0 0
  %2230 = vmatprep.subr.bf16.mxu0 0
  %2231 = vmatpush1.bf16.msra.mxu0 0
  %2232 = vmatprep.subr.bf16.mxu0 0
  %2233 = vmatpush1.bf16.msra.mxu0 0
  %2234 = vmatprep.subr.bf16.mxu0 0
  %2235 = vmatpush1.bf16.msra.mxu0 0
  %2236 = vmatprep.subr.bf16.mxu0 0
  %2237 = vmatpush1.bf16.msra.mxu0 0
  %2238 = vmatprep.subr.bf16.mxu0 0
  %2239 = vmatpush1.bf16.msra.mxu0 0
  %2240 = vmatprep.subr.bf16.mxu0 0
  %2241 = vmatpush1.bf16.msra.mxu0 0
  %2242 = vmatprep.subr.bf16.mxu0 0
  %2243 = vmatpush1.bf16.msra.mxu0 0
  %2244 = vmatprep.subr.bf16.mxu0 0
  %2245 = vmatpush1.bf16.msra.mxu0 0
  %2246 = vmatprep.subr.bf16.mxu0 0
  %2247 = vmatpush1.bf16.msra.mxu0 0
  %2248 = vmatprep.subr.bf16.mxu0 0
  %2249 = vmatpush1.bf16.msra.mxu0 0
  %2250 = vmatprep.subr.bf16.mxu0 0
  %2251 = vmatpush1.bf16.msra.mxu0 0
  %2252 = vmatprep.subr.bf16.mxu0 0
  %2253 = vmatpush1.bf16.msra.mxu0 0
  %2254 = vmatprep.subr.bf16.mxu0 0
  %2255 = vmatpush1.bf16.msra.mxu0 0
  %2256 = vmatprep.subr.bf16.mxu0 0
  %2257 = vmatpush1.bf16.msra.mxu0 0
  %2258 = vmatprep.mubr.bf16.mxu0 0
  %2259 = vmatmul.mubr.bf16.gmra.mrb[0].mxu0 %v789
  %v2260 = vpop.f32.mrb[0].mxu0
  %v2261 = vadd.f32 0.0, %v2260
  %v2262 = vpop.f32.mrb[0].mxu0
  %v2263 = vadd.f32 0.0, %v2262
  %v2264 = vpop.f32.mrb[0].mxu0
  %v2265 = vpop.f32.mrb[0].mxu0
  %2266 = vdwg.mxu0
  %2267 = vmatprep.subr.bf16.mxu0 %v604
  %2268 = vmatpush1.bf16.msra.mxu0 %v603
  %2269 = vmatprep.subr.bf16.mxu0 0
  %2270 = vmatpush1.bf16.msra.mxu0 0
  %2271 = vmatprep.subr.bf16.mxu0 0
  %2272 = vmatpush1.bf16.msra.mxu0 0
  %2273 = vmatprep.subr.bf16.mxu0 0
  %2274 = vmatpush1.bf16.msra.mxu0 0
  %2275 = vmatprep.subr.bf16.mxu0 0
  %2276 = vmatpush1.bf16.msra.mxu0 0
  %2277 = vmatprep.subr.bf16.mxu0 0
  %2278 = vmatpush1.bf16.msra.mxu0 0
  %2279 = vmatprep.subr.bf16.mxu0 0
  %2280 = vmatpush1.bf16.msra.mxu0 0
  %2281 = vmatprep.subr.bf16.mxu0 0
  %2282 = vmatpush1.bf16.msra.mxu0 0
  %2283 = vmatprep.subr.bf16.mxu0 0
  %2284 = vmatpush1.bf16.msra.mxu0 0
  %2285 = vmatprep.subr.bf16.mxu0 0
  %2286 = vmatpush1.bf16.msra.mxu0 0
  %2287 = vmatprep.subr.bf16.mxu0 0
  %2288 = vmatpush1.bf16.msra.mxu0 0
  %2289 = vmatprep.subr.bf16.mxu0 0
  %2290 = vmatpush1.bf16.msra.mxu0 0
  %2291 = vmatprep.subr.bf16.mxu0 0
  %2292 = vmatpush1.bf16.msra.mxu0 0
  %2293 = vmatprep.subr.bf16.mxu0 0
  %2294 = vmatpush1.bf16.msra.mxu0 0
  %2295 = vmatprep.subr.bf16.mxu0 0
  %2296 = vmatpush1.bf16.msra.mxu0 0
  %2297 = vmatprep.subr.bf16.mxu0 0
  %2298 = vmatpush1.bf16.msra.mxu0 0
  %2299 = vmatprep.mubr.bf16.mxu0 0
  %2300 = vmatmul.mubr.bf16.gmra.mrb[0].mxu0 %v789
  %v2301 = vpop.f32.mrb[0].mxu0
  %v2302 = vadd.f32 0.0, %v2301
  %v2303 = vpop.f32.mrb[0].mxu0
  %v2304 = vadd.f32 0.0, %v2303
  %v2305 = vpop.f32.mrb[0].mxu0
  %v2306 = vpop.f32.mrb[0].mxu0
  %2307 = vdwg.mxu0
  %2308 = vmatprep.subr.bf16.mxu0 %v606
  %2309 = vmatpush1.bf16.msra.mxu0 %v605
  %2310 = vmatprep.subr.bf16.mxu0 0
  %2311 = vmatpush1.bf16.msra.mxu0 0
  %2312 = vmatprep.subr.bf16.mxu0 0
  %2313 = vmatpush1.bf16.msra.mxu0 0
  %2314 = vmatprep.subr.bf16.mxu0 0
  %2315 = vmatpush1.bf16.msra.mxu0 0
  %2316 = vmatprep.subr.bf16.mxu0 0
  %2317 = vmatpush1.bf16.msra.mxu0 0
  %2318 = vmatprep.subr.bf16.mxu0 0
  %2319 = vmatpush1.bf16.msra.mxu0 0
  %2320 = vmatprep.subr.bf16.mxu0 0
  %2321 = vmatpush1.bf16.msra.mxu0 0
  %2322 = vmatprep.subr.bf16.mxu0 0
  %2323 = vmatpush1.bf16.msra.mxu0 0
  %2324 = vmatprep.subr.bf16.mxu0 0
  %2325 = vmatpush1.bf16.msra.mxu0 0
  %2326 = vmatprep.subr.bf16.mxu0 0
  %2327 = vmatpush1.bf16.msra.mxu0 0
  %2328 = vmatprep.subr.bf16.mxu0 0
  %2329 = vmatpush1.bf16.msra.mxu0 0
  %2330 = vmatprep.subr.bf16.mxu0 0
  %2331 = vmatpush1.bf16.msra.mxu0 0
  %2332 = vmatprep.subr.bf16.mxu0 0
  %2333 = vmatpush1.bf16.msra.mxu0 0
  %2334 = vmatprep.subr.bf16.mxu0 0
  %2335 = vmatpush1.bf16.msra.mxu0 0
  %2336 = vmatprep.subr.bf16.mxu0 0
  %2337 = vmatpush1.bf16.msra.mxu0 0
  %2338 = vmatprep.subr.bf16.mxu0 0
  %2339 = vmatpush1.bf16.msra.mxu0 0
  %2340 = vmatprep.mubr.bf16.mxu0 0
  %2341 = vmatmul.mubr.bf16.gmra.mrb[0].mxu0 %v789
  %v2342 = vpop.f32.mrb[0].mxu0
  %v2343 = vadd.f32 0.0, %v2342
  %v2344 = vpop.f32.mrb[0].mxu0
  %v2345 = vadd.f32 0.0, %v2344
  %v2346 = vpop.f32.mrb[0].mxu0
  %v2347 = vpop.f32.mrb[0].mxu0
  %2348 = vdwg.mxu0
  %2349 = vmatprep.subr.bf16.mxu0 %v608
  %2350 = vmatpush1.bf16.msra.mxu0 %v607
  %2351 = vmatprep.subr.bf16.mxu0 0
  %2352 = vmatpush1.bf16.msra.mxu0 0
  %2353 = vmatprep.subr.bf16.mxu0 0
  %2354 = vmatpush1.bf16.msra.mxu0 0
  %2355 = vmatprep.subr.bf16.mxu0 0
  %2356 = vmatpush1.bf16.msra.mxu0 0
  %2357 = vmatprep.subr.bf16.mxu0 0
  %2358 = vmatpush1.bf16.msra.mxu0 0
  %2359 = vmatprep.subr.bf16.mxu0 0
  %2360 = vmatpush1.bf16.msra.mxu0 0
  %2361 = vmatprep.subr.bf16.mxu0 0
  %2362 = vmatpush1.bf16.msra.mxu0 0
  %2363 = vmatprep.subr.bf16.mxu0 0
  %2364 = vmatpush1.bf16.msra.mxu0 0
  %2365 = vmatprep.subr.bf16.mxu0 0
  %2366 = vmatpush1.bf16.msra.mxu0 0
  %2367 = vmatprep.subr.bf16.mxu0 0
  %2368 = vmatpush1.bf16.msra.mxu0 0
  %2369 = vmatprep.subr.bf16.mxu0 0
  %2370 = vmatpush1.bf16.msra.mxu0 0
  %2371 = vmatprep.subr.bf16.mxu0 0
  %2372 = vmatpush1.bf16.msra.mxu0 0
  %2373 = vmatprep.subr.bf16.mxu0 0
  %2374 = vmatpush1.bf16.msra.mxu0 0
  %2375 = vmatprep.subr.bf16.mxu0 0
  %2376 = vmatpush1.bf16.msra.mxu0 0
  %2377 = vmatprep.subr.bf16.mxu0 0
  %2378 = vmatpush1.bf16.msra.mxu0 0
  %2379 = vmatprep.subr.bf16.mxu0 0
  %2380 = vmatpush1.bf16.msra.mxu0 0
  %2381 = vmatprep.mubr.bf16.mxu0 0
  %2382 = vmatmul.mubr.bf16.gmra.mrb[0].mxu0 %v789
  %v2383 = vpop.f32.mrb[0].mxu0
  %v2384 = vadd.f32 0.0, %v2383
  %v2385 = vpop.f32.mrb[0].mxu0
  %v2386 = vadd.f32 0.0, %v2385
  %v2387 = vpop.f32.mrb[0].mxu0
  %v2388 = vpop.f32.mrb[0].mxu0
  %2389 = vdwg.mxu0
  %2390 = vmatprep.subr.bf16.mxu0 %v610
  %2391 = vmatpush1.bf16.msra.mxu0 %v609
  %2392 = vmatprep.subr.bf16.mxu0 0
  %2393 = vmatpush1.bf16.msra.mxu0 0
  %2394 = vmatprep.subr.bf16.mxu0 0
  %2395 = vmatpush1.bf16.msra.mxu0 0
  %2396 = vmatprep.subr.bf16.mxu0 0
  %2397 = vmatpush1.bf16.msra.mxu0 0
  %2398 = vmatprep.subr.bf16.mxu0 0
  %2399 = vmatpush1.bf16.msra.mxu0 0
  %2400 = vmatprep.subr.bf16.mxu0 0
  %2401 = vmatpush1.bf16.msra.mxu0 0
  %2402 = vmatprep.subr.bf16.mxu0 0
  %2403 = vmatpush1.bf16.msra.mxu0 0
  %2404 = vmatprep.subr.bf16.mxu0 0
  %2405 = vmatpush1.bf16.msra.mxu0 0
  %2406 = vmatprep.subr.bf16.mxu0 0
  %2407 = vmatpush1.bf16.msra.mxu0 0
  %2408 = vmatprep.subr.bf16.mxu0 0
  %2409 = vmatpush1.bf16.msra.mxu0 0
  %2410 = vmatprep.subr.bf16.mxu0 0
  %2411 = vmatpush1.bf16.msra.mxu0 0
  %2412 = vmatprep.subr.bf16.mxu0 0
  %2413 = vmatpush1.bf16.msra.mxu0 0
  %2414 = vmatprep.subr.bf16.mxu0 0
  %2415 = vmatpush1.bf16.msra.mxu0 0
  %2416 = vmatprep.subr.bf16.mxu0 0
  %2417 = vmatpush1.bf16.msra.mxu0 0
  %2418 = vmatprep.subr.bf16.mxu0 0
  %2419 = vmatpush1.bf16.msra.mxu0 0
  %2420 = vmatprep.subr.bf16.mxu0 0
  %2421 = vmatpush1.bf16.msra.mxu0 0
  %2422 = vmatprep.mubr.bf16.mxu0 0
  %2423 = vmatmul.mubr.bf16.gmra.mrb[0].mxu0 %v789
  %v2424 = vpop.f32.mrb[0].mxu0
  %v2425 = vadd.f32 0.0, %v2424
  %v2426 = vpop.f32.mrb[0].mxu0
  %v2427 = vadd.f32 0.0, %v2426
  %v2428 = vpop.f32.mrb[0].mxu0
  %v2429 = vpop.f32.mrb[0].mxu0
  %2430 = vdwg.mxu0
  %2431 = vmatprep.subr.bf16.mxu0 %v612
  %2432 = vmatpush1.bf16.msra.mxu0 %v611
  %2433 = vmatprep.subr.bf16.mxu0 0
  %2434 = vmatpush1.bf16.msra.mxu0 0
  %2435 = vmatprep.subr.bf16.mxu0 0
  %2436 = vmatpush1.bf16.msra.mxu0 0
  %2437 = vmatprep.subr.bf16.mxu0 0
  %2438 = vmatpush1.bf16.msra.mxu0 0
  %2439 = vmatprep.subr.bf16.mxu0 0
  %2440 = vmatpush1.bf16.msra.mxu0 0
  %2441 = vmatprep.subr.bf16.mxu0 0
  %2442 = vmatpush1.bf16.msra.mxu0 0
  %2443 = vmatprep.subr.bf16.mxu0 0
  %2444 = vmatpush1.bf16.msra.mxu0 0
  %2445 = vmatprep.subr.bf16.mxu0 0
  %2446 = vmatpush1.bf16.msra.mxu0 0
  %2447 = vmatprep.subr.bf16.mxu0 0
  %2448 = vmatpush1.bf16.msra.mxu0 0
  %2449 = vmatprep.subr.bf16.mxu0 0
  %2450 = vmatpush1.bf16.msra.mxu0 0
  %2451 = vmatprep.subr.bf16.mxu0 0
  %2452 = vmatpush1.bf16.msra.mxu0 0
  %2453 = vmatprep.subr.bf16.mxu0 0
  %2454 = vmatpush1.bf16.msra.mxu0 0
  %2455 = vmatprep.subr.bf16.mxu0 0
  %2456 = vmatpush1.bf16.msra.mxu0 0
  %2457 = vmatprep.subr.bf16.mxu0 0
  %2458 = vmatpush1.bf16.msra.mxu0 0
  %2459 = vmatprep.subr.bf16.mxu0 0
  %2460 = vmatpush1.bf16.msra.mxu0 0
  %2461 = vmatprep.subr.bf16.mxu0 0
  %2462 = vmatpush1.bf16.msra.mxu0 0
  %2463 = vmatprep.mubr.bf16.mxu0 0
  %2464 = vmatmul.mubr.bf16.gmra.mrb[0].mxu0 %v789
  %v2465 = vpop.f32.mrb[0].mxu0
  %v2466 = vadd.f32 0.0, %v2465
  %v2467 = vpop.f32.mrb[0].mxu0
  %v2468 = vadd.f32 0.0, %v2467
  %v2469 = vpop.f32.mrb[0].mxu0
  %v2470 = vpop.f32.mrb[0].mxu0
  %2471 = vdwg.mxu0
  %2472 = vmatprep.subr.bf16.mxu0 %v614
  %2473 = vmatpush1.bf16.msra.mxu0 %v613
  %2474 = vmatprep.subr.bf16.mxu0 0
  %2475 = vmatpush1.bf16.msra.mxu0 0
  %2476 = vmatprep.subr.bf16.mxu0 0
  %2477 = vmatpush1.bf16.msra.mxu0 0
  %2478 = vmatprep.subr.bf16.mxu0 0
  %2479 = vmatpush1.bf16.msra.mxu0 0
  %2480 = vmatprep.subr.bf16.mxu0 0
  %2481 = vmatpush1.bf16.msra.mxu0 0
  %2482 = vmatprep.subr.bf16.mxu0 0
  %2483 = vmatpush1.bf16.msra.mxu0 0
  %2484 = vmatprep.subr.bf16.mxu0 0
  %2485 = vmatpush1.bf16.msra.mxu0 0
  %2486 = vmatprep.subr.bf16.mxu0 0
  %2487 = vmatpush1.bf16.msra.mxu0 0
  %2488 = vmatprep.subr.bf16.mxu0 0
  %2489 = vmatpush1.bf16.msra.mxu0 0
  %2490 = vmatprep.subr.bf16.mxu0 0
  %2491 = vmatpush1.bf16.msra.mxu0 0
  %2492 = vmatprep.subr.bf16.mxu0 0
  %2493 = vmatpush1.bf16.msra.mxu0 0
  %2494 = vmatprep.subr.bf16.mxu0 0
  %2495 = vmatpush1.bf16.msra.mxu0 0
  %2496 = vmatprep.subr.bf16.mxu0 0
  %2497 = vmatpush1.bf16.msra.mxu0 0
  %2498 = vmatprep.subr.bf16.mxu0 0
  %2499 = vmatpush1.bf16.msra.mxu0 0
  %2500 = vmatprep.subr.bf16.mxu0 0
  %2501 = vmatpush1.bf16.msra.mxu0 0
  %2502 = vmatprep.subr.bf16.mxu0 0
  %2503 = vmatpush1.bf16.msra.mxu0 0
  %2504 = vmatprep.mubr.bf16.mxu0 0
  %2505 = vmatmul.mubr.bf16.gmra.mrb[0].mxu0 %v789
  %v2506 = vpop.f32.mrb[0].mxu0
  %v2507 = vadd.f32 0.0, %v2506
  %v2508 = vpop.f32.mrb[0].mxu0
  %v2509 = vadd.f32 0.0, %v2508
  %v2510 = vpop.f32.mrb[0].mxu0
  %v2511 = vpop.f32.mrb[0].mxu0
  %2512 = vdwg.mxu0
  %2513 = vmatprep.subr.bf16.mxu0 %v616
  %2514 = vmatpush1.bf16.msra.mxu0 %v615
  %2515 = vmatprep.subr.bf16.mxu0 0
  %2516 = vmatpush1.bf16.msra.mxu0 0
  %2517 = vmatprep.subr.bf16.mxu0 0
  %2518 = vmatpush1.bf16.msra.mxu0 0
  %2519 = vmatprep.subr.bf16.mxu0 0
  %2520 = vmatpush1.bf16.msra.mxu0 0
  %2521 = vmatprep.subr.bf16.mxu0 0
  %2522 = vmatpush1.bf16.msra.mxu0 0
  %2523 = vmatprep.subr.bf16.mxu0 0
  %2524 = vmatpush1.bf16.msra.mxu0 0
  %2525 = vmatprep.subr.bf16.mxu0 0
  %2526 = vmatpush1.bf16.msra.mxu0 0
  %2527 = vmatprep.subr.bf16.mxu0 0
  %2528 = vmatpush1.bf16.msra.mxu0 0
  %2529 = vmatprep.subr.bf16.mxu0 0
  %2530 = vmatpush1.bf16.msra.mxu0 0
  %2531 = vmatprep.subr.bf16.mxu0 0
  %2532 = vmatpush1.bf16.msra.mxu0 0
  %2533 = vmatprep.subr.bf16.mxu0 0
  %2534 = vmatpush1.bf16.msra.mxu0 0
  %2535 = vmatprep.subr.bf16.mxu0 0
  %2536 = vmatpush1.bf16.msra.mxu0 0
  %2537 = vmatprep.subr.bf16.mxu0 0
  %2538 = vmatpush1.bf16.msra.mxu0 0
  %2539 = vmatprep.subr.bf16.mxu0 0
  %2540 = vmatpush1.bf16.msra.mxu0 0
  %2541 = vmatprep.subr.bf16.mxu0 0
  %2542 = vmatpush1.bf16.msra.mxu0 0
  %2543 = vmatprep.subr.bf16.mxu0 0
  %2544 = vmatpush1.bf16.msra.mxu0 0
  %2545 = vmatprep.mubr.bf16.mxu0 0
  %2546 = vmatmul.mubr.bf16.gmra.mrb[0].mxu0 %v789
  %v2547 = vpop.f32.mrb[0].mxu0
  %v2548 = vadd.f32 0.0, %v2547
  %v2549 = vpop.f32.mrb[0].mxu0
  %v2550 = vadd.f32 0.0, %v2549
  %v2551 = vpop.f32.mrb[0].mxu0
  %v2552 = vpop.f32.mrb[0].mxu0
  %2553 = vdwg.mxu0
  %2554 = vmatprep.subr.bf16.mxu0 %v618
  %2555 = vmatpush1.bf16.msra.mxu0 %v617
  %2556 = vmatprep.subr.bf16.mxu0 0
  %2557 = vmatpush1.bf16.msra.mxu0 0
  %2558 = vmatprep.subr.bf16.mxu0 0
  %2559 = vmatpush1.bf16.msra.mxu0 0
  %2560 = vmatprep.subr.bf16.mxu0 0
  %2561 = vmatpush1.bf16.msra.mxu0 0
  %2562 = vmatprep.subr.bf16.mxu0 0
  %2563 = vmatpush1.bf16.msra.mxu0 0
  %2564 = vmatprep.subr.bf16.mxu0 0
  %2565 = vmatpush1.bf16.msra.mxu0 0
  %2566 = vmatprep.subr.bf16.mxu0 0
  %2567 = vmatpush1.bf16.msra.mxu0 0
  %2568 = vmatprep.subr.bf16.mxu0 0
  %2569 = vmatpush1.bf16.msra.mxu0 0
  %2570 = vmatprep.subr.bf16.mxu0 0
  %2571 = vmatpush1.bf16.msra.mxu0 0
  %2572 = vmatprep.subr.bf16.mxu0 0
  %2573 = vmatpush1.bf16.msra.mxu0 0
  %2574 = vmatprep.subr.bf16.mxu0 0
  %2575 = vmatpush1.bf16.msra.mxu0 0
  %2576 = vmatprep.subr.bf16.mxu0 0
  %2577 = vmatpush1.bf16.msra.mxu0 0
  %2578 = vmatprep.subr.bf16.mxu0 0
  %2579 = vmatpush1.bf16.msra.mxu0 0
  %2580 = vmatprep.subr.bf16.mxu0 0
  %2581 = vmatpush1.bf16.msra.mxu0 0
  %2582 = vmatprep.subr.bf16.mxu0 0
  %2583 = vmatpush1.bf16.msra.mxu0 0
  %2584 = vmatprep.subr.bf16.mxu0 0
  %2585 = vmatpush1.bf16.msra.mxu0 0
  %2586 = vmatprep.mubr.bf16.mxu0 0
  %2587 = vmatmul.mubr.bf16.gmra.mrb[0].mxu0 %v789
  %v2588 = vpop.f32.mrb[0].mxu0
  %v2589 = vadd.f32 0.0, %v2588
  %v2590 = vpop.f32.mrb[0].mxu0
  %v2591 = vadd.f32 0.0, %v2590
  %v2592 = vpop.f32.mrb[0].mxu0
  %v2593 = vpop.f32.mrb[0].mxu0
  %2594 = vdwg.mxu0
  %2595 = vmatprep.subr.bf16.mxu0 %v620
  %2596 = vmatpush1.bf16.msra.mxu0 %v619
  %2597 = vmatprep.subr.bf16.mxu0 0
  %2598 = vmatpush1.bf16.msra.mxu0 0
  %2599 = vmatprep.subr.bf16.mxu0 0
  %2600 = vmatpush1.bf16.msra.mxu0 0
  %2601 = vmatprep.subr.bf16.mxu0 0
  %2602 = vmatpush1.bf16.msra.mxu0 0
  %2603 = vmatprep.subr.bf16.mxu0 0
  %2604 = vmatpush1.bf16.msra.mxu0 0
  %2605 = vmatprep.subr.bf16.mxu0 0
  %2606 = vmatpush1.bf16.msra.mxu0 0
  %2607 = vmatprep.subr.bf16.mxu0 0
  %2608 = vmatpush1.bf16.msra.mxu0 0
  %2609 = vmatprep.subr.bf16.mxu0 0
  %2610 = vmatpush1.bf16.msra.mxu0 0
  %2611 = vmatprep.subr.bf16.mxu0 0
  %2612 = vmatpush1.bf16.msra.mxu0 0
  %2613 = vmatprep.subr.bf16.mxu0 0
  %2614 = vmatpush1.bf16.msra.mxu0 0
  %2615 = vmatprep.subr.bf16.mxu0 0
  %2616 = vmatpush1.bf16.msra.mxu0 0
  %2617 = vmatprep.subr.bf16.mxu0 0
  %2618 = vmatpush1.bf16.msra.mxu0 0
  %2619 = vmatprep.subr.bf16.mxu0 0
  %2620 = vmatpush1.bf16.msra.mxu0 0
  %2621 = vmatprep.subr.bf16.mxu0 0
  %2622 = vmatpush1.bf16.msra.mxu0 0
  %2623 = vmatprep.subr.bf16.mxu0 0
  %2624 = vmatpush1.bf16.msra.mxu0 0
  %2625 = vmatprep.subr.bf16.mxu0 0
  %2626 = vmatpush1.bf16.msra.mxu0 0
  %2627 = vmatprep.mubr.bf16.mxu0 0
  %2628 = vmatmul.mubr.bf16.gmra.mrb[0].mxu0 %v789
  %v2629 = vpop.f32.mrb[0].mxu0
  %v2630 = vadd.f32 0.0, %v2629
  %v2631 = vpop.f32.mrb[0].mxu0
  %v2632 = vadd.f32 0.0, %v2631
  %v2633 = vpop.f32.mrb[0].mxu0
  %v2634 = vpop.f32.mrb[0].mxu0
  %2635 = vdwg.mxu0
  %2636 = vmatprep.subr.bf16.mxu0 %v622
  %2637 = vmatpush1.bf16.msra.mxu0 %v621
  %2638 = vmatprep.subr.bf16.mxu0 0
  %2639 = vmatpush1.bf16.msra.mxu0 0
  %2640 = vmatprep.subr.bf16.mxu0 0
  %2641 = vmatpush1.bf16.msra.mxu0 0
  %2642 = vmatprep.subr.bf16.mxu0 0
  %2643 = vmatpush1.bf16.msra.mxu0 0
  %2644 = vmatprep.subr.bf16.mxu0 0
  %2645 = vmatpush1.bf16.msra.mxu0 0
  %2646 = vmatprep.subr.bf16.mxu0 0
  %2647 = vmatpush1.bf16.msra.mxu0 0
  %2648 = vmatprep.subr.bf16.mxu0 0
  %2649 = vmatpush1.bf16.msra.mxu0 0
  %2650 = vmatprep.subr.bf16.mxu0 0
  %2651 = vmatpush1.bf16.msra.mxu0 0
  %2652 = vmatprep.subr.bf16.mxu0 0
  %2653 = vmatpush1.bf16.msra.mxu0 0
  %2654 = vmatprep.subr.bf16.mxu0 0
  %2655 = vmatpush1.bf16.msra.mxu0 0
  %2656 = vmatprep.subr.bf16.mxu0 0
  %2657 = vmatpush1.bf16.msra.mxu0 0
  %2658 = vmatprep.subr.bf16.mxu0 0
  %2659 = vmatpush1.bf16.msra.mxu0 0
  %2660 = vmatprep.subr.bf16.mxu0 0
  %2661 = vmatpush1.bf16.msra.mxu0 0
  %2662 = vmatprep.subr.bf16.mxu0 0
  %2663 = vmatpush1.bf16.msra.mxu0 0
  %2664 = vmatprep.subr.bf16.mxu0 0
  %2665 = vmatpush1.bf16.msra.mxu0 0
  %2666 = vmatprep.subr.bf16.mxu0 0
  %2667 = vmatpush1.bf16.msra.mxu0 0
  %2668 = vmatprep.mubr.bf16.mxu0 0
  %2669 = vmatmul.mubr.bf16.gmra.mrb[0].mxu0 %v789
  %v2670 = vpop.f32.mrb[0].mxu0
  %v2671 = vadd.f32 0.0, %v2670
  %v2672 = vpop.f32.mrb[0].mxu0
  %v2673 = vadd.f32 0.0, %v2672
  %v2674 = vpop.f32.mrb[0].mxu0
  %v2675 = vpop.f32.mrb[0].mxu0
  %2676 = vdwg.mxu0
  %2677 = vmatprep.subr.bf16.mxu0 %v624
  %2678 = vmatpush1.bf16.msra.mxu0 %v623
  %2679 = vmatprep.subr.bf16.mxu0 0
  %2680 = vmatpush1.bf16.msra.mxu0 0
  %2681 = vmatprep.subr.bf16.mxu0 0
  %2682 = vmatpush1.bf16.msra.mxu0 0
  %2683 = vmatprep.subr.bf16.mxu0 0
  %2684 = vmatpush1.bf16.msra.mxu0 0
  %2685 = vmatprep.subr.bf16.mxu0 0
  %2686 = vmatpush1.bf16.msra.mxu0 0
  %2687 = vmatprep.subr.bf16.mxu0 0
  %2688 = vmatpush1.bf16.msra.mxu0 0
  %2689 = vmatprep.subr.bf16.mxu0 0
  %2690 = vmatpush1.bf16.msra.mxu0 0
  %2691 = vmatprep.subr.bf16.mxu0 0
  %2692 = vmatpush1.bf16.msra.mxu0 0
  %2693 = vmatprep.subr.bf16.mxu0 0
  %2694 = vmatpush1.bf16.msra.mxu0 0
  %2695 = vmatprep.subr.bf16.mxu0 0
  %2696 = vmatpush1.bf16.msra.mxu0 0
  %2697 = vmatprep.subr.bf16.mxu0 0
  %2698 = vmatpush1.bf16.msra.mxu0 0
  %2699 = vmatprep.subr.bf16.mxu0 0
  %2700 = vmatpush1.bf16.msra.mxu0 0
  %2701 = vmatprep.subr.bf16.mxu0 0
  %2702 = vmatpush1.bf16.msra.mxu0 0
  %2703 = vmatprep.subr.bf16.mxu0 0
  %2704 = vmatpush1.bf16.msra.mxu0 0
  %2705 = vmatprep.subr.bf16.mxu0 0
  %2706 = vmatpush1.bf16.msra.mxu0 0
  %2707 = vmatprep.subr.bf16.mxu0 0
  %2708 = vmatpush1.bf16.msra.mxu0 0
  %2709 = vmatprep.mubr.bf16.mxu0 0
  %2710 = vmatmul.mubr.bf16.gmra.mrb[0].mxu0 %v789
  %v2711 = vpop.f32.mrb[0].mxu0
  %v2712 = vadd.f32 0.0, %v2711
  %v2713 = vpop.f32.mrb[0].mxu0
  %v2714 = vadd.f32 0.0, %v2713
  %v2715 = vpop.f32.mrb[0].mxu0
  %v2716 = vpop.f32.mrb[0].mxu0
  %2717 = vdwg.mxu0
  %2718 = vmatprep.subr.bf16.mxu0 %v626
  %2719 = vmatpush1.bf16.msra.mxu0 %v625
  %2720 = vmatprep.subr.bf16.mxu0 0
  %2721 = vmatpush1.bf16.msra.mxu0 0
  %2722 = vmatprep.subr.bf16.mxu0 0
  %2723 = vmatpush1.bf16.msra.mxu0 0
  %2724 = vmatprep.subr.bf16.mxu0 0
  %2725 = vmatpush1.bf16.msra.mxu0 0
  %2726 = vmatprep.subr.bf16.mxu0 0
  %2727 = vmatpush1.bf16.msra.mxu0 0
  %2728 = vmatprep.subr.bf16.mxu0 0
  %2729 = vmatpush1.bf16.msra.mxu0 0
  %2730 = vmatprep.subr.bf16.mxu0 0
  %2731 = vmatpush1.bf16.msra.mxu0 0
  %2732 = vmatprep.subr.bf16.mxu0 0
  %2733 = vmatpush1.bf16.msra.mxu0 0
  %2734 = vmatprep.subr.bf16.mxu0 0
  %2735 = vmatpush1.bf16.msra.mxu0 0
  %2736 = vmatprep.subr.bf16.mxu0 0
  %2737 = vmatpush1.bf16.msra.mxu0 0
  %2738 = vmatprep.subr.bf16.mxu0 0
  %2739 = vmatpush1.bf16.msra.mxu0 0
  %2740 = vmatprep.subr.bf16.mxu0 0
  %2741 = vmatpush1.bf16.msra.mxu0 0
  %2742 = vmatprep.subr.bf16.mxu0 0
  %2743 = vmatpush1.bf16.msra.mxu0 0
  %2744 = vmatprep.subr.bf16.mxu0 0
  %2745 = vmatpush1.bf16.msra.mxu0 0
  %2746 = vmatprep.subr.bf16.mxu0 0
  %2747 = vmatpush1.bf16.msra.mxu0 0
  %2748 = vmatprep.subr.bf16.mxu0 0
  %2749 = vmatpush1.bf16.msra.mxu0 0
  %2750 = vmatprep.mubr.bf16.mxu0 0
  %2751 = vmatmul.mubr.bf16.gmra.mrb[0].mxu0 %v789
  %v2752 = vpop.f32.mrb[0].mxu0
  %v2753 = vadd.f32 0.0, %v2752
  %v2754 = vpop.f32.mrb[0].mxu0
  %v2755 = vadd.f32 0.0, %v2754
  %v2756 = vpop.f32.mrb[0].mxu0
  %v2757 = vpop.f32.mrb[0].mxu0
  %2758 = vdwg.mxu0
  %2759 = vmatprep.subr.bf16.mxu0 %v628
  %2760 = vmatpush1.bf16.msra.mxu0 %v627
  %2761 = vmatprep.subr.bf16.mxu0 0
  %2762 = vmatpush1.bf16.msra.mxu0 0
  %2763 = vmatprep.subr.bf16.mxu0 0
  %2764 = vmatpush1.bf16.msra.mxu0 0
  %2765 = vmatprep.subr.bf16.mxu0 0
  %2766 = vmatpush1.bf16.msra.mxu0 0
  %2767 = vmatprep.subr.bf16.mxu0 0
  %2768 = vmatpush1.bf16.msra.mxu0 0
  %2769 = vmatprep.subr.bf16.mxu0 0
  %2770 = vmatpush1.bf16.msra.mxu0 0
  %2771 = vmatprep.subr.bf16.mxu0 0
  %2772 = vmatpush1.bf16.msra.mxu0 0
  %2773 = vmatprep.subr.bf16.mxu0 0
  %2774 = vmatpush1.bf16.msra.mxu0 0
  %2775 = vmatprep.subr.bf16.mxu0 0
  %2776 = vmatpush1.bf16.msra.mxu0 0
  %2777 = vmatprep.subr.bf16.mxu0 0
  %2778 = vmatpush1.bf16.msra.mxu0 0
  %2779 = vmatprep.subr.bf16.mxu0 0
  %2780 = vmatpush1.bf16.msra.mxu0 0
  %2781 = vmatprep.subr.bf16.mxu0 0
  %2782 = vmatpush1.bf16.msra.mxu0 0
  %2783 = vmatprep.subr.bf16.mxu0 0
  %2784 = vmatpush1.bf16.msra.mxu0 0
  %2785 = vmatprep.subr.bf16.mxu0 0
  %2786 = vmatpush1.bf16.msra.mxu0 0
  %2787 = vmatprep.subr.bf16.mxu0 0
  %2788 = vmatpush1.bf16.msra.mxu0 0
  %2789 = vmatprep.subr.bf16.mxu0 0
  %2790 = vmatpush1.bf16.msra.mxu0 0
  %2791 = vmatprep.mubr.bf16.mxu0 0
  %2792 = vmatmul.mubr.bf16.gmra.mrb[0].mxu0 %v789
  %v2793 = vpop.f32.mrb[0].mxu0
  %v2794 = vadd.f32 0.0, %v2793
  %v2795 = vpop.f32.mrb[0].mxu0
  %v2796 = vadd.f32 0.0, %v2795
  %v2797 = vpop.f32.mrb[0].mxu0
  %v2798 = vpop.f32.mrb[0].mxu0
  %2799 = vdwg.mxu0
  %2800 = vmatprep.subr.bf16.mxu0 %v630
  %2801 = vmatpush1.bf16.msra.mxu0 %v629
  %2802 = vmatprep.subr.bf16.mxu0 0
  %2803 = vmatpush1.bf16.msra.mxu0 0
  %2804 = vmatprep.subr.bf16.mxu0 0
  %2805 = vmatpush1.bf16.msra.mxu0 0
  %2806 = vmatprep.subr.bf16.mxu0 0
  %2807 = vmatpush1.bf16.msra.mxu0 0
  %2808 = vmatprep.subr.bf16.mxu0 0
  %2809 = vmatpush1.bf16.msra.mxu0 0
  %2810 = vmatprep.subr.bf16.mxu0 0
  %2811 = vmatpush1.bf16.msra.mxu0 0
  %2812 = vmatprep.subr.bf16.mxu0 0
  %2813 = vmatpush1.bf16.msra.mxu0 0
  %2814 = vmatprep.subr.bf16.mxu0 0
  %2815 = vmatpush1.bf16.msra.mxu0 0
  %2816 = vmatprep.subr.bf16.mxu0 0
  %2817 = vmatpush1.bf16.msra.mxu0 0
  %2818 = vmatprep.subr.bf16.mxu0 0
  %2819 = vmatpush1.bf16.msra.mxu0 0
  %2820 = vmatprep.subr.bf16.mxu0 0
  %2821 = vmatpush1.bf16.msra.mxu0 0
  %2822 = vmatprep.subr.bf16.mxu0 0
  %2823 = vmatpush1.bf16.msra.mxu0 0
  %2824 = vmatprep.subr.bf16.mxu0 0
  %2825 = vmatpush1.bf16.msra.mxu0 0
  %2826 = vmatprep.subr.bf16.mxu0 0
  %2827 = vmatpush1.bf16.msra.mxu0 0
  %2828 = vmatprep.subr.bf16.mxu0 0
  %2829 = vmatpush1.bf16.msra.mxu0 0
  %2830 = vmatprep.subr.bf16.mxu0 0
  %2831 = vmatpush1.bf16.msra.mxu0 0
  %2832 = vmatprep.mubr.bf16.mxu0 0
  %2833 = vmatmul.mubr.bf16.gmra.mrb[0].mxu0 %v789
  %v2834 = vpop.f32.mrb[0].mxu0
  %v2835 = vadd.f32 0.0, %v2834
  %v2836 = vpop.f32.mrb[0].mxu0
  %v2837 = vadd.f32 0.0, %v2836
  %v2838 = vpop.f32.mrb[0].mxu0
  %v2839 = vpop.f32.mrb[0].mxu0
  %2840 = vdwg.mxu0
  %2841 = vmatprep.subr.bf16.mxu0 %v632
  %2842 = vmatpush1.bf16.msra.mxu0 %v631
  %2843 = vmatprep.subr.bf16.mxu0 0
  %2844 = vmatpush1.bf16.msra.mxu0 0
  %2845 = vmatprep.subr.bf16.mxu0 0
  %2846 = vmatpush1.bf16.msra.mxu0 0
  %2847 = vmatprep.subr.bf16.mxu0 0
  %2848 = vmatpush1.bf16.msra.mxu0 0
  %2849 = vmatprep.subr.bf16.mxu0 0
  %2850 = vmatpush1.bf16.msra.mxu0 0
  %2851 = vmatprep.subr.bf16.mxu0 0
  %2852 = vmatpush1.bf16.msra.mxu0 0
  %2853 = vmatprep.subr.bf16.mxu0 0
  %2854 = vmatpush1.bf16.msra.mxu0 0
  %2855 = vmatprep.subr.bf16.mxu0 0
  %2856 = vmatpush1.bf16.msra.mxu0 0
  %2857 = vmatprep.subr.bf16.mxu0 0
  %2858 = vmatpush1.bf16.msra.mxu0 0
  %2859 = vmatprep.subr.bf16.mxu0 0
  %2860 = vmatpush1.bf16.msra.mxu0 0
  %2861 = vmatprep.subr.bf16.mxu0 0
  %2862 = vmatpush1.bf16.msra.mxu0 0
  %2863 = vmatprep.subr.bf16.mxu0 0
  %2864 = vmatpush1.bf16.msra.mxu0 0
  %2865 = vmatprep.subr.bf16.mxu0 0
  %2866 = vmatpush1.bf16.msra.mxu0 0
  %2867 = vmatprep.subr.bf16.mxu0 0
  %2868 = vmatpush1.bf16.msra.mxu0 0
  %2869 = vmatprep.subr.bf16.mxu0 0
  %2870 = vmatpush1.bf16.msra.mxu0 0
  %2871 = vmatprep.subr.bf16.mxu0 0
  %2872 = vmatpush1.bf16.msra.mxu0 0
  %2873 = vmatprep.mubr.bf16.mxu0 0
  %2874 = vmatmul.mubr.bf16.gmra.mrb[0].mxu0 %v789
  %v2875 = vpop.f32.mrb[0].mxu0
  %v2876 = vadd.f32 0.0, %v2875
  %v2877 = vpop.f32.mrb[0].mxu0
  %v2878 = vadd.f32 0.0, %v2877
  %v2879 = vpop.f32.mrb[0].mxu0
  %v2880 = vpop.f32.mrb[0].mxu0
  %2881 = vdwg.mxu0
  %2882 = vmatprep.subr.bf16.mxu0 %v634
  %2883 = vmatpush1.bf16.msra.mxu0 %v633
  %2884 = vmatprep.subr.bf16.mxu0 0
  %2885 = vmatpush1.bf16.msra.mxu0 0
  %2886 = vmatprep.subr.bf16.mxu0 0
  %2887 = vmatpush1.bf16.msra.mxu0 0
  %2888 = vmatprep.subr.bf16.mxu0 0
  %2889 = vmatpush1.bf16.msra.mxu0 0
  %2890 = vmatprep.subr.bf16.mxu0 0
  %2891 = vmatpush1.bf16.msra.mxu0 0
  %2892 = vmatprep.subr.bf16.mxu0 0
  %2893 = vmatpush1.bf16.msra.mxu0 0
  %2894 = vmatprep.subr.bf16.mxu0 0
  %2895 = vmatpush1.bf16.msra.mxu0 0
  %2896 = vmatprep.subr.bf16.mxu0 0
  %2897 = vmatpush1.bf16.msra.mxu0 0
  %2898 = vmatprep.subr.bf16.mxu0 0
  %2899 = vmatpush1.bf16.msra.mxu0 0
  %2900 = vmatprep.subr.bf16.mxu0 0
  %2901 = vmatpush1.bf16.msra.mxu0 0
  %2902 = vmatprep.subr.bf16.mxu0 0
  %2903 = vmatpush1.bf16.msra.mxu0 0
  %2904 = vmatprep.subr.bf16.mxu0 0
  %2905 = vmatpush1.bf16.msra.mxu0 0
  %2906 = vmatprep.subr.bf16.mxu0 0
  %2907 = vmatpush1.bf16.msra.mxu0 0
  %2908 = vmatprep.subr.bf16.mxu0 0
  %2909 = vmatpush1.bf16.msra.mxu0 0
  %2910 = vmatprep.subr.bf16.mxu0 0
  %2911 = vmatpush1.bf16.msra.mxu0 0
  %2912 = vmatprep.subr.bf16.mxu0 0
  %2913 = vmatpush1.bf16.msra.mxu0 0
  %2914 = vmatprep.mubr.bf16.mxu0 0
  %2915 = vmatmul.mubr.bf16.gmra.mrb[0].mxu0 %v789
  %v2916 = vpop.f32.mrb[0].mxu0
  %v2917 = vadd.f32 0.0, %v2916
  %v2918 = vpop.f32.mrb[0].mxu0
  %v2919 = vadd.f32 0.0, %v2918
  %v2920 = vpop.f32.mrb[0].mxu0
  %v2921 = vpop.f32.mrb[0].mxu0
  %2922 = vdwg.mxu0
  %2923 = vmatprep.subr.bf16.mxu0 %v636
  %2924 = vmatpush1.bf16.msra.mxu0 %v635
  %2925 = vmatprep.subr.bf16.mxu0 0
  %2926 = vmatpush1.bf16.msra.mxu0 0
  %2927 = vmatprep.subr.bf16.mxu0 0
  %2928 = vmatpush1.bf16.msra.mxu0 0
  %2929 = vmatprep.subr.bf16.mxu0 0
  %2930 = vmatpush1.bf16.msra.mxu0 0
  %2931 = vmatprep.subr.bf16.mxu0 0
  %2932 = vmatpush1.bf16.msra.mxu0 0
  %2933 = vmatprep.subr.bf16.mxu0 0
  %2934 = vmatpush1.bf16.msra.mxu0 0
  %2935 = vmatprep.subr.bf16.mxu0 0
  %2936 = vmatpush1.bf16.msra.mxu0 0
  %2937 = vmatprep.subr.bf16.mxu0 0
  %2938 = vmatpush1.bf16.msra.mxu0 0
  %2939 = vmatprep.subr.bf16.mxu0 0
  %2940 = vmatpush1.bf16.msra.mxu0 0
  %2941 = vmatprep.subr.bf16.mxu0 0
  %2942 = vmatpush1.bf16.msra.mxu0 0
  %2943 = vmatprep.subr.bf16.mxu0 0
  %2944 = vmatpush1.bf16.msra.mxu0 0
  %2945 = vmatprep.subr.bf16.mxu0 0
  %2946 = vmatpush1.bf16.msra.mxu0 0
  %2947 = vmatprep.subr.bf16.mxu0 0
  %2948 = vmatpush1.bf16.msra.mxu0 0
  %2949 = vmatprep.subr.bf16.mxu0 0
  %2950 = vmatpush1.bf16.msra.mxu0 0
  %2951 = vmatprep.subr.bf16.mxu0 0
  %2952 = vmatpush1.bf16.msra.mxu0 0
  %2953 = vmatprep.subr.bf16.mxu0 0
  %2954 = vmatpush1.bf16.msra.mxu0 0
  %2955 = vmatprep.mubr.bf16.mxu0 0
  %2956 = vmatmul.mubr.bf16.gmra.mrb[0].mxu0 %v789
  %v2957 = vpop.f32.mrb[0].mxu0
  %v2958 = vadd.f32 0.0, %v2957
  %v2959 = vpop.f32.mrb[0].mxu0
  %v2960 = vadd.f32 0.0, %v2959
  %v2961 = vpop.f32.mrb[0].mxu0
  %v2962 = vpop.f32.mrb[0].mxu0
  %2963 = vdwg.mxu0
  %2964 = vmatprep.subr.bf16.mxu0 %v638
  %2965 = vmatpush1.bf16.msra.mxu0 %v637
  %2966 = vmatprep.subr.bf16.mxu0 0
  %2967 = vmatpush1.bf16.msra.mxu0 0
  %2968 = vmatprep.subr.bf16.mxu0 0
  %2969 = vmatpush1.bf16.msra.mxu0 0
  %2970 = vmatprep.subr.bf16.mxu0 0
  %2971 = vmatpush1.bf16.msra.mxu0 0
  %2972 = vmatprep.subr.bf16.mxu0 0
  %2973 = vmatpush1.bf16.msra.mxu0 0
  %2974 = vmatprep.subr.bf16.mxu0 0
  %2975 = vmatpush1.bf16.msra.mxu0 0
  %2976 = vmatprep.subr.bf16.mxu0 0
  %2977 = vmatpush1.bf16.msra.mxu0 0
  %2978 = vmatprep.subr.bf16.mxu0 0
  %2979 = vmatpush1.bf16.msra.mxu0 0
  %2980 = vmatprep.subr.bf16.mxu0 0
  %2981 = vmatpush1.bf16.msra.mxu0 0
  %2982 = vmatprep.subr.bf16.mxu0 0
  %2983 = vmatpush1.bf16.msra.mxu0 0
  %2984 = vmatprep.subr.bf16.mxu0 0
  %2985 = vmatpush1.bf16.msra.mxu0 0
  %2986 = vmatprep.subr.bf16.mxu0 0
  %2987 = vmatpush1.bf16.msra.mxu0 0
  %2988 = vmatprep.subr.bf16.mxu0 0
  %2989 = vmatpush1.bf16.msra.mxu0 0
  %2990 = vmatprep.subr.bf16.mxu0 0
  %2991 = vmatpush1.bf16.msra.mxu0 0
  %2992 = vmatprep.subr.bf16.mxu0 0
  %2993 = vmatpush1.bf16.msra.mxu0 0
  %2994 = vmatprep.subr.bf16.mxu0 0
  %2995 = vmatpush1.bf16.msra.mxu0 0
  %2996 = vmatprep.mubr.bf16.mxu0 0
  %2997 = vmatmul.mubr.bf16.gmra.mrb[0].mxu0 %v789
  %v2998 = vpop.f32.mrb[0].mxu0
  %v2999 = vadd.f32 0.0, %v2998
  %v3000 = vpop.f32.mrb[0].mxu0
  %v3001 = vadd.f32 0.0, %v3000
  %v3002 = vpop.f32.mrb[0].mxu0
  %v3003 = vpop.f32.mrb[0].mxu0
  %3004 = vdwg.mxu0
  %3005 = vmatprep.subr.bf16.mxu0 %v640
  %3006 = vmatpush1.bf16.msra.mxu0 %v639
  %3007 = vmatprep.subr.bf16.mxu0 0
  %3008 = vmatpush1.bf16.msra.mxu0 0
  %3009 = vmatprep.subr.bf16.mxu0 0
  %3010 = vmatpush1.bf16.msra.mxu0 0
  %3011 = vmatprep.subr.bf16.mxu0 0
  %3012 = vmatpush1.bf16.msra.mxu0 0
  %3013 = vmatprep.subr.bf16.mxu0 0
  %3014 = vmatpush1.bf16.msra.mxu0 0
  %3015 = vmatprep.subr.bf16.mxu0 0
  %3016 = vmatpush1.bf16.msra.mxu0 0
  %3017 = vmatprep.subr.bf16.mxu0 0
  %3018 = vmatpush1.bf16.msra.mxu0 0
  %3019 = vmatprep.subr.bf16.mxu0 0
  %3020 = vmatpush1.bf16.msra.mxu0 0
  %3021 = vmatprep.subr.bf16.mxu0 0
  %3022 = vmatpush1.bf16.msra.mxu0 0
  %3023 = vmatprep.subr.bf16.mxu0 0
  %3024 = vmatpush1.bf16.msra.mxu0 0
  %3025 = vmatprep.subr.bf16.mxu0 0
  %3026 = vmatpush1.bf16.msra.mxu0 0
  %3027 = vmatprep.subr.bf16.mxu0 0
  %3028 = vmatpush1.bf16.msra.mxu0 0
  %3029 = vmatprep.subr.bf16.mxu0 0
  %3030 = vmatpush1.bf16.msra.mxu0 0
  %3031 = vmatprep.subr.bf16.mxu0 0
  %3032 = vmatpush1.bf16.msra.mxu0 0
  %3033 = vmatprep.subr.bf16.mxu0 0
  %3034 = vmatpush1.bf16.msra.mxu0 0
  %3035 = vmatprep.subr.bf16.mxu0 0
  %3036 = vmatpush1.bf16.msra.mxu0 0
  %3037 = vmatprep.mubr.bf16.mxu0 0
  %3038 = vmatmul.mubr.bf16.gmra.mrb[0].mxu0 %v789
  %v3039 = vpop.f32.mrb[0].mxu0
  %v3040 = vadd.f32 0.0, %v3039
  %v3041 = vpop.f32.mrb[0].mxu0
  %v3042 = vadd.f32 0.0, %v3041
  %v3043 = vpop.f32.mrb[0].mxu0
  %v3044 = vpop.f32.mrb[0].mxu0
  %3045 = vdwg.mxu0
  %3046 = vmatprep.subr.bf16.mxu0 %v642
  %3047 = vmatpush1.bf16.msra.mxu0 %v641
  %3048 = vmatprep.subr.bf16.mxu0 0
  %3049 = vmatpush1.bf16.msra.mxu0 0
  %3050 = vmatprep.subr.bf16.mxu0 0
  %3051 = vmatpush1.bf16.msra.mxu0 0
  %3052 = vmatprep.subr.bf16.mxu0 0
  %3053 = vmatpush1.bf16.msra.mxu0 0
  %3054 = vmatprep.subr.bf16.mxu0 0
  %3055 = vmatpush1.bf16.msra.mxu0 0
  %3056 = vmatprep.subr.bf16.mxu0 0
  %3057 = vmatpush1.bf16.msra.mxu0 0
  %3058 = vmatprep.subr.bf16.mxu0 0
  %3059 = vmatpush1.bf16.msra.mxu0 0
  %3060 = vmatprep.subr.bf16.mxu0 0
  %3061 = vmatpush1.bf16.msra.mxu0 0
  %3062 = vmatprep.subr.bf16.mxu0 0
  %3063 = vmatpush1.bf16.msra.mxu0 0
  %3064 = vmatprep.subr.bf16.mxu0 0
  %3065 = vmatpush1.bf16.msra.mxu0 0
  %3066 = vmatprep.subr.bf16.mxu0 0
  %3067 = vmatpush1.bf16.msra.mxu0 0
  %3068 = vmatprep.subr.bf16.mxu0 0
  %3069 = vmatpush1.bf16.msra.mxu0 0
  %3070 = vmatprep.subr.bf16.mxu0 0
  %3071 = vmatpush1.bf16.msra.mxu0 0
  %3072 = vmatprep.subr.bf16.mxu0 0
  %3073 = vmatpush1.bf16.msra.mxu0 0
  %3074 = vmatprep.subr.bf16.mxu0 0
  %3075 = vmatpush1.bf16.msra.mxu0 0
  %3076 = vmatprep.subr.bf16.mxu0 0
  %3077 = vmatpush1.bf16.msra.mxu0 0
  %3078 = vmatprep.mubr.bf16.mxu0 0
  %3079 = vmatmul.mubr.bf16.gmra.mrb[0].mxu0 %v789
  %v3080 = vpop.f32.mrb[0].mxu0
  %v3081 = vadd.f32 0.0, %v3080
  %v3082 = vpop.f32.mrb[0].mxu0
  %v3083 = vadd.f32 0.0, %v3082
  %v3084 = vpop.f32.mrb[0].mxu0
  %v3085 = vpop.f32.mrb[0].mxu0
  %3086 = vdwg.mxu0
  %3087 = vmatprep.subr.bf16.mxu0 %v644
  %3088 = vmatpush1.bf16.msra.mxu0 %v643
  %3089 = vmatprep.subr.bf16.mxu0 0
  %3090 = vmatpush1.bf16.msra.mxu0 0
  %3091 = vmatprep.subr.bf16.mxu0 0
  %3092 = vmatpush1.bf16.msra.mxu0 0
  %3093 = vmatprep.subr.bf16.mxu0 0
  %3094 = vmatpush1.bf16.msra.mxu0 0
  %3095 = vmatprep.subr.bf16.mxu0 0
  %3096 = vmatpush1.bf16.msra.mxu0 0
  %3097 = vmatprep.subr.bf16.mxu0 0
  %3098 = vmatpush1.bf16.msra.mxu0 0
  %3099 = vmatprep.subr.bf16.mxu0 0
  %3100 = vmatpush1.bf16.msra.mxu0 0
  %3101 = vmatprep.subr.bf16.mxu0 0
  %3102 = vmatpush1.bf16.msra.mxu0 0
  %3103 = vmatprep.subr.bf16.mxu0 0
  %3104 = vmatpush1.bf16.msra.mxu0 0
  %3105 = vmatprep.subr.bf16.mxu0 0
  %3106 = vmatpush1.bf16.msra.mxu0 0
  %3107 = vmatprep.subr.bf16.mxu0 0
  %3108 = vmatpush1.bf16.msra.mxu0 0
  %3109 = vmatprep.subr.bf16.mxu0 0
  %3110 = vmatpush1.bf16.msra.mxu0 0
  %3111 = vmatprep.subr.bf16.mxu0 0
  %3112 = vmatpush1.bf16.msra.mxu0 0
  %3113 = vmatprep.subr.bf16.mxu0 0
  %3114 = vmatpush1.bf16.msra.mxu0 0
  %3115 = vmatprep.subr.bf16.mxu0 0
  %3116 = vmatpush1.bf16.msra.mxu0 0
  %3117 = vmatprep.subr.bf16.mxu0 0
  %3118 = vmatpush1.bf16.msra.mxu0 0
  %3119 = vmatprep.mubr.bf16.mxu0 0
  %3120 = vmatmul.mubr.bf16.gmra.mrb[0].mxu0 %v789
  %v3121 = vpop.f32.mrb[0].mxu0
  %v3122 = vadd.f32 0.0, %v3121
  %v3123 = vpop.f32.mrb[0].mxu0
  %v3124 = vadd.f32 0.0, %v3123
  %v3125 = vpop.f32.mrb[0].mxu0
  %v3126 = vpop.f32.mrb[0].mxu0
  %3127 = vdwg.mxu0
  %3128 = vmatprep.subr.bf16.mxu0 %v646
  %3129 = vmatpush1.bf16.msra.mxu0 %v645
  %3130 = vmatprep.subr.bf16.mxu0 0
  %3131 = vmatpush1.bf16.msra.mxu0 0
  %3132 = vmatprep.subr.bf16.mxu0 0
  %3133 = vmatpush1.bf16.msra.mxu0 0
  %3134 = vmatprep.subr.bf16.mxu0 0
  %3135 = vmatpush1.bf16.msra.mxu0 0
  %3136 = vmatprep.subr.bf16.mxu0 0
  %3137 = vmatpush1.bf16.msra.mxu0 0
  %3138 = vmatprep.subr.bf16.mxu0 0
  %3139 = vmatpush1.bf16.msra.mxu0 0
  %3140 = vmatprep.subr.bf16.mxu0 0
  %3141 = vmatpush1.bf16.msra.mxu0 0
  %3142 = vmatprep.subr.bf16.mxu0 0
  %3143 = vmatpush1.bf16.msra.mxu0 0
  %3144 = vmatprep.subr.bf16.mxu0 0
  %3145 = vmatpush1.bf16.msra.mxu0 0
  %3146 = vmatprep.subr.bf16.mxu0 0
  %3147 = vmatpush1.bf16.msra.mxu0 0
  %3148 = vmatprep.subr.bf16.mxu0 0
  %3149 = vmatpush1.bf16.msra.mxu0 0
  %3150 = vmatprep.subr.bf16.mxu0 0
  %3151 = vmatpush1.bf16.msra.mxu0 0
  %3152 = vmatprep.subr.bf16.mxu0 0
  %3153 = vmatpush1.bf16.msra.mxu0 0
  %3154 = vmatprep.subr.bf16.mxu0 0
  %3155 = vmatpush1.bf16.msra.mxu0 0
  %3156 = vmatprep.subr.bf16.mxu0 0
  %3157 = vmatpush1.bf16.msra.mxu0 0
  %3158 = vmatprep.subr.bf16.mxu0 0
  %3159 = vmatpush1.bf16.msra.mxu0 0
  %3160 = vmatprep.mubr.bf16.mxu0 0
  %3161 = vmatmul.mubr.bf16.gmra.mrb[0].mxu0 %v789
  %v3162 = vpop.f32.mrb[0].mxu0
  %v3163 = vadd.f32 0.0, %v3162
  %v3164 = vpop.f32.mrb[0].mxu0
  %v3165 = vadd.f32 0.0, %v3164
  %v3166 = vpop.f32.mrb[0].mxu0
  %v3167 = vpop.f32.mrb[0].mxu0
  %3168 = vdwg.mxu0
  %3169 = vmatprep.subr.bf16.mxu0 %v648
  %3170 = vmatpush1.bf16.msra.mxu0 %v647
  %3171 = vmatprep.subr.bf16.mxu0 0
  %3172 = vmatpush1.bf16.msra.mxu0 0
  %3173 = vmatprep.subr.bf16.mxu0 0
  %3174 = vmatpush1.bf16.msra.mxu0 0
  %3175 = vmatprep.subr.bf16.mxu0 0
  %3176 = vmatpush1.bf16.msra.mxu0 0
  %3177 = vmatprep.subr.bf16.mxu0 0
  %3178 = vmatpush1.bf16.msra.mxu0 0
  %3179 = vmatprep.subr.bf16.mxu0 0
  %3180 = vmatpush1.bf16.msra.mxu0 0
  %3181 = vmatprep.subr.bf16.mxu0 0
  %3182 = vmatpush1.bf16.msra.mxu0 0
  %3183 = vmatprep.subr.bf16.mxu0 0
  %3184 = vmatpush1.bf16.msra.mxu0 0
  %3185 = vmatprep.subr.bf16.mxu0 0
  %3186 = vmatpush1.bf16.msra.mxu0 0
  %3187 = vmatprep.subr.bf16.mxu0 0
  %3188 = vmatpush1.bf16.msra.mxu0 0
  %3189 = vmatprep.subr.bf16.mxu0 0
  %3190 = vmatpush1.bf16.msra.mxu0 0
  %3191 = vmatprep.subr.bf16.mxu0 0
  %3192 = vmatpush1.bf16.msra.mxu0 0
  %3193 = vmatprep.subr.bf16.mxu0 0
  %3194 = vmatpush1.bf16.msra.mxu0 0
  %3195 = vmatprep.subr.bf16.mxu0 0
  %3196 = vmatpush1.bf16.msra.mxu0 0
  %3197 = vmatprep.subr.bf16.mxu0 0
  %3198 = vmatpush1.bf16.msra.mxu0 0
  %3199 = vmatprep.subr.bf16.mxu0 0
  %3200 = vmatpush1.bf16.msra.mxu0 0
  %3201 = vmatprep.mubr.bf16.mxu0 0
  %3202 = vmatmul.mubr.bf16.gmra.mrb[0].mxu0 %v789
  %v3203 = vpop.f32.mrb[0].mxu0
  %v3204 = vadd.f32 0.0, %v3203
  %v3205 = vpop.f32.mrb[0].mxu0
  %v3206 = vadd.f32 0.0, %v3205
  %v3207 = vpop.f32.mrb[0].mxu0
  %v3208 = vpop.f32.mrb[0].mxu0
  %3209 = vdwg.mxu0
  %3210 = vmatprep.subr.bf16.mxu0 %v650
  %3211 = vmatpush1.bf16.msra.mxu0 %v649
  %3212 = vmatprep.subr.bf16.mxu0 0
  %3213 = vmatpush1.bf16.msra.mxu0 0
  %3214 = vmatprep.subr.bf16.mxu0 0
  %3215 = vmatpush1.bf16.msra.mxu0 0
  %3216 = vmatprep.subr.bf16.mxu0 0
  %3217 = vmatpush1.bf16.msra.mxu0 0
  %3218 = vmatprep.subr.bf16.mxu0 0
  %3219 = vmatpush1.bf16.msra.mxu0 0
  %3220 = vmatprep.subr.bf16.mxu0 0
  %3221 = vmatpush1.bf16.msra.mxu0 0
  %3222 = vmatprep.subr.bf16.mxu0 0
  %3223 = vmatpush1.bf16.msra.mxu0 0
  %3224 = vmatprep.subr.bf16.mxu0 0
  %3225 = vmatpush1.bf16.msra.mxu0 0
  %3226 = vmatprep.subr.bf16.mxu0 0
  %3227 = vmatpush1.bf16.msra.mxu0 0
  %3228 = vmatprep.subr.bf16.mxu0 0
  %3229 = vmatpush1.bf16.msra.mxu0 0
  %3230 = vmatprep.subr.bf16.mxu0 0
  %3231 = vmatpush1.bf16.msra.mxu0 0
  %3232 = vmatprep.subr.bf16.mxu0 0
  %3233 = vmatpush1.bf16.msra.mxu0 0
  %3234 = vmatprep.subr.bf16.mxu0 0
  %3235 = vmatpush1.bf16.msra.mxu0 0
  %3236 = vmatprep.subr.bf16.mxu0 0
  %3237 = vmatpush1.bf16.msra.mxu0 0
  %3238 = vmatprep.subr.bf16.mxu0 0
  %3239 = vmatpush1.bf16.msra.mxu0 0
  %3240 = vmatprep.subr.bf16.mxu0 0
  %3241 = vmatpush1.bf16.msra.mxu0 0
  %3242 = vmatprep.mubr.bf16.mxu0 0
  %3243 = vmatmul.mubr.bf16.gmra.mrb[0].mxu0 %v789
  %v3244 = vpop.f32.mrb[0].mxu0
  %v3245 = vadd.f32 0.0, %v3244
  %v3246 = vpop.f32.mrb[0].mxu0
  %v3247 = vadd.f32 0.0, %v3246
  %v3248 = vpop.f32.mrb[0].mxu0
  %v3249 = vpop.f32.mrb[0].mxu0
  %3250 = vdwg.mxu0
  %3251 = vmatprep.subr.bf16.mxu0 %v652
  %3252 = vmatpush1.bf16.msra.mxu0 %v651
  %3253 = vmatprep.subr.bf16.mxu0 0
  %3254 = vmatpush1.bf16.msra.mxu0 0
  %3255 = vmatprep.subr.bf16.mxu0 0
  %3256 = vmatpush1.bf16.msra.mxu0 0
  %3257 = vmatprep.subr.bf16.mxu0 0
  %3258 = vmatpush1.bf16.msra.mxu0 0
  %3259 = vmatprep.subr.bf16.mxu0 0
  %3260 = vmatpush1.bf16.msra.mxu0 0
  %3261 = vmatprep.subr.bf16.mxu0 0
  %3262 = vmatpush1.bf16.msra.mxu0 0
  %3263 = vmatprep.subr.bf16.mxu0 0
  %3264 = vmatpush1.bf16.msra.mxu0 0
  %3265 = vmatprep.subr.bf16.mxu0 0
  %3266 = vmatpush1.bf16.msra.mxu0 0
  %3267 = vmatprep.subr.bf16.mxu0 0
  %3268 = vmatpush1.bf16.msra.mxu0 0
  %3269 = vmatprep.subr.bf16.mxu0 0
  %3270 = vmatpush1.bf16.msra.mxu0 0
  %3271 = vmatprep.subr.bf16.mxu0 0
  %3272 = vmatpush1.bf16.msra.mxu0 0
  %3273 = vmatprep.subr.bf16.mxu0 0
  %3274 = vmatpush1.bf16.msra.mxu0 0
  %3275 = vmatprep.subr.bf16.mxu0 0
  %3276 = vmatpush1.bf16.msra.mxu0 0
  %3277 = vmatprep.subr.bf16.mxu0 0
  %3278 = vmatpush1.bf16.msra.mxu0 0
  %3279 = vmatprep.subr.bf16.mxu0 0
  %3280 = vmatpush1.bf16.msra.mxu0 0
  %3281 = vmatprep.subr.bf16.mxu0 0
  %3282 = vmatpush1.bf16.msra.mxu0 0
  %3283 = vmatprep.mubr.bf16.mxu0 0
  %3284 = vmatmul.mubr.bf16.gmra.mrb[0].mxu0 %v789
  %v3285 = vpop.f32.mrb[0].mxu0
  %v3286 = vadd.f32 0.0, %v3285
  %v3287 = vpop.f32.mrb[0].mxu0
  %v3288 = vadd.f32 0.0, %v3287
  %v3289 = vpop.f32.mrb[0].mxu0
  %v3290 = vpop.f32.mrb[0].mxu0
  %3291 = vdwg.mxu0
  %3292 = vmatprep.subr.bf16.mxu0 %v654
  %3293 = vmatpush1.bf16.msra.mxu0 %v653
  %3294 = vmatprep.subr.bf16.mxu0 0
  %3295 = vmatpush1.bf16.msra.mxu0 0
  %3296 = vmatprep.subr.bf16.mxu0 0
  %3297 = vmatpush1.bf16.msra.mxu0 0
  %3298 = vmatprep.subr.bf16.mxu0 0
  %3299 = vmatpush1.bf16.msra.mxu0 0
  %3300 = vmatprep.subr.bf16.mxu0 0
  %3301 = vmatpush1.bf16.msra.mxu0 0
  %3302 = vmatprep.subr.bf16.mxu0 0
  %3303 = vmatpush1.bf16.msra.mxu0 0
  %3304 = vmatprep.subr.bf16.mxu0 0
  %3305 = vmatpush1.bf16.msra.mxu0 0
  %3306 = vmatprep.subr.bf16.mxu0 0
  %3307 = vmatpush1.bf16.msra.mxu0 0
  %3308 = vmatprep.subr.bf16.mxu0 0
  %3309 = vmatpush1.bf16.msra.mxu0 0
  %3310 = vmatprep.subr.bf16.mxu0 0
  %3311 = vmatpush1.bf16.msra.mxu0 0
  %3312 = vmatprep.subr.bf16.mxu0 0
  %3313 = vmatpush1.bf16.msra.mxu0 0
  %3314 = vmatprep.subr.bf16.mxu0 0
  %3315 = vmatpush1.bf16.msra.mxu0 0
  %3316 = vmatprep.subr.bf16.mxu0 0
  %3317 = vmatpush1.bf16.msra.mxu0 0
  %3318 = vmatprep.subr.bf16.mxu0 0
  %3319 = vmatpush1.bf16.msra.mxu0 0
  %3320 = vmatprep.subr.bf16.mxu0 0
  %3321 = vmatpush1.bf16.msra.mxu0 0
  %3322 = vmatprep.subr.bf16.mxu0 0
  %3323 = vmatpush1.bf16.msra.mxu0 0
  %3324 = vmatprep.mubr.bf16.mxu0 0
  %3325 = vmatmul.mubr.bf16.gmra.mrb[0].mxu0 %v789
  %v3326 = vpop.f32.mrb[0].mxu0
  %v3327 = vadd.f32 0.0, %v3326
  %v3328 = vpop.f32.mrb[0].mxu0
  %v3329 = vadd.f32 0.0, %v3328
  %v3330 = vpop.f32.mrb[0].mxu0
  %v3331 = vpop.f32.mrb[0].mxu0
  %3332 = vdwg.mxu0
  %3333 = vmatprep.subr.bf16.mxu0 %v656
  %3334 = vmatpush1.bf16.msra.mxu0 %v655
  %3335 = vmatprep.subr.bf16.mxu0 0
  %3336 = vmatpush1.bf16.msra.mxu0 0
  %3337 = vmatprep.subr.bf16.mxu0 0
  %3338 = vmatpush1.bf16.msra.mxu0 0
  %3339 = vmatprep.subr.bf16.mxu0 0
  %3340 = vmatpush1.bf16.msra.mxu0 0
  %3341 = vmatprep.subr.bf16.mxu0 0
  %3342 = vmatpush1.bf16.msra.mxu0 0
  %3343 = vmatprep.subr.bf16.mxu0 0
  %3344 = vmatpush1.bf16.msra.mxu0 0
  %3345 = vmatprep.subr.bf16.mxu0 0
  %3346 = vmatpush1.bf16.msra.mxu0 0
  %3347 = vmatprep.subr.bf16.mxu0 0
  %3348 = vmatpush1.bf16.msra.mxu0 0
  %3349 = vmatprep.subr.bf16.mxu0 0
  %3350 = vmatpush1.bf16.msra.mxu0 0
  %3351 = vmatprep.subr.bf16.mxu0 0
  %3352 = vmatpush1.bf16.msra.mxu0 0
  %3353 = vmatprep.subr.bf16.mxu0 0
  %3354 = vmatpush1.bf16.msra.mxu0 0
  %3355 = vmatprep.subr.bf16.mxu0 0
  %3356 = vmatpush1.bf16.msra.mxu0 0
  %3357 = vmatprep.subr.bf16.mxu0 0
  %3358 = vmatpush1.bf16.msra.mxu0 0
  %3359 = vmatprep.subr.bf16.mxu0 0
  %3360 = vmatpush1.bf16.msra.mxu0 0
  %3361 = vmatprep.subr.bf16.mxu0 0
  %3362 = vmatpush1.bf16.msra.mxu0 0
  %3363 = vmatprep.subr.bf16.mxu0 0
  %3364 = vmatpush1.bf16.msra.mxu0 0
  %3365 = vmatprep.mubr.bf16.mxu0 0
  %3366 = vmatmul.mubr.bf16.gmra.mrb[0].mxu0 %v789
  %v3367 = vpop.f32.mrb[0].mxu0
  %v3368 = vadd.f32 0.0, %v3367
  %v3369 = vpop.f32.mrb[0].mxu0
  %v3370 = vadd.f32 0.0, %v3369
  %v3371 = vpop.f32.mrb[0].mxu0
  %v3372 = vpop.f32.mrb[0].mxu0
  %3373 = vdwg.mxu0
  %3374 = vmatprep.subr.bf16.mxu0 %v658
  %3375 = vmatpush1.bf16.msra.mxu0 %v657
  %3376 = vmatprep.subr.bf16.mxu0 0
  %3377 = vmatpush1.bf16.msra.mxu0 0
  %3378 = vmatprep.subr.bf16.mxu0 0
  %3379 = vmatpush1.bf16.msra.mxu0 0
  %3380 = vmatprep.subr.bf16.mxu0 0
  %3381 = vmatpush1.bf16.msra.mxu0 0
  %3382 = vmatprep.subr.bf16.mxu0 0
  %3383 = vmatpush1.bf16.msra.mxu0 0
  %3384 = vmatprep.subr.bf16.mxu0 0
  %3385 = vmatpush1.bf16.msra.mxu0 0
  %3386 = vmatprep.subr.bf16.mxu0 0
  %3387 = vmatpush1.bf16.msra.mxu0 0
  %3388 = vmatprep.subr.bf16.mxu0 0
  %3389 = vmatpush1.bf16.msra.mxu0 0
  %3390 = vmatprep.subr.bf16.mxu0 0
  %3391 = vmatpush1.bf16.msra.mxu0 0
  %3392 = vmatprep.subr.bf16.mxu0 0
  %3393 = vmatpush1.bf16.msra.mxu0 0
  %3394 = vmatprep.subr.bf16.mxu0 0
  %3395 = vmatpush1.bf16.msra.mxu0 0
  %3396 = vmatprep.subr.bf16.mxu0 0
  %3397 = vmatpush1.bf16.msra.mxu0 0
  %3398 = vmatprep.subr.bf16.mxu0 0
  %3399 = vmatpush1.bf16.msra.mxu0 0
  %3400 = vmatprep.subr.bf16.mxu0 0
  %3401 = vmatpush1.bf16.msra.mxu0 0
  %3402 = vmatprep.subr.bf16.mxu0 0
  %3403 = vmatpush1.bf16.msra.mxu0 0
  %3404 = vmatprep.subr.bf16.mxu0 0
  %3405 = vmatpush1.bf16.msra.mxu0 0
  %3406 = vmatprep.mubr.bf16.mxu0 0
  %3407 = vmatmul.mubr.bf16.gmra.mrb[0].mxu0 %v789
  %v3408 = vpop.f32.mrb[0].mxu0
  %v3409 = vadd.f32 0.0, %v3408
  %v3410 = vpop.f32.mrb[0].mxu0
  %v3411 = vadd.f32 0.0, %v3410
  %v3412 = vpop.f32.mrb[0].mxu0
  %v3413 = vpop.f32.mrb[0].mxu0
  %3414 = vdwg.mxu0
  %v3415 = vadd.f32 %v826, %v828
  %v3416 = vadd.f32 %v3415, %v867
  %v3417 = vadd.f32 %v3416, %v869
  %v3418 = vadd.f32 %v3417, %v908
  %v3419 = vadd.f32 %v3418, %v910
  %v3420 = vadd.f32 %v3419, %v949
  %v3421 = vadd.f32 %v3420, %v951
  %v3422 = vadd.f32 %v3421, %v990
  %v3423 = vadd.f32 %v3422, %v992
  %v3424 = vadd.f32 %v3423, %v1031
  %v3425 = vadd.f32 %v3424, %v1033
  %v3426 = vadd.f32 %v3425, %v1072
  %v3427 = vadd.f32 %v3426, %v1074
  %v3428 = vadd.f32 %v3427, %v1113
  %v3429 = vadd.f32 %v3428, %v1115
  %v3430 = vadd.f32 %v3429, %v1154
  %v3431 = vadd.f32 %v3430, %v1156
  %v3432 = vadd.f32 %v3431, %v1195
  %v3433 = vadd.f32 %v3432, %v1197
  %v3434 = vadd.f32 %v3433, %v1236
  %v3435 = vadd.f32 %v3434, %v1238
  %v3436 = vadd.f32 %v3435, %v1277
  %v3437 = vadd.f32 %v3436, %v1279
  %v3438 = vadd.f32 %v3437, %v1318
  %v3439 = vadd.f32 %v3438, %v1320
  %v3440 = vadd.f32 %v3439, %v1359
  %v3441 = vadd.f32 %v3440, %v1361
  %v3442 = vadd.f32 %v3441, %v1400
  %v3443 = vadd.f32 %v3442, %v1402
  %v3444 = vadd.f32 %v3443, %v1441
  %v3445 = vadd.f32 %v3444, %v1443
  %v3446 = vadd.f32 %v3445, %v1482
  %v3447 = vadd.f32 %v3446, %v1484
  %v3448 = vadd.f32 %v3447, %v1523
  %v3449 = vadd.f32 %v3448, %v1525
  %v3450 = vadd.f32 %v3449, %v1564
  %v3451 = vadd.f32 %v3450, %v1566
  %v3452 = vadd.f32 %v3451, %v1605
  %v3453 = vadd.f32 %v3452, %v1607
  %v3454 = vadd.f32 %v3453, %v1646
  %v3455 = vadd.f32 %v3454, %v1648
  %v3456 = vadd.f32 %v3455, %v1687
  %v3457 = vadd.f32 %v3456, %v1689
  %v3458 = vadd.f32 %v3457, %v1728
  %v3459 = vadd.f32 %v3458, %v1730
  %v3460 = vadd.f32 %v3459, %v1769
  %v3461 = vadd.f32 %v3460, %v1771
  %v3462 = vadd.f32 %v3461, %v1810
  %v3463 = vadd.f32 %v3462, %v1812
  %v3464 = vadd.f32 %v3463, %v1851
  %v3465 = vadd.f32 %v3464, %v1853
  %v3466 = vadd.f32 %v3465, %v1892
  %v3467 = vadd.f32 %v3466, %v1894
  %v3468 = vadd.f32 %v3467, %v1933
  %v3469 = vadd.f32 %v3468, %v1935
  %v3470 = vadd.f32 %v3469, %v1974
  %v3471 = vadd.f32 %v3470, %v1976
  %v3472 = vadd.f32 %v3471, %v2015
  %v3473 = vadd.f32 %v3472, %v2017
  %v3474 = vadd.f32 %v3473, %v2056
  %v3475 = vadd.f32 %v3474, %v2058
  %v3476 = vadd.f32 %v3475, %v2097
  %v3477 = vadd.f32 %v3476, %v2099
  %v3478 = vadd.f32 %v3477, %v2138
  %v3479 = vadd.f32 %v3478, %v2140
  %v3480 = vadd.f32 %v3479, %v2179
  %v3481 = vadd.f32 %v3480, %v2181
  %v3482 = vadd.f32 %v3481, %v2220
  %v3483 = vadd.f32 %v3482, %v2222
  %v3484 = vadd.f32 %v3483, %v2261
  %v3485 = vadd.f32 %v3484, %v2263
  %v3486 = vadd.f32 %v3485, %v2302
  %v3487 = vadd.f32 %v3486, %v2304
  %v3488 = vadd.f32 %v3487, %v2343
  %v3489 = vadd.f32 %v3488, %v2345
  %v3490 = vadd.f32 %v3489, %v2384
  %v3491 = vadd.f32 %v3490, %v2386
  %v3492 = vadd.f32 %v3491, %v2425
  %v3493 = vadd.f32 %v3492, %v2427
  %v3494 = vadd.f32 %v3493, %v2466
  %v3495 = vadd.f32 %v3494, %v2468
  %v3496 = vadd.f32 %v3495, %v2507
  %v3497 = vadd.f32 %v3496, %v2509
  %v3498 = vadd.f32 %v3497, %v2548
  %v3499 = vadd.f32 %v3498, %v2550
  %v3500 = vadd.f32 %v3499, %v2589
  %v3501 = vadd.f32 %v3500, %v2591
  %v3502 = vadd.f32 %v3501, %v2630
  %v3503 = vadd.f32 %v3502, %v2632
  %v3504 = vadd.f32 %v3503, %v2671
  %v3505 = vadd.f32 %v3504, %v2673
  %v3506 = vadd.f32 %v3505, %v2712
  %v3507 = vadd.f32 %v3506, %v2714
  %v3508 = vadd.f32 %v3507, %v2753
  %v3509 = vadd.f32 %v3508, %v2755
  %v3510 = vadd.f32 %v3509, %v2794
  %v3511 = vadd.f32 %v3510, %v2796
  %v3512 = vadd.f32 %v3511, %v2835
  %v3513 = vadd.f32 %v3512, %v2837
  %v3514 = vadd.f32 %v3513, %v2876
  %v3515 = vadd.f32 %v3514, %v2878
  %v3516 = vadd.f32 %v3515, %v2917
  %v3517 = vadd.f32 %v3516, %v2919
  %v3518 = vadd.f32 %v3517, %v2958
  %v3519 = vadd.f32 %v3518, %v2960
  %v3520 = vadd.f32 %v3519, %v2999
  %v3521 = vadd.f32 %v3520, %v3001
  %v3522 = vadd.f32 %v3521, %v3040
  %v3523 = vadd.f32 %v3522, %v3042
  %v3524 = vadd.f32 %v3523, %v3081
  %v3525 = vadd.f32 %v3524, %v3083
  %v3526 = vadd.f32 %v3525, %v3122
  %v3527 = vadd.f32 %v3526, %v3124
  %v3528 = vadd.f32 %v3527, %v3163
  %v3529 = vadd.f32 %v3528, %v3165
  %v3530 = vadd.f32 %v3529, %v3204
  %v3531 = vadd.f32 %v3530, %v3206
  %v3532 = vadd.f32 %v3531, %v3245
  %v3533 = vadd.f32 %v3532, %v3247
  %v3534 = vadd.f32 %v3533, %v3286
  %v3535 = vadd.f32 %v3534, %v3288
  %v3536 = vadd.f32 %v3535, %v3327
  %v3537 = vadd.f32 %v3536, %v3329
  %v3538 = vadd.f32 %v3537, %v3368
  %v3539 = vadd.f32 %v3538, %v3370
  %v3540 = vadd.f32 %v3539, %v3409
  %v3541 = vadd.f32 %v3540, %v3411
  %3542 = vadd.xlane.f32.xlu0 %v3541
  %v3543 = vpop.xlane.xlu0 %3542
  %v3544 = vmul.f32 %v3543, 6.1035156e-05
  %v3545 = vmul.f32 %v826, %v826
  %v3546 = vmul.f32 %v828, %v828
  %v3547 = vmul.f32 %v867, %v867
  %v3548 = vmul.f32 %v869, %v869
  %v3549 = vmul.f32 %v908, %v908
  %v3550 = vmul.f32 %v910, %v910
  %v3551 = vmul.f32 %v949, %v949
  %v3552 = vmul.f32 %v951, %v951
  %v3553 = vmul.f32 %v990, %v990
  %v3554 = vmul.f32 %v992, %v992
  %v3555 = vmul.f32 %v1031, %v1031
  %v3556 = vmul.f32 %v1033, %v1033
  %v3557 = vmul.f32 %v1072, %v1072
  %v3558 = vmul.f32 %v1074, %v1074
  %v3559 = vmul.f32 %v1113, %v1113
  %v3560 = vmul.f32 %v1115, %v1115
  %v3561 = vmul.f32 %v1154, %v1154
  %v3562 = vmul.f32 %v1156, %v1156
  %v3563 = vmul.f32 %v1195, %v1195
  %v3564 = vmul.f32 %v1197, %v1197
  %v3565 = vmul.f32 %v1236, %v1236
  %v3566 = vmul.f32 %v1238, %v1238
  %v3567 = vmul.f32 %v1277, %v1277
  %v3568 = vmul.f32 %v1279, %v1279
  %v3569 = vmul.f32 %v1318, %v1318
  %v3570 = vmul.f32 %v1320, %v1320
  %v3571 = vmul.f32 %v1359, %v1359
  %v3572 = vmul.f32 %v1361, %v1361
  %v3573 = vmul.f32 %v1400, %v1400
  %v3574 = vmul.f32 %v1402, %v1402
  %v3575 = vmul.f32 %v1441, %v1441
  %v3576 = vmul.f32 %v1443, %v1443
  %v3577 = vmul.f32 %v1482, %v1482
  %v3578 = vmul.f32 %v1484, %v1484
  %v3579 = vmul.f32 %v1523, %v1523
  %v3580 = vmul.f32 %v1525, %v1525
  %v3581 = vmul.f32 %v1564, %v1564
  %v3582 = vmul.f32 %v1566, %v1566
  %v3583 = vmul.f32 %v1605, %v1605
  %v3584 = vmul.f32 %v1607, %v1607
  %v3585 = vmul.f32 %v1646, %v1646
  %v3586 = vmul.f32 %v1648, %v1648
  %v3587 = vmul.f32 %v1687, %v1687
  %v3588 = vmul.f32 %v1689, %v1689
  %v3589 = vmul.f32 %v1728, %v1728
  %v3590 = vmul.f32 %v1730, %v1730
  %v3591 = vmul.f32 %v1769, %v1769
  %v3592 = vmul.f32 %v1771, %v1771
  %v3593 = vmul.f32 %v1810, %v1810
  %v3594 = vmul.f32 %v1812, %v1812
  %v3595 = vmul.f32 %v1851, %v1851
  %v3596 = vmul.f32 %v1853, %v1853
  %v3597 = vmul.f32 %v1892, %v1892
  %v3598 = vmul.f32 %v1894, %v1894
  %v3599 = vmul.f32 %v1933, %v1933
  %v3600 = vmul.f32 %v1935, %v1935
  %v3601 = vmul.f32 %v1974, %v1974
  %v3602 = vmul.f32 %v1976, %v1976
  %v3603 = vmul.f32 %v2015, %v2015
  %v3604 = vmul.f32 %v2017, %v2017
  %v3605 = vmul.f32 %v2056, %v2056
  %v3606 = vmul.f32 %v2058, %v2058
  %v3607 = vmul.f32 %v2097, %v2097
  %v3608 = vmul.f32 %v2099, %v2099
  %v3609 = vmul.f32 %v2138, %v2138
  %v3610 = vmul.f32 %v2140, %v2140
  %v3611 = vmul.f32 %v2179, %v2179
  %v3612 = vmul.f32 %v2181, %v2181
  %v3613 = vmul.f32 %v2220, %v2220
  %v3614 = vmul.f32 %v2222, %v2222
  %v3615 = vmul.f32 %v2261, %v2261
  %v3616 = vmul.f32 %v2263, %v2263
  %v3617 = vmul.f32 %v2302, %v2302
  %v3618 = vmul.f32 %v2304, %v2304
  %v3619 = vmul.f32 %v2343, %v2343
  %v3620 = vmul.f32 %v2345, %v2345
  %v3621 = vmul.f32 %v2384, %v2384
  %v3622 = vmul.f32 %v2386, %v2386
  %v3623 = vmul.f32 %v2425, %v2425
  %v3624 = vmul.f32 %v2427, %v2427
  %v3625 = vmul.f32 %v2466, %v2466
  %v3626 = vmul.f32 %v2468, %v2468
  %v3627 = vmul.f32 %v2507, %v2507
  %v3628 = vmul.f32 %v2509, %v2509
  %v3629 = vmul.f32 %v2548, %v2548
  %v3630 = vmul.f32 %v2550, %v2550
  %v3631 = vmul.f32 %v2589, %v2589
  %v3632 = vmul.f32 %v2591, %v2591
  %v3633 = vmul.f32 %v2630, %v2630
  %v3634 = vmul.f32 %v2632, %v2632
  %v3635 = vmul.f32 %v2671, %v2671
  %v3636 = vmul.f32 %v2673, %v2673
  %v3637 = vmul.f32 %v2712, %v2712
  %v3638 = vmul.f32 %v2714, %v2714
  %v3639 = vmul.f32 %v2753, %v2753
  %v3640 = vmul.f32 %v2755, %v2755
  %v3641 = vmul.f32 %v2794, %v2794
  %v3642 = vmul.f32 %v2796, %v2796
  %v3643 = vmul.f32 %v2835, %v2835
  %v3644 = vmul.f32 %v2837, %v2837
  %v3645 = vmul.f32 %v2876, %v2876
  %v3646 = vmul.f32 %v2878, %v2878
  %v3647 = vmul.f32 %v2917, %v2917
  %v3648 = vmul.f32 %v2919, %v2919
  %v3649 = vmul.f32 %v2958, %v2958
  %v3650 = vmul.f32 %v2960, %v2960
  %v3651 = vmul.f32 %v2999, %v2999
  %v3652 = vmul.f32 %v3001, %v3001
  %v3653 = vmul.f32 %v3040, %v3040
  %v3654 = vmul.f32 %v3042, %v3042
  %v3655 = vmul.f32 %v3081, %v3081
  %v3656 = vmul.f32 %v3083, %v3083
  %v3657 = vmul.f32 %v3122, %v3122
  %v3658 = vmul.f32 %v3124, %v3124
  %v3659 = vmul.f32 %v3163, %v3163
  %v3660 = vmul.f32 %v3165, %v3165
  %v3661 = vmul.f32 %v3204, %v3204
  %v3662 = vmul.f32 %v3206, %v3206
  %v3663 = vmul.f32 %v3245, %v3245
  %v3664 = vmul.f32 %v3247, %v3247
  %v3665 = vmul.f32 %v3286, %v3286
  %v3666 = vmul.f32 %v3288, %v3288
  %v3667 = vmul.f32 %v3327, %v3327
  %v3668 = vmul.f32 %v3329, %v3329
  %v3669 = vmul.f32 %v3368, %v3368
  %v3670 = vmul.f32 %v3370, %v3370
  %v3671 = vmul.f32 %v3409, %v3409
  %v3672 = vmul.f32 %v3411, %v3411
  %v3673 = vadd.f32 %v3545, %v3546
  %v3674 = vadd.f32 %v3673, %v3547
  %v3675 = vadd.f32 %v3674, %v3548
  %v3676 = vadd.f32 %v3675, %v3549
  %v3677 = vadd.f32 %v3676, %v3550
  %v3678 = vadd.f32 %v3677, %v3551
  %v3679 = vadd.f32 %v3678, %v3552
  %v3680 = vadd.f32 %v3679, %v3553
  %v3681 = vadd.f32 %v3680, %v3554
  %v3682 = vadd.f32 %v3681, %v3555
  %v3683 = vadd.f32 %v3682, %v3556
  %v3684 = vadd.f32 %v3683, %v3557
  %v3685 = vadd.f32 %v3684, %v3558
  %v3686 = vadd.f32 %v3685, %v3559
  %v3687 = vadd.f32 %v3686, %v3560
  %v3688 = vadd.f32 %v3687, %v3561
  %v3689 = vadd.f32 %v3688, %v3562
  %v3690 = vadd.f32 %v3689, %v3563
  %v3691 = vadd.f32 %v3690, %v3564
  %v3692 = vadd.f32 %v3691, %v3565
  %v3693 = vadd.f32 %v3692, %v3566
  %v3694 = vadd.f32 %v3693, %v3567
  %v3695 = vadd.f32 %v3694, %v3568
  %v3696 = vadd.f32 %v3695, %v3569
  %v3697 = vadd.f32 %v3696, %v3570
  %v3698 = vadd.f32 %v3697, %v3571
  %v3699 = vadd.f32 %v3698, %v3572
  %v3700 = vadd.f32 %v3699, %v3573
  %v3701 = vadd.f32 %v3700, %v3574
  %v3702 = vadd.f32 %v3701, %v3575
  %v3703 = vadd.f32 %v3702, %v3576
  %v3704 = vadd.f32 %v3703, %v3577
  %v3705 = vadd.f32 %v3704, %v3578
  %v3706 = vadd.f32 %v3705, %v3579
  %v3707 = vadd.f32 %v3706, %v3580
  %v3708 = vadd.f32 %v3707, %v3581
  %v3709 = vadd.f32 %v3708, %v3582
  %v3710 = vadd.f32 %v3709, %v3583
  %v3711 = vadd.f32 %v3710, %v3584
  %v3712 = vadd.f32 %v3711, %v3585
  %v3713 = vadd.f32 %v3712, %v3586
  %v3714 = vadd.f32 %v3713, %v3587
  %v3715 = vadd.f32 %v3714, %v3588
  %v3716 = vadd.f32 %v3715, %v3589
  %v3717 = vadd.f32 %v3716, %v3590
  %v3718 = vadd.f32 %v3717, %v3591
  %v3719 = vadd.f32 %v3718, %v3592
  %v3720 = vadd.f32 %v3719, %v3593
  %v3721 = vadd.f32 %v3720, %v3594
  %v3722 = vadd.f32 %v3721, %v3595
  %v3723 = vadd.f32 %v3722, %v3596
  %v3724 = vadd.f32 %v3723, %v3597
  %v3725 = vadd.f32 %v3724, %v3598
  %v3726 = vadd.f32 %v3725, %v3599
  %v3727 = vadd.f32 %v3726, %v3600
  %v3728 = vadd.f32 %v3727, %v3601
  %v3729 = vadd.f32 %v3728, %v3602
  %v3730 = vadd.f32 %v3729, %v3603
  %v3731 = vadd.f32 %v3730, %v3604
  %v3732 = vadd.f32 %v3731, %v3605
  %v3733 = vadd.f32 %v3732, %v3606
  %v3734 = vadd.f32 %v3733, %v3607
  %v3735 = vadd.f32 %v3734, %v3608
  %v3736 = vadd.f32 %v3735, %v3609
  %v3737 = vadd.f32 %v3736, %v3610
  %v3738 = vadd.f32 %v3737, %v3611
  %v3739 = vadd.f32 %v3738, %v3612
  %v3740 = vadd.f32 %v3739, %v3613
  %v3741 = vadd.f32 %v3740, %v3614
  %v3742 = vadd.f32 %v3741, %v3615
  %v3743 = vadd.f32 %v3742, %v3616
  %v3744 = vadd.f32 %v3743, %v3617
  %v3745 = vadd.f32 %v3744, %v3618
  %v3746 = vadd.f32 %v3745, %v3619
  %v3747 = vadd.f32 %v3746, %v3620
  %v3748 = vadd.f32 %v3747, %v3621
  %v3749 = vadd.f32 %v3748, %v3622
  %v3750 = vadd.f32 %v3749, %v3623
  %v3751 = vadd.f32 %v3750, %v3624
  %v3752 = vadd.f32 %v3751, %v3625
  %v3753 = vadd.f32 %v3752, %v3626
  %v3754 = vadd.f32 %v3753, %v3627
  %v3755 = vadd.f32 %v3754, %v3628
  %v3756 = vadd.f32 %v3755, %v3629
  %v3757 = vadd.f32 %v3756, %v3630
  %v3758 = vadd.f32 %v3757, %v3631
  %v3759 = vadd.f32 %v3758, %v3632
  %v3760 = vadd.f32 %v3759, %v3633
  %v3761 = vadd.f32 %v3760, %v3634
  %v3762 = vadd.f32 %v3761, %v3635
  %v3763 = vadd.f32 %v3762, %v3636
  %v3764 = vadd.f32 %v3763, %v3637
  %v3765 = vadd.f32 %v3764, %v3638
  %v3766 = vadd.f32 %v3765, %v3639
  %v3767 = vadd.f32 %v3766, %v3640
  %v3768 = vadd.f32 %v3767, %v3641
  %v3769 = vadd.f32 %v3768, %v3642
  %v3770 = vadd.f32 %v3769, %v3643
  %v3771 = vadd.f32 %v3770, %v3644
  %v3772 = vadd.f32 %v3771, %v3645
  %v3773 = vadd.f32 %v3772, %v3646
  %v3774 = vadd.f32 %v3773, %v3647
  %v3775 = vadd.f32 %v3774, %v3648
  %v3776 = vadd.f32 %v3775, %v3649
  %v3777 = vadd.f32 %v3776, %v3650
  %v3778 = vadd.f32 %v3777, %v3651
  %v3779 = vadd.f32 %v3778, %v3652
  %v3780 = vadd.f32 %v3779, %v3653
  %v3781 = vadd.f32 %v3780, %v3654
  %v3782 = vadd.f32 %v3781, %v3655
  %v3783 = vadd.f32 %v3782, %v3656
  %v3784 = vadd.f32 %v3783, %v3657
  %v3785 = vadd.f32 %v3784, %v3658
  %v3786 = vadd.f32 %v3785, %v3659
  %v3787 = vadd.f32 %v3786, %v3660
  %v3788 = vadd.f32 %v3787, %v3661
  %v3789 = vadd.f32 %v3788, %v3662
  %v3790 = vadd.f32 %v3789, %v3663
  %v3791 = vadd.f32 %v3790, %v3664
  %v3792 = vadd.f32 %v3791, %v3665
  %v3793 = vadd.f32 %v3792, %v3666
  %v3794 = vadd.f32 %v3793, %v3667
  %v3795 = vadd.f32 %v3794, %v3668
  %v3796 = vadd.f32 %v3795, %v3669
  %v3797 = vadd.f32 %v3796, %v3670
  %v3798 = vadd.f32 %v3797, %v3671
  %v3799 = vadd.f32 %v3798, %v3672
  %3800 = vadd.xlane.f32.xlu0 %v3799
  %v3801 = vpop.xlane.xlu0 %3800
  %v3802 = vmul.f32 %v3801, 6.1035156e-05
  %v3803 = vmul.f32 %v3544, %v3544
  %v3804 = vsub.f32 %v3802, %v3803
  %v3805 = vld [vmem:[%s2] sm:$0xff]
  %v3806 = vadd.f32 %v3804, 1e-05
  %v3807 = vrsqrt.pop %v3806
  %v3808 = vmul.f32 %v3805, %v3807
  %v3809 = vld [vmem:[%s3] sm:$0xff]
  %v3810 = vmul.f32 %v3544, %v3808
  %v3811 = vsub.f32 %v3809, %v3810
  %3813 = vset.pattern.permute.xlu0 0
  %3814 = vperm.xlu0 %3813, %v3808
  %v3815 = vpop.permute.xlu0 %3814
  %v3817 = vmul.f32 %v826, %v3815
  %v3818 = vmul.f32 %v828, %v3815
  %v3819 = vmul.f32 %v867, %v3815
  %v3820 = vmul.f32 %v869, %v3815
  %v3821 = vmul.f32 %v908, %v3815
  %v3822 = vmul.f32 %v910, %v3815
  %v3823 = vmul.f32 %v949, %v3815
  %v3824 = vmul.f32 %v951, %v3815
  %v3825 = vmul.f32 %v990, %v3815
  %v3826 = vmul.f32 %v992, %v3815
  %v3827 = vmul.f32 %v1031, %v3815
  %v3828 = vmul.f32 %v1033, %v3815
  %v3829 = vmul.f32 %v1072, %v3815
  %v3830 = vmul.f32 %v1074, %v3815
  %v3831 = vmul.f32 %v1113, %v3815
  %v3832 = vmul.f32 %v1115, %v3815
  %v3833 = vmul.f32 %v1154, %v3815
  %v3834 = vmul.f32 %v1156, %v3815
  %v3835 = vmul.f32 %v1195, %v3815
  %v3836 = vmul.f32 %v1197, %v3815
  %v3837 = vmul.f32 %v1236, %v3815
  %v3838 = vmul.f32 %v1238, %v3815
  %v3839 = vmul.f32 %v1277, %v3815
  %v3840 = vmul.f32 %v1279, %v3815
  %v3841 = vmul.f32 %v1318, %v3815
  %v3842 = vmul.f32 %v1320, %v3815
  %v3843 = vmul.f32 %v1359, %v3815
  %v3844 = vmul.f32 %v1361, %v3815
  %v3845 = vmul.f32 %v1400, %v3815
  %v3846 = vmul.f32 %v1402, %v3815
  %v3847 = vmul.f32 %v1441, %v3815
  %v3848 = vmul.f32 %v1443, %v3815
  %v3849 = vmul.f32 %v1482, %v3815
  %v3850 = vmul.f32 %v1484, %v3815
  %v3851 = vmul.f32 %v1523, %v3815
  %v3852 = vmul.f32 %v1525, %v3815
  %v3853 = vmul.f32 %v1564, %v3815
  %v3854 = vmul.f32 %v1566, %v3815
  %v3855 = vmul.f32 %v1605, %v3815
  %v3856 = vmul.f32 %v1607, %v3815
  %v3857 = vmul.f32 %v1646, %v3815
  %v3858 = vmul.f32 %v1648, %v3815
  %v3859 = vmul.f32 %v1687, %v3815
  %v3860 = vmul.f32 %v1689, %v3815
  %v3861 = vmul.f32 %v1728, %v3815
  %v3862 = vmul.f32 %v1730, %v3815
  %v3863 = vmul.f32 %v1769, %v3815
  %v3864 = vmul.f32 %v1771, %v3815
  %v3865 = vmul.f32 %v1810, %v3815
  %v3866 = vmul.f32 %v1812, %v3815
  %v3867 = vmul.f32 %v1851, %v3815
  %v3868 = vmul.f32 %v1853, %v3815
  %v3869 = vmul.f32 %v1892, %v3815
  %v3870 = vmul.f32 %v1894, %v3815
  %v3871 = vmul.f32 %v1933, %v3815
  %v3872 = vmul.f32 %v1935, %v3815
  %v3873 = vmul.f32 %v1974, %v3815
  %v3874 = vmul.f32 %v1976, %v3815
  %v3875 = vmul.f32 %v2015, %v3815
  %v3876 = vmul.f32 %v2017, %v3815
  %v3877 = vmul.f32 %v2056, %v3815
  %v3878 = vmul.f32 %v2058, %v3815
  %v3879 = vmul.f32 %v2097, %v3815
  %v3880 = vmul.f32 %v2099, %v3815
  %v3881 = vmul.f32 %v2138, %v3815
  %v3882 = vmul.f32 %v2140, %v3815
  %v3883 = vmul.f32 %v2179, %v3815
  %v3884 = vmul.f32 %v2181, %v3815
  %v3885 = vmul.f32 %v2220, %v3815
  %v3886 = vmul.f32 %v2222, %v3815
  %v3887 = vmul.f32 %v2261, %v3815
  %v3888 = vmul.f32 %v2263, %v3815
  %v3889 = vmul.f32 %v2302, %v3815
  %v3890 = vmul.f32 %v2304, %v3815
  %v3891 = vmul.f32 %v2343, %v3815
  %v3892 = vmul.f32 %v2345, %v3815
  %v3893 = vmul.f32 %v2384, %v3815
  %v3894 = vmul.f32 %v2386, %v3815
  %v3895 = vmul.f32 %v2425, %v3815
  %v3896 = vmul.f32 %v2427, %v3815
  %v3897 = vmul.f32 %v2466, %v3815
  %v3898 = vmul.f32 %v2468, %v3815
  %v3899 = vmul.f32 %v2507, %v3815
  %v3900 = vmul.f32 %v2509, %v3815
  %v3901 = vmul.f32 %v2548, %v3815
  %v3902 = vmul.f32 %v2550, %v3815
  %v3903 = vmul.f32 %v2589, %v3815
  %v3904 = vmul.f32 %v2591, %v3815
  %v3905 = vmul.f32 %v2630, %v3815
  %v3906 = vmul.f32 %v2632, %v3815
  %v3907 = vmul.f32 %v2671, %v3815
  %v3908 = vmul.f32 %v2673, %v3815
  %v3909 = vmul.f32 %v2712, %v3815
  %v3910 = vmul.f32 %v2714, %v3815
  %v3911 = vmul.f32 %v2753, %v3815
  %v3912 = vmul.f32 %v2755, %v3815
  %v3913 = vmul.f32 %v2794, %v3815
  %v3914 = vmul.f32 %v2796, %v3815
  %v3915 = vmul.f32 %v2835, %v3815
  %v3916 = vmul.f32 %v2837, %v3815
  %v3917 = vmul.f32 %v2876, %v3815
  %v3918 = vmul.f32 %v2878, %v3815
  %v3919 = vmul.f32 %v2917, %v3815
  %v3920 = vmul.f32 %v2919, %v3815
  %v3921 = vmul.f32 %v2958, %v3815
  %v3922 = vmul.f32 %v2960, %v3815
  %v3923 = vmul.f32 %v2999, %v3815
  %v3924 = vmul.f32 %v3001, %v3815
  %v3925 = vmul.f32 %v3040, %v3815
  %v3926 = vmul.f32 %v3042, %v3815
  %v3927 = vmul.f32 %v3081, %v3815
  %v3928 = vmul.f32 %v3083, %v3815
  %v3929 = vmul.f32 %v3122, %v3815
  %v3930 = vmul.f32 %v3124, %v3815
  %v3931 = vmul.f32 %v3163, %v3815
  %v3932 = vmul.f32 %v3165, %v3815
  %v3933 = vmul.f32 %v3204, %v3815
  %v3934 = vmul.f32 %v3206, %v3815
  %v3935 = vmul.f32 %v3245, %v3815
  %v3936 = vmul.f32 %v3247, %v3815
  %v3937 = vmul.f32 %v3286, %v3815
  %v3938 = vmul.f32 %v3288, %v3815
  %v3939 = vmul.f32 %v3327, %v3815
  %v3940 = vmul.f32 %v3329, %v3815
  %v3941 = vmul.f32 %v3368, %v3815
  %v3942 = vmul.f32 %v3370, %v3815
  %v3943 = vmul.f32 %v3409, %v3815
  %v3944 = vmul.f32 %v3411, %v3815
  %3946 = vset.pattern.permute.xlu0 0
  %3947 = vperm.xlu0 %3946, %v3811
  %v3948 = vpop.permute.xlu0 %3947
  %v3950 = vadd.f32 %v3817, %v3948
  %v3951 = vadd.f32 %v3818, %v3948
  %v3952 = vadd.f32 %v3819, %v3948
  %v3953 = vadd.f32 %v3820, %v3948
  %v3954 = vadd.f32 %v3821, %v3948
  %v3955 = vadd.f32 %v3822, %v3948
  %v3956 = vadd.f32 %v3823, %v3948
  %v3957 = vadd.f32 %v3824, %v3948
  %v3958 = vadd.f32 %v3825, %v3948
  %v3959 = vadd.f32 %v3826, %v3948
  %v3960 = vadd.f32 %v3827, %v3948
  %v3961 = vadd.f32 %v3828, %v3948
  %v3962 = vadd.f32 %v3829, %v3948
  %v3963 = vadd.f32 %v3830, %v3948
  %v3964 = vadd.f32 %v3831, %v3948
  %v3965 = vadd.f32 %v3832, %v3948
  %v3966 = vadd.f32 %v3833, %v3948
  %v3967 = vadd.f32 %v3834, %v3948
  %v3968 = vadd.f32 %v3835, %v3948
  %v3969 = vadd.f32 %v3836, %v3948
  %v3970 = vadd.f32 %v3837, %v3948
  %v3971 = vadd.f32 %v3838, %v3948
  %v3972 = vadd.f32 %v3839, %v3948
  %v3973 = vadd.f32 %v3840, %v3948
  %v3974 = vadd.f32 %v3841, %v3948
  %v3975 = vadd.f32 %v3842, %v3948
  %v3976 = vadd.f32 %v3843, %v3948
  %v3977 = vadd.f32 %v3844, %v3948
  %v3978 = vadd.f32 %v3845, %v3948
  %v3979 = vadd.f32 %v3846, %v3948
  %v3980 = vadd.f32 %v3847, %v3948
  %v3981 = vadd.f32 %v3848, %v3948
  %v3982 = vadd.f32 %v3849, %v3948
  %v3983 = vadd.f32 %v3850, %v3948
  %v3984 = vadd.f32 %v3851, %v3948
  %v3985 = vadd.f32 %v3852, %v3948
  %v3986 = vadd.f32 %v3853, %v3948
  %v3987 = vadd.f32 %v3854, %v3948
  %v3988 = vadd.f32 %v3855, %v3948
  %v3989 = vadd.f32 %v3856, %v3948
  %v3990 = vadd.f32 %v3857, %v3948
  %v3991 = vadd.f32 %v3858, %v3948
  %v3992 = vadd.f32 %v3859, %v3948
  %v3993 = vadd.f32 %v3860, %v3948
  %v3994 = vadd.f32 %v3861, %v3948
  %v3995 = vadd.f32 %v3862, %v3948
  %v3996 = vadd.f32 %v3863, %v3948
  %v3997 = vadd.f32 %v3864, %v3948
  %v3998 = vadd.f32 %v3865, %v3948
  %v3999 = vadd.f32 %v3866, %v3948
  %v4000 = vadd.f32 %v3867, %v3948
  %v4001 = vadd.f32 %v3868, %v3948
  %v4002 = vadd.f32 %v3869, %v3948
  %v4003 = vadd.f32 %v3870, %v3948
  %v4004 = vadd.f32 %v3871, %v3948
  %v4005 = vadd.f32 %v3872, %v3948
  %v4006 = vadd.f32 %v3873, %v3948
  %v4007 = vadd.f32 %v3874, %v3948
  %v4008 = vadd.f32 %v3875, %v3948
  %v4009 = vadd.f32 %v3876, %v3948
  %v4010 = vadd.f32 %v3877, %v3948
  %v4011 = vadd.f32 %v3878, %v3948
  %v4012 = vadd.f32 %v3879, %v3948
  %v4013 = vadd.f32 %v3880, %v3948
  %v4014 = vadd.f32 %v3881, %v3948
  %v4015 = vadd.f32 %v3882, %v3948
  %v4016 = vadd.f32 %v3883, %v3948
  %v4017 = vadd.f32 %v3884, %v3948
  %v4018 = vadd.f32 %v3885, %v3948
  %v4019 = vadd.f32 %v3886, %v3948
  %v4020 = vadd.f32 %v3887, %v3948
  %v4021 = vadd.f32 %v3888, %v3948
  %v4022 = vadd.f32 %v3889, %v3948
  %v4023 = vadd.f32 %v3890, %v3948
  %v4024 = vadd.f32 %v3891, %v3948
  %v4025 = vadd.f32 %v3892, %v3948
  %v4026 = vadd.f32 %v3893, %v3948
  %v4027 = vadd.f32 %v3894, %v3948
  %v4028 = vadd.f32 %v3895, %v3948
  %v4029 = vadd.f32 %v3896, %v3948
  %v4030 = vadd.f32 %v3897, %v3948
  %v4031 = vadd.f32 %v3898, %v3948
  %v4032 = vadd.f32 %v3899, %v3948
  %v4033 = vadd.f32 %v3900, %v3948
  %v4034 = vadd.f32 %v3901, %v3948
  %v4035 = vadd.f32 %v3902, %v3948
  %v4036 = vadd.f32 %v3903, %v3948
  %v4037 = vadd.f32 %v3904, %v3948
  %v4038 = vadd.f32 %v3905, %v3948
  %v4039 = vadd.f32 %v3906, %v3948
  %v4040 = vadd.f32 %v3907, %v3948
  %v4041 = vadd.f32 %v3908, %v3948
  %v4042 = vadd.f32 %v3909, %v3948
  %v4043 = vadd.f32 %v3910, %v3948
  %v4044 = vadd.f32 %v3911, %v3948
  %v4045 = vadd.f32 %v3912, %v3948
  %v4046 = vadd.f32 %v3913, %v3948
  %v4047 = vadd.f32 %v3914, %v3948
  %v4048 = vadd.f32 %v3915, %v3948
  %v4049 = vadd.f32 %v3916, %v3948
  %v4050 = vadd.f32 %v3917, %v3948
  %v4051 = vadd.f32 %v3918, %v3948
  %v4052 = vadd.f32 %v3919, %v3948
  %v4053 = vadd.f32 %v3920, %v3948
  %v4054 = vadd.f32 %v3921, %v3948
  %v4055 = vadd.f32 %v3922, %v3948
  %v4056 = vadd.f32 %v3923, %v3948
  %v4057 = vadd.f32 %v3924, %v3948
  %v4058 = vadd.f32 %v3925, %v3948
  %v4059 = vadd.f32 %v3926, %v3948
  %v4060 = vadd.f32 %v3927, %v3948
  %v4061 = vadd.f32 %v3928, %v3948
  %v4062 = vadd.f32 %v3929, %v3948
  %v4063 = vadd.f32 %v3930, %v3948
  %v4064 = vadd.f32 %v3931, %v3948
  %v4065 = vadd.f32 %v3932, %v3948
  %v4066 = vadd.f32 %v3933, %v3948
  %v4067 = vadd.f32 %v3934, %v3948
  %v4068 = vadd.f32 %v3935, %v3948
  %v4069 = vadd.f32 %v3936, %v3948
  %v4070 = vadd.f32 %v3937, %v3948
  %v4071 = vadd.f32 %v3938, %v3948
  %v4072 = vadd.f32 %v3939, %v3948
  %v4073 = vadd.f32 %v3940, %v3948
  %v4074 = vadd.f32 %v3941, %v3948
  %v4075 = vadd.f32 %v3942, %v3948
  %v4076 = vadd.f32 %v3943, %v3948
  %v4077 = vadd.f32 %v3944, %v3948
  %vm4078 = vcmp.gt.f32.partialorder %v3950, 0.0
  %vm4079 = vcmp.gt.f32.partialorder %v3951, 0.0
  %vm4080 = vcmp.gt.f32.partialorder %v3952, 0.0
  %vm4081 = vcmp.gt.f32.partialorder %v3953, 0.0
  %vm4082 = vcmp.gt.f32.partialorder %v3954, 0.0
  %vm4083 = vcmp.gt.f32.partialorder %v3955, 0.0
  %vm4084 = vcmp.gt.f32.partialorder %v3956, 0.0
  %vm4085 = vcmp.gt.f32.partialorder %v3957, 0.0
  %vm4086 = vcmp.gt.f32.partialorder %v3958, 0.0
  %vm4087 = vcmp.gt.f32.partialorder %v3959, 0.0
  %vm4088 = vcmp.gt.f32.partialorder %v3960, 0.0
  %vm4089 = vcmp.gt.f32.partialorder %v3961, 0.0
  %vm4090 = vcmp.gt.f32.partialorder %v3962, 0.0
  %vm4091 = vcmp.gt.f32.partialorder %v3963, 0.0
  %vm4092 = vcmp.gt.f32.partialorder %v3964, 0.0
  %vm4093 = vcmp.gt.f32.partialorder %v3965, 0.0
  %vm4094 = vcmp.gt.f32.partialorder %v3966, 0.0
  %vm4095 = vcmp.gt.f32.partialorder %v3967, 0.0
  %vm4096 = vcmp.gt.f32.partialorder %v3968, 0.0
  %vm4097 = vcmp.gt.f32.partialorder %v3969, 0.0
  %vm4098 = vcmp.gt.f32.partialorder %v3970, 0.0
  %vm4099 = vcmp.gt.f32.partialorder %v3971, 0.0
  %vm4100 = vcmp.gt.f32.partialorder %v3972, 0.0
  %vm4101 = vcmp.gt.f32.partialorder %v3973, 0.0
  %vm4102 = vcmp.gt.f32.partialorder %v3974, 0.0
  %vm4103 = vcmp.gt.f32.partialorder %v3975, 0.0
  %vm4104 = vcmp.gt.f32.partialorder %v3976, 0.0
  %vm4105 = vcmp.gt.f32.partialorder %v3977, 0.0
  %vm4106 = vcmp.gt.f32.partialorder %v3978, 0.0
  %vm4107 = vcmp.gt.f32.partialorder %v3979, 0.0
  %vm4108 = vcmp.gt.f32.partialorder %v3980, 0.0
  %vm4109 = vcmp.gt.f32.partialorder %v3981, 0.0
  %vm4110 = vcmp.gt.f32.partialorder %v3982, 0.0
  %vm4111 = vcmp.gt.f32.partialorder %v3983, 0.0
  %vm4112 = vcmp.gt.f32.partialorder %v3984, 0.0
  %vm4113 = vcmp.gt.f32.partialorder %v3985, 0.0
  %vm4114 = vcmp.gt.f32.partialorder %v3986, 0.0
  %vm4115 = vcmp.gt.f32.partialorder %v3987, 0.0
  %vm4116 = vcmp.gt.f32.partialorder %v3988, 0.0
  %vm4117 = vcmp.gt.f32.partialorder %v3989, 0.0
  %vm4118 = vcmp.gt.f32.partialorder %v3990, 0.0
  %vm4119 = vcmp.gt.f32.partialorder %v3991, 0.0
  %vm4120 = vcmp.gt.f32.partialorder %v3992, 0.0
  %vm4121 = vcmp.gt.f32.partialorder %v3993, 0.0
  %vm4122 = vcmp.gt.f32.partialorder %v3994, 0.0
  %vm4123 = vcmp.gt.f32.partialorder %v3995, 0.0
  %vm4124 = vcmp.gt.f32.partialorder %v3996, 0.0
  %vm4125 = vcmp.gt.f32.partialorder %v3997, 0.0
  %vm4126 = vcmp.gt.f32.partialorder %v3998, 0.0
  %vm4127 = vcmp.gt.f32.partialorder %v3999, 0.0
  %vm4128 = vcmp.gt.f32.partialorder %v4000, 0.0
  %vm4129 = vcmp.gt.f32.partialorder %v4001, 0.0
  %vm4130 = vcmp.gt.f32.partialorder %v4002, 0.0
  %vm4131 = vcmp.gt.f32.partialorder %v4003, 0.0
  %vm4132 = vcmp.gt.f32.partialorder %v4004, 0.0
  %vm4133 = vcmp.gt.f32.partialorder %v4005, 0.0
  %vm4134 = vcmp.gt.f32.partialorder %v4006, 0.0
  %vm4135 = vcmp.gt.f32.partialorder %v4007, 0.0
  %vm4136 = vcmp.gt.f32.partialorder %v4008, 0.0
  %vm4137 = vcmp.gt.f32.partialorder %v4009, 0.0
  %vm4138 = vcmp.gt.f32.partialorder %v4010, 0.0
  %vm4139 = vcmp.gt.f32.partialorder %v4011, 0.0
  %vm4140 = vcmp.gt.f32.partialorder %v4012, 0.0
  %vm4141 = vcmp.gt.f32.partialorder %v4013, 0.0
  %vm4142 = vcmp.gt.f32.partialorder %v4014, 0.0
  %vm4143 = vcmp.gt.f32.partialorder %v4015, 0.0
  %vm4144 = vcmp.gt.f32.partialorder %v4016, 0.0
  %vm4145 = vcmp.gt.f32.partialorder %v4017, 0.0
  %vm4146 = vcmp.gt.f32.partialorder %v4018, 0.0
  %vm4147 = vcmp.gt.f32.partialorder %v4019, 0.0
  %vm4148 = vcmp.gt.f32.partialorder %v4020, 0.0
  %vm4149 = vcmp.gt.f32.partialorder %v4021, 0.0
  %vm4150 = vcmp.gt.f32.partialorder %v4022, 0.0
  %vm4151 = vcmp.gt.f32.partialorder %v4023, 0.0
  %vm4152 = vcmp.gt.f32.partialorder %v4024, 0.0
  %vm4153 = vcmp.gt.f32.partialorder %v4025, 0.0
  %vm4154 = vcmp.gt.f32.partialorder %v4026, 0.0
  %vm4155 = vcmp.gt.f32.partialorder %v4027, 0.0
  %vm4156 = vcmp.gt.f32.partialorder %v4028, 0.0
  %vm4157 = vcmp.gt.f32.partialorder %v4029, 0.0
  %vm4158 = vcmp.gt.f32.partialorder %v4030, 0.0
  %vm4159 = vcmp.gt.f32.partialorder %v4031, 0.0
  %vm4160 = vcmp.gt.f32.partialorder %v4032, 0.0
  %vm4161 = vcmp.gt.f32.partialorder %v4033, 0.0
  %vm4162 = vcmp.gt.f32.partialorder %v4034, 0.0
  %vm4163 = vcmp.gt.f32.partialorder %v4035, 0.0
  %vm4164 = vcmp.gt.f32.partialorder %v4036, 0.0
  %vm4165 = vcmp.gt.f32.partialorder %v4037, 0.0
  %vm4166 = vcmp.gt.f32.partialorder %v4038, 0.0
  %vm4167 = vcmp.gt.f32.partialorder %v4039, 0.0
  %vm4168 = vcmp.gt.f32.partialorder %v4040, 0.0
  %vm4169 = vcmp.gt.f32.partialorder %v4041, 0.0
  %vm4170 = vcmp.gt.f32.partialorder %v4042, 0.0
  %vm4171 = vcmp.gt.f32.partialorder %v4043, 0.0
  %vm4172 = vcmp.gt.f32.partialorder %v4044, 0.0
  %vm4173 = vcmp.gt.f32.partialorder %v4045, 0.0
  %vm4174 = vcmp.gt.f32.partialorder %v4046, 0.0
  %vm4175 = vcmp.gt.f32.partialorder %v4047, 0.0
  %vm4176 = vcmp.gt.f32.partialorder %v4048, 0.0
  %vm4177 = vcmp.gt.f32.partialorder %v4049, 0.0
  %vm4178 = vcmp.gt.f32.partialorder %v4050, 0.0
  %vm4179 = vcmp.gt.f32.partialorder %v4051, 0.0
  %vm4180 = vcmp.gt.f32.partialorder %v4052, 0.0
  %vm4181 = vcmp.gt.f32.partialorder %v4053, 0.0
  %vm4182 = vcmp.gt.f32.partialorder %v4054, 0.0
  %vm4183 = vcmp.gt.f32.partialorder %v4055, 0.0
  %vm4184 = vcmp.gt.f32.partialorder %v4056, 0.0
  %vm4185 = vcmp.gt.f32.partialorder %v4057, 0.0
  %vm4186 = vcmp.gt.f32.partialorder %v4058, 0.0
  %vm4187 = vcmp.gt.f32.partialorder %v4059, 0.0
  %vm4188 = vcmp.gt.f32.partialorder %v4060, 0.0
  %vm4189 = vcmp.gt.f32.partialorder %v4061, 0.0
  %vm4190 = vcmp.gt.f32.partialorder %v4062, 0.0
  %vm4191 = vcmp.gt.f32.partialorder %v4063, 0.0
  %vm4192 = vcmp.gt.f32.partialorder %v4064, 0.0
  %vm4193 = vcmp.gt.f32.partialorder %v4065, 0.0
  %vm4194 = vcmp.gt.f32.partialorder %v4066, 0.0
  %vm4195 = vcmp.gt.f32.partialorder %v4067, 0.0
  %vm4196 = vcmp.gt.f32.partialorder %v4068, 0.0
  %vm4197 = vcmp.gt.f32.partialorder %v4069, 0.0
  %vm4198 = vcmp.gt.f32.partialorder %v4070, 0.0
  %vm4199 = vcmp.gt.f32.partialorder %v4071, 0.0
  %vm4200 = vcmp.gt.f32.partialorder %v4072, 0.0
  %vm4201 = vcmp.gt.f32.partialorder %v4073, 0.0
  %vm4202 = vcmp.gt.f32.partialorder %v4074, 0.0
  %vm4203 = vcmp.gt.f32.partialorder %v4075, 0.0
  %vm4204 = vcmp.gt.f32.partialorder %v4076, 0.0
  %vm4205 = vcmp.gt.f32.partialorder %v4077, 0.0
  %v4206 = vmul.f32 %v3950, 0.2
  %v4207 = vmul.f32 %v3951, 0.2
  %v4208 = vmul.f32 %v3952, 0.2
  %v4209 = vmul.f32 %v3953, 0.2
  %v4210 = vmul.f32 %v3954, 0.2
  %v4211 = vmul.f32 %v3955, 0.2
  %v4212 = vmul.f32 %v3956, 0.2
  %v4213 = vmul.f32 %v3957, 0.2
  %v4214 = vmul.f32 %v3958, 0.2
  %v4215 = vmul.f32 %v3959, 0.2
  %v4216 = vmul.f32 %v3960, 0.2
  %v4217 = vmul.f32 %v3961, 0.2
  %v4218 = vmul.f32 %v3962, 0.2
  %v4219 = vmul.f32 %v3963, 0.2
  %v4220 = vmul.f32 %v3964, 0.2
  %v4221 = vmul.f32 %v3965, 0.2
  %v4222 = vmul.f32 %v3966, 0.2
  %v4223 = vmul.f32 %v3967, 0.2
  %v4224 = vmul.f32 %v3968, 0.2
  %v4225 = vmul.f32 %v3969, 0.2
  %v4226 = vmul.f32 %v3970, 0.2
  %v4227 = vmul.f32 %v3971, 0.2
  %v4228 = vmul.f32 %v3972, 0.2
  %v4229 = vmul.f32 %v3973, 0.2
  %v4230 = vmul.f32 %v3974, 0.2
  %v4231 = vmul.f32 %v3975, 0.2
  %v4232 = vmul.f32 %v3976, 0.2
  %v4233 = vmul.f32 %v3977, 0.2
  %v4234 = vmul.f32 %v3978, 0.2
  %v4235 = vmul.f32 %v3979, 0.2
  %v4236 = vmul.f32 %v3980, 0.2
  %v4237 = vmul.f32 %v3981, 0.2
  %v4238 = vmul.f32 %v3982, 0.2
  %v4239 = vmul.f32 %v3983, 0.2
  %v4240 = vmul.f32 %v3984, 0.2
  %v4241 = vmul.f32 %v3985, 0.2
  %v4242 = vmul.f32 %v3986, 0.2
  %v4243 = vmul.f32 %v3987, 0.2
  %v4244 = vmul.f32 %v3988, 0.2
  %v4245 = vmul.f32 %v3989, 0.2
  %v4246 = vmul.f32 %v3990, 0.2
  %v4247 = vmul.f32 %v3991, 0.2
  %v4248 = vmul.f32 %v3992, 0.2
  %v4249 = vmul.f32 %v3993, 0.2
  %v4250 = vmul.f32 %v3994, 0.2
  %v4251 = vmul.f32 %v3995, 0.2
  %v4252 = vmul.f32 %v3996, 0.2
  %v4253 = vmul.f32 %v3997, 0.2
  %v4254 = vmul.f32 %v3998, 0.2
  %v4255 = vmul.f32 %v3999, 0.2
  %v4256 = vmul.f32 %v4000, 0.2
  %v4257 = vmul.f32 %v4001, 0.2
  %v4258 = vmul.f32 %v4002, 0.2
  %v4259 = vmul.f32 %v4003, 0.2
  %v4260 = vmul.f32 %v4004, 0.2
  %v4261 = vmul.f32 %v4005, 0.2
  %v4262 = vmul.f32 %v4006, 0.2
  %v4263 = vmul.f32 %v4007, 0.2
  %v4264 = vmul.f32 %v4008, 0.2
  %v4265 = vmul.f32 %v4009, 0.2
  %v4266 = vmul.f32 %v4010, 0.2
  %v4267 = vmul.f32 %v4011, 0.2
  %v4268 = vmul.f32 %v4012, 0.2
  %v4269 = vmul.f32 %v4013, 0.2
  %v4270 = vmul.f32 %v4014, 0.2
  %v4271 = vmul.f32 %v4015, 0.2
  %v4272 = vmul.f32 %v4016, 0.2
  %v4273 = vmul.f32 %v4017, 0.2
  %v4274 = vmul.f32 %v4018, 0.2
  %v4275 = vmul.f32 %v4019, 0.2
  %v4276 = vmul.f32 %v4020, 0.2
  %v4277 = vmul.f32 %v4021, 0.2
  %v4278 = vmul.f32 %v4022, 0.2
  %v4279 = vmul.f32 %v4023, 0.2
  %v4280 = vmul.f32 %v4024, 0.2
  %v4281 = vmul.f32 %v4025, 0.2
  %v4282 = vmul.f32 %v4026, 0.2
  %v4283 = vmul.f32 %v4027, 0.2
  %v4284 = vmul.f32 %v4028, 0.2
  %v4285 = vmul.f32 %v4029, 0.2
  %v4286 = vmul.f32 %v4030, 0.2
  %v4287 = vmul.f32 %v4031, 0.2
  %v4288 = vmul.f32 %v4032, 0.2
  %v4289 = vmul.f32 %v4033, 0.2
  %v4290 = vmul.f32 %v4034, 0.2
  %v4291 = vmul.f32 %v4035, 0.2
  %v4292 = vmul.f32 %v4036, 0.2
  %v4293 = vmul.f32 %v4037, 0.2
  %v4294 = vmul.f32 %v4038, 0.2
  %v4295 = vmul.f32 %v4039, 0.2
  %v4296 = vmul.f32 %v4040, 0.2
  %v4297 = vmul.f32 %v4041, 0.2
  %v4298 = vmul.f32 %v4042, 0.2
  %v4299 = vmul.f32 %v4043, 0.2
  %v4300 = vmul.f32 %v4044, 0.2
  %v4301 = vmul.f32 %v4045, 0.2
  %v4302 = vmul.f32 %v4046, 0.2
  %v4303 = vmul.f32 %v4047, 0.2
  %v4304 = vmul.f32 %v4048, 0.2
  %v4305 = vmul.f32 %v4049, 0.2
  %v4306 = vmul.f32 %v4050, 0.2
  %v4307 = vmul.f32 %v4051, 0.2
  %v4308 = vmul.f32 %v4052, 0.2
  %v4309 = vmul.f32 %v4053, 0.2
  %v4310 = vmul.f32 %v4054, 0.2
  %v4311 = vmul.f32 %v4055, 0.2
  %v4312 = vmul.f32 %v4056, 0.2
  %v4313 = vmul.f32 %v4057, 0.2
  %v4314 = vmul.f32 %v4058, 0.2
  %v4315 = vmul.f32 %v4059, 0.2
  %v4316 = vmul.f32 %v4060, 0.2
  %v4317 = vmul.f32 %v4061, 0.2
  %v4318 = vmul.f32 %v4062, 0.2
  %v4319 = vmul.f32 %v4063, 0.2
  %v4320 = vmul.f32 %v4064, 0.2
  %v4321 = vmul.f32 %v4065, 0.2
  %v4322 = vmul.f32 %v4066, 0.2
  %v4323 = vmul.f32 %v4067, 0.2
  %v4324 = vmul.f32 %v4068, 0.2
  %v4325 = vmul.f32 %v4069, 0.2
  %v4326 = vmul.f32 %v4070, 0.2
  %v4327 = vmul.f32 %v4071, 0.2
  %v4328 = vmul.f32 %v4072, 0.2
  %v4329 = vmul.f32 %v4073, 0.2
  %v4330 = vmul.f32 %v4074, 0.2
  %v4331 = vmul.f32 %v4075, 0.2
  %v4332 = vmul.f32 %v4076, 0.2
  %v4333 = vmul.f32 %v4077, 0.2
  %v4334 = vsel %vm4078, %v3950, %v4206
  %v4335 = vsel %vm4079, %v3951, %v4207
  %v4336 = vsel %vm4080, %v3952, %v4208
  %v4337 = vsel %vm4081, %v3953, %v4209
  %v4338 = vsel %vm4082, %v3954, %v4210
  %v4339 = vsel %vm4083, %v3955, %v4211
  %v4340 = vsel %vm4084, %v3956, %v4212
  %v4341 = vsel %vm4085, %v3957, %v4213
  %v4342 = vsel %vm4086, %v3958, %v4214
  %v4343 = vsel %vm4087, %v3959, %v4215
  %v4344 = vsel %vm4088, %v3960, %v4216
  %v4345 = vsel %vm4089, %v3961, %v4217
  %v4346 = vsel %vm4090, %v3962, %v4218
  %v4347 = vsel %vm4091, %v3963, %v4219
  %v4348 = vsel %vm4092, %v3964, %v4220
  %v4349 = vsel %vm4093, %v3965, %v4221
  %v4350 = vsel %vm4094, %v3966, %v4222
  %v4351 = vsel %vm4095, %v3967, %v4223
  %v4352 = vsel %vm4096, %v3968, %v4224
  %v4353 = vsel %vm4097, %v3969, %v4225
  %v4354 = vsel %vm4098, %v3970, %v4226
  %v4355 = vsel %vm4099, %v3971, %v4227
  %v4356 = vsel %vm4100, %v3972, %v4228
  %v4357 = vsel %vm4101, %v3973, %v4229
  %v4358 = vsel %vm4102, %v3974, %v4230
  %v4359 = vsel %vm4103, %v3975, %v4231
  %v4360 = vsel %vm4104, %v3976, %v4232
  %v4361 = vsel %vm4105, %v3977, %v4233
  %v4362 = vsel %vm4106, %v3978, %v4234
  %v4363 = vsel %vm4107, %v3979, %v4235
  %v4364 = vsel %vm4108, %v3980, %v4236
  %v4365 = vsel %vm4109, %v3981, %v4237
  %v4366 = vsel %vm4110, %v3982, %v4238
  %v4367 = vsel %vm4111, %v3983, %v4239
  %v4368 = vsel %vm4112, %v3984, %v4240
  %v4369 = vsel %vm4113, %v3985, %v4241
  %v4370 = vsel %vm4114, %v3986, %v4242
  %v4371 = vsel %vm4115, %v3987, %v4243
  %v4372 = vsel %vm4116, %v3988, %v4244
  %v4373 = vsel %vm4117, %v3989, %v4245
  %v4374 = vsel %vm4118, %v3990, %v4246
  %v4375 = vsel %vm4119, %v3991, %v4247
  %v4376 = vsel %vm4120, %v3992, %v4248
  %v4377 = vsel %vm4121, %v3993, %v4249
  %v4378 = vsel %vm4122, %v3994, %v4250
  %v4379 = vsel %vm4123, %v3995, %v4251
  %v4380 = vsel %vm4124, %v3996, %v4252
  %v4381 = vsel %vm4125, %v3997, %v4253
  %v4382 = vsel %vm4126, %v3998, %v4254
  %v4383 = vsel %vm4127, %v3999, %v4255
  %v4384 = vsel %vm4128, %v4000, %v4256
  %v4385 = vsel %vm4129, %v4001, %v4257
  %v4386 = vsel %vm4130, %v4002, %v4258
  %v4387 = vsel %vm4131, %v4003, %v4259
  %v4388 = vsel %vm4132, %v4004, %v4260
  %v4389 = vsel %vm4133, %v4005, %v4261
  %v4390 = vsel %vm4134, %v4006, %v4262
  %v4391 = vsel %vm4135, %v4007, %v4263
  %v4392 = vsel %vm4136, %v4008, %v4264
  %v4393 = vsel %vm4137, %v4009, %v4265
  %v4394 = vsel %vm4138, %v4010, %v4266
  %v4395 = vsel %vm4139, %v4011, %v4267
  %v4396 = vsel %vm4140, %v4012, %v4268
  %v4397 = vsel %vm4141, %v4013, %v4269
  %v4398 = vsel %vm4142, %v4014, %v4270
  %v4399 = vsel %vm4143, %v4015, %v4271
  %v4400 = vsel %vm4144, %v4016, %v4272
  %v4401 = vsel %vm4145, %v4017, %v4273
  %v4402 = vsel %vm4146, %v4018, %v4274
  %v4403 = vsel %vm4147, %v4019, %v4275
  %v4404 = vsel %vm4148, %v4020, %v4276
  %v4405 = vsel %vm4149, %v4021, %v4277
  %v4406 = vsel %vm4150, %v4022, %v4278
  %v4407 = vsel %vm4151, %v4023, %v4279
  %v4408 = vsel %vm4152, %v4024, %v4280
  %v4409 = vsel %vm4153, %v4025, %v4281
  %v4410 = vsel %vm4154, %v4026, %v4282
  %v4411 = vsel %vm4155, %v4027, %v4283
  %v4412 = vsel %vm4156, %v4028, %v4284
  %v4413 = vsel %vm4157, %v4029, %v4285
  %v4414 = vsel %vm4158, %v4030, %v4286
  %v4415 = vsel %vm4159, %v4031, %v4287
  %v4416 = vsel %vm4160, %v4032, %v4288
  %v4417 = vsel %vm4161, %v4033, %v4289
  %v4418 = vsel %vm4162, %v4034, %v4290
  %v4419 = vsel %vm4163, %v4035, %v4291
  %v4420 = vsel %vm4164, %v4036, %v4292
  %v4421 = vsel %vm4165, %v4037, %v4293
  %v4422 = vsel %vm4166, %v4038, %v4294
  %v4423 = vsel %vm4167, %v4039, %v4295
  %v4424 = vsel %vm4168, %v4040, %v4296
  %v4425 = vsel %vm4169, %v4041, %v4297
  %v4426 = vsel %vm4170, %v4042, %v4298
  %v4427 = vsel %vm4171, %v4043, %v4299
  %v4428 = vsel %vm4172, %v4044, %v4300
  %v4429 = vsel %vm4173, %v4045, %v4301
  %v4430 = vsel %vm4174, %v4046, %v4302
  %v4431 = vsel %vm4175, %v4047, %v4303
  %v4432 = vsel %vm4176, %v4048, %v4304
  %v4433 = vsel %vm4177, %v4049, %v4305
  %v4434 = vsel %vm4178, %v4050, %v4306
  %v4435 = vsel %vm4179, %v4051, %v4307
  %v4436 = vsel %vm4180, %v4052, %v4308
  %v4437 = vsel %vm4181, %v4053, %v4309
  %v4438 = vsel %vm4182, %v4054, %v4310
  %v4439 = vsel %vm4183, %v4055, %v4311
  %v4440 = vsel %vm4184, %v4056, %v4312
  %v4441 = vsel %vm4185, %v4057, %v4313
  %v4442 = vsel %vm4186, %v4058, %v4314
  %v4443 = vsel %vm4187, %v4059, %v4315
  %v4444 = vsel %vm4188, %v4060, %v4316
  %v4445 = vsel %vm4189, %v4061, %v4317
  %v4446 = vsel %vm4190, %v4062, %v4318
  %v4447 = vsel %vm4191, %v4063, %v4319
  %v4448 = vsel %vm4192, %v4064, %v4320
  %v4449 = vsel %vm4193, %v4065, %v4321
  %v4450 = vsel %vm4194, %v4066, %v4322
  %v4451 = vsel %vm4195, %v4067, %v4323
  %v4452 = vsel %vm4196, %v4068, %v4324
  %v4453 = vsel %vm4197, %v4069, %v4325
  %v4454 = vsel %vm4198, %v4070, %v4326
  %v4455 = vsel %vm4199, %v4071, %v4327
  %v4456 = vsel %vm4200, %v4072, %v4328
  %v4457 = vsel %vm4201, %v4073, %v4329
  %v4458 = vsel %vm4202, %v4074, %v4330
  %v4459 = vsel %vm4203, %v4075, %v4331
  %v4460 = vsel %vm4204, %v4076, %v4332
  %v4461 = vsel %vm4205, %v4077, %v4333
  %v4462 = vpack.c.bf16 %v4334, %v4334
  %v4463 = vpack.c.bf16 %v4335, %v4335
  %v4464 = vpack.c.bf16 %v4336, %v4336
  %v4465 = vpack.c.bf16 %v4337, %v4337
  %v4466 = vpack.c.bf16 %v4338, %v4338
  %v4467 = vpack.c.bf16 %v4339, %v4339
  %v4468 = vpack.c.bf16 %v4340, %v4340
  %v4469 = vpack.c.bf16 %v4341, %v4341
  %v4470 = vpack.c.bf16 %v4342, %v4342
  %v4471 = vpack.c.bf16 %v4343, %v4343
  %v4472 = vpack.c.bf16 %v4344, %v4344
  %v4473 = vpack.c.bf16 %v4345, %v4345
  %v4474 = vpack.c.bf16 %v4346, %v4346
  %v4475 = vpack.c.bf16 %v4347, %v4347
  %v4476 = vpack.c.bf16 %v4348, %v4348
  %v4477 = vpack.c.bf16 %v4349, %v4349
  %v4478 = vpack.c.bf16 %v4350, %v4350
  %v4479 = vpack.c.bf16 %v4351, %v4351
  %v4480 = vpack.c.bf16 %v4352, %v4352
  %v4481 = vpack.c.bf16 %v4353, %v4353
  %v4482 = vpack.c.bf16 %v4354, %v4354
  %v4483 = vpack.c.bf16 %v4355, %v4355
  %v4484 = vpack.c.bf16 %v4356, %v4356
  %v4485 = vpack.c.bf16 %v4357, %v4357
  %v4486 = vpack.c.bf16 %v4358, %v4358
  %v4487 = vpack.c.bf16 %v4359, %v4359
  %v4488 = vpack.c.bf16 %v4360, %v4360
  %v4489 = vpack.c.bf16 %v4361, %v4361
  %v4490 = vpack.c.bf16 %v4362, %v4362
  %v4491 = vpack.c.bf16 %v4363, %v4363
  %v4492 = vpack.c.bf16 %v4364, %v4364
  %v4493 = vpack.c.bf16 %v4365, %v4365
  %v4494 = vpack.c.bf16 %v4366, %v4366
  %v4495 = vpack.c.bf16 %v4367, %v4367
  %v4496 = vpack.c.bf16 %v4368, %v4368
  %v4497 = vpack.c.bf16 %v4369, %v4369
  %v4498 = vpack.c.bf16 %v4370, %v4370
  %v4499 = vpack.c.bf16 %v4371, %v4371
  %v4500 = vpack.c.bf16 %v4372, %v4372
  %v4501 = vpack.c.bf16 %v4373, %v4373
  %v4502 = vpack.c.bf16 %v4374, %v4374
  %v4503 = vpack.c.bf16 %v4375, %v4375
  %v4504 = vpack.c.bf16 %v4376, %v4376
  %v4505 = vpack.c.bf16 %v4377, %v4377
  %v4506 = vpack.c.bf16 %v4378, %v4378
  %v4507 = vpack.c.bf16 %v4379, %v4379
  %v4508 = vpack.c.bf16 %v4380, %v4380
  %v4509 = vpack.c.bf16 %v4381, %v4381
  %v4510 = vpack.c.bf16 %v4382, %v4382
  %v4511 = vpack.c.bf16 %v4383, %v4383
  %v4512 = vpack.c.bf16 %v4384, %v4384
  %v4513 = vpack.c.bf16 %v4385, %v4385
  %v4514 = vpack.c.bf16 %v4386, %v4386
  %v4515 = vpack.c.bf16 %v4387, %v4387
  %v4516 = vpack.c.bf16 %v4388, %v4388
  %v4517 = vpack.c.bf16 %v4389, %v4389
  %v4518 = vpack.c.bf16 %v4390, %v4390
  %v4519 = vpack.c.bf16 %v4391, %v4391
  %v4520 = vpack.c.bf16 %v4392, %v4392
  %v4521 = vpack.c.bf16 %v4393, %v4393
  %v4522 = vpack.c.bf16 %v4394, %v4394
  %v4523 = vpack.c.bf16 %v4395, %v4395
  %v4524 = vpack.c.bf16 %v4396, %v4396
  %v4525 = vpack.c.bf16 %v4397, %v4397
  %v4526 = vpack.c.bf16 %v4398, %v4398
  %v4527 = vpack.c.bf16 %v4399, %v4399
  %v4528 = vpack.c.bf16 %v4400, %v4400
  %v4529 = vpack.c.bf16 %v4401, %v4401
  %v4530 = vpack.c.bf16 %v4402, %v4402
  %v4531 = vpack.c.bf16 %v4403, %v4403
  %v4532 = vpack.c.bf16 %v4404, %v4404
  %v4533 = vpack.c.bf16 %v4405, %v4405
  %v4534 = vpack.c.bf16 %v4406, %v4406
  %v4535 = vpack.c.bf16 %v4407, %v4407
  %v4536 = vpack.c.bf16 %v4408, %v4408
  %v4537 = vpack.c.bf16 %v4409, %v4409
  %v4538 = vpack.c.bf16 %v4410, %v4410
  %v4539 = vpack.c.bf16 %v4411, %v4411
  %v4540 = vpack.c.bf16 %v4412, %v4412
  %v4541 = vpack.c.bf16 %v4413, %v4413
  %v4542 = vpack.c.bf16 %v4414, %v4414
  %v4543 = vpack.c.bf16 %v4415, %v4415
  %v4544 = vpack.c.bf16 %v4416, %v4416
  %v4545 = vpack.c.bf16 %v4417, %v4417
  %v4546 = vpack.c.bf16 %v4418, %v4418
  %v4547 = vpack.c.bf16 %v4419, %v4419
  %v4548 = vpack.c.bf16 %v4420, %v4420
  %v4549 = vpack.c.bf16 %v4421, %v4421
  %v4550 = vpack.c.bf16 %v4422, %v4422
  %v4551 = vpack.c.bf16 %v4423, %v4423
  %v4552 = vpack.c.bf16 %v4424, %v4424
  %v4553 = vpack.c.bf16 %v4425, %v4425
  %v4554 = vpack.c.bf16 %v4426, %v4426
  %v4555 = vpack.c.bf16 %v4427, %v4427
  %v4556 = vpack.c.bf16 %v4428, %v4428
  %v4557 = vpack.c.bf16 %v4429, %v4429
  %v4558 = vpack.c.bf16 %v4430, %v4430
  %v4559 = vpack.c.bf16 %v4431, %v4431
  %v4560 = vpack.c.bf16 %v4432, %v4432
  %v4561 = vpack.c.bf16 %v4433, %v4433
  %v4562 = vpack.c.bf16 %v4434, %v4434
  %v4563 = vpack.c.bf16 %v4435, %v4435
  %v4564 = vpack.c.bf16 %v4436, %v4436
  %v4565 = vpack.c.bf16 %v4437, %v4437
  %v4566 = vpack.c.bf16 %v4438, %v4438
  %v4567 = vpack.c.bf16 %v4439, %v4439
  %v4568 = vpack.c.bf16 %v4440, %v4440
  %v4569 = vpack.c.bf16 %v4441, %v4441
  %v4570 = vpack.c.bf16 %v4442, %v4442
  %v4571 = vpack.c.bf16 %v4443, %v4443
  %v4572 = vpack.c.bf16 %v4444, %v4444
  %v4573 = vpack.c.bf16 %v4445, %v4445
  %v4574 = vpack.c.bf16 %v4446, %v4446
  %v4575 = vpack.c.bf16 %v4447, %v4447
  %v4576 = vpack.c.bf16 %v4448, %v4448
  %v4577 = vpack.c.bf16 %v4449, %v4449
  %v4578 = vpack.c.bf16 %v4450, %v4450
  %v4579 = vpack.c.bf16 %v4451, %v4451
  %v4580 = vpack.c.bf16 %v4452, %v4452
  %v4581 = vpack.c.bf16 %v4453, %v4453
  %v4582 = vpack.c.bf16 %v4454, %v4454
  %v4583 = vpack.c.bf16 %v4455, %v4455
  %v4584 = vpack.c.bf16 %v4456, %v4456
  %v4585 = vpack.c.bf16 %v4457, %v4457
  %v4586 = vpack.c.bf16 %v4458, %v4458
  %v4587 = vpack.c.bf16 %v4459, %v4459
  %v4588 = vpack.c.bf16 %v4460, %v4460
  %v4589 = vpack.c.bf16 %v4461, %v4461
  %v4718 = vunpack.c.l.b16 %v4462
  %v4719 = vunpack.c.l.b16 %v4463
  %v4720 = vunpack.c.l.b16 %v4464
  %v4721 = vunpack.c.l.b16 %v4465
  %v4722 = vunpack.c.l.b16 %v4466
  %v4723 = vunpack.c.l.b16 %v4467
  %v4724 = vunpack.c.l.b16 %v4468
  %v4725 = vunpack.c.l.b16 %v4469
  %v4726 = vunpack.c.l.b16 %v4470
  %v4727 = vunpack.c.l.b16 %v4471
  %v4728 = vunpack.c.l.b16 %v4472
  %v4729 = vunpack.c.l.b16 %v4473
  %v4730 = vunpack.c.l.b16 %v4474
  %v4731 = vunpack.c.l.b16 %v4475
  %v4732 = vunpack.c.l.b16 %v4476
  %v4733 = vunpack.c.l.b16 %v4477
  %v4734 = vunpack.c.l.b16 %v4478
  %v4735 = vunpack.c.l.b16 %v4479
  %v4736 = vunpack.c.l.b16 %v4480
  %v4737 = vunpack.c.l.b16 %v4481
  %v4738 = vunpack.c.l.b16 %v4482
  %v4739 = vunpack.c.l.b16 %v4483
  %v4740 = vunpack.c.l.b16 %v4484
  %v4741 = vunpack.c.l.b16 %v4485
  %v4742 = vunpack.c.l.b16 %v4486
  %v4743 = vunpack.c.l.b16 %v4487
  %v4744 = vunpack.c.l.b16 %v4488
  %v4745 = vunpack.c.l.b16 %v4489
  %v4746 = vunpack.c.l.b16 %v4490
  %v4747 = vunpack.c.l.b16 %v4491
  %v4748 = vunpack.c.l.b16 %v4492
  %v4749 = vunpack.c.l.b16 %v4493
  %v4750 = vunpack.c.l.b16 %v4494
  %v4751 = vunpack.c.l.b16 %v4495
  %v4752 = vunpack.c.l.b16 %v4496
  %v4753 = vunpack.c.l.b16 %v4497
  %v4754 = vunpack.c.l.b16 %v4498
  %v4755 = vunpack.c.l.b16 %v4499
  %v4756 = vunpack.c.l.b16 %v4500
  %v4757 = vunpack.c.l.b16 %v4501
  %v4758 = vunpack.c.l.b16 %v4502
  %v4759 = vunpack.c.l.b16 %v4503
  %v4760 = vunpack.c.l.b16 %v4504
  %v4761 = vunpack.c.l.b16 %v4505
  %v4762 = vunpack.c.l.b16 %v4506
  %v4763 = vunpack.c.l.b16 %v4507
  %v4764 = vunpack.c.l.b16 %v4508
  %v4765 = vunpack.c.l.b16 %v4509
  %v4766 = vunpack.c.l.b16 %v4510
  %v4767 = vunpack.c.l.b16 %v4511
  %v4768 = vunpack.c.l.b16 %v4512
  %v4769 = vunpack.c.l.b16 %v4513
  %v4770 = vunpack.c.l.b16 %v4514
  %v4771 = vunpack.c.l.b16 %v4515
  %v4772 = vunpack.c.l.b16 %v4516
  %v4773 = vunpack.c.l.b16 %v4517
  %v4774 = vunpack.c.l.b16 %v4518
  %v4775 = vunpack.c.l.b16 %v4519
  %v4776 = vunpack.c.l.b16 %v4520
  %v4777 = vunpack.c.l.b16 %v4521
  %v4778 = vunpack.c.l.b16 %v4522
  %v4779 = vunpack.c.l.b16 %v4523
  %v4780 = vunpack.c.l.b16 %v4524
  %v4781 = vunpack.c.l.b16 %v4525
  %v4782 = vunpack.c.l.b16 %v4526
  %v4783 = vunpack.c.l.b16 %v4527
  %v4784 = vunpack.c.l.b16 %v4528
  %v4785 = vunpack.c.l.b16 %v4529
  %v4786 = vunpack.c.l.b16 %v4530
  %v4787 = vunpack.c.l.b16 %v4531
  %v4788 = vunpack.c.l.b16 %v4532
  %v4789 = vunpack.c.l.b16 %v4533
  %v4790 = vunpack.c.l.b16 %v4534
  %v4791 = vunpack.c.l.b16 %v4535
  %v4792 = vunpack.c.l.b16 %v4536
  %v4793 = vunpack.c.l.b16 %v4537
  %v4794 = vunpack.c.l.b16 %v4538
  %v4795 = vunpack.c.l.b16 %v4539
  %v4796 = vunpack.c.l.b16 %v4540
  %v4797 = vunpack.c.l.b16 %v4541
  %v4798 = vunpack.c.l.b16 %v4542
  %v4799 = vunpack.c.l.b16 %v4543
  %v4800 = vunpack.c.l.b16 %v4544
  %v4801 = vunpack.c.l.b16 %v4545
  %v4802 = vunpack.c.l.b16 %v4546
  %v4803 = vunpack.c.l.b16 %v4547
  %v4804 = vunpack.c.l.b16 %v4548
  %v4805 = vunpack.c.l.b16 %v4549
  %v4806 = vunpack.c.l.b16 %v4550
  %v4807 = vunpack.c.l.b16 %v4551
  %v4808 = vunpack.c.l.b16 %v4552
  %v4809 = vunpack.c.l.b16 %v4553
  %v4810 = vunpack.c.l.b16 %v4554
  %v4811 = vunpack.c.l.b16 %v4555
  %v4812 = vunpack.c.l.b16 %v4556
  %v4813 = vunpack.c.l.b16 %v4557
  %v4814 = vunpack.c.l.b16 %v4558
  %v4815 = vunpack.c.l.b16 %v4559
  %v4816 = vunpack.c.l.b16 %v4560
  %v4817 = vunpack.c.l.b16 %v4561
  %v4818 = vunpack.c.l.b16 %v4562
  %v4819 = vunpack.c.l.b16 %v4563
  %v4820 = vunpack.c.l.b16 %v4564
  %v4821 = vunpack.c.l.b16 %v4565
  %v4822 = vunpack.c.l.b16 %v4566
  %v4823 = vunpack.c.l.b16 %v4567
  %v4824 = vunpack.c.l.b16 %v4568
  %v4825 = vunpack.c.l.b16 %v4569
  %v4826 = vunpack.c.l.b16 %v4570
  %v4827 = vunpack.c.l.b16 %v4571
  %v4828 = vunpack.c.l.b16 %v4572
  %v4829 = vunpack.c.l.b16 %v4573
  %v4830 = vunpack.c.l.b16 %v4574
  %v4831 = vunpack.c.l.b16 %v4575
  %v4832 = vunpack.c.l.b16 %v4576
  %v4833 = vunpack.c.l.b16 %v4577
  %v4834 = vunpack.c.l.b16 %v4578
  %v4835 = vunpack.c.l.b16 %v4579
  %v4836 = vunpack.c.l.b16 %v4580
  %v4837 = vunpack.c.l.b16 %v4581
  %v4838 = vunpack.c.l.b16 %v4582
  %v4839 = vunpack.c.l.b16 %v4583
  %v4840 = vunpack.c.l.b16 %v4584
  %v4841 = vunpack.c.l.b16 %v4585
  %v4842 = vunpack.c.l.b16 %v4586
  %v4843 = vunpack.c.l.b16 %v4587
  %v4844 = vunpack.c.l.b16 %v4588
  %v4845 = vunpack.c.l.b16 %v4589
  %v4846 = vpack.c.b16 %v4719, %v4718
  %v4847 = vpack.c.b16 %v4721, %v4720
  %v4848 = vpack.c.b16 %v4723, %v4722
  %v4849 = vpack.c.b16 %v4725, %v4724
  %v4850 = vpack.c.b16 %v4727, %v4726
  %v4851 = vpack.c.b16 %v4729, %v4728
  %v4852 = vpack.c.b16 %v4731, %v4730
  %v4853 = vpack.c.b16 %v4733, %v4732
  %v4854 = vpack.c.b16 %v4735, %v4734
  %v4855 = vpack.c.b16 %v4737, %v4736
  %v4856 = vpack.c.b16 %v4739, %v4738
  %v4857 = vpack.c.b16 %v4741, %v4740
  %v4858 = vpack.c.b16 %v4743, %v4742
  %v4859 = vpack.c.b16 %v4745, %v4744
  %v4860 = vpack.c.b16 %v4747, %v4746
  %v4861 = vpack.c.b16 %v4749, %v4748
  %v4862 = vpack.c.b16 %v4751, %v4750
  %v4863 = vpack.c.b16 %v4753, %v4752
  %v4864 = vpack.c.b16 %v4755, %v4754
  %v4865 = vpack.c.b16 %v4757, %v4756
  %v4866 = vpack.c.b16 %v4759, %v4758
  %v4867 = vpack.c.b16 %v4761, %v4760
  %v4868 = vpack.c.b16 %v4763, %v4762
  %v4869 = vpack.c.b16 %v4765, %v4764
  %v4870 = vpack.c.b16 %v4767, %v4766
  %v4871 = vpack.c.b16 %v4769, %v4768
  %v4872 = vpack.c.b16 %v4771, %v4770
  %v4873 = vpack.c.b16 %v4773, %v4772
  %v4874 = vpack.c.b16 %v4775, %v4774
  %v4875 = vpack.c.b16 %v4777, %v4776
  %v4876 = vpack.c.b16 %v4779, %v4778
  %v4877 = vpack.c.b16 %v4781, %v4780
  %v4878 = vpack.c.b16 %v4783, %v4782
  %v4879 = vpack.c.b16 %v4785, %v4784
  %v4880 = vpack.c.b16 %v4787, %v4786
  %v4881 = vpack.c.b16 %v4789, %v4788
  %v4882 = vpack.c.b16 %v4791, %v4790
  %v4883 = vpack.c.b16 %v4793, %v4792
  %v4884 = vpack.c.b16 %v4795, %v4794
  %v4885 = vpack.c.b16 %v4797, %v4796
  %v4886 = vpack.c.b16 %v4799, %v4798
  %v4887 = vpack.c.b16 %v4801, %v4800
  %v4888 = vpack.c.b16 %v4803, %v4802
  %v4889 = vpack.c.b16 %v4805, %v4804
  %v4890 = vpack.c.b16 %v4807, %v4806
  %v4891 = vpack.c.b16 %v4809, %v4808
  %v4892 = vpack.c.b16 %v4811, %v4810
  %v4893 = vpack.c.b16 %v4813, %v4812
  %v4894 = vpack.c.b16 %v4815, %v4814
  %v4895 = vpack.c.b16 %v4817, %v4816
  %v4896 = vpack.c.b16 %v4819, %v4818
  %v4897 = vpack.c.b16 %v4821, %v4820
  %v4898 = vpack.c.b16 %v4823, %v4822
  %v4899 = vpack.c.b16 %v4825, %v4824
  %v4900 = vpack.c.b16 %v4827, %v4826
  %v4901 = vpack.c.b16 %v4829, %v4828
  %v4902 = vpack.c.b16 %v4831, %v4830
  %v4903 = vpack.c.b16 %v4833, %v4832
  %v4904 = vpack.c.b16 %v4835, %v4834
  %v4905 = vpack.c.b16 %v4837, %v4836
  %v4906 = vpack.c.b16 %v4839, %v4838
  %v4907 = vpack.c.b16 %v4841, %v4840
  %v4908 = vpack.c.b16 %v4843, %v4842
  %v4909 = vpack.c.b16 %v4845, %v4844
  %4974 = vst [vmem:[%s4] sm:$0xff] %v4846
  %4975 = vst [vmem:[%s4 + $0x8] sm:$0xff] %v4847
  %4976 = vst [vmem:[%s4 + $0x10] sm:$0xff] %v4848
  %4977 = vst [vmem:[%s4 + $0x18] sm:$0xff] %v4849
  %4978 = vst [vmem:[%s4 + $0x20] sm:$0xff] %v4850
  %4979 = vst [vmem:[%s4 + $0x28] sm:$0xff] %v4851
  %4980 = vst [vmem:[%s4 + $0x30] sm:$0xff] %v4852
  %4981 = vst [vmem:[%s4 + $0x38] sm:$0xff] %v4853
  %4982 = vst [vmem:[%s4 + $0x40] sm:$0xff] %v4854
  %4983 = vst [vmem:[%s4 + $0x48] sm:$0xff] %v4855
  %4984 = vst [vmem:[%s4 + $0x50] sm:$0xff] %v4856
  %4985 = vst [vmem:[%s4 + $0x58] sm:$0xff] %v4857
  %4986 = vst [vmem:[%s4 + $0x60] sm:$0xff] %v4858
  %4987 = vst [vmem:[%s4 + $0x68] sm:$0xff] %v4859
  %4988 = vst [vmem:[%s4 + $0x70] sm:$0xff] %v4860
  %4989 = vst [vmem:[%s4 + $0x78] sm:$0xff] %v4861
  %4990 = vst [vmem:[%s4 + $0x80] sm:$0xff] %v4862
  %4991 = vst [vmem:[%s4 + $0x88] sm:$0xff] %v4863
  %4992 = vst [vmem:[%s4 + $0x90] sm:$0xff] %v4864
  %4993 = vst [vmem:[%s4 + $0x98] sm:$0xff] %v4865
  %4994 = vst [vmem:[%s4 + $0xa0] sm:$0xff] %v4866
  %4995 = vst [vmem:[%s4 + $0xa8] sm:$0xff] %v4867
  %4996 = vst [vmem:[%s4 + $0xb0] sm:$0xff] %v4868
  %4997 = vst [vmem:[%s4 + $0xb8] sm:$0xff] %v4869
  %4998 = vst [vmem:[%s4 + $0xc0] sm:$0xff] %v4870
  %4999 = vst [vmem:[%s4 + $0xc8] sm:$0xff] %v4871
  %5000 = vst [vmem:[%s4 + $0xd0] sm:$0xff] %v4872
  %5001 = vst [vmem:[%s4 + $0xd8] sm:$0xff] %v4873
  %5002 = vst [vmem:[%s4 + $0xe0] sm:$0xff] %v4874
  %5003 = vst [vmem:[%s4 + $0xe8] sm:$0xff] %v4875
  %5004 = vst [vmem:[%s4 + $0xf0] sm:$0xff] %v4876
  %5005 = vst [vmem:[%s4 + $0xf8] sm:$0xff] %v4877
  %5006 = vst [vmem:[%s4 + $0x100] sm:$0xff] %v4878
  %5007 = vst [vmem:[%s4 + $0x108] sm:$0xff] %v4879
  %5008 = vst [vmem:[%s4 + $0x110] sm:$0xff] %v4880
  %5009 = vst [vmem:[%s4 + $0x118] sm:$0xff] %v4881
  %5010 = vst [vmem:[%s4 + $0x120] sm:$0xff] %v4882
  %5011 = vst [vmem:[%s4 + $0x128] sm:$0xff] %v4883
  %5012 = vst [vmem:[%s4 + $0x130] sm:$0xff] %v4884
  %5013 = vst [vmem:[%s4 + $0x138] sm:$0xff] %v4885
  %5014 = vst [vmem:[%s4 + $0x140] sm:$0xff] %v4886
  %5015 = vst [vmem:[%s4 + $0x148] sm:$0xff] %v4887
  %5016 = vst [vmem:[%s4 + $0x150] sm:$0xff] %v4888
  %5017 = vst [vmem:[%s4 + $0x158] sm:$0xff] %v4889
  %5018 = vst [vmem:[%s4 + $0x160] sm:$0xff] %v4890
  %5019 = vst [vmem:[%s4 + $0x168] sm:$0xff] %v4891
  %5020 = vst [vmem:[%s4 + $0x170] sm:$0xff] %v4892
  %5021 = vst [vmem:[%s4 + $0x178] sm:$0xff] %v4893
  %5022 = vst [vmem:[%s4 + $0x180] sm:$0xff] %v4894
  %5023 = vst [vmem:[%s4 + $0x188] sm:$0xff] %v4895
  %5024 = vst [vmem:[%s4 + $0x190] sm:$0xff] %v4896
  %5025 = vst [vmem:[%s4 + $0x198] sm:$0xff] %v4897
  %5026 = vst [vmem:[%s4 + $0x1a0] sm:$0xff] %v4898
  %5027 = vst [vmem:[%s4 + $0x1a8] sm:$0xff] %v4899
  %5028 = vst [vmem:[%s4 + $0x1b0] sm:$0xff] %v4900
  %5029 = vst [vmem:[%s4 + $0x1b8] sm:$0xff] %v4901
  %5030 = vst [vmem:[%s4 + $0x1c0] sm:$0xff] %v4902
  %5031 = vst [vmem:[%s4 + $0x1c8] sm:$0xff] %v4903
  %5032 = vst [vmem:[%s4 + $0x1d0] sm:$0xff] %v4904
  %5033 = vst [vmem:[%s4 + $0x1d8] sm:$0xff] %v4905
  %5034 = vst [vmem:[%s4 + $0x1e0] sm:$0xff] %v4906
  %5035 = vst [vmem:[%s4 + $0x1e8] sm:$0xff] %v4907
  %5036 = vst [vmem:[%s4 + $0x1f0] sm:$0xff] %v4908
  %5037 = vst [vmem:[%s4 + $0x1f8] sm:$0xff] %v4909
  // Predicated region
  $region18: #{content_encoder_forward.6} parent=0 // pred_check
    _
  $region19: #{content_encoder_forward.6} parent=0 // pred_check_branch
    %5039 = sbr.rel (0) target = $region21
  $region20: #{content_encoder_forward.6} parent=0 // pred_region
    _
  $region21: #{content_encoder_forward.6} parent=0 // pred_fallthru
    _
  // Predicated region
  $region22: #{content_encoder_forward.6} parent=0 // pred_check
    _
  $region23: #{content_encoder_forward.6} parent=0 // pred_check_branch
    %5041 = sbr.rel (0) target = $region25
  $region24: #{content_encoder_forward.6} parent=0 // pred_region
    _
  $region25: #{content_encoder_forward.6} parent=0 // pred_fallthru
    _

// kernel: content_encoder_forward.7
$region0: #{content_encoder_forward.7}
  #allocation0 [shape = 'u32[]', space=smem, size = 0x4, offset = 0x4, fixed_abs, tag = 'smem constant byte address 0x4 - core index']
  #allocation1 [shape = 'u32[144,128]{1,0:T(1,128)}', space=vmem, size = 0x12000, scoped, tag = 'internal scratch']
  %s0 = inlined_call_operand.vmem [shape: bf16[128,4096], index: 0, kind: input, shape index: {}]
  %s1 = inlined_call_operand.vmem [shape: bf16[16,128], index: 1, kind: input, shape index: {}]
  %s2 = inlined_call_operand.vmem [shape: f32[16,1], index: 2, kind: input, shape index: {}]
  %s3 = inlined_call_operand.vmem [shape: f32[16,1], index: 3, kind: input, shape index: {}]
  %s4 = inlined_call_operand.vmem [shape: bf16[16,4096], index: 4, kind: output, shape index: {}]
  %s5 = sld [smem:[#allocation0]]
  $region26: #{content_encoder_forward.7} parent=0
    _
  %s7 = ssub.s32 1, %s5
  %s8 = scalar_select 0, %s7, %s5
  // Predicated region
  $region2: #{content_encoder_forward.7} parent=0 // pred_check
    _
  $region3: #{content_encoder_forward.7} parent=0 // pred_check_branch
    %10 = sbr.rel (0) target = $region5
  $region4: #{content_encoder_forward.7} parent=0 // pred_region
    _
  $region5: #{content_encoder_forward.7} parent=0 // pred_fallthru
    _
  // Predicated region
  $region6: #{content_encoder_forward.7} parent=0 // pred_check
    _
  $region7: #{content_encoder_forward.7} parent=0 // pred_check_branch
    %12 = sbr.rel (0) target = $region9
  $region8: #{content_encoder_forward.7} parent=0 // pred_region
    _
  $region9: #{content_encoder_forward.7} parent=0 // pred_fallthru
    _
  // Predicated region
  $region10: #{content_encoder_forward.7} parent=0 // pred_check
    _
  $region11: #{content_encoder_forward.7} parent=0 // pred_check_branch
    %14 = sbr.rel (0) target = $region13
  $region12: #{content_encoder_forward.7} parent=0 // pred_region
    _
  $region13: #{content_encoder_forward.7} parent=0 // pred_fallthru
    _
  // Predicated region
  $region14: #{content_encoder_forward.7} parent=0 // pred_check
    _
  $region15: #{content_encoder_forward.7} parent=0 // pred_check_branch
    %16 = sbr.rel (0) target = $region17
  $region16: #{content_encoder_forward.7} parent=0 // pred_region
    _
  $region17: #{content_encoder_forward.7} parent=0 // pred_fallthru
    _
  %v18 = vld [vmem:[%s1] sm:$0xf]
  %v19 = vld [vmem:[%s1 + $0x4] sm:$0xf]
  %v20 = vld [vmem:[%s0] sm:$0xff]
  %v21 = vld [vmem:[%s0 + $0x8] sm:$0xff]
  %v22 = vld [vmem:[%s0 + $0x10] sm:$0xff]
  %v23 = vld [vmem:[%s0 + $0x18] sm:$0xff]
  %v24 = vld [vmem:[%s0 + $0x20] sm:$0xff]
  %v25 = vld [vmem:[%s0 + $0x28] sm:$0xff]
  %v26 = vld [vmem:[%s0 + $0x30] sm:$0xff]
  %v27 = vld [vmem:[%s0 + $0x38] sm:$0xff]
  %v28 = vld [vmem:[%s0 + $0x40] sm:$0xff]
  %v29 = vld [vmem:[%s0 + $0x48] sm:$0xff]
  %v30 = vld [vmem:[%s0 + $0x50] sm:$0xff]
  %v31 = vld [vmem:[%s0 + $0x58] sm:$0xff]
  %v32 = vld [vmem:[%s0 + $0x60] sm:$0xff]
  %v33 = vld [vmem:[%s0 + $0x68] sm:$0xff]
  %v34 = vld [vmem:[%s0 + $0x70] sm:$0xff]
  %v35 = vld [vmem:[%s0 + $0x78] sm:$0xff]
  %v36 = vld [vmem:[%s0 + $0x80] sm:$0xff]
  %v37 = vld [vmem:[%s0 + $0x88] sm:$0xff]
  %v38 = vld [vmem:[%s0 + $0x90] sm:$0xff]
  %v39 = vld [vmem:[%s0 + $0x98] sm:$0xff]
  %v40 = vld [vmem:[%s0 + $0xa0] sm:$0xff]
  %v41 = vld [vmem:[%s0 + $0xa8] sm:$0xff]
  %v42 = vld [vmem:[%s0 + $0xb0] sm:$0xff]
  %v43 = vld [vmem:[%s0 + $0xb8] sm:$0xff]
  %v44 = vld [vmem:[%s0 + $0xc0] sm:$0xff]
  %v45 = vld [vmem:[%s0 + $0xc8] sm:$0xff]
  %v46 = vld [vmem:[%s0 + $0xd0] sm:$0xff]
  %v47 = vld [vmem:[%s0 + $0xd8] sm:$0xff]
  %v48 = vld [vmem:[%s0 + $0xe0] sm:$0xff]
  %v49 = vld [vmem:[%s0 + $0xe8] sm:$0xff]
  %v50 = vld [vmem:[%s0 + $0xf0] sm:$0xff]
  %v51 = vld [vmem:[%s0 + $0xf8] sm:$0xff]
  %v52 = vld [vmem:[%s0 + $0x100] sm:$0xff]
  %v53 = vld [vmem:[%s0 + $0x108] sm:$0xff]
  %v54 = vld [vmem:[%s0 + $0x110] sm:$0xff]
  %v55 = vld [vmem:[%s0 + $0x118] sm:$0xff]
  %v56 = vld [vmem:[%s0 + $0x120] sm:$0xff]
  %v57 = vld [vmem:[%s0 + $0x128] sm:$0xff]
  %v58 = vld [vmem:[%s0 + $0x130] sm:$0xff]
  %v59 = vld [vmem:[%s0 + $0x138] sm:$0xff]
  %v60 = vld [vmem:[%s0 + $0x140] sm:$0xff]
  %v61 = vld [vmem:[%s0 + $0x148] sm:$0xff]
  %v62 = vld [vmem:[%s0 + $0x150] sm:$0xff]
  %v63 = vld [vmem:[%s0 + $0x158] sm:$0xff]
  %v64 = vld [vmem:[%s0 + $0x160] sm:$0xff]
  %v65 = vld [vmem:[%s0 + $0x168] sm:$0xff]
  %v66 = vld [vmem:[%s0 + $0x170] sm:$0xff]
  %v67 = vld [vmem:[%s0 + $0x178] sm:$0xff]
  %v68 = vld [vmem:[%s0 + $0x180] sm:$0xff]
  %v69 = vld [vmem:[%s0 + $0x188] sm:$0xff]
  %v70 = vld [vmem:[%s0 + $0x190] sm:$0xff]
  %v71 = vld [vmem:[%s0 + $0x198] sm:$0xff]
  %v72 = vld [vmem:[%s0 + $0x1a0] sm:$0xff]
  %v73 = vld [vmem:[%s0 + $0x1a8] sm:$0xff]
  %v74 = vld [vmem:[%s0 + $0x1b0] sm:$0xff]
  %v75 = vld [vmem:[%s0 + $0x1b8] sm:$0xff]
  %v76 = vld [vmem:[%s0 + $0x1c0] sm:$0xff]
  %v77 = vld [vmem:[%s0 + $0x1c8] sm:$0xff]
  %v78 = vld [vmem:[%s0 + $0x1d0] sm:$0xff]
  %v79 = vld [vmem:[%s0 + $0x1d8] sm:$0xff]
  %v80 = vld [vmem:[%s0 + $0x1e0] sm:$0xff]
  %v81 = vld [vmem:[%s0 + $0x1e8] sm:$0xff]
  %v82 = vld [vmem:[%s0 + $0x1f0] sm:$0xff]
  %v83 = vld [vmem:[%s0 + $0x1f8] sm:$0xff]
  %v84 = vld [vmem:[%s0 + $0x200] sm:$0xff]
  %v85 = vld [vmem:[%s0 + $0x208] sm:$0xff]
  %v86 = vld [vmem:[%s0 + $0x210] sm:$0xff]
  %v87 = vld [vmem:[%s0 + $0x218] sm:$0xff]
  %v88 = vld [vmem:[%s0 + $0x220] sm:$0xff]
  %v89 = vld [vmem:[%s0 + $0x228] sm:$0xff]
  %v90 = vld [vmem:[%s0 + $0x230] sm:$0xff]
  %v91 = vld [vmem:[%s0 + $0x238] sm:$0xff]
  %v92 = vld [vmem:[%s0 + $0x240] sm:$0xff]
  %v93 = vld [vmem:[%s0 + $0x248] sm:$0xff]
  %v94 = vld [vmem:[%s0 + $0x250] sm:$0xff]
  %v95 = vld [vmem:[%s0 + $0x258] sm:$0xff]
  %v96 = vld [vmem:[%s0 + $0x260] sm:$0xff]
  %v97 = vld [vmem:[%s0 + $0x268] sm:$0xff]
  %v98 = vld [vmem:[%s0 + $0x270] sm:$0xff]
  %v99 = vld [vmem:[%s0 + $0x278] sm:$0xff]
  %v100 = vld [vmem:[%s0 + $0x280] sm:$0xff]
  %v101 = vld [vmem:[%s0 + $0x288] sm:$0xff]
  %v102 = vld [vmem:[%s0 + $0x290] sm:$0xff]
  %v103 = vld [vmem:[%s0 + $0x298] sm:$0xff]
  %v104 = vld [vmem:[%s0 + $0x2a0] sm:$0xff]
  %v105 = vld [vmem:[%s0 + $0x2a8] sm:$0xff]
  %v106 = vld [vmem:[%s0 + $0x2b0] sm:$0xff]
  %v107 = vld [vmem:[%s0 + $0x2b8] sm:$0xff]
  %v108 = vld [vmem:[%s0 + $0x2c0] sm:$0xff]
  %v109 = vld [vmem:[%s0 + $0x2c8] sm:$0xff]
  %v110 = vld [vmem:[%s0 + $0x2d0] sm:$0xff]
  %v111 = vld [vmem:[%s0 + $0x2d8] sm:$0xff]
  %v112 = vld [vmem:[%s0 + $0x2e0] sm:$0xff]
  %v113 = vld [vmem:[%s0 + $0x2e8] sm:$0xff]
  %v114 = vld [vmem:[%s0 + $0x2f0] sm:$0xff]
  %v115 = vld [vmem:[%s0 + $0x2f8] sm:$0xff]
  %v116 = vld [vmem:[%s0 + $0x300] sm:$0xff]
  %v117 = vld [vmem:[%s0 + $0x308] sm:$0xff]
  %v118 = vld [vmem:[%s0 + $0x310] sm:$0xff]
  %v119 = vld [vmem:[%s0 + $0x318] sm:$0xff]
  %v120 = vld [vmem:[%s0 + $0x320] sm:$0xff]
  %v121 = vld [vmem:[%s0 + $0x328] sm:$0xff]
  %v122 = vld [vmem:[%s0 + $0x330] sm:$0xff]
  %v123 = vld [vmem:[%s0 + $0x338] sm:$0xff]
  %v124 = vld [vmem:[%s0 + $0x340] sm:$0xff]
  %v125 = vld [vmem:[%s0 + $0x348] sm:$0xff]
  %v126 = vld [vmem:[%s0 + $0x350] sm:$0xff]
  %v127 = vld [vmem:[%s0 + $0x358] sm:$0xff]
  %v128 = vld [vmem:[%s0 + $0x360] sm:$0xff]
  %v129 = vld [vmem:[%s0 + $0x368] sm:$0xff]
  %v130 = vld [vmem:[%s0 + $0x370] sm:$0xff]
  %v131 = vld [vmem:[%s0 + $0x378] sm:$0xff]
  %v132 = vld [vmem:[%s0 + $0x380] sm:$0xff]
  %v133 = vld [vmem:[%s0 + $0x388] sm:$0xff]
  %v134 = vld [vmem:[%s0 + $0x390] sm:$0xff]
  %v135 = vld [vmem:[%s0 + $0x398] sm:$0xff]
  %v136 = vld [vmem:[%s0 + $0x3a0] sm:$0xff]
  %v137 = vld [vmem:[%s0 + $0x3a8] sm:$0xff]
  %v138 = vld [vmem:[%s0 + $0x3b0] sm:$0xff]
  %v139 = vld [vmem:[%s0 + $0x3b8] sm:$0xff]
  %v140 = vld [vmem:[%s0 + $0x3c0] sm:$0xff]
  %v141 = vld [vmem:[%s0 + $0x3c8] sm:$0xff]
  %v142 = vld [vmem:[%s0 + $0x3d0] sm:$0xff]
  %v143 = vld [vmem:[%s0 + $0x3d8] sm:$0xff]
  %v144 = vld [vmem:[%s0 + $0x3e0] sm:$0xff]
  %v145 = vld [vmem:[%s0 + $0x3e8] sm:$0xff]
  %v146 = vld [vmem:[%s0 + $0x3f0] sm:$0xff]
  %v147 = vld [vmem:[%s0 + $0x3f8] sm:$0xff]
  %v148 = vld [vmem:[%s0 + $0x400] sm:$0xff]
  %v149 = vld [vmem:[%s0 + $0x408] sm:$0xff]
  %v150 = vld [vmem:[%s0 + $0x410] sm:$0xff]
  %v151 = vld [vmem:[%s0 + $0x418] sm:$0xff]
  %v152 = vld [vmem:[%s0 + $0x420] sm:$0xff]
  %v153 = vld [vmem:[%s0 + $0x428] sm:$0xff]
  %v154 = vld [vmem:[%s0 + $0x430] sm:$0xff]
  %v155 = vld [vmem:[%s0 + $0x438] sm:$0xff]
  %v156 = vld [vmem:[%s0 + $0x440] sm:$0xff]
  %v157 = vld [vmem:[%s0 + $0x448] sm:$0xff]
  %v158 = vld [vmem:[%s0 + $0x450] sm:$0xff]
  %v159 = vld [vmem:[%s0 + $0x458] sm:$0xff]
  %v160 = vld [vmem:[%s0 + $0x460] sm:$0xff]
  %v161 = vld [vmem:[%s0 + $0x468] sm:$0xff]
  %v162 = vld [vmem:[%s0 + $0x470] sm:$0xff]
  %v163 = vld [vmem:[%s0 + $0x478] sm:$0xff]
  %v164 = vld [vmem:[%s0 + $0x480] sm:$0xff]
  %v165 = vld [vmem:[%s0 + $0x488] sm:$0xff]
  %v166 = vld [vmem:[%s0 + $0x490] sm:$0xff]
  %v167 = vld [vmem:[%s0 + $0x498] sm:$0xff]
  %v168 = vld [vmem:[%s0 + $0x4a0] sm:$0xff]
  %v169 = vld [vmem:[%s0 + $0x4a8] sm:$0xff]
  %v170 = vld [vmem:[%s0 + $0x4b0] sm:$0xff]
  %v171 = vld [vmem:[%s0 + $0x4b8] sm:$0xff]
  %v172 = vld [vmem:[%s0 + $0x4c0] sm:$0xff]
  %v173 = vld [vmem:[%s0 + $0x4c8] sm:$0xff]
  %v174 = vld [vmem:[%s0 + $0x4d0] sm:$0xff]
  %v175 = vld [vmem:[%s0 + $0x4d8] sm:$0xff]
  %v176 = vld [vmem:[%s0 + $0x4e0] sm:$0xff]
  %v177 = vld [vmem:[%s0 + $0x4e8] sm:$0xff]
  %v178 = vld [vmem:[%s0 + $0x4f0] sm:$0xff]
  %v179 = vld [vmem:[%s0 + $0x4f8] sm:$0xff]
  %v180 = vld [vmem:[%s0 + $0x500] sm:$0xff]
  %v181 = vld [vmem:[%s0 + $0x508] sm:$0xff]
  %v182 = vld [vmem:[%s0 + $0x510] sm:$0xff]
  %v183 = vld [vmem:[%s0 + $0x518] sm:$0xff]
  %v184 = vld [vmem:[%s0 + $0x520] sm:$0xff]
  %v185 = vld [vmem:[%s0 + $0x528] sm:$0xff]
  %v186 = vld [vmem:[%s0 + $0x530] sm:$0xff]
  %v187 = vld [vmem:[%s0 + $0x538] sm:$0xff]
  %v188 = vld [vmem:[%s0 + $0x540] sm:$0xff]
  %v189 = vld [vmem:[%s0 + $0x548] sm:$0xff]
  %v190 = vld [vmem:[%s0 + $0x550] sm:$0xff]
  %v191 = vld [vmem:[%s0 + $0x558] sm:$0xff]
  %v192 = vld [vmem:[%s0 + $0x560] sm:$0xff]
  %v193 = vld [vmem:[%s0 + $0x568] sm:$0xff]
  %v194 = vld [vmem:[%s0 + $0x570] sm:$0xff]
  %v195 = vld [vmem:[%s0 + $0x578] sm:$0xff]
  %v196 = vld [vmem:[%s0 + $0x580] sm:$0xff]
  %v197 = vld [vmem:[%s0 + $0x588] sm:$0xff]
  %v198 = vld [vmem:[%s0 + $0x590] sm:$0xff]
  %v199 = vld [vmem:[%s0 + $0x598] sm:$0xff]
  %v200 = vld [vmem:[%s0 + $0x5a0] sm:$0xff]
  %v201 = vld [vmem:[%s0 + $0x5a8] sm:$0xff]
  %v202 = vld [vmem:[%s0 + $0x5b0] sm:$0xff]
  %v203 = vld [vmem:[%s0 + $0x5b8] sm:$0xff]
  %v204 = vld [vmem:[%s0 + $0x5c0] sm:$0xff]
  %v205 = vld [vmem:[%s0 + $0x5c8] sm:$0xff]
  %v206 = vld [vmem:[%s0 + $0x5d0] sm:$0xff]
  %v207 = vld [vmem:[%s0 + $0x5d8] sm:$0xff]
  %v208 = vld [vmem:[%s0 + $0x5e0] sm:$0xff]
  %v209 = vld [vmem:[%s0 + $0x5e8] sm:$0xff]
  %v210 = vld [vmem:[%s0 + $0x5f0] sm:$0xff]
  %v211 = vld [vmem:[%s0 + $0x5f8] sm:$0xff]
  %v212 = vld [vmem:[%s0 + $0x600] sm:$0xff]
  %v213 = vld [vmem:[%s0 + $0x608] sm:$0xff]
  %v214 = vld [vmem:[%s0 + $0x610] sm:$0xff]
  %v215 = vld [vmem:[%s0 + $0x618] sm:$0xff]
  %v216 = vld [vmem:[%s0 + $0x620] sm:$0xff]
  %v217 = vld [vmem:[%s0 + $0x628] sm:$0xff]
  %v218 = vld [vmem:[%s0 + $0x630] sm:$0xff]
  %v219 = vld [vmem:[%s0 + $0x638] sm:$0xff]
  %v220 = vld [vmem:[%s0 + $0x640] sm:$0xff]
  %v221 = vld [vmem:[%s0 + $0x648] sm:$0xff]
  %v222 = vld [vmem:[%s0 + $0x650] sm:$0xff]
  %v223 = vld [vmem:[%s0 + $0x658] sm:$0xff]
  %v224 = vld [vmem:[%s0 + $0x660] sm:$0xff]
  %v225 = vld [vmem:[%s0 + $0x668] sm:$0xff]
  %v226 = vld [vmem:[%s0 + $0x670] sm:$0xff]
  %v227 = vld [vmem:[%s0 + $0x678] sm:$0xff]
  %v228 = vld [vmem:[%s0 + $0x680] sm:$0xff]
  %v229 = vld [vmem:[%s0 + $0x688] sm:$0xff]
  %v230 = vld [vmem:[%s0 + $0x690] sm:$0xff]
  %v231 = vld [vmem:[%s0 + $0x698] sm:$0xff]
  %v232 = vld [vmem:[%s0 + $0x6a0] sm:$0xff]
  %v233 = vld [vmem:[%s0 + $0x6a8] sm:$0xff]
  %v234 = vld [vmem:[%s0 + $0x6b0] sm:$0xff]
  %v235 = vld [vmem:[%s0 + $0x6b8] sm:$0xff]
  %v236 = vld [vmem:[%s0 + $0x6c0] sm:$0xff]
  %v237 = vld [vmem:[%s0 + $0x6c8] sm:$0xff]
  %v238 = vld [vmem:[%s0 + $0x6d0] sm:$0xff]
  %v239 = vld [vmem:[%s0 + $0x6d8] sm:$0xff]
  %v240 = vld [vmem:[%s0 + $0x6e0] sm:$0xff]
  %v241 = vld [vmem:[%s0 + $0x6e8] sm:$0xff]
  %v242 = vld [vmem:[%s0 + $0x6f0] sm:$0xff]
  %v243 = vld [vmem:[%s0 + $0x6f8] sm:$0xff]
  %v244 = vld [vmem:[%s0 + $0x700] sm:$0xff]
  %v245 = vld [vmem:[%s0 + $0x708] sm:$0xff]
  %v246 = vld [vmem:[%s0 + $0x710] sm:$0xff]
  %v247 = vld [vmem:[%s0 + $0x718] sm:$0xff]
  %v248 = vld [vmem:[%s0 + $0x720] sm:$0xff]
  %v249 = vld [vmem:[%s0 + $0x728] sm:$0xff]
  %v250 = vld [vmem:[%s0 + $0x730] sm:$0xff]
  %v251 = vld [vmem:[%s0 + $0x738] sm:$0xff]
  %v252 = vld [vmem:[%s0 + $0x740] sm:$0xff]
  %v253 = vld [vmem:[%s0 + $0x748] sm:$0xff]
  %v254 = vld [vmem:[%s0 + $0x750] sm:$0xff]
  %v255 = vld [vmem:[%s0 + $0x758] sm:$0xff]
  %v256 = vld [vmem:[%s0 + $0x760] sm:$0xff]
  %v257 = vld [vmem:[%s0 + $0x768] sm:$0xff]
  %v258 = vld [vmem:[%s0 + $0x770] sm:$0xff]
  %v259 = vld [vmem:[%s0 + $0x778] sm:$0xff]
  %v260 = vld [vmem:[%s0 + $0x780] sm:$0xff]
  %v261 = vld [vmem:[%s0 + $0x788] sm:$0xff]
  %v262 = vld [vmem:[%s0 + $0x790] sm:$0xff]
  %v263 = vld [vmem:[%s0 + $0x798] sm:$0xff]
  %v264 = vld [vmem:[%s0 + $0x7a0] sm:$0xff]
  %v265 = vld [vmem:[%s0 + $0x7a8] sm:$0xff]
  %v266 = vld [vmem:[%s0 + $0x7b0] sm:$0xff]
  %v267 = vld [vmem:[%s0 + $0x7b8] sm:$0xff]
  %v268 = vld [vmem:[%s0 + $0x7c0] sm:$0xff]
  %v269 = vld [vmem:[%s0 + $0x7c8] sm:$0xff]
  %v270 = vld [vmem:[%s0 + $0x7d0] sm:$0xff]
  %v271 = vld [vmem:[%s0 + $0x7d8] sm:$0xff]
  %v272 = vld [vmem:[%s0 + $0x7e0] sm:$0xff]
  %v273 = vld [vmem:[%s0 + $0x7e8] sm:$0xff]
  %v274 = vld [vmem:[%s0 + $0x7f0] sm:$0xff]
  %v275 = vld [vmem:[%s0 + $0x7f8] sm:$0xff]
  %v278 = vunpack.c.l.b16 %v18
  %v279 = vunpack.c.l.b16 %v19
  %v280 = vpack.c.b16 %v279, %v278
  %v538 = vunpack.c.l.b16 %v20
  %v539 = vunpack.c.h.b16 %v20
  %v540 = vunpack.c.l.b16 %v21
  %v541 = vunpack.c.h.b16 %v21
  %v542 = vunpack.c.l.b16 %v22
  %v543 = vunpack.c.h.b16 %v22
  %v544 = vunpack.c.l.b16 %v23
  %v545 = vunpack.c.h.b16 %v23
  %v546 = vunpack.c.l.b16 %v24
  %v547 = vunpack.c.h.b16 %v24
  %v548 = vunpack.c.l.b16 %v25
  %v549 = vunpack.c.h.b16 %v25
  %v550 = vunpack.c.l.b16 %v26
  %v551 = vunpack.c.h.b16 %v26
  %v552 = vunpack.c.l.b16 %v27
  %v553 = vunpack.c.h.b16 %v27
  %v554 = vunpack.c.l.b16 %v28
  %v555 = vunpack.c.h.b16 %v28
  %v556 = vunpack.c.l.b16 %v29
  %v557 = vunpack.c.h.b16 %v29
  %v558 = vunpack.c.l.b16 %v30
  %v559 = vunpack.c.h.b16 %v30
  %v560 = vunpack.c.l.b16 %v31
  %v561 = vunpack.c.h.b16 %v31
  %v562 = vunpack.c.l.b16 %v32
  %v563 = vunpack.c.h.b16 %v32
  %v564 = vunpack.c.l.b16 %v33
  %v565 = vunpack.c.h.b16 %v33
  %v566 = vunpack.c.l.b16 %v34
  %v567 = vunpack.c.h.b16 %v34
  %v568 = vunpack.c.l.b16 %v35
  %v569 = vunpack.c.h.b16 %v35
  %v570 = vunpack.c.l.b16 %v36
  %v571 = vunpack.c.h.b16 %v36
  %v572 = vunpack.c.l.b16 %v37
  %v573 = vunpack.c.h.b16 %v37
  %v574 = vunpack.c.l.b16 %v38
  %v575 = vunpack.c.h.b16 %v38
  %v576 = vunpack.c.l.b16 %v39
  %v577 = vunpack.c.h.b16 %v39
  %v578 = vunpack.c.l.b16 %v40
  %v579 = vunpack.c.h.b16 %v40
  %v580 = vunpack.c.l.b16 %v41
  %v581 = vunpack.c.h.b16 %v41
  %v582 = vunpack.c.l.b16 %v42
  %v583 = vunpack.c.h.b16 %v42
  %v584 = vunpack.c.l.b16 %v43
  %v585 = vunpack.c.h.b16 %v43
  %v586 = vunpack.c.l.b16 %v44
  %v587 = vunpack.c.h.b16 %v44
  %v588 = vunpack.c.l.b16 %v45
  %v589 = vunpack.c.h.b16 %v45
  %v590 = vunpack.c.l.b16 %v46
  %v591 = vunpack.c.h.b16 %v46
  %v592 = vunpack.c.l.b16 %v47
  %v593 = vunpack.c.h.b16 %v47
  %v594 = vunpack.c.l.b16 %v48
  %v595 = vunpack.c.h.b16 %v48
  %v596 = vunpack.c.l.b16 %v49
  %v597 = vunpack.c.h.b16 %v49
  %v598 = vunpack.c.l.b16 %v50
  %v599 = vunpack.c.h.b16 %v50
  %v600 = vunpack.c.l.b16 %v51
  %v601 = vunpack.c.h.b16 %v51
  %v602 = vunpack.c.l.b16 %v52
  %v603 = vunpack.c.h.b16 %v52
  %v604 = vunpack.c.l.b16 %v53
  %v605 = vunpack.c.h.b16 %v53
  %v606 = vunpack.c.l.b16 %v54
  %v607 = vunpack.c.h.b16 %v54
  %v608 = vunpack.c.l.b16 %v55
  %v609 = vunpack.c.h.b16 %v55
  %v610 = vunpack.c.l.b16 %v56
  %v611 = vunpack.c.h.b16 %v56
  %v612 = vunpack.c.l.b16 %v57
  %v613 = vunpack.c.h.b16 %v57
  %v614 = vunpack.c.l.b16 %v58
  %v615 = vunpack.c.h.b16 %v58
  %v616 = vunpack.c.l.b16 %v59
  %v617 = vunpack.c.h.b16 %v59
  %v618 = vunpack.c.l.b16 %v60
  %v619 = vunpack.c.h.b16 %v60
  %v620 = vunpack.c.l.b16 %v61
  %v621 = vunpack.c.h.b16 %v61
  %v622 = vunpack.c.l.b16 %v62
  %v623 = vunpack.c.h.b16 %v62
  %v624 = vunpack.c.l.b16 %v63
  %v625 = vunpack.c.h.b16 %v63
  %v626 = vunpack.c.l.b16 %v64
  %v627 = vunpack.c.h.b16 %v64
  %v628 = vunpack.c.l.b16 %v65
  %v629 = vunpack.c.h.b16 %v65
  %v630 = vunpack.c.l.b16 %v66
  %v631 = vunpack.c.h.b16 %v66
  %v632 = vunpack.c.l.b16 %v67
  %v633 = vunpack.c.h.b16 %v67
  %v634 = vunpack.c.l.b16 %v68
  %v635 = vunpack.c.h.b16 %v68
  %v636 = vunpack.c.l.b16 %v69
  %v637 = vunpack.c.h.b16 %v69
  %v638 = vunpack.c.l.b16 %v70
  %v639 = vunpack.c.h.b16 %v70
  %v640 = vunpack.c.l.b16 %v71
  %v641 = vunpack.c.h.b16 %v71
  %v642 = vunpack.c.l.b16 %v72
  %v643 = vunpack.c.h.b16 %v72
  %v644 = vunpack.c.l.b16 %v73
  %v645 = vunpack.c.h.b16 %v73
  %v646 = vunpack.c.l.b16 %v74
  %v647 = vunpack.c.h.b16 %v74
  %v648 = vunpack.c.l.b16 %v75
  %v649 = vunpack.c.h.b16 %v75
  %v650 = vunpack.c.l.b16 %v76
  %v651 = vunpack.c.h.b16 %v76
  %v652 = vunpack.c.l.b16 %v77
  %v653 = vunpack.c.h.b16 %v77
  %v654 = vunpack.c.l.b16 %v78
  %v655 = vunpack.c.h.b16 %v78
  %v656 = vunpack.c.l.b16 %v79
  %v657 = vunpack.c.h.b16 %v79
  %v658 = vunpack.c.l.b16 %v80
  %v659 = vunpack.c.h.b16 %v80
  %v660 = vunpack.c.l.b16 %v81
  %v661 = vunpack.c.h.b16 %v81
  %v662 = vunpack.c.l.b16 %v82
  %v663 = vunpack.c.h.b16 %v82
  %v664 = vunpack.c.l.b16 %v83
  %v665 = vunpack.c.h.b16 %v83
  %v666 = vunpack.c.l.b16 %v84
  %v667 = vunpack.c.h.b16 %v84
  %v668 = vunpack.c.l.b16 %v85
  %v669 = vunpack.c.h.b16 %v85
  %v670 = vunpack.c.l.b16 %v86
  %v671 = vunpack.c.h.b16 %v86
  %v672 = vunpack.c.l.b16 %v87
  %v673 = vunpack.c.h.b16 %v87
  %v674 = vunpack.c.l.b16 %v88
  %v675 = vunpack.c.h.b16 %v88
  %v676 = vunpack.c.l.b16 %v89
  %v677 = vunpack.c.h.b16 %v89
  %v678 = vunpack.c.l.b16 %v90
  %v679 = vunpack.c.h.b16 %v90
  %v680 = vunpack.c.l.b16 %v91
  %v681 = vunpack.c.h.b16 %v91
  %v682 = vunpack.c.l.b16 %v92
  %v683 = vunpack.c.h.b16 %v92
  %v684 = vunpack.c.l.b16 %v93
  %v685 = vunpack.c.h.b16 %v93
  %v686 = vunpack.c.l.b16 %v94
  %v687 = vunpack.c.h.b16 %v94
  %v688 = vunpack.c.l.b16 %v95
  %v689 = vunpack.c.h.b16 %v95
  %v690 = vunpack.c.l.b16 %v96
  %v691 = vunpack.c.h.b16 %v96
  %v692 = vunpack.c.l.b16 %v97
  %v693 = vunpack.c.h.b16 %v97
  %v694 = vunpack.c.l.b16 %v98
  %v695 = vunpack.c.h.b16 %v98
  %v696 = vunpack.c.l.b16 %v99
  %v697 = vunpack.c.h.b16 %v99
  %v698 = vunpack.c.l.b16 %v100
  %v699 = vunpack.c.h.b16 %v100
  %v700 = vunpack.c.l.b16 %v101
  %v701 = vunpack.c.h.b16 %v101
  %v702 = vunpack.c.l.b16 %v102
  %v703 = vunpack.c.h.b16 %v102
  %v704 = vunpack.c.l.b16 %v103
  %v705 = vunpack.c.h.b16 %v103
  %v706 = vunpack.c.l.b16 %v104
  %v707 = vunpack.c.h.b16 %v104
  %v708 = vunpack.c.l.b16 %v105
  %v709 = vunpack.c.h.b16 %v105
  %v710 = vunpack.c.l.b16 %v106
  %v711 = vunpack.c.h.b16 %v106
  %v712 = vunpack.c.l.b16 %v107
  %v713 = vunpack.c.h.b16 %v107
  %v714 = vunpack.c.l.b16 %v108
  %v715 = vunpack.c.h.b16 %v108
  %v716 = vunpack.c.l.b16 %v109
  %v717 = vunpack.c.h.b16 %v109
  %v718 = vunpack.c.l.b16 %v110
  %v719 = vunpack.c.h.b16 %v110
  %v720 = vunpack.c.l.b16 %v111
  %v721 = vunpack.c.h.b16 %v111
  %v722 = vunpack.c.l.b16 %v112
  %v723 = vunpack.c.h.b16 %v112
  %v724 = vunpack.c.l.b16 %v113
  %v725 = vunpack.c.h.b16 %v113
  %v726 = vunpack.c.l.b16 %v114
  %v727 = vunpack.c.h.b16 %v114
  %v728 = vunpack.c.l.b16 %v115
  %v729 = vunpack.c.h.b16 %v115
  %v730 = vunpack.c.l.b16 %v116
  %v731 = vunpack.c.h.b16 %v116
  %v732 = vunpack.c.l.b16 %v117
  %v733 = vunpack.c.h.b16 %v117
  %v734 = vunpack.c.l.b16 %v118
  %v735 = vunpack.c.h.b16 %v118
  %v736 = vunpack.c.l.b16 %v119
  %v737 = vunpack.c.h.b16 %v119
  %v738 = vunpack.c.l.b16 %v120
  %v739 = vunpack.c.h.b16 %v120
  %v740 = vunpack.c.l.b16 %v121
  %v741 = vunpack.c.h.b16 %v121
  %v742 = vunpack.c.l.b16 %v122
  %v743 = vunpack.c.h.b16 %v122
  %v744 = vunpack.c.l.b16 %v123
  %v745 = vunpack.c.h.b16 %v123
  %v746 = vunpack.c.l.b16 %v124
  %v747 = vunpack.c.h.b16 %v124
  %v748 = vunpack.c.l.b16 %v125
  %v749 = vunpack.c.h.b16 %v125
  %v750 = vunpack.c.l.b16 %v126
  %v751 = vunpack.c.h.b16 %v126
  %v752 = vunpack.c.l.b16 %v127
  %v753 = vunpack.c.h.b16 %v127
  %v754 = vunpack.c.l.b16 %v128
  %v755 = vunpack.c.h.b16 %v128
  %v756 = vunpack.c.l.b16 %v129
  %v757 = vunpack.c.h.b16 %v129
  %v758 = vunpack.c.l.b16 %v130
  %v759 = vunpack.c.h.b16 %v130
  %v760 = vunpack.c.l.b16 %v131
  %v761 = vunpack.c.h.b16 %v131
  %v762 = vunpack.c.l.b16 %v132
  %v763 = vunpack.c.h.b16 %v132
  %v764 = vunpack.c.l.b16 %v133
  %v765 = vunpack.c.h.b16 %v133
  %v766 = vunpack.c.l.b16 %v134
  %v767 = vunpack.c.h.b16 %v134
  %v768 = vunpack.c.l.b16 %v135
  %v769 = vunpack.c.h.b16 %v135
  %v770 = vunpack.c.l.b16 %v136
  %v771 = vunpack.c.h.b16 %v136
  %v772 = vunpack.c.l.b16 %v137
  %v773 = vunpack.c.h.b16 %v137
  %v774 = vunpack.c.l.b16 %v138
  %v775 = vunpack.c.h.b16 %v138
  %v776 = vunpack.c.l.b16 %v139
  %v777 = vunpack.c.h.b16 %v139
  %v778 = vunpack.c.l.b16 %v140
  %v779 = vunpack.c.h.b16 %v140
  %v780 = vunpack.c.l.b16 %v141
  %v781 = vunpack.c.h.b16 %v141
  %v782 = vunpack.c.l.b16 %v142
  %v783 = vunpack.c.h.b16 %v142
  %v784 = vunpack.c.l.b16 %v143
  %v785 = vunpack.c.h.b16 %v143
  %v786 = vunpack.c.l.b16 %v144
  %v787 = vunpack.c.h.b16 %v144
  %v788 = vunpack.c.l.b16 %v145
  %v789 = vunpack.c.h.b16 %v145
  %v790 = vunpack.c.l.b16 %v146
  %v791 = vunpack.c.h.b16 %v146
  %v792 = vunpack.c.l.b16 %v147
  %v793 = vunpack.c.h.b16 %v147
  %v794 = vunpack.c.l.b16 %v148
  %v795 = vunpack.c.h.b16 %v148
  %v796 = vunpack.c.l.b16 %v149
  %v797 = vunpack.c.h.b16 %v149
  %v798 = vunpack.c.l.b16 %v150
  %v799 = vunpack.c.h.b16 %v150
  %v800 = vunpack.c.l.b16 %v151
  %v801 = vunpack.c.h.b16 %v151
  %v802 = vunpack.c.l.b16 %v152
  %v803 = vunpack.c.h.b16 %v152
  %v804 = vunpack.c.l.b16 %v153
  %v805 = vunpack.c.h.b16 %v153
  %v806 = vunpack.c.l.b16 %v154
  %v807 = vunpack.c.h.b16 %v154
  %v808 = vunpack.c.l.b16 %v155
  %v809 = vunpack.c.h.b16 %v155
  %v810 = vunpack.c.l.b16 %v156
  %v811 = vunpack.c.h.b16 %v156
  %v812 = vunpack.c.l.b16 %v157
  %v813 = vunpack.c.h.b16 %v157
  %v814 = vunpack.c.l.b16 %v158
  %v815 = vunpack.c.h.b16 %v158
  %v816 = vunpack.c.l.b16 %v159
  %v817 = vunpack.c.h.b16 %v159
  %v818 = vunpack.c.l.b16 %v160
  %v819 = vunpack.c.h.b16 %v160
  %v820 = vunpack.c.l.b16 %v161
  %v821 = vunpack.c.h.b16 %v161
  %v822 = vunpack.c.l.b16 %v162
  %v823 = vunpack.c.h.b16 %v162
  %v824 = vunpack.c.l.b16 %v163
  %v825 = vunpack.c.h.b16 %v163
  %v826 = vunpack.c.l.b16 %v164
  %v827 = vunpack.c.h.b16 %v164
  %v828 = vunpack.c.l.b16 %v165
  %v829 = vunpack.c.h.b16 %v165
  %v830 = vunpack.c.l.b16 %v166
  %v831 = vunpack.c.h.b16 %v166
  %v832 = vunpack.c.l.b16 %v167
  %v833 = vunpack.c.h.b16 %v167
  %v834 = vunpack.c.l.b16 %v168
  %v835 = vunpack.c.h.b16 %v168
  %v836 = vunpack.c.l.b16 %v169
  %v837 = vunpack.c.h.b16 %v169
  %v838 = vunpack.c.l.b16 %v170
  %v839 = vunpack.c.h.b16 %v170
  %v840 = vunpack.c.l.b16 %v171
  %v841 = vunpack.c.h.b16 %v171
  %v842 = vunpack.c.l.b16 %v172
  %v843 = vunpack.c.h.b16 %v172
  %v844 = vunpack.c.l.b16 %v173
  %v845 = vunpack.c.h.b16 %v173
  %v846 = vunpack.c.l.b16 %v174
  %v847 = vunpack.c.h.b16 %v174
  %v848 = vunpack.c.l.b16 %v175
  %v849 = vunpack.c.h.b16 %v175
  %v850 = vunpack.c.l.b16 %v176
  %v851 = vunpack.c.h.b16 %v176
  %v852 = vunpack.c.l.b16 %v177
  %v853 = vunpack.c.h.b16 %v177
  %v854 = vunpack.c.l.b16 %v178
  %v855 = vunpack.c.h.b16 %v178
  %v856 = vunpack.c.l.b16 %v179
  %v857 = vunpack.c.h.b16 %v179
  %v858 = vunpack.c.l.b16 %v180
  %v859 = vunpack.c.h.b16 %v180
  %v860 = vunpack.c.l.b16 %v181
  %v861 = vunpack.c.h.b16 %v181
  %v862 = vunpack.c.l.b16 %v182
  %v863 = vunpack.c.h.b16 %v182
  %v864 = vunpack.c.l.b16 %v183
  %v865 = vunpack.c.h.b16 %v183
  %v866 = vunpack.c.l.b16 %v184
  %v867 = vunpack.c.h.b16 %v184
  %v868 = vunpack.c.l.b16 %v185
  %v869 = vunpack.c.h.b16 %v185
  %v870 = vunpack.c.l.b16 %v186
  %v871 = vunpack.c.h.b16 %v186
  %v872 = vunpack.c.l.b16 %v187
  %v873 = vunpack.c.h.b16 %v187
  %v874 = vunpack.c.l.b16 %v188
  %v875 = vunpack.c.h.b16 %v188
  %v876 = vunpack.c.l.b16 %v189
  %v877 = vunpack.c.h.b16 %v189
  %v878 = vunpack.c.l.b16 %v190
  %v879 = vunpack.c.h.b16 %v190
  %v880 = vunpack.c.l.b16 %v191
  %v881 = vunpack.c.h.b16 %v191
  %v882 = vunpack.c.l.b16 %v192
  %v883 = vunpack.c.h.b16 %v192
  %v884 = vunpack.c.l.b16 %v193
  %v885 = vunpack.c.h.b16 %v193
  %v886 = vunpack.c.l.b16 %v194
  %v887 = vunpack.c.h.b16 %v194
  %v888 = vunpack.c.l.b16 %v195
  %v889 = vunpack.c.h.b16 %v195
  %v890 = vunpack.c.l.b16 %v196
  %v891 = vunpack.c.h.b16 %v196
  %v892 = vunpack.c.l.b16 %v197
  %v893 = vunpack.c.h.b16 %v197
  %v894 = vunpack.c.l.b16 %v198
  %v895 = vunpack.c.h.b16 %v198
  %v896 = vunpack.c.l.b16 %v199
  %v897 = vunpack.c.h.b16 %v199
  %v898 = vunpack.c.l.b16 %v200
  %v899 = vunpack.c.h.b16 %v200
  %v900 = vunpack.c.l.b16 %v201
  %v901 = vunpack.c.h.b16 %v201
  %v902 = vunpack.c.l.b16 %v202
  %v903 = vunpack.c.h.b16 %v202
  %v904 = vunpack.c.l.b16 %v203
  %v905 = vunpack.c.h.b16 %v203
  %v906 = vunpack.c.l.b16 %v204
  %v907 = vunpack.c.h.b16 %v204
  %v908 = vunpack.c.l.b16 %v205
  %v909 = vunpack.c.h.b16 %v205
  %v910 = vunpack.c.l.b16 %v206
  %v911 = vunpack.c.h.b16 %v206
  %v912 = vunpack.c.l.b16 %v207
  %v913 = vunpack.c.h.b16 %v207
  %v914 = vunpack.c.l.b16 %v208
  %v915 = vunpack.c.h.b16 %v208
  %v916 = vunpack.c.l.b16 %v209
  %v917 = vunpack.c.h.b16 %v209
  %v918 = vunpack.c.l.b16 %v210
  %v919 = vunpack.c.h.b16 %v210
  %v920 = vunpack.c.l.b16 %v211
  %v921 = vunpack.c.h.b16 %v211
  %v922 = vunpack.c.l.b16 %v212
  %v923 = vunpack.c.h.b16 %v212
  %v924 = vunpack.c.l.b16 %v213
  %v925 = vunpack.c.h.b16 %v213
  %v926 = vunpack.c.l.b16 %v214
  %v927 = vunpack.c.h.b16 %v214
  %v928 = vunpack.c.l.b16 %v215
  %v929 = vunpack.c.h.b16 %v215
  %v930 = vunpack.c.l.b16 %v216
  %v931 = vunpack.c.h.b16 %v216
  %v932 = vunpack.c.l.b16 %v217
  %v933 = vunpack.c.h.b16 %v217
  %v934 = vunpack.c.l.b16 %v218
  %v935 = vunpack.c.h.b16 %v218
  %v936 = vunpack.c.l.b16 %v219
  %v937 = vunpack.c.h.b16 %v219
  %v938 = vunpack.c.l.b16 %v220
  %v939 = vunpack.c.h.b16 %v220
  %v940 = vunpack.c.l.b16 %v221
  %v941 = vunpack.c.h.b16 %v221
  %v942 = vunpack.c.l.b16 %v222
  %v943 = vunpack.c.h.b16 %v222
  %v944 = vunpack.c.l.b16 %v223
  %v945 = vunpack.c.h.b16 %v223
  %v946 = vunpack.c.l.b16 %v224
  %v947 = vunpack.c.h.b16 %v224
  %v948 = vunpack.c.l.b16 %v225
  %v949 = vunpack.c.h.b16 %v225
  %v950 = vunpack.c.l.b16 %v226
  %v951 = vunpack.c.h.b16 %v226
  %v952 = vunpack.c.l.b16 %v227
  %v953 = vunpack.c.h.b16 %v227
  %v954 = vunpack.c.l.b16 %v228
  %v955 = vunpack.c.h.b16 %v228
  %v956 = vunpack.c.l.b16 %v229
  %v957 = vunpack.c.h.b16 %v229
  %v958 = vunpack.c.l.b16 %v230
  %v959 = vunpack.c.h.b16 %v230
  %v960 = vunpack.c.l.b16 %v231
  %v961 = vunpack.c.h.b16 %v231
  %v962 = vunpack.c.l.b16 %v232
  %v963 = vunpack.c.h.b16 %v232
  %v964 = vunpack.c.l.b16 %v233
  %v965 = vunpack.c.h.b16 %v233
  %v966 = vunpack.c.l.b16 %v234
  %v967 = vunpack.c.h.b16 %v234
  %v968 = vunpack.c.l.b16 %v235
  %v969 = vunpack.c.h.b16 %v235
  %v970 = vunpack.c.l.b16 %v236
  %v971 = vunpack.c.h.b16 %v236
  %v972 = vunpack.c.l.b16 %v237
  %v973 = vunpack.c.h.b16 %v237
  %v974 = vunpack.c.l.b16 %v238
  %v975 = vunpack.c.h.b16 %v238
  %v976 = vunpack.c.l.b16 %v239
  %v977 = vunpack.c.h.b16 %v239
  %v978 = vunpack.c.l.b16 %v240
  %v979 = vunpack.c.h.b16 %v240
  %v980 = vunpack.c.l.b16 %v241
  %v981 = vunpack.c.h.b16 %v241
  %v982 = vunpack.c.l.b16 %v242
  %v983 = vunpack.c.h.b16 %v242
  %v984 = vunpack.c.l.b16 %v243
  %v985 = vunpack.c.h.b16 %v243
  %v986 = vunpack.c.l.b16 %v244
  %v987 = vunpack.c.h.b16 %v244
  %v988 = vunpack.c.l.b16 %v245
  %v989 = vunpack.c.h.b16 %v245
  %v990 = vunpack.c.l.b16 %v246
  %v991 = vunpack.c.h.b16 %v246
  %v992 = vunpack.c.l.b16 %v247
  %v993 = vunpack.c.h.b16 %v247
  %v994 = vunpack.c.l.b16 %v248
  %v995 = vunpack.c.h.b16 %v248
  %v996 = vunpack.c.l.b16 %v249
  %v997 = vunpack.c.h.b16 %v249
  %v998 = vunpack.c.l.b16 %v250
  %v999 = vunpack.c.h.b16 %v250
  %v1000 = vunpack.c.l.b16 %v251
  %v1001 = vunpack.c.h.b16 %v251
  %v1002 = vunpack.c.l.b16 %v252
  %v1003 = vunpack.c.h.b16 %v252
  %v1004 = vunpack.c.l.b16 %v253
  %v1005 = vunpack.c.h.b16 %v253
  %v1006 = vunpack.c.l.b16 %v254
  %v1007 = vunpack.c.h.b16 %v254
  %v1008 = vunpack.c.l.b16 %v255
  %v1009 = vunpack.c.h.b16 %v255
  %v1010 = vunpack.c.l.b16 %v256
  %v1011 = vunpack.c.h.b16 %v256
  %v1012 = vunpack.c.l.b16 %v257
  %v1013 = vunpack.c.h.b16 %v257
  %v1014 = vunpack.c.l.b16 %v258
  %v1015 = vunpack.c.h.b16 %v258
  %v1016 = vunpack.c.l.b16 %v259
  %v1017 = vunpack.c.h.b16 %v259
  %v1018 = vunpack.c.l.b16 %v260
  %v1019 = vunpack.c.h.b16 %v260
  %v1020 = vunpack.c.l.b16 %v261
  %v1021 = vunpack.c.h.b16 %v261
  %v1022 = vunpack.c.l.b16 %v262
  %v1023 = vunpack.c.h.b16 %v262
  %v1024 = vunpack.c.l.b16 %v263
  %v1025 = vunpack.c.h.b16 %v263
  %v1026 = vunpack.c.l.b16 %v264
  %v1027 = vunpack.c.h.b16 %v264
  %v1028 = vunpack.c.l.b16 %v265
  %v1029 = vunpack.c.h.b16 %v265
  %v1030 = vunpack.c.l.b16 %v266
  %v1031 = vunpack.c.h.b16 %v266
  %v1032 = vunpack.c.l.b16 %v267
  %v1033 = vunpack.c.h.b16 %v267
  %v1034 = vunpack.c.l.b16 %v268
  %v1035 = vunpack.c.h.b16 %v268
  %v1036 = vunpack.c.l.b16 %v269
  %v1037 = vunpack.c.h.b16 %v269
  %v1038 = vunpack.c.l.b16 %v270
  %v1039 = vunpack.c.h.b16 %v270
  %v1040 = vunpack.c.l.b16 %v271
  %v1041 = vunpack.c.h.b16 %v271
  %v1042 = vunpack.c.l.b16 %v272
  %v1043 = vunpack.c.h.b16 %v272
  %v1044 = vunpack.c.l.b16 %v273
  %v1045 = vunpack.c.h.b16 %v273
  %v1046 = vunpack.c.l.b16 %v274
  %v1047 = vunpack.c.h.b16 %v274
  %v1048 = vunpack.c.l.b16 %v275
  %v1049 = vunpack.c.h.b16 %v275
  %v1050 = vpack.c.b16 %v570, %v538
  %v1051 = vpack.c.b16 %v571, %v539
  %v1052 = vpack.c.b16 %v572, %v540
  %v1053 = vpack.c.b16 %v573, %v541
  %v1054 = vpack.c.b16 %v574, %v542
  %v1055 = vpack.c.b16 %v575, %v543
  %v1056 = vpack.c.b16 %v576, %v544
  %v1057 = vpack.c.b16 %v577, %v545
  %v1058 = vpack.c.b16 %v578, %v546
  %v1059 = vpack.c.b16 %v579, %v547
  %v1060 = vpack.c.b16 %v580, %v548
  %v1061 = vpack.c.b16 %v581, %v549
  %v1062 = vpack.c.b16 %v582, %v550
  %v1063 = vpack.c.b16 %v583, %v551
  %v1064 = vpack.c.b16 %v584, %v552
  %v1065 = vpack.c.b16 %v585, %v553
  %v1066 = vpack.c.b16 %v586, %v554
  %v1067 = vpack.c.b16 %v587, %v555
  %v1068 = vpack.c.b16 %v588, %v556
  %v1069 = vpack.c.b16 %v589, %v557
  %v1070 = vpack.c.b16 %v590, %v558
  %v1071 = vpack.c.b16 %v591, %v559
  %v1072 = vpack.c.b16 %v592, %v560
  %v1073 = vpack.c.b16 %v593, %v561
  %v1074 = vpack.c.b16 %v594, %v562
  %v1075 = vpack.c.b16 %v595, %v563
  %v1076 = vpack.c.b16 %v596, %v564
  %v1077 = vpack.c.b16 %v597, %v565
  %v1078 = vpack.c.b16 %v598, %v566
  %v1079 = vpack.c.b16 %v599, %v567
  %v1080 = vpack.c.b16 %v600, %v568
  %v1081 = vpack.c.b16 %v601, %v569
  %v1082 = vpack.c.b16 %v634, %v602
  %v1083 = vpack.c.b16 %v635, %v603
  %v1084 = vpack.c.b16 %v636, %v604
  %v1085 = vpack.c.b16 %v637, %v605
  %v1086 = vpack.c.b16 %v638, %v606
  %v1087 = vpack.c.b16 %v639, %v607
  %v1088 = vpack.c.b16 %v640, %v608
  %v1089 = vpack.c.b16 %v641, %v609
  %v1090 = vpack.c.b16 %v642, %v610
  %v1091 = vpack.c.b16 %v643, %v611
  %v1092 = vpack.c.b16 %v644, %v612
  %v1093 = vpack.c.b16 %v645, %v613
  %v1094 = vpack.c.b16 %v646, %v614
  %v1095 = vpack.c.b16 %v647, %v615
  %v1096 = vpack.c.b16 %v648, %v616
  %v1097 = vpack.c.b16 %v649, %v617
  %v1098 = vpack.c.b16 %v650, %v618
  %v1099 = vpack.c.b16 %v651, %v619
  %v1100 = vpack.c.b16 %v652, %v620
  %v1101 = vpack.c.b16 %v653, %v621
  %v1102 = vpack.c.b16 %v654, %v622
  %v1103 = vpack.c.b16 %v655, %v623
  %v1104 = vpack.c.b16 %v656, %v624
  %v1105 = vpack.c.b16 %v657, %v625
  %v1106 = vpack.c.b16 %v658, %v626
  %v1107 = vpack.c.b16 %v659, %v627
  %v1108 = vpack.c.b16 %v660, %v628
  %v1109 = vpack.c.b16 %v661, %v629
  %v1110 = vpack.c.b16 %v662, %v630
  %v1111 = vpack.c.b16 %v663, %v631
  %v1112 = vpack.c.b16 %v664, %v632
  %v1113 = vpack.c.b16 %v665, %v633
  %v1114 = vpack.c.b16 %v698, %v666
  %v1115 = vpack.c.b16 %v699, %v667
  %v1116 = vpack.c.b16 %v700, %v668
  %v1117 = vpack.c.b16 %v701, %v669
  %v1118 = vpack.c.b16 %v702, %v670
  %v1119 = vpack.c.b16 %v703, %v671
  %v1120 = vpack.c.b16 %v704, %v672
  %v1121 = vpack.c.b16 %v705, %v673
  %v1122 = vpack.c.b16 %v706, %v674
  %v1123 = vpack.c.b16 %v707, %v675
  %v1124 = vpack.c.b16 %v708, %v676
  %v1125 = vpack.c.b16 %v709, %v677
  %v1126 = vpack.c.b16 %v710, %v678
  %v1127 = vpack.c.b16 %v711, %v679
  %v1128 = vpack.c.b16 %v712, %v680
  %v1129 = vpack.c.b16 %v713, %v681
  %v1130 = vpack.c.b16 %v714, %v682
  %v1131 = vpack.c.b16 %v715, %v683
  %v1132 = vpack.c.b16 %v716, %v684
  %v1133 = vpack.c.b16 %v717, %v685
  %v1134 = vpack.c.b16 %v718, %v686
  %v1135 = vpack.c.b16 %v719, %v687
  %v1136 = vpack.c.b16 %v720, %v688
  %v1137 = vpack.c.b16 %v721, %v689
  %v1138 = vpack.c.b16 %v722, %v690
  %v1139 = vpack.c.b16 %v723, %v691
  %v1140 = vpack.c.b16 %v724, %v692
  %v1141 = vpack.c.b16 %v725, %v693
  %v1142 = vpack.c.b16 %v726, %v694
  %v1143 = vpack.c.b16 %v727, %v695
  %v1144 = vpack.c.b16 %v728, %v696
  %v1145 = vpack.c.b16 %v729, %v697
  %v1146 = vpack.c.b16 %v762, %v730
  %v1147 = vpack.c.b16 %v763, %v731
  %v1148 = vpack.c.b16 %v764, %v732
  %v1149 = vpack.c.b16 %v765, %v733
  %v1150 = vpack.c.b16 %v766, %v734
  %v1151 = vpack.c.b16 %v767, %v735
  %v1152 = vpack.c.b16 %v768, %v736
  %v1153 = vpack.c.b16 %v769, %v737
  %v1154 = vpack.c.b16 %v770, %v738
  %v1155 = vpack.c.b16 %v771, %v739
  %v1156 = vpack.c.b16 %v772, %v740
  %v1157 = vpack.c.b16 %v773, %v741
  %v1158 = vpack.c.b16 %v774, %v742
  %v1159 = vpack.c.b16 %v775, %v743
  %v1160 = vpack.c.b16 %v776, %v744
  %v1161 = vpack.c.b16 %v777, %v745
  %v1162 = vpack.c.b16 %v778, %v746
  %v1163 = vpack.c.b16 %v779, %v747
  %v1164 = vpack.c.b16 %v780, %v748
  %v1165 = vpack.c.b16 %v781, %v749
  %v1166 = vpack.c.b16 %v782, %v750
  %v1167 = vpack.c.b16 %v783, %v751
  %v1168 = vpack.c.b16 %v784, %v752
  %v1169 = vpack.c.b16 %v785, %v753
  %v1170 = vpack.c.b16 %v786, %v754
  %v1171 = vpack.c.b16 %v787, %v755
  %v1172 = vpack.c.b16 %v788, %v756
  %v1173 = vpack.c.b16 %v789, %v757
  %v1174 = vpack.c.b16 %v790, %v758
  %v1175 = vpack.c.b16 %v791, %v759
  %v1176 = vpack.c.b16 %v792, %v760
  %v1177 = vpack.c.b16 %v793, %v761
  %v1178 = vpack.c.b16 %v826, %v794
  %v1179 = vpack.c.b16 %v827, %v795
  %v1180 = vpack.c.b16 %v828, %v796
  %v1181 = vpack.c.b16 %v829, %v797
  %v1182 = vpack.c.b16 %v830, %v798
  %v1183 = vpack.c.b16 %v831, %v799
  %v1184 = vpack.c.b16 %v832, %v800
  %v1185 = vpack.c.b16 %v833, %v801
  %v1186 = vpack.c.b16 %v834, %v802
  %v1187 = vpack.c.b16 %v835, %v803
  %v1188 = vpack.c.b16 %v836, %v804
  %v1189 = vpack.c.b16 %v837, %v805
  %v1190 = vpack.c.b16 %v838, %v806
  %v1191 = vpack.c.b16 %v839, %v807
  %v1192 = vpack.c.b16 %v840, %v808
  %v1193 = vpack.c.b16 %v841, %v809
  %v1194 = vpack.c.b16 %v842, %v810
  %v1195 = vpack.c.b16 %v843, %v811
  %v1196 = vpack.c.b16 %v844, %v812
  %v1197 = vpack.c.b16 %v845, %v813
  %v1198 = vpack.c.b16 %v846, %v814
  %v1199 = vpack.c.b16 %v847, %v815
  %v1200 = vpack.c.b16 %v848, %v816
  %v1201 = vpack.c.b16 %v849, %v817
  %v1202 = vpack.c.b16 %v850, %v818
  %v1203 = vpack.c.b16 %v851, %v819
  %v1204 = vpack.c.b16 %v852, %v820
  %v1205 = vpack.c.b16 %v853, %v821
  %v1206 = vpack.c.b16 %v854, %v822
  %v1207 = vpack.c.b16 %v855, %v823
  %v1208 = vpack.c.b16 %v856, %v824
  %v1209 = vpack.c.b16 %v857, %v825
  %v1210 = vpack.c.b16 %v890, %v858
  %v1211 = vpack.c.b16 %v891, %v859
  %v1212 = vpack.c.b16 %v892, %v860
  %v1213 = vpack.c.b16 %v893, %v861
  %v1214 = vpack.c.b16 %v894, %v862
  %v1215 = vpack.c.b16 %v895, %v863
  %v1216 = vpack.c.b16 %v896, %v864
  %v1217 = vpack.c.b16 %v897, %v865
  %v1218 = vpack.c.b16 %v898, %v866
  %v1219 = vpack.c.b16 %v899, %v867
  %v1220 = vpack.c.b16 %v900, %v868
  %v1221 = vpack.c.b16 %v901, %v869
  %v1222 = vpack.c.b16 %v902, %v870
  %v1223 = vpack.c.b16 %v903, %v871
  %v1224 = vpack.c.b16 %v904, %v872
  %v1225 = vpack.c.b16 %v905, %v873
  %v1226 = vpack.c.b16 %v906, %v874
  %v1227 = vpack.c.b16 %v907, %v875
  %v1228 = vpack.c.b16 %v908, %v876
  %v1229 = vpack.c.b16 %v909, %v877
  %v1230 = vpack.c.b16 %v910, %v878
  %v1231 = vpack.c.b16 %v911, %v879
  %v1232 = vpack.c.b16 %v912, %v880
  %v1233 = vpack.c.b16 %v913, %v881
  %v1234 = vpack.c.b16 %v914, %v882
  %v1235 = vpack.c.b16 %v915, %v883
  %v1236 = vpack.c.b16 %v916, %v884
  %v1237 = vpack.c.b16 %v917, %v885
  %v1238 = vpack.c.b16 %v918, %v886
  %v1239 = vpack.c.b16 %v919, %v887
  %v1240 = vpack.c.b16 %v920, %v888
  %v1241 = vpack.c.b16 %v921, %v889
  %v1242 = vpack.c.b16 %v954, %v922
  %v1243 = vpack.c.b16 %v955, %v923
  %v1244 = vpack.c.b16 %v956, %v924
  %v1245 = vpack.c.b16 %v957, %v925
  %v1246 = vpack.c.b16 %v958, %v926
  %v1247 = vpack.c.b16 %v959, %v927
  %v1248 = vpack.c.b16 %v960, %v928
  %v1249 = vpack.c.b16 %v961, %v929
  %v1250 = vpack.c.b16 %v962, %v930
  %v1251 = vpack.c.b16 %v963, %v931
  %v1252 = vpack.c.b16 %v964, %v932
  %v1253 = vpack.c.b16 %v965, %v933
  %v1254 = vpack.c.b16 %v966, %v934
  %v1255 = vpack.c.b16 %v967, %v935
  %v1256 = vpack.c.b16 %v968, %v936
  %v1257 = vpack.c.b16 %v969, %v937
  %v1258 = vpack.c.b16 %v970, %v938
  %v1259 = vpack.c.b16 %v971, %v939
  %v1260 = vpack.c.b16 %v972, %v940
  %v1261 = vpack.c.b16 %v973, %v941
  %v1262 = vpack.c.b16 %v974, %v942
  %v1263 = vpack.c.b16 %v975, %v943
  %v1264 = vpack.c.b16 %v976, %v944
  %v1265 = vpack.c.b16 %v977, %v945
  %v1266 = vpack.c.b16 %v978, %v946
  %v1267 = vpack.c.b16 %v979, %v947
  %v1268 = vpack.c.b16 %v980, %v948
  %v1269 = vpack.c.b16 %v981, %v949
  %v1270 = vpack.c.b16 %v982, %v950
  %v1271 = vpack.c.b16 %v983, %v951
  %v1272 = vpack.c.b16 %v984, %v952
  %v1273 = vpack.c.b16 %v985, %v953
  %v1274 = vpack.c.b16 %v1018, %v986
  %v1275 = vpack.c.b16 %v1019, %v987
  %v1276 = vpack.c.b16 %v1020, %v988
  %v1277 = vpack.c.b16 %v1021, %v989
  %v1278 = vpack.c.b16 %v1022, %v990
  %v1279 = vpack.c.b16 %v1023, %v991
  %v1280 = vpack.c.b16 %v1024, %v992
  %v1281 = vpack.c.b16 %v1025, %v993
  %v1282 = vpack.c.b16 %v1026, %v994
  %v1283 = vpack.c.b16 %v1027, %v995
  %v1284 = vpack.c.b16 %v1028, %v996
  %v1285 = vpack.c.b16 %v1029, %v997
  %v1286 = vpack.c.b16 %v1030, %v998
  %v1287 = vpack.c.b16 %v1031, %v999
  %v1288 = vpack.c.b16 %v1032, %v1000
  %v1289 = vpack.c.b16 %v1033, %v1001
  %v1290 = vpack.c.b16 %v1034, %v1002
  %v1291 = vpack.c.b16 %v1035, %v1003
  %v1292 = vpack.c.b16 %v1036, %v1004
  %v1293 = vpack.c.b16 %v1037, %v1005
  %v1294 = vpack.c.b16 %v1038, %v1006
  %v1295 = vpack.c.b16 %v1039, %v1007
  %v1296 = vpack.c.b16 %v1040, %v1008
  %v1297 = vpack.c.b16 %v1041, %v1009
  %v1298 = vpack.c.b16 %v1042, %v1010
  %v1299 = vpack.c.b16 %v1043, %v1011
  %v1300 = vpack.c.b16 %v1044, %v1012
  %v1301 = vpack.c.b16 %v1045, %v1013
  %v1302 = vpack.c.b16 %v1046, %v1014
  %v1303 = vpack.c.b16 %v1047, %v1015
  %v1304 = vpack.c.b16 %v1048, %v1016
  %v1305 = vpack.c.b16 %v1049, %v1017
  %1562 = vmatprep.subr.bf16.mxu0 %v1051
  %1563 = vmatpush1.bf16.msra.mxu0 %v1050
  %1564 = vmatprep.subr.bf16.mxu0 %v1083
  %1565 = vmatpush1.bf16.msra.mxu0 %v1082
  %1566 = vmatprep.subr.bf16.mxu0 %v1115
  %1567 = vmatpush1.bf16.msra.mxu0 %v1114
  %1568 = vmatprep.subr.bf16.mxu0 %v1147
  %1569 = vmatpush1.bf16.msra.mxu0 %v1146
  %1570 = vmatprep.subr.bf16.mxu0 %v1179
  %1571 = vmatpush1.bf16.msra.mxu0 %v1178
  %1572 = vmatprep.subr.bf16.mxu0 %v1211
  %1573 = vmatpush1.bf16.msra.mxu0 %v1210
  %1574 = vmatprep.subr.bf16.mxu0 %v1243
  %1575 = vmatpush1.bf16.msra.mxu0 %v1242
  %1576 = vmatprep.subr.bf16.mxu0 %v1275
  %1577 = vmatpush1.bf16.msra.mxu0 %v1274
  %1578 = vmatprep.subr.bf16.mxu0 0
  %1579 = vmatpush1.bf16.msra.mxu0 0
  %1580 = vmatprep.subr.bf16.mxu0 0
  %1581 = vmatpush1.bf16.msra.mxu0 0
  %1582 = vmatprep.subr.bf16.mxu0 0
  %1583 = vmatpush1.bf16.msra.mxu0 0
  %1584 = vmatprep.subr.bf16.mxu0 0
  %1585 = vmatpush1.bf16.msra.mxu0 0
  %1586 = vmatprep.subr.bf16.mxu0 0
  %1587 = vmatpush1.bf16.msra.mxu0 0
  %1588 = vmatprep.subr.bf16.mxu0 0
  %1589 = vmatpush1.bf16.msra.mxu0 0
  %1590 = vmatprep.subr.bf16.mxu0 0
  %1591 = vmatpush1.bf16.msra.mxu0 0
  %1592 = vmatprep.subr.bf16.mxu0 0
  %1593 = vmatpush1.bf16.msra.mxu0 0
  %1594 = vmatprep.mubr.bf16.mxu0 0
  %1595 = vmatmul.mubr.bf16.gmra.mrb[0].mxu0 %v280
  %v1596 = vpop.f32.mrb[0].mxu0
  %v1597 = vadd.f32 0.0, %v1596
  %v1598 = vpop.f32.mrb[0].mxu0
  %v1599 = vadd.f32 0.0, %v1598
  %v1600 = vpop.f32.mrb[0].mxu0
  %v1601 = vadd.f32 0.0, %v1600
  %v1602 = vpop.f32.mrb[0].mxu0
  %v1603 = vadd.f32 0.0, %v1602
  %1604 = vdwg.mxu0
  %1605 = vmatprep.subr.bf16.mxu0 %v1053
  %1606 = vmatpush1.bf16.msra.mxu0 %v1052
  %1607 = vmatprep.subr.bf16.mxu0 %v1085
  %1608 = vmatpush1.bf16.msra.mxu0 %v1084
  %1609 = vmatprep.subr.bf16.mxu0 %v1117
  %1610 = vmatpush1.bf16.msra.mxu0 %v1116
  %1611 = vmatprep.subr.bf16.mxu0 %v1149
  %1612 = vmatpush1.bf16.msra.mxu0 %v1148
  %1613 = vmatprep.subr.bf16.mxu0 %v1181
  %1614 = vmatpush1.bf16.msra.mxu0 %v1180
  %1615 = vmatprep.subr.bf16.mxu0 %v1213
  %1616 = vmatpush1.bf16.msra.mxu0 %v1212
  %1617 = vmatprep.subr.bf16.mxu0 %v1245
  %1618 = vmatpush1.bf16.msra.mxu0 %v1244
  %1619 = vmatprep.subr.bf16.mxu0 %v1277
  %1620 = vmatpush1.bf16.msra.mxu0 %v1276
  %1621 = vmatprep.subr.bf16.mxu0 0
  %1622 = vmatpush1.bf16.msra.mxu0 0
  %1623 = vmatprep.subr.bf16.mxu0 0
  %1624 = vmatpush1.bf16.msra.mxu0 0
  %1625 = vmatprep.subr.bf16.mxu0 0
  %1626 = vmatpush1.bf16.msra.mxu0 0
  %1627 = vmatprep.subr.bf16.mxu0 0
  %1628 = vmatpush1.bf16.msra.mxu0 0
  %1629 = vmatprep.subr.bf16.mxu0 0
  %1630 = vmatpush1.bf16.msra.mxu0 0
  %1631 = vmatprep.subr.bf16.mxu0 0
  %1632 = vmatpush1.bf16.msra.mxu0 0
  %1633 = vmatprep.subr.bf16.mxu0 0
  %1634 = vmatpush1.bf16.msra.mxu0 0
  %1635 = vmatprep.subr.bf16.mxu0 0
  %1636 = vmatpush1.bf16.msra.mxu0 0
  %1637 = vmatprep.mubr.bf16.mxu0 0
  %1638 = vmatmul.mubr.bf16.gmra.mrb[0].mxu0 %v280
  %v1639 = vpop.f32.mrb[0].mxu0
  %v1640 = vadd.f32 0.0, %v1639
  %v1641 = vpop.f32.mrb[0].mxu0
  %v1642 = vadd.f32 0.0, %v1641
  %v1643 = vpop.f32.mrb[0].mxu0
  %v1644 = vadd.f32 0.0, %v1643
  %v1645 = vpop.f32.mrb[0].mxu0
  %v1646 = vadd.f32 0.0, %v1645
  %1647 = vdwg.mxu0
  %1648 = vmatprep.subr.bf16.mxu0 %v1055
  %1649 = vmatpush1.bf16.msra.mxu0 %v1054
  %1650 = vmatprep.subr.bf16.mxu0 %v1087
  %1651 = vmatpush1.bf16.msra.mxu0 %v1086
  %1652 = vmatprep.subr.bf16.mxu0 %v1119
  %1653 = vmatpush1.bf16.msra.mxu0 %v1118
  %1654 = vmatprep.subr.bf16.mxu0 %v1151
  %1655 = vmatpush1.bf16.msra.mxu0 %v1150
  %1656 = vmatprep.subr.bf16.mxu0 %v1183
  %1657 = vmatpush1.bf16.msra.mxu0 %v1182
  %1658 = vmatprep.subr.bf16.mxu0 %v1215
  %1659 = vmatpush1.bf16.msra.mxu0 %v1214
  %1660 = vmatprep.subr.bf16.mxu0 %v1247
  %1661 = vmatpush1.bf16.msra.mxu0 %v1246
  %1662 = vmatprep.subr.bf16.mxu0 %v1279
  %1663 = vmatpush1.bf16.msra.mxu0 %v1278
  %1664 = vmatprep.subr.bf16.mxu0 0
  %1665 = vmatpush1.bf16.msra.mxu0 0
  %1666 = vmatprep.subr.bf16.mxu0 0
  %1667 = vmatpush1.bf16.msra.mxu0 0
  %1668 = vmatprep.subr.bf16.mxu0 0
  %1669 = vmatpush1.bf16.msra.mxu0 0
  %1670 = vmatprep.subr.bf16.mxu0 0
  %1671 = vmatpush1.bf16.msra.mxu0 0
  %1672 = vmatprep.subr.bf16.mxu0 0
  %1673 = vmatpush1.bf16.msra.mxu0 0
  %1674 = vmatprep.subr.bf16.mxu0 0
  %1675 = vmatpush1.bf16.msra.mxu0 0
  %1676 = vmatprep.subr.bf16.mxu0 0
  %1677 = vmatpush1.bf16.msra.mxu0 0
  %1678 = vmatprep.subr.bf16.mxu0 0
  %1679 = vmatpush1.bf16.msra.mxu0 0
  %1680 = vmatprep.mubr.bf16.mxu0 0
  %1681 = vmatmul.mubr.bf16.gmra.mrb[0].mxu0 %v280
  %v1682 = vpop.f32.mrb[0].mxu0
  %v1683 = vadd.f32 0.0, %v1682
  %v1684 = vpop.f32.mrb[0].mxu0
  %v1685 = vadd.f32 0.0, %v1684
  %v1686 = vpop.f32.mrb[0].mxu0
  %v1687 = vadd.f32 0.0, %v1686
  %v1688 = vpop.f32.mrb[0].mxu0
  %v1689 = vadd.f32 0.0, %v1688
  %1690 = vdwg.mxu0
  %1691 = vmatprep.subr.bf16.mxu0 %v1057
  %1692 = vmatpush1.bf16.msra.mxu0 %v1056
  %1693 = vmatprep.subr.bf16.mxu0 %v1089
  %1694 = vmatpush1.bf16.msra.mxu0 %v1088
  %1695 = vmatprep.subr.bf16.mxu0 %v1121
  %1696 = vmatpush1.bf16.msra.mxu0 %v1120
  %1697 = vmatprep.subr.bf16.mxu0 %v1153
  %1698 = vmatpush1.bf16.msra.mxu0 %v1152
  %1699 = vmatprep.subr.bf16.mxu0 %v1185
  %1700 = vmatpush1.bf16.msra.mxu0 %v1184
  %1701 = vmatprep.subr.bf16.mxu0 %v1217
  %1702 = vmatpush1.bf16.msra.mxu0 %v1216
  %1703 = vmatprep.subr.bf16.mxu0 %v1249
  %1704 = vmatpush1.bf16.msra.mxu0 %v1248
  %1705 = vmatprep.subr.bf16.mxu0 %v1281
  %1706 = vmatpush1.bf16.msra.mxu0 %v1280
  %1707 = vmatprep.subr.bf16.mxu0 0
  %1708 = vmatpush1.bf16.msra.mxu0 0
  %1709 = vmatprep.subr.bf16.mxu0 0
  %1710 = vmatpush1.bf16.msra.mxu0 0
  %1711 = vmatprep.subr.bf16.mxu0 0
  %1712 = vmatpush1.bf16.msra.mxu0 0
  %1713 = vmatprep.subr.bf16.mxu0 0
  %1714 = vmatpush1.bf16.msra.mxu0 0
  %1715 = vmatprep.subr.bf16.mxu0 0
  %1716 = vmatpush1.bf16.msra.mxu0 0
  %1717 = vmatprep.subr.bf16.mxu0 0
  %1718 = vmatpush1.bf16.msra.mxu0 0
  %1719 = vmatprep.subr.bf16.mxu0 0
  %1720 = vmatpush1.bf16.msra.mxu0 0
  %1721 = vmatprep.subr.bf16.mxu0 0
  %1722 = vmatpush1.bf16.msra.mxu0 0
  %1723 = vmatprep.mubr.bf16.mxu0 0
  %1724 = vmatmul.mubr.bf16.gmra.mrb[0].mxu0 %v280
  %v1725 = vpop.f32.mrb[0].mxu0
  %v1726 = vadd.f32 0.0, %v1725
  %v1727 = vpop.f32.mrb[0].mxu0
  %v1728 = vadd.f32 0.0, %v1727
  %v1729 = vpop.f32.mrb[0].mxu0
  %v1730 = vadd.f32 0.0, %v1729
  %v1731 = vpop.f32.mrb[0].mxu0
  %v1732 = vadd.f32 0.0, %v1731
  %1733 = vdwg.mxu0
  %1734 = vmatprep.subr.bf16.mxu0 %v1059
  %1735 = vmatpush1.bf16.msra.mxu0 %v1058
  %1736 = vmatprep.subr.bf16.mxu0 %v1091
  %1737 = vmatpush1.bf16.msra.mxu0 %v1090
  %1738 = vmatprep.subr.bf16.mxu0 %v1123
  %1739 = vmatpush1.bf16.msra.mxu0 %v1122
  %1740 = vmatprep.subr.bf16.mxu0 %v1155
  %1741 = vmatpush1.bf16.msra.mxu0 %v1154
  %1742 = vmatprep.subr.bf16.mxu0 %v1187
  %1743 = vmatpush1.bf16.msra.mxu0 %v1186
  %1744 = vmatprep.subr.bf16.mxu0 %v1219
  %1745 = vmatpush1.bf16.msra.mxu0 %v1218
  %1746 = vmatprep.subr.bf16.mxu0 %v1251
  %1747 = vmatpush1.bf16.msra.mxu0 %v1250
  %1748 = vmatprep.subr.bf16.mxu0 %v1283
  %1749 = vmatpush1.bf16.msra.mxu0 %v1282
  %1750 = vmatprep.subr.bf16.mxu0 0
  %1751 = vmatpush1.bf16.msra.mxu0 0
  %1752 = vmatprep.subr.bf16.mxu0 0
  %1753 = vmatpush1.bf16.msra.mxu0 0
  %1754 = vmatprep.subr.bf16.mxu0 0
  %1755 = vmatpush1.bf16.msra.mxu0 0
  %1756 = vmatprep.subr.bf16.mxu0 0
  %1757 = vmatpush1.bf16.msra.mxu0 0
  %1758 = vmatprep.subr.bf16.mxu0 0
  %1759 = vmatpush1.bf16.msra.mxu0 0
  %1760 = vmatprep.subr.bf16.mxu0 0
  %1761 = vmatpush1.bf16.msra.mxu0 0
  %1762 = vmatprep.subr.bf16.mxu0 0
  %1763 = vmatpush1.bf16.msra.mxu0 0
  %1764 = vmatprep.subr.bf16.mxu0 0
  %1765 = vmatpush1.bf16.msra.mxu0 0
  %1766 = vmatprep.mubr.bf16.mxu0 0
  %1767 = vmatmul.mubr.bf16.gmra.mrb[0].mxu0 %v280
  %v1768 = vpop.f32.mrb[0].mxu0
  %v1769 = vadd.f32 0.0, %v1768
  %v1770 = vpop.f32.mrb[0].mxu0
  %v1771 = vadd.f32 0.0, %v1770
  %v1772 = vpop.f32.mrb[0].mxu0
  %v1773 = vadd.f32 0.0, %v1772
  %v1774 = vpop.f32.mrb[0].mxu0
  %v1775 = vadd.f32 0.0, %v1774
  %1776 = vdwg.mxu0
  %1777 = vmatprep.subr.bf16.mxu0 %v1061
  %1778 = vmatpush1.bf16.msra.mxu0 %v1060
  %1779 = vmatprep.subr.bf16.mxu0 %v1093
  %1780 = vmatpush1.bf16.msra.mxu0 %v1092
  %1781 = vmatprep.subr.bf16.mxu0 %v1125
  %1782 = vmatpush1.bf16.msra.mxu0 %v1124
  %1783 = vmatprep.subr.bf16.mxu0 %v1157
  %1784 = vmatpush1.bf16.msra.mxu0 %v1156
  %1785 = vmatprep.subr.bf16.mxu0 %v1189
  %1786 = vmatpush1.bf16.msra.mxu0 %v1188
  %1787 = vmatprep.subr.bf16.mxu0 %v1221
  %1788 = vmatpush1.bf16.msra.mxu0 %v1220
  %1789 = vmatprep.subr.bf16.mxu0 %v1253
  %1790 = vmatpush1.bf16.msra.mxu0 %v1252
  %1791 = vmatprep.subr.bf16.mxu0 %v1285
  %1792 = vmatpush1.bf16.msra.mxu0 %v1284
  %1793 = vmatprep.subr.bf16.mxu0 0
  %1794 = vmatpush1.bf16.msra.mxu0 0
  %1795 = vmatprep.subr.bf16.mxu0 0
  %1796 = vmatpush1.bf16.msra.mxu0 0
  %1797 = vmatprep.subr.bf16.mxu0 0
  %1798 = vmatpush1.bf16.msra.mxu0 0
  %1799 = vmatprep.subr.bf16.mxu0 0
  %1800 = vmatpush1.bf16.msra.mxu0 0
  %1801 = vmatprep.subr.bf16.mxu0 0
  %1802 = vmatpush1.bf16.msra.mxu0 0
  %1803 = vmatprep.subr.bf16.mxu0 0
  %1804 = vmatpush1.bf16.msra.mxu0 0
  %1805 = vmatprep.subr.bf16.mxu0 0
  %1806 = vmatpush1.bf16.msra.mxu0 0
  %1807 = vmatprep.subr.bf16.mxu0 0
  %1808 = vmatpush1.bf16.msra.mxu0 0
  %1809 = vmatprep.mubr.bf16.mxu0 0
  %1810 = vmatmul.mubr.bf16.gmra.mrb[0].mxu0 %v280
  %v1811 = vpop.f32.mrb[0].mxu0
  %v1812 = vadd.f32 0.0, %v1811
  %v1813 = vpop.f32.mrb[0].mxu0
  %v1814 = vadd.f32 0.0, %v1813
  %v1815 = vpop.f32.mrb[0].mxu0
  %v1816 = vadd.f32 0.0, %v1815
  %v1817 = vpop.f32.mrb[0].mxu0
  %v1818 = vadd.f32 0.0, %v1817
  %1819 = vdwg.mxu0
  %1820 = vmatprep.subr.bf16.mxu0 %v1063
  %1821 = vmatpush1.bf16.msra.mxu0 %v1062
  %1822 = vmatprep.subr.bf16.mxu0 %v1095
  %1823 = vmatpush1.bf16.msra.mxu0 %v1094
  %1824 = vmatprep.subr.bf16.mxu0 %v1127
  %1825 = vmatpush1.bf16.msra.mxu0 %v1126
  %1826 = vmatprep.subr.bf16.mxu0 %v1159
  %1827 = vmatpush1.bf16.msra.mxu0 %v1158
  %1828 = vmatprep.subr.bf16.mxu0 %v1191
  %1829 = vmatpush1.bf16.msra.mxu0 %v1190
  %1830 = vmatprep.subr.bf16.mxu0 %v1223
  %1831 = vmatpush1.bf16.msra.mxu0 %v1222
  %1832 = vmatprep.subr.bf16.mxu0 %v1255
  %1833 = vmatpush1.bf16.msra.mxu0 %v1254
  %1834 = vmatprep.subr.bf16.mxu0 %v1287
  %1835 = vmatpush1.bf16.msra.mxu0 %v1286
  %1836 = vmatprep.subr.bf16.mxu0 0
  %1837 = vmatpush1.bf16.msra.mxu0 0
  %1838 = vmatprep.subr.bf16.mxu0 0
  %1839 = vmatpush1.bf16.msra.mxu0 0
  %1840 = vmatprep.subr.bf16.mxu0 0
  %1841 = vmatpush1.bf16.msra.mxu0 0
  %1842 = vmatprep.subr.bf16.mxu0 0
  %1843 = vmatpush1.bf16.msra.mxu0 0
  %1844 = vmatprep.subr.bf16.mxu0 0
  %1845 = vmatpush1.bf16.msra.mxu0 0
  %1846 = vmatprep.subr.bf16.mxu0 0
  %1847 = vmatpush1.bf16.msra.mxu0 0
  %1848 = vmatprep.subr.bf16.mxu0 0
  %1849 = vmatpush1.bf16.msra.mxu0 0
  %1850 = vmatprep.subr.bf16.mxu0 0
  %1851 = vmatpush1.bf16.msra.mxu0 0
  %1852 = vmatprep.mubr.bf16.mxu0 0
  %1853 = vmatmul.mubr.bf16.gmra.mrb[0].mxu0 %v280
  %v1854 = vpop.f32.mrb[0].mxu0
  %v1855 = vadd.f32 0.0, %v1854
  %v1856 = vpop.f32.mrb[0].mxu0
  %v1857 = vadd.f32 0.0, %v1856
  %v1858 = vpop.f32.mrb[0].mxu0
  %v1859 = vadd.f32 0.0, %v1858
  %v1860 = vpop.f32.mrb[0].mxu0
  %v1861 = vadd.f32 0.0, %v1860
  %1862 = vdwg.mxu0
  %1863 = vmatprep.subr.bf16.mxu0 %v1065
  %1864 = vmatpush1.bf16.msra.mxu0 %v1064
  %1865 = vmatprep.subr.bf16.mxu0 %v1097
  %1866 = vmatpush1.bf16.msra.mxu0 %v1096
  %1867 = vmatprep.subr.bf16.mxu0 %v1129
  %1868 = vmatpush1.bf16.msra.mxu0 %v1128
  %1869 = vmatprep.subr.bf16.mxu0 %v1161
  %1870 = vmatpush1.bf16.msra.mxu0 %v1160
  %1871 = vmatprep.subr.bf16.mxu0 %v1193
  %1872 = vmatpush1.bf16.msra.mxu0 %v1192
  %1873 = vmatprep.subr.bf16.mxu0 %v1225
  %1874 = vmatpush1.bf16.msra.mxu0 %v1224
  %1875 = vmatprep.subr.bf16.mxu0 %v1257
  %1876 = vmatpush1.bf16.msra.mxu0 %v1256
  %1877 = vmatprep.subr.bf16.mxu0 %v1289
  %1878 = vmatpush1.bf16.msra.mxu0 %v1288
  %1879 = vmatprep.subr.bf16.mxu0 0
  %1880 = vmatpush1.bf16.msra.mxu0 0
  %1881 = vmatprep.subr.bf16.mxu0 0
  %1882 = vmatpush1.bf16.msra.mxu0 0
  %1883 = vmatprep.subr.bf16.mxu0 0
  %1884 = vmatpush1.bf16.msra.mxu0 0
  %1885 = vmatprep.subr.bf16.mxu0 0
  %1886 = vmatpush1.bf16.msra.mxu0 0
  %1887 = vmatprep.subr.bf16.mxu0 0
  %1888 = vmatpush1.bf16.msra.mxu0 0
  %1889 = vmatprep.subr.bf16.mxu0 0
  %1890 = vmatpush1.bf16.msra.mxu0 0
  %1891 = vmatprep.subr.bf16.mxu0 0
  %1892 = vmatpush1.bf16.msra.mxu0 0
  %1893 = vmatprep.subr.bf16.mxu0 0
  %1894 = vmatpush1.bf16.msra.mxu0 0
  %1895 = vmatprep.mubr.bf16.mxu0 0
  %1896 = vmatmul.mubr.bf16.gmra.mrb[0].mxu0 %v280
  %v1897 = vpop.f32.mrb[0].mxu0
  %v1898 = vadd.f32 0.0, %v1897
  %v1899 = vpop.f32.mrb[0].mxu0
  %v1900 = vadd.f32 0.0, %v1899
  %v1901 = vpop.f32.mrb[0].mxu0
  %v1902 = vadd.f32 0.0, %v1901
  %v1903 = vpop.f32.mrb[0].mxu0
  %v1904 = vadd.f32 0.0, %v1903
  %1905 = vdwg.mxu0
  %1906 = vmatprep.subr.bf16.mxu0 %v1067
  %1907 = vmatpush1.bf16.msra.mxu0 %v1066
  %1908 = vmatprep.subr.bf16.mxu0 %v1099
  %1909 = vmatpush1.bf16.msra.mxu0 %v1098
  %1910 = vmatprep.subr.bf16.mxu0 %v1131
  %1911 = vmatpush1.bf16.msra.mxu0 %v1130
  %1912 = vmatprep.subr.bf16.mxu0 %v1163
  %1913 = vmatpush1.bf16.msra.mxu0 %v1162
  %1914 = vmatprep.subr.bf16.mxu0 %v1195
  %1915 = vmatpush1.bf16.msra.mxu0 %v1194
  %1916 = vmatprep.subr.bf16.mxu0 %v1227
  %1917 = vmatpush1.bf16.msra.mxu0 %v1226
  %1918 = vmatprep.subr.bf16.mxu0 %v1259
  %1919 = vmatpush1.bf16.msra.mxu0 %v1258
  %1920 = vmatprep.subr.bf16.mxu0 %v1291
  %1921 = vmatpush1.bf16.msra.mxu0 %v1290
  %1922 = vmatprep.subr.bf16.mxu0 0
  %1923 = vmatpush1.bf16.msra.mxu0 0
  %1924 = vmatprep.subr.bf16.mxu0 0
  %1925 = vmatpush1.bf16.msra.mxu0 0
  %1926 = vmatprep.subr.bf16.mxu0 0
  %1927 = vmatpush1.bf16.msra.mxu0 0
  %1928 = vmatprep.subr.bf16.mxu0 0
  %1929 = vmatpush1.bf16.msra.mxu0 0
  %1930 = vmatprep.subr.bf16.mxu0 0
  %1931 = vmatpush1.bf16.msra.mxu0 0
  %1932 = vmatprep.subr.bf16.mxu0 0
  %1933 = vmatpush1.bf16.msra.mxu0 0
  %1934 = vmatprep.subr.bf16.mxu0 0
  %1935 = vmatpush1.bf16.msra.mxu0 0
  %1936 = vmatprep.subr.bf16.mxu0 0
  %1937 = vmatpush1.bf16.msra.mxu0 0
  %1938 = vmatprep.mubr.bf16.mxu0 0
  %1939 = vmatmul.mubr.bf16.gmra.mrb[0].mxu0 %v280
  %v1940 = vpop.f32.mrb[0].mxu0
  %v1941 = vadd.f32 0.0, %v1940
  %v1942 = vpop.f32.mrb[0].mxu0
  %v1943 = vadd.f32 0.0, %v1942
  %v1944 = vpop.f32.mrb[0].mxu0
  %v1945 = vadd.f32 0.0, %v1944
  %v1946 = vpop.f32.mrb[0].mxu0
  %v1947 = vadd.f32 0.0, %v1946
  %1948 = vdwg.mxu0
  %1949 = vmatprep.subr.bf16.mxu0 %v1069
  %1950 = vmatpush1.bf16.msra.mxu0 %v1068
  %1951 = vmatprep.subr.bf16.mxu0 %v1101
  %1952 = vmatpush1.bf16.msra.mxu0 %v1100
  %1953 = vmatprep.subr.bf16.mxu0 %v1133
  %1954 = vmatpush1.bf16.msra.mxu0 %v1132
  %1955 = vmatprep.subr.bf16.mxu0 %v1165
  %1956 = vmatpush1.bf16.msra.mxu0 %v1164
  %1957 = vmatprep.subr.bf16.mxu0 %v1197
  %1958 = vmatpush1.bf16.msra.mxu0 %v1196
  %1959 = vmatprep.subr.bf16.mxu0 %v1229
  %1960 = vmatpush1.bf16.msra.mxu0 %v1228
  %1961 = vmatprep.subr.bf16.mxu0 %v1261
  %1962 = vmatpush1.bf16.msra.mxu0 %v1260
  %1963 = vmatprep.subr.bf16.mxu0 %v1293
  %1964 = vmatpush1.bf16.msra.mxu0 %v1292
  %1965 = vmatprep.subr.bf16.mxu0 0
  %1966 = vmatpush1.bf16.msra.mxu0 0
  %1967 = vmatprep.subr.bf16.mxu0 0
  %1968 = vmatpush1.bf16.msra.mxu0 0
  %1969 = vmatprep.subr.bf16.mxu0 0
  %1970 = vmatpush1.bf16.msra.mxu0 0
  %1971 = vmatprep.subr.bf16.mxu0 0
  %1972 = vmatpush1.bf16.msra.mxu0 0
  %1973 = vmatprep.subr.bf16.mxu0 0
  %1974 = vmatpush1.bf16.msra.mxu0 0
  %1975 = vmatprep.subr.bf16.mxu0 0
  %1976 = vmatpush1.bf16.msra.mxu0 0
  %1977 = vmatprep.subr.bf16.mxu0 0
  %1978 = vmatpush1.bf16.msra.mxu0 0
  %1979 = vmatprep.subr.bf16.mxu0 0
  %1980 = vmatpush1.bf16.msra.mxu0 0
  %1981 = vmatprep.mubr.bf16.mxu0 0
  %1982 = vmatmul.mubr.bf16.gmra.mrb[0].mxu0 %v280
  %v1983 = vpop.f32.mrb[0].mxu0
  %v1984 = vadd.f32 0.0, %v1983
  %v1985 = vpop.f32.mrb[0].mxu0
  %v1986 = vadd.f32 0.0, %v1985
  %v1987 = vpop.f32.mrb[0].mxu0
  %v1988 = vadd.f32 0.0, %v1987
  %v1989 = vpop.f32.mrb[0].mxu0
  %v1990 = vadd.f32 0.0, %v1989
  %1991 = vdwg.mxu0
  %1992 = vmatprep.subr.bf16.mxu0 %v1071
  %1993 = vmatpush1.bf16.msra.mxu0 %v1070
  %1994 = vmatprep.subr.bf16.mxu0 %v1103
  %1995 = vmatpush1.bf16.msra.mxu0 %v1102
  %1996 = vmatprep.subr.bf16.mxu0 %v1135
  %1997 = vmatpush1.bf16.msra.mxu0 %v1134
  %1998 = vmatprep.subr.bf16.mxu0 %v1167
  %1999 = vmatpush1.bf16.msra.mxu0 %v1166
  %2000 = vmatprep.subr.bf16.mxu0 %v1199
  %2001 = vmatpush1.bf16.msra.mxu0 %v1198
  %2002 = vmatprep.subr.bf16.mxu0 %v1231
  %2003 = vmatpush1.bf16.msra.mxu0 %v1230
  %2004 = vmatprep.subr.bf16.mxu0 %v1263
  %2005 = vmatpush1.bf16.msra.mxu0 %v1262
  %2006 = vmatprep.subr.bf16.mxu0 %v1295
  %2007 = vmatpush1.bf16.msra.mxu0 %v1294
  %2008 = vmatprep.subr.bf16.mxu0 0
  %2009 = vmatpush1.bf16.msra.mxu0 0
  %2010 = vmatprep.subr.bf16.mxu0 0
  %2011 = vmatpush1.bf16.msra.mxu0 0
  %2012 = vmatprep.subr.bf16.mxu0 0
  %2013 = vmatpush1.bf16.msra.mxu0 0
  %2014 = vmatprep.subr.bf16.mxu0 0
  %2015 = vmatpush1.bf16.msra.mxu0 0
  %2016 = vmatprep.subr.bf16.mxu0 0
  %2017 = vmatpush1.bf16.msra.mxu0 0
  %2018 = vmatprep.subr.bf16.mxu0 0
  %2019 = vmatpush1.bf16.msra.mxu0 0
  %2020 = vmatprep.subr.bf16.mxu0 0
  %2021 = vmatpush1.bf16.msra.mxu0 0
  %2022 = vmatprep.subr.bf16.mxu0 0
  %2023 = vmatpush1.bf16.msra.mxu0 0
  %2024 = vmatprep.mubr.bf16.mxu0 0
  %2025 = vmatmul.mubr.bf16.gmra.mrb[0].mxu0 %v280
  %v2026 = vpop.f32.mrb[0].mxu0
  %v2027 = vadd.f32 0.0, %v2026
  %v2028 = vpop.f32.mrb[0].mxu0
  %v2029 = vadd.f32 0.0, %v2028
  %v2030 = vpop.f32.mrb[0].mxu0
  %v2031 = vadd.f32 0.0, %v2030
  %v2032 = vpop.f32.mrb[0].mxu0
  %v2033 = vadd.f32 0.0, %v2032
  %2034 = vdwg.mxu0
  %2035 = vmatprep.subr.bf16.mxu0 %v1073
  %2036 = vmatpush1.bf16.msra.mxu0 %v1072
  %2037 = vmatprep.subr.bf16.mxu0 %v1105
  %2038 = vmatpush1.bf16.msra.mxu0 %v1104
  %2039 = vmatprep.subr.bf16.mxu0 %v1137
  %2040 = vmatpush1.bf16.msra.mxu0 %v1136
  %2041 = vmatprep.subr.bf16.mxu0 %v1169
  %2042 = vmatpush1.bf16.msra.mxu0 %v1168
  %2043 = vmatprep.subr.bf16.mxu0 %v1201
  %2044 = vmatpush1.bf16.msra.mxu0 %v1200
  %2045 = vmatprep.subr.bf16.mxu0 %v1233
  %2046 = vmatpush1.bf16.msra.mxu0 %v1232
  %2047 = vmatprep.subr.bf16.mxu0 %v1265
  %2048 = vmatpush1.bf16.msra.mxu0 %v1264
  %2049 = vmatprep.subr.bf16.mxu0 %v1297
  %2050 = vmatpush1.bf16.msra.mxu0 %v1296
  %2051 = vmatprep.subr.bf16.mxu0 0
  %2052 = vmatpush1.bf16.msra.mxu0 0
  %2053 = vmatprep.subr.bf16.mxu0 0
  %2054 = vmatpush1.bf16.msra.mxu0 0
  %2055 = vmatprep.subr.bf16.mxu0 0
  %2056 = vmatpush1.bf16.msra.mxu0 0
  %2057 = vmatprep.subr.bf16.mxu0 0
  %2058 = vmatpush1.bf16.msra.mxu0 0
  %2059 = vmatprep.subr.bf16.mxu0 0
  %2060 = vmatpush1.bf16.msra.mxu0 0
  %2061 = vmatprep.subr.bf16.mxu0 0
  %2062 = vmatpush1.bf16.msra.mxu0 0
  %2063 = vmatprep.subr.bf16.mxu0 0
  %2064 = vmatpush1.bf16.msra.mxu0 0
  %2065 = vmatprep.subr.bf16.mxu0 0
  %2066 = vmatpush1.bf16.msra.mxu0 0
  %2067 = vmatprep.mubr.bf16.mxu0 0
  %2068 = vmatmul.mubr.bf16.gmra.mrb[0].mxu0 %v280
  %v2069 = vpop.f32.mrb[0].mxu0
  %v2070 = vadd.f32 0.0, %v2069
  %v2071 = vpop.f32.mrb[0].mxu0
  %v2072 = vadd.f32 0.0, %v2071
  %v2073 = vpop.f32.mrb[0].mxu0
  %v2074 = vadd.f32 0.0, %v2073
  %v2075 = vpop.f32.mrb[0].mxu0
  %v2076 = vadd.f32 0.0, %v2075
  %2077 = vdwg.mxu0
  %2078 = vmatprep.subr.bf16.mxu0 %v1075
  %2079 = vmatpush1.bf16.msra.mxu0 %v1074
  %2080 = vmatprep.subr.bf16.mxu0 %v1107
  %2081 = vmatpush1.bf16.msra.mxu0 %v1106
  %2082 = vmatprep.subr.bf16.mxu0 %v1139
  %2083 = vmatpush1.bf16.msra.mxu0 %v1138
  %2084 = vmatprep.subr.bf16.mxu0 %v1171
  %2085 = vmatpush1.bf16.msra.mxu0 %v1170
  %2086 = vmatprep.subr.bf16.mxu0 %v1203
  %2087 = vmatpush1.bf16.msra.mxu0 %v1202
  %2088 = vmatprep.subr.bf16.mxu0 %v1235
  %2089 = vmatpush1.bf16.msra.mxu0 %v1234
  %2090 = vmatprep.subr.bf16.mxu0 %v1267
  %2091 = vmatpush1.bf16.msra.mxu0 %v1266
  %2092 = vmatprep.subr.bf16.mxu0 %v1299
  %2093 = vmatpush1.bf16.msra.mxu0 %v1298
  %2094 = vmatprep.subr.bf16.mxu0 0
  %2095 = vmatpush1.bf16.msra.mxu0 0
  %2096 = vmatprep.subr.bf16.mxu0 0
  %2097 = vmatpush1.bf16.msra.mxu0 0
  %2098 = vmatprep.subr.bf16.mxu0 0
  %2099 = vmatpush1.bf16.msra.mxu0 0
  %2100 = vmatprep.subr.bf16.mxu0 0
  %2101 = vmatpush1.bf16.msra.mxu0 0
  %2102 = vmatprep.subr.bf16.mxu0 0
  %2103 = vmatpush1.bf16.msra.mxu0 0
  %2104 = vmatprep.subr.bf16.mxu0 0
  %2105 = vmatpush1.bf16.msra.mxu0 0
  %2106 = vmatprep.subr.bf16.mxu0 0
  %2107 = vmatpush1.bf16.msra.mxu0 0
  %2108 = vmatprep.subr.bf16.mxu0 0
  %2109 = vmatpush1.bf16.msra.mxu0 0
  %2110 = vmatprep.mubr.bf16.mxu0 0
  %2111 = vmatmul.mubr.bf16.gmra.mrb[0].mxu0 %v280
  %v2112 = vpop.f32.mrb[0].mxu0
  %v2113 = vadd.f32 0.0, %v2112
  %v2114 = vpop.f32.mrb[0].mxu0
  %v2115 = vadd.f32 0.0, %v2114
  %v2116 = vpop.f32.mrb[0].mxu0
  %v2117 = vadd.f32 0.0, %v2116
  %v2118 = vpop.f32.mrb[0].mxu0
  %v2119 = vadd.f32 0.0, %v2118
  %2120 = vdwg.mxu0
  %2121 = vmatprep.subr.bf16.mxu0 %v1077
  %2122 = vmatpush1.bf16.msra.mxu0 %v1076
  %2123 = vmatprep.subr.bf16.mxu0 %v1109
  %2124 = vmatpush1.bf16.msra.mxu0 %v1108
  %2125 = vmatprep.subr.bf16.mxu0 %v1141
  %2126 = vmatpush1.bf16.msra.mxu0 %v1140
  %2127 = vmatprep.subr.bf16.mxu0 %v1173
  %2128 = vmatpush1.bf16.msra.mxu0 %v1172
  %2129 = vmatprep.subr.bf16.mxu0 %v1205
  %2130 = vmatpush1.bf16.msra.mxu0 %v1204
  %2131 = vmatprep.subr.bf16.mxu0 %v1237
  %2132 = vmatpush1.bf16.msra.mxu0 %v1236
  %2133 = vmatprep.subr.bf16.mxu0 %v1269
  %2134 = vmatpush1.bf16.msra.mxu0 %v1268
  %2135 = vmatprep.subr.bf16.mxu0 %v1301
  %2136 = vmatpush1.bf16.msra.mxu0 %v1300
  %2137 = vmatprep.subr.bf16.mxu0 0
  %2138 = vmatpush1.bf16.msra.mxu0 0
  %2139 = vmatprep.subr.bf16.mxu0 0
  %2140 = vmatpush1.bf16.msra.mxu0 0
  %2141 = vmatprep.subr.bf16.mxu0 0
  %2142 = vmatpush1.bf16.msra.mxu0 0
  %2143 = vmatprep.subr.bf16.mxu0 0
  %2144 = vmatpush1.bf16.msra.mxu0 0
  %2145 = vmatprep.subr.bf16.mxu0 0
  %2146 = vmatpush1.bf16.msra.mxu0 0
  %2147 = vmatprep.subr.bf16.mxu0 0
  %2148 = vmatpush1.bf16.msra.mxu0 0
  %2149 = vmatprep.subr.bf16.mxu0 0
  %2150 = vmatpush1.bf16.msra.mxu0 0
  %2151 = vmatprep.subr.bf16.mxu0 0
  %2152 = vmatpush1.bf16.msra.mxu0 0
  %2153 = vmatprep.mubr.bf16.mxu0 0
  %2154 = vmatmul.mubr.bf16.gmra.mrb[0].mxu0 %v280
  %v2155 = vpop.f32.mrb[0].mxu0
  %v2156 = vadd.f32 0.0, %v2155
  %v2157 = vpop.f32.mrb[0].mxu0
  %v2158 = vadd.f32 0.0, %v2157
  %v2159 = vpop.f32.mrb[0].mxu0
  %v2160 = vadd.f32 0.0, %v2159
  %v2161 = vpop.f32.mrb[0].mxu0
  %v2162 = vadd.f32 0.0, %v2161
  %2163 = vdwg.mxu0
  %2164 = vmatprep.subr.bf16.mxu0 %v1079
  %2165 = vmatpush1.bf16.msra.mxu0 %v1078
  %2166 = vmatprep.subr.bf16.mxu0 %v1111
  %2167 = vmatpush1.bf16.msra.mxu0 %v1110
  %2168 = vmatprep.subr.bf16.mxu0 %v1143
  %2169 = vmatpush1.bf16.msra.mxu0 %v1142
  %2170 = vmatprep.subr.bf16.mxu0 %v1175
  %2171 = vmatpush1.bf16.msra.mxu0 %v1174
  %2172 = vmatprep.subr.bf16.mxu0 %v1207
  %2173 = vmatpush1.bf16.msra.mxu0 %v1206
  %2174 = vmatprep.subr.bf16.mxu0 %v1239
  %2175 = vmatpush1.bf16.msra.mxu0 %v1238
  %2176 = vmatprep.subr.bf16.mxu0 %v1271
  %2177 = vmatpush1.bf16.msra.mxu0 %v1270
  %2178 = vmatprep.subr.bf16.mxu0 %v1303
  %2179 = vmatpush1.bf16.msra.mxu0 %v1302
  %2180 = vmatprep.subr.bf16.mxu0 0
  %2181 = vmatpush1.bf16.msra.mxu0 0
  %2182 = vmatprep.subr.bf16.mxu0 0
  %2183 = vmatpush1.bf16.msra.mxu0 0
  %2184 = vmatprep.subr.bf16.mxu0 0
  %2185 = vmatpush1.bf16.msra.mxu0 0
  %2186 = vmatprep.subr.bf16.mxu0 0
  %2187 = vmatpush1.bf16.msra.mxu0 0
  %2188 = vmatprep.subr.bf16.mxu0 0
  %2189 = vmatpush1.bf16.msra.mxu0 0
  %2190 = vmatprep.subr.bf16.mxu0 0
  %2191 = vmatpush1.bf16.msra.mxu0 0
  %2192 = vmatprep.subr.bf16.mxu0 0
  %2193 = vmatpush1.bf16.msra.mxu0 0
  %2194 = vmatprep.subr.bf16.mxu0 0
  %2195 = vmatpush1.bf16.msra.mxu0 0
  %2196 = vmatprep.mubr.bf16.mxu0 0
  %2197 = vmatmul.mubr.bf16.gmra.mrb[0].mxu0 %v280
  %v2198 = vpop.f32.mrb[0].mxu0
  %v2199 = vadd.f32 0.0, %v2198
  %v2200 = vpop.f32.mrb[0].mxu0
  %v2201 = vadd.f32 0.0, %v2200
  %v2202 = vpop.f32.mrb[0].mxu0
  %v2203 = vadd.f32 0.0, %v2202
  %v2204 = vpop.f32.mrb[0].mxu0
  %v2205 = vadd.f32 0.0, %v2204
  %2206 = vdwg.mxu0
  %2207 = vmatprep.subr.bf16.mxu0 %v1081
  %2208 = vmatpush1.bf16.msra.mxu0 %v1080
  %2209 = vmatprep.subr.bf16.mxu0 %v1113
  %2210 = vmatpush1.bf16.msra.mxu0 %v1112
  %2211 = vmatprep.subr.bf16.mxu0 %v1145
  %2212 = vmatpush1.bf16.msra.mxu0 %v1144
  %2213 = vmatprep.subr.bf16.mxu0 %v1177
  %2214 = vmatpush1.bf16.msra.mxu0 %v1176
  %2215 = vmatprep.subr.bf16.mxu0 %v1209
  %2216 = vmatpush1.bf16.msra.mxu0 %v1208
  %2217 = vmatprep.subr.bf16.mxu0 %v1241
  %2218 = vmatpush1.bf16.msra.mxu0 %v1240
  %2219 = vmatprep.subr.bf16.mxu0 %v1273
  %2220 = vmatpush1.bf16.msra.mxu0 %v1272
  %2221 = vmatprep.subr.bf16.mxu0 %v1305
  %2222 = vmatpush1.bf16.msra.mxu0 %v1304
  %2223 = vmatprep.subr.bf16.mxu0 0
  %2224 = vmatpush1.bf16.msra.mxu0 0
  %2225 = vmatprep.subr.bf16.mxu0 0
  %2226 = vmatpush1.bf16.msra.mxu0 0
  %2227 = vmatprep.subr.bf16.mxu0 0
  %2228 = vmatpush1.bf16.msra.mxu0 0
  %2229 = vmatprep.subr.bf16.mxu0 0
  %2230 = vmatpush1.bf16.msra.mxu0 0
  %2231 = vmatprep.subr.bf16.mxu0 0
  %2232 = vmatpush1.bf16.msra.mxu0 0
  %2233 = vmatprep.subr.bf16.mxu0 0
  %2234 = vmatpush1.bf16.msra.mxu0 0
  %2235 = vmatprep.subr.bf16.mxu0 0
  %2236 = vmatpush1.bf16.msra.mxu0 0
  %2237 = vmatprep.subr.bf16.mxu0 0
  %2238 = vmatpush1.bf16.msra.mxu0 0
  %2239 = vmatprep.mubr.bf16.mxu0 0
  %2240 = vmatmul.mubr.bf16.gmra.mrb[0].mxu0 %v280
  %v2241 = vpop.f32.mrb[0].mxu0
  %v2242 = vadd.f32 0.0, %v2241
  %v2243 = vpop.f32.mrb[0].mxu0
  %v2244 = vadd.f32 0.0, %v2243
  %v2245 = vpop.f32.mrb[0].mxu0
  %v2246 = vadd.f32 0.0, %v2245
  %v2247 = vpop.f32.mrb[0].mxu0
  %v2248 = vadd.f32 0.0, %v2247
  %2249 = vdwg.mxu0
  %v2250 = vadd.f32 %v1597, %v1599
  %v2251 = vadd.f32 %v2250, %v1640
  %v2252 = vadd.f32 %v2251, %v1642
  %v2253 = vadd.f32 %v2252, %v1683
  %v2254 = vadd.f32 %v2253, %v1685
  %v2255 = vadd.f32 %v2254, %v1726
  %v2256 = vadd.f32 %v2255, %v1728
  %v2257 = vadd.f32 %v2256, %v1769
  %v2258 = vadd.f32 %v2257, %v1771
  %v2259 = vadd.f32 %v2258, %v1812
  %v2260 = vadd.f32 %v2259, %v1814
  %v2261 = vadd.f32 %v2260, %v1855
  %v2262 = vadd.f32 %v2261, %v1857
  %v2263 = vadd.f32 %v2262, %v1898
  %v2264 = vadd.f32 %v2263, %v1900
  %v2265 = vadd.f32 %v2264, %v1941
  %v2266 = vadd.f32 %v2265, %v1943
  %v2267 = vadd.f32 %v2266, %v1984
  %v2268 = vadd.f32 %v2267, %v1986
  %v2269 = vadd.f32 %v2268, %v2027
  %v2270 = vadd.f32 %v2269, %v2029
  %v2271 = vadd.f32 %v2270, %v2070
  %v2272 = vadd.f32 %v2271, %v2072
  %v2273 = vadd.f32 %v2272, %v2113
  %v2274 = vadd.f32 %v2273, %v2115
  %v2275 = vadd.f32 %v2274, %v2156
  %v2276 = vadd.f32 %v2275, %v2158
  %v2277 = vadd.f32 %v2276, %v2199
  %v2278 = vadd.f32 %v2277, %v2201
  %v2279 = vadd.f32 %v2278, %v2242
  %v2280 = vadd.f32 %v2279, %v2244
  %2281 = vadd.xlane.f32.xlu0 %v2280
  %v2282 = vpop.xlane.xlu0 %2281
  %v2283 = vadd.f32 %v1601, %v1603
  %v2284 = vadd.f32 %v2283, %v1644
  %v2285 = vadd.f32 %v2284, %v1646
  %v2286 = vadd.f32 %v2285, %v1687
  %v2287 = vadd.f32 %v2286, %v1689
  %v2288 = vadd.f32 %v2287, %v1730
  %v2289 = vadd.f32 %v2288, %v1732
  %v2290 = vadd.f32 %v2289, %v1773
  %v2291 = vadd.f32 %v2290, %v1775
  %v2292 = vadd.f32 %v2291, %v1816
  %v2293 = vadd.f32 %v2292, %v1818
  %v2294 = vadd.f32 %v2293, %v1859
  %v2295 = vadd.f32 %v2294, %v1861
  %v2296 = vadd.f32 %v2295, %v1902
  %v2297 = vadd.f32 %v2296, %v1904
  %v2298 = vadd.f32 %v2297, %v1945
  %v2299 = vadd.f32 %v2298, %v1947
  %v2300 = vadd.f32 %v2299, %v1988
  %v2301 = vadd.f32 %v2300, %v1990
  %v2302 = vadd.f32 %v2301, %v2031
  %v2303 = vadd.f32 %v2302, %v2033
  %v2304 = vadd.f32 %v2303, %v2074
  %v2305 = vadd.f32 %v2304, %v2076
  %v2306 = vadd.f32 %v2305, %v2117
  %v2307 = vadd.f32 %v2306, %v2119
  %v2308 = vadd.f32 %v2307, %v2160
  %v2309 = vadd.f32 %v2308, %v2162
  %v2310 = vadd.f32 %v2309, %v2203
  %v2311 = vadd.f32 %v2310, %v2205
  %v2312 = vadd.f32 %v2311, %v2246
  %v2313 = vadd.f32 %v2312, %v2248
  %2314 = vadd.xlane.f32.xlu0 %v2313
  %v2315 = vpop.xlane.xlu0 %2314
  %v2316 = vmul.f32 %v2282, 0.00024414063
  %v2317 = vmul.f32 %v2315, 0.00024414063
  %v2318 = vmul.f32 %v1597, %v1597
  %v2319 = vmul.f32 %v1599, %v1599
  %v2320 = vmul.f32 %v1640, %v1640
  %v2321 = vmul.f32 %v1642, %v1642
  %v2322 = vmul.f32 %v1683, %v1683
  %v2323 = vmul.f32 %v1685, %v1685
  %v2324 = vmul.f32 %v1726, %v1726
  %v2325 = vmul.f32 %v1728, %v1728
  %v2326 = vmul.f32 %v1769, %v1769
  %v2327 = vmul.f32 %v1771, %v1771
  %v2328 = vmul.f32 %v1812, %v1812
  %v2329 = vmul.f32 %v1814, %v1814
  %v2330 = vmul.f32 %v1855, %v1855
  %v2331 = vmul.f32 %v1857, %v1857
  %v2332 = vmul.f32 %v1898, %v1898
  %v2333 = vmul.f32 %v1900, %v1900
  %v2334 = vmul.f32 %v1941, %v1941
  %v2335 = vmul.f32 %v1943, %v1943
  %v2336 = vmul.f32 %v1984, %v1984
  %v2337 = vmul.f32 %v1986, %v1986
  %v2338 = vmul.f32 %v2027, %v2027
  %v2339 = vmul.f32 %v2029, %v2029
  %v2340 = vmul.f32 %v2070, %v2070
  %v2341 = vmul.f32 %v2072, %v2072
  %v2342 = vmul.f32 %v2113, %v2113
  %v2343 = vmul.f32 %v2115, %v2115
  %v2344 = vmul.f32 %v2156, %v2156
  %v2345 = vmul.f32 %v2158, %v2158
  %v2346 = vmul.f32 %v2199, %v2199
  %v2347 = vmul.f32 %v2201, %v2201
  %v2348 = vmul.f32 %v2242, %v2242
  %v2349 = vmul.f32 %v2244, %v2244
  %v2350 = vmul.f32 %v1601, %v1601
  %v2351 = vmul.f32 %v1603, %v1603
  %v2352 = vmul.f32 %v1644, %v1644
  %v2353 = vmul.f32 %v1646, %v1646
  %v2354 = vmul.f32 %v1687, %v1687
  %v2355 = vmul.f32 %v1689, %v1689
  %v2356 = vmul.f32 %v1730, %v1730
  %v2357 = vmul.f32 %v1732, %v1732
  %v2358 = vmul.f32 %v1773, %v1773
  %v2359 = vmul.f32 %v1775, %v1775
  %v2360 = vmul.f32 %v1816, %v1816
  %v2361 = vmul.f32 %v1818, %v1818
  %v2362 = vmul.f32 %v1859, %v1859
  %v2363 = vmul.f32 %v1861, %v1861
  %v2364 = vmul.f32 %v1902, %v1902
  %v2365 = vmul.f32 %v1904, %v1904
  %v2366 = vmul.f32 %v1945, %v1945
  %v2367 = vmul.f32 %v1947, %v1947
  %v2368 = vmul.f32 %v1988, %v1988
  %v2369 = vmul.f32 %v1990, %v1990
  %v2370 = vmul.f32 %v2031, %v2031
  %v2371 = vmul.f32 %v2033, %v2033
  %v2372 = vmul.f32 %v2074, %v2074
  %v2373 = vmul.f32 %v2076, %v2076
  %v2374 = vmul.f32 %v2117, %v2117
  %v2375 = vmul.f32 %v2119, %v2119
  %v2376 = vmul.f32 %v2160, %v2160
  %v2377 = vmul.f32 %v2162, %v2162
  %v2378 = vmul.f32 %v2203, %v2203
  %v2379 = vmul.f32 %v2205, %v2205
  %v2380 = vmul.f32 %v2246, %v2246
  %v2381 = vmul.f32 %v2248, %v2248
  %v2382 = vadd.f32 %v2318, %v2319
  %v2383 = vadd.f32 %v2382, %v2320
  %v2384 = vadd.f32 %v2383, %v2321
  %v2385 = vadd.f32 %v2384, %v2322
  %v2386 = vadd.f32 %v2385, %v2323
  %v2387 = vadd.f32 %v2386, %v2324
  %v2388 = vadd.f32 %v2387, %v2325
  %v2389 = vadd.f32 %v2388, %v2326
  %v2390 = vadd.f32 %v2389, %v2327
  %v2391 = vadd.f32 %v2390, %v2328
  %v2392 = vadd.f32 %v2391, %v2329
  %v2393 = vadd.f32 %v2392, %v2330
  %v2394 = vadd.f32 %v2393, %v2331
  %v2395 = vadd.f32 %v2394, %v2332
  %v2396 = vadd.f32 %v2395, %v2333
  %v2397 = vadd.f32 %v2396, %v2334
  %v2398 = vadd.f32 %v2397, %v2335
  %v2399 = vadd.f32 %v2398, %v2336
  %v2400 = vadd.f32 %v2399, %v2337
  %v2401 = vadd.f32 %v2400, %v2338
  %v2402 = vadd.f32 %v2401, %v2339
  %v2403 = vadd.f32 %v2402, %v2340
  %v2404 = vadd.f32 %v2403, %v2341
  %v2405 = vadd.f32 %v2404, %v2342
  %v2406 = vadd.f32 %v2405, %v2343
  %v2407 = vadd.f32 %v2406, %v2344
  %v2408 = vadd.f32 %v2407, %v2345
  %v2409 = vadd.f32 %v2408, %v2346
  %v2410 = vadd.f32 %v2409, %v2347
  %v2411 = vadd.f32 %v2410, %v2348
  %v2412 = vadd.f32 %v2411, %v2349
  %2413 = vadd.xlane.f32.xlu0 %v2412
  %v2414 = vpop.xlane.xlu0 %2413
  %v2415 = vadd.f32 %v2350, %v2351
  %v2416 = vadd.f32 %v2415, %v2352
  %v2417 = vadd.f32 %v2416, %v2353
  %v2418 = vadd.f32 %v2417, %v2354
  %v2419 = vadd.f32 %v2418, %v2355
  %v2420 = vadd.f32 %v2419, %v2356
  %v2421 = vadd.f32 %v2420, %v2357
  %v2422 = vadd.f32 %v2421, %v2358
  %v2423 = vadd.f32 %v2422, %v2359
  %v2424 = vadd.f32 %v2423, %v2360
  %v2425 = vadd.f32 %v2424, %v2361
  %v2426 = vadd.f32 %v2425, %v2362
  %v2427 = vadd.f32 %v2426, %v2363
  %v2428 = vadd.f32 %v2427, %v2364
  %v2429 = vadd.f32 %v2428, %v2365
  %v2430 = vadd.f32 %v2429, %v2366
  %v2431 = vadd.f32 %v2430, %v2367
  %v2432 = vadd.f32 %v2431, %v2368
  %v2433 = vadd.f32 %v2432, %v2369
  %v2434 = vadd.f32 %v2433, %v2370
  %v2435 = vadd.f32 %v2434, %v2371
  %v2436 = vadd.f32 %v2435, %v2372
  %v2437 = vadd.f32 %v2436, %v2373
  %v2438 = vadd.f32 %v2437, %v2374
  %v2439 = vadd.f32 %v2438, %v2375
  %v2440 = vadd.f32 %v2439, %v2376
  %v2441 = vadd.f32 %v2440, %v2377
  %v2442 = vadd.f32 %v2441, %v2378
  %v2443 = vadd.f32 %v2442, %v2379
  %v2444 = vadd.f32 %v2443, %v2380
  %v2445 = vadd.f32 %v2444, %v2381
  %2446 = vadd.xlane.f32.xlu0 %v2445
  %v2447 = vpop.xlane.xlu0 %2446
  %v2448 = vmul.f32 %v2414, 0.00024414063
  %v2449 = vmul.f32 %v2447, 0.00024414063
  %v2450 = vmul.f32 %v2316, %v2316
  %v2451 = vmul.f32 %v2317, %v2317
  %v2452 = vsub.f32 %v2448, %v2450
  %v2453 = vsub.f32 %v2449, %v2451
  %v2454 = vld [vmem:[%s2] sm:$0xff]
  %v2455 = vld [vmem:[%s2 + $0x8] sm:$0xff]
  %v2456 = vadd.f32 %v2452, 1e-05
  %v2457 = vadd.f32 %v2453, 1e-05
  %v2458 = vrsqrt.pop %v2456
  %v2459 = vrsqrt.pop %v2457
  %v2460 = vmul.f32 %v2454, %v2458
  %v2461 = vmul.f32 %v2455, %v2459
  %v2462 = vld [vmem:[%s3] sm:$0xff]
  %v2463 = vld [vmem:[%s3 + $0x8] sm:$0xff]
  %v2464 = vmul.f32 %v2316, %v2460
  %v2465 = vmul.f32 %v2317, %v2461
  %v2466 = vsub.f32 %v2462, %v2464
  %v2467 = vsub.f32 %v2463, %v2465
  %2469 = vset.pattern.permute.xlu0 0
  %2470 = vperm.xlu0 %2469, %v2460
  %v2471 = vpop.permute.xlu0 %2470
  %2474 = vset.pattern.permute.xlu0 0
  %2475 = vperm.xlu0 %2474, %v2461
  %v2476 = vpop.permute.xlu0 %2475
  %v2478 = vmul.f32 %v1597, %v2471
  %v2479 = vmul.f32 %v1599, %v2471
  %v2480 = vmul.f32 %v1640, %v2471
  %v2481 = vmul.f32 %v1642, %v2471
  %v2482 = vmul.f32 %v1683, %v2471
  %v2483 = vmul.f32 %v1685, %v2471
  %v2484 = vmul.f32 %v1726, %v2471
  %v2485 = vmul.f32 %v1728, %v2471
  %v2486 = vmul.f32 %v1769, %v2471
  %v2487 = vmul.f32 %v1771, %v2471
  %v2488 = vmul.f32 %v1812, %v2471
  %v2489 = vmul.f32 %v1814, %v2471
  %v2490 = vmul.f32 %v1855, %v2471
  %v2491 = vmul.f32 %v1857, %v2471
  %v2492 = vmul.f32 %v1898, %v2471
  %v2493 = vmul.f32 %v1900, %v2471
  %v2494 = vmul.f32 %v1941, %v2471
  %v2495 = vmul.f32 %v1943, %v2471
  %v2496 = vmul.f32 %v1984, %v2471
  %v2497 = vmul.f32 %v1986, %v2471
  %v2498 = vmul.f32 %v2027, %v2471
  %v2499 = vmul.f32 %v2029, %v2471
  %v2500 = vmul.f32 %v2070, %v2471
  %v2501 = vmul.f32 %v2072, %v2471
  %v2502 = vmul.f32 %v2113, %v2471
  %v2503 = vmul.f32 %v2115, %v2471
  %v2504 = vmul.f32 %v2156, %v2471
  %v2505 = vmul.f32 %v2158, %v2471
  %v2506 = vmul.f32 %v2199, %v2471
  %v2507 = vmul.f32 %v2201, %v2471
  %v2508 = vmul.f32 %v2242, %v2471
  %v2509 = vmul.f32 %v2244, %v2471
  %v2510 = vmul.f32 %v1601, %v2476
  %v2511 = vmul.f32 %v1603, %v2476
  %v2512 = vmul.f32 %v1644, %v2476
  %v2513 = vmul.f32 %v1646, %v2476
  %v2514 = vmul.f32 %v1687, %v2476
  %v2515 = vmul.f32 %v1689, %v2476
  %v2516 = vmul.f32 %v1730, %v2476
  %v2517 = vmul.f32 %v1732, %v2476
  %v2518 = vmul.f32 %v1773, %v2476
  %v2519 = vmul.f32 %v1775, %v2476
  %v2520 = vmul.f32 %v1816, %v2476
  %v2521 = vmul.f32 %v1818, %v2476
  %v2522 = vmul.f32 %v1859, %v2476
  %v2523 = vmul.f32 %v1861, %v2476
  %v2524 = vmul.f32 %v1902, %v2476
  %v2525 = vmul.f32 %v1904, %v2476
  %v2526 = vmul.f32 %v1945, %v2476
  %v2527 = vmul.f32 %v1947, %v2476
  %v2528 = vmul.f32 %v1988, %v2476
  %v2529 = vmul.f32 %v1990, %v2476
  %v2530 = vmul.f32 %v2031, %v2476
  %v2531 = vmul.f32 %v2033, %v2476
  %v2532 = vmul.f32 %v2074, %v2476
  %v2533 = vmul.f32 %v2076, %v2476
  %v2534 = vmul.f32 %v2117, %v2476
  %v2535 = vmul.f32 %v2119, %v2476
  %v2536 = vmul.f32 %v2160, %v2476
  %v2537 = vmul.f32 %v2162, %v2476
  %v2538 = vmul.f32 %v2203, %v2476
  %v2539 = vmul.f32 %v2205, %v2476
  %v2540 = vmul.f32 %v2246, %v2476
  %v2541 = vmul.f32 %v2248, %v2476
  %2543 = vset.pattern.permute.xlu0 0
  %2544 = vperm.xlu0 %2543, %v2466
  %v2545 = vpop.permute.xlu0 %2544
  %2548 = vset.pattern.permute.xlu0 0
  %2549 = vperm.xlu0 %2548, %v2467
  %v2550 = vpop.permute.xlu0 %2549
  %v2552 = vadd.f32 %v2478, %v2545
  %v2553 = vadd.f32 %v2479, %v2545
  %v2554 = vadd.f32 %v2480, %v2545
  %v2555 = vadd.f32 %v2481, %v2545
  %v2556 = vadd.f32 %v2482, %v2545
  %v2557 = vadd.f32 %v2483, %v2545
  %v2558 = vadd.f32 %v2484, %v2545
  %v2559 = vadd.f32 %v2485, %v2545
  %v2560 = vadd.f32 %v2486, %v2545
  %v2561 = vadd.f32 %v2487, %v2545
  %v2562 = vadd.f32 %v2488, %v2545
  %v2563 = vadd.f32 %v2489, %v2545
  %v2564 = vadd.f32 %v2490, %v2545
  %v2565 = vadd.f32 %v2491, %v2545
  %v2566 = vadd.f32 %v2492, %v2545
  %v2567 = vadd.f32 %v2493, %v2545
  %v2568 = vadd.f32 %v2494, %v2545
  %v2569 = vadd.f32 %v2495, %v2545
  %v2570 = vadd.f32 %v2496, %v2545
  %v2571 = vadd.f32 %v2497, %v2545
  %v2572 = vadd.f32 %v2498, %v2545
  %v2573 = vadd.f32 %v2499, %v2545
  %v2574 = vadd.f32 %v2500, %v2545
  %v2575 = vadd.f32 %v2501, %v2545
  %v2576 = vadd.f32 %v2502, %v2545
  %v2577 = vadd.f32 %v2503, %v2545
  %v2578 = vadd.f32 %v2504, %v2545
  %v2579 = vadd.f32 %v2505, %v2545
  %v2580 = vadd.f32 %v2506, %v2545
  %v2581 = vadd.f32 %v2507, %v2545
  %v2582 = vadd.f32 %v2508, %v2545
  %v2583 = vadd.f32 %v2509, %v2545
  %v2584 = vadd.f32 %v2510, %v2550
  %v2585 = vadd.f32 %v2511, %v2550
  %v2586 = vadd.f32 %v2512, %v2550
  %v2587 = vadd.f32 %v2513, %v2550
  %v2588 = vadd.f32 %v2514, %v2550
  %v2589 = vadd.f32 %v2515, %v2550
  %v2590 = vadd.f32 %v2516, %v2550
  %v2591 = vadd.f32 %v2517, %v2550
  %v2592 = vadd.f32 %v2518, %v2550
  %v2593 = vadd.f32 %v2519, %v2550
  %v2594 = vadd.f32 %v2520, %v2550
  %v2595 = vadd.f32 %v2521, %v2550
  %v2596 = vadd.f32 %v2522, %v2550
  %v2597 = vadd.f32 %v2523, %v2550
  %v2598 = vadd.f32 %v2524, %v2550
  %v2599 = vadd.f32 %v2525, %v2550
  %v2600 = vadd.f32 %v2526, %v2550
  %v2601 = vadd.f32 %v2527, %v2550
  %v2602 = vadd.f32 %v2528, %v2550
  %v2603 = vadd.f32 %v2529, %v2550
  %v2604 = vadd.f32 %v2530, %v2550
  %v2605 = vadd.f32 %v2531, %v2550
  %v2606 = vadd.f32 %v2532, %v2550
  %v2607 = vadd.f32 %v2533, %v2550
  %v2608 = vadd.f32 %v2534, %v2550
  %v2609 = vadd.f32 %v2535, %v2550
  %v2610 = vadd.f32 %v2536, %v2550
  %v2611 = vadd.f32 %v2537, %v2550
  %v2612 = vadd.f32 %v2538, %v2550
  %v2613 = vadd.f32 %v2539, %v2550
  %v2614 = vadd.f32 %v2540, %v2550
  %v2615 = vadd.f32 %v2541, %v2550
  %vm2616 = vcmp.gt.f32.partialorder %v2552, 0.0
  %vm2617 = vcmp.gt.f32.partialorder %v2553, 0.0
  %vm2618 = vcmp.gt.f32.partialorder %v2554, 0.0
  %vm2619 = vcmp.gt.f32.partialorder %v2555, 0.0
  %vm2620 = vcmp.gt.f32.partialorder %v2556, 0.0
  %vm2621 = vcmp.gt.f32.partialorder %v2557, 0.0
  %vm2622 = vcmp.gt.f32.partialorder %v2558, 0.0
  %vm2623 = vcmp.gt.f32.partialorder %v2559, 0.0
  %vm2624 = vcmp.gt.f32.partialorder %v2560, 0.0
  %vm2625 = vcmp.gt.f32.partialorder %v2561, 0.0
  %vm2626 = vcmp.gt.f32.partialorder %v2562, 0.0
  %vm2627 = vcmp.gt.f32.partialorder %v2563, 0.0
  %vm2628 = vcmp.gt.f32.partialorder %v2564, 0.0
  %vm2629 = vcmp.gt.f32.partialorder %v2565, 0.0
  %vm2630 = vcmp.gt.f32.partialorder %v2566, 0.0
  %vm2631 = vcmp.gt.f32.partialorder %v2567, 0.0
  %vm2632 = vcmp.gt.f32.partialorder %v2568, 0.0
  %vm2633 = vcmp.gt.f32.partialorder %v2569, 0.0
  %vm2634 = vcmp.gt.f32.partialorder %v2570, 0.0
  %vm2635 = vcmp.gt.f32.partialorder %v2571, 0.0
  %vm2636 = vcmp.gt.f32.partialorder %v2572, 0.0
  %vm2637 = vcmp.gt.f32.partialorder %v2573, 0.0
  %vm2638 = vcmp.gt.f32.partialorder %v2574, 0.0
  %vm2639 = vcmp.gt.f32.partialorder %v2575, 0.0
  %vm2640 = vcmp.gt.f32.partialorder %v2576, 0.0
  %vm2641 = vcmp.gt.f32.partialorder %v2577, 0.0
  %vm2642 = vcmp.gt.f32.partialorder %v2578, 0.0
  %vm2643 = vcmp.gt.f32.partialorder %v2579, 0.0
  %vm2644 = vcmp.gt.f32.partialorder %v2580, 0.0
  %vm2645 = vcmp.gt.f32.partialorder %v2581, 0.0
  %vm2646 = vcmp.gt.f32.partialorder %v2582, 0.0
  %vm2647 = vcmp.gt.f32.partialorder %v2583, 0.0
  %vm2648 = vcmp.gt.f32.partialorder %v2584, 0.0
  %vm2649 = vcmp.gt.f32.partialorder %v2585, 0.0
  %vm2650 = vcmp.gt.f32.partialorder %v2586, 0.0
  %vm2651 = vcmp.gt.f32.partialorder %v2587, 0.0
  %vm2652 = vcmp.gt.f32.partialorder %v2588, 0.0
  %vm2653 = vcmp.gt.f32.partialorder %v2589, 0.0
  %vm2654 = vcmp.gt.f32.partialorder %v2590, 0.0
  %vm2655 = vcmp.gt.f32.partialorder %v2591, 0.0
  %vm2656 = vcmp.gt.f32.partialorder %v2592, 0.0
  %vm2657 = vcmp.gt.f32.partialorder %v2593, 0.0
  %vm2658 = vcmp.gt.f32.partialorder %v2594, 0.0
  %vm2659 = vcmp.gt.f32.partialorder %v2595, 0.0
  %vm2660 = vcmp.gt.f32.partialorder %v2596, 0.0
  %vm2661 = vcmp.gt.f32.partialorder %v2597, 0.0
  %vm2662 = vcmp.gt.f32.partialorder %v2598, 0.0
  %vm2663 = vcmp.gt.f32.partialorder %v2599, 0.0
  %vm2664 = vcmp.gt.f32.partialorder %v2600, 0.0
  %vm2665 = vcmp.gt.f32.partialorder %v2601, 0.0
  %vm2666 = vcmp.gt.f32.partialorder %v2602, 0.0
  %vm2667 = vcmp.gt.f32.partialorder %v2603, 0.0
  %vm2668 = vcmp.gt.f32.partialorder %v2604, 0.0
  %vm2669 = vcmp.gt.f32.partialorder %v2605, 0.0
  %vm2670 = vcmp.gt.f32.partialorder %v2606, 0.0
  %vm2671 = vcmp.gt.f32.partialorder %v2607, 0.0
  %vm2672 = vcmp.gt.f32.partialorder %v2608, 0.0
  %vm2673 = vcmp.gt.f32.partialorder %v2609, 0.0
  %vm2674 = vcmp.gt.f32.partialorder %v2610, 0.0
  %vm2675 = vcmp.gt.f32.partialorder %v2611, 0.0
  %vm2676 = vcmp.gt.f32.partialorder %v2612, 0.0
  %vm2677 = vcmp.gt.f32.partialorder %v2613, 0.0
  %vm2678 = vcmp.gt.f32.partialorder %v2614, 0.0
  %vm2679 = vcmp.gt.f32.partialorder %v2615, 0.0
  %v2680 = vmul.f32 %v2552, 0.2
  %v2681 = vmul.f32 %v2553, 0.2
  %v2682 = vmul.f32 %v2554, 0.2
  %v2683 = vmul.f32 %v2555, 0.2
  %v2684 = vmul.f32 %v2556, 0.2
  %v2685 = vmul.f32 %v2557, 0.2
  %v2686 = vmul.f32 %v2558, 0.2
  %v2687 = vmul.f32 %v2559, 0.2
  %v2688 = vmul.f32 %v2560, 0.2
  %v2689 = vmul.f32 %v2561, 0.2
  %v2690 = vmul.f32 %v2562, 0.2
  %v2691 = vmul.f32 %v2563, 0.2
  %v2692 = vmul.f32 %v2564, 0.2
  %v2693 = vmul.f32 %v2565, 0.2
  %v2694 = vmul.f32 %v2566, 0.2
  %v2695 = vmul.f32 %v2567, 0.2
  %v2696 = vmul.f32 %v2568, 0.2
  %v2697 = vmul.f32 %v2569, 0.2
  %v2698 = vmul.f32 %v2570, 0.2
  %v2699 = vmul.f32 %v2571, 0.2
  %v2700 = vmul.f32 %v2572, 0.2
  %v2701 = vmul.f32 %v2573, 0.2
  %v2702 = vmul.f32 %v2574, 0.2
  %v2703 = vmul.f32 %v2575, 0.2
  %v2704 = vmul.f32 %v2576, 0.2
  %v2705 = vmul.f32 %v2577, 0.2
  %v2706 = vmul.f32 %v2578, 0.2
  %v2707 = vmul.f32 %v2579, 0.2
  %v2708 = vmul.f32 %v2580, 0.2
  %v2709 = vmul.f32 %v2581, 0.2
  %v2710 = vmul.f32 %v2582, 0.2
  %v2711 = vmul.f32 %v2583, 0.2
  %v2712 = vmul.f32 %v2584, 0.2
  %v2713 = vmul.f32 %v2585, 0.2
  %v2714 = vmul.f32 %v2586, 0.2
  %v2715 = vmul.f32 %v2587, 0.2
  %v2716 = vmul.f32 %v2588, 0.2
  %v2717 = vmul.f32 %v2589, 0.2
  %v2718 = vmul.f32 %v2590, 0.2
  %v2719 = vmul.f32 %v2591, 0.2
  %v2720 = vmul.f32 %v2592, 0.2
  %v2721 = vmul.f32 %v2593, 0.2
  %v2722 = vmul.f32 %v2594, 0.2
  %v2723 = vmul.f32 %v2595, 0.2
  %v2724 = vmul.f32 %v2596, 0.2
  %v2725 = vmul.f32 %v2597, 0.2
  %v2726 = vmul.f32 %v2598, 0.2
  %v2727 = vmul.f32 %v2599, 0.2
  %v2728 = vmul.f32 %v2600, 0.2
  %v2729 = vmul.f32 %v2601, 0.2
  %v2730 = vmul.f32 %v2602, 0.2
  %v2731 = vmul.f32 %v2603, 0.2
  %v2732 = vmul.f32 %v2604, 0.2
  %v2733 = vmul.f32 %v2605, 0.2
  %v2734 = vmul.f32 %v2606, 0.2
  %v2735 = vmul.f32 %v2607, 0.2
  %v2736 = vmul.f32 %v2608, 0.2
  %v2737 = vmul.f32 %v2609, 0.2
  %v2738 = vmul.f32 %v2610, 0.2
  %v2739 = vmul.f32 %v2611, 0.2
  %v2740 = vmul.f32 %v2612, 0.2
  %v2741 = vmul.f32 %v2613, 0.2
  %v2742 = vmul.f32 %v2614, 0.2
  %v2743 = vmul.f32 %v2615, 0.2
  %v2744 = vsel %vm2616, %v2552, %v2680
  %v2745 = vsel %vm2617, %v2553, %v2681
  %v2746 = vsel %vm2618, %v2554, %v2682
  %v2747 = vsel %vm2619, %v2555, %v2683
  %v2748 = vsel %vm2620, %v2556, %v2684
  %v2749 = vsel %vm2621, %v2557, %v2685
  %v2750 = vsel %vm2622, %v2558, %v2686
  %v2751 = vsel %vm2623, %v2559, %v2687
  %v2752 = vsel %vm2624, %v2560, %v2688
  %v2753 = vsel %vm2625, %v2561, %v2689
  %v2754 = vsel %vm2626, %v2562, %v2690
  %v2755 = vsel %vm2627, %v2563, %v2691
  %v2756 = vsel %vm2628, %v2564, %v2692
  %v2757 = vsel %vm2629, %v2565, %v2693
  %v2758 = vsel %vm2630, %v2566, %v2694
  %v2759 = vsel %vm2631, %v2567, %v2695
  %v2760 = vsel %vm2632, %v2568, %v2696
  %v2761 = vsel %vm2633, %v2569, %v2697
  %v2762 = vsel %vm2634, %v2570, %v2698
  %v2763 = vsel %vm2635, %v2571, %v2699
  %v2764 = vsel %vm2636, %v2572, %v2700
  %v2765 = vsel %vm2637, %v2573, %v2701
  %v2766 = vsel %vm2638, %v2574, %v2702
  %v2767 = vsel %vm2639, %v2575, %v2703
  %v2768 = vsel %vm2640, %v2576, %v2704
  %v2769 = vsel %vm2641, %v2577, %v2705
  %v2770 = vsel %vm2642, %v2578, %v2706
  %v2771 = vsel %vm2643, %v2579, %v2707
  %v2772 = vsel %vm2644, %v2580, %v2708
  %v2773 = vsel %vm2645, %v2581, %v2709
  %v2774 = vsel %vm2646, %v2582, %v2710
  %v2775 = vsel %vm2647, %v2583, %v2711
  %v2776 = vsel %vm2648, %v2584, %v2712
  %v2777 = vsel %vm2649, %v2585, %v2713
  %v2778 = vsel %vm2650, %v2586, %v2714
  %v2779 = vsel %vm2651, %v2587, %v2715
  %v2780 = vsel %vm2652, %v2588, %v2716
  %v2781 = vsel %vm2653, %v2589, %v2717
  %v2782 = vsel %vm2654, %v2590, %v2718
  %v2783 = vsel %vm2655, %v2591, %v2719
  %v2784 = vsel %vm2656, %v2592, %v2720
  %v2785 = vsel %vm2657, %v2593, %v2721
  %v2786 = vsel %vm2658, %v2594, %v2722
  %v2787 = vsel %vm2659, %v2595, %v2723
  %v2788 = vsel %vm2660, %v2596, %v2724
  %v2789 = vsel %vm2661, %v2597, %v2725
  %v2790 = vsel %vm2662, %v2598, %v2726
  %v2791 = vsel %vm2663, %v2599, %v2727
  %v2792 = vsel %vm2664, %v2600, %v2728
  %v2793 = vsel %vm2665, %v2601, %v2729
  %v2794 = vsel %vm2666, %v2602, %v2730
  %v2795 = vsel %vm2667, %v2603, %v2731
  %v2796 = vsel %vm2668, %v2604, %v2732
  %v2797 = vsel %vm2669, %v2605, %v2733
  %v2798 = vsel %vm2670, %v2606, %v2734
  %v2799 = vsel %vm2671, %v2607, %v2735
  %v2800 = vsel %vm2672, %v2608, %v2736
  %v2801 = vsel %vm2673, %v2609, %v2737
  %v2802 = vsel %vm2674, %v2610, %v2738
  %v2803 = vsel %vm2675, %v2611, %v2739
  %v2804 = vsel %vm2676, %v2612, %v2740
  %v2805 = vsel %vm2677, %v2613, %v2741
  %v2806 = vsel %vm2678, %v2614, %v2742
  %v2807 = vsel %vm2679, %v2615, %v2743
  %v2808 = vpack.c.bf16 %v2776, %v2744
  %v2809 = vpack.c.bf16 %v2777, %v2745
  %v2810 = vpack.c.bf16 %v2778, %v2746
  %v2811 = vpack.c.bf16 %v2779, %v2747
  %v2812 = vpack.c.bf16 %v2780, %v2748
  %v2813 = vpack.c.bf16 %v2781, %v2749
  %v2814 = vpack.c.bf16 %v2782, %v2750
  %v2815 = vpack.c.bf16 %v2783, %v2751
  %v2816 = vpack.c.bf16 %v2784, %v2752
  %v2817 = vpack.c.bf16 %v2785, %v2753
  %v2818 = vpack.c.bf16 %v2786, %v2754
  %v2819 = vpack.c.bf16 %v2787, %v2755
  %v2820 = vpack.c.bf16 %v2788, %v2756
  %v2821 = vpack.c.bf16 %v2789, %v2757
  %v2822 = vpack.c.bf16 %v2790, %v2758
  %v2823 = vpack.c.bf16 %v2791, %v2759
  %v2824 = vpack.c.bf16 %v2792, %v2760
  %v2825 = vpack.c.bf16 %v2793, %v2761
  %v2826 = vpack.c.bf16 %v2794, %v2762
  %v2827 = vpack.c.bf16 %v2795, %v2763
  %v2828 = vpack.c.bf16 %v2796, %v2764
  %v2829 = vpack.c.bf16 %v2797, %v2765
  %v2830 = vpack.c.bf16 %v2798, %v2766
  %v2831 = vpack.c.bf16 %v2799, %v2767
  %v2832 = vpack.c.bf16 %v2800, %v2768
  %v2833 = vpack.c.bf16 %v2801, %v2769
  %v2834 = vpack.c.bf16 %v2802, %v2770
  %v2835 = vpack.c.bf16 %v2803, %v2771
  %v2836 = vpack.c.bf16 %v2804, %v2772
  %v2837 = vpack.c.bf16 %v2805, %v2773
  %v2838 = vpack.c.bf16 %v2806, %v2774
  %v2839 = vpack.c.bf16 %v2807, %v2775
  %v2872 = vunpack.c.l.b16 %v2808
  %v2873 = vunpack.c.l.b16 %v2809
  %v2874 = vunpack.c.l.b16 %v2810
  %v2875 = vunpack.c.l.b16 %v2811
  %v2876 = vunpack.c.l.b16 %v2812
  %v2877 = vunpack.c.l.b16 %v2813
  %v2878 = vunpack.c.l.b16 %v2814
  %v2879 = vunpack.c.l.b16 %v2815
  %v2880 = vunpack.c.l.b16 %v2816
  %v2881 = vunpack.c.l.b16 %v2817
  %v2882 = vunpack.c.l.b16 %v2818
  %v2883 = vunpack.c.l.b16 %v2819
  %v2884 = vunpack.c.l.b16 %v2820
  %v2885 = vunpack.c.l.b16 %v2821
  %v2886 = vunpack.c.l.b16 %v2822
  %v2887 = vunpack.c.l.b16 %v2823
  %v2888 = vunpack.c.l.b16 %v2824
  %v2889 = vunpack.c.l.b16 %v2825
  %v2890 = vunpack.c.l.b16 %v2826
  %v2891 = vunpack.c.l.b16 %v2827
  %v2892 = vunpack.c.l.b16 %v2828
  %v2893 = vunpack.c.l.b16 %v2829
  %v2894 = vunpack.c.l.b16 %v2830
  %v2895 = vunpack.c.l.b16 %v2831
  %v2896 = vunpack.c.l.b16 %v2832
  %v2897 = vunpack.c.l.b16 %v2833
  %v2898 = vunpack.c.l.b16 %v2834
  %v2899 = vunpack.c.l.b16 %v2835
  %v2900 = vunpack.c.l.b16 %v2836
  %v2901 = vunpack.c.l.b16 %v2837
  %v2902 = vunpack.c.l.b16 %v2838
  %v2903 = vunpack.c.l.b16 %v2839
  %v2904 = vunpack.c.h.b16 %v2808
  %v2905 = vunpack.c.h.b16 %v2809
  %v2906 = vunpack.c.h.b16 %v2810
  %v2907 = vunpack.c.h.b16 %v2811
  %v2908 = vunpack.c.h.b16 %v2812
  %v2909 = vunpack.c.h.b16 %v2813
  %v2910 = vunpack.c.h.b16 %v2814
  %v2911 = vunpack.c.h.b16 %v2815
  %v2912 = vunpack.c.h.b16 %v2816
  %v2913 = vunpack.c.h.b16 %v2817
  %v2914 = vunpack.c.h.b16 %v2818
  %v2915 = vunpack.c.h.b16 %v2819
  %v2916 = vunpack.c.h.b16 %v2820
  %v2917 = vunpack.c.h.b16 %v2821
  %v2918 = vunpack.c.h.b16 %v2822
  %v2919 = vunpack.c.h.b16 %v2823
  %v2920 = vunpack.c.h.b16 %v2824
  %v2921 = vunpack.c.h.b16 %v2825
  %v2922 = vunpack.c.h.b16 %v2826
  %v2923 = vunpack.c.h.b16 %v2827
  %v2924 = vunpack.c.h.b16 %v2828
  %v2925 = vunpack.c.h.b16 %v2829
  %v2926 = vunpack.c.h.b16 %v2830
  %v2927 = vunpack.c.h.b16 %v2831
  %v2928 = vunpack.c.h.b16 %v2832
  %v2929 = vunpack.c.h.b16 %v2833
  %v2930 = vunpack.c.h.b16 %v2834
  %v2931 = vunpack.c.h.b16 %v2835
  %v2932 = vunpack.c.h.b16 %v2836
  %v2933 = vunpack.c.h.b16 %v2837
  %v2934 = vunpack.c.h.b16 %v2838
  %v2935 = vunpack.c.h.b16 %v2839
  %v2936 = vpack.c.b16 %v2873, %v2872
  %v2937 = vpack.c.b16 %v2875, %v2874
  %v2938 = vpack.c.b16 %v2877, %v2876
  %v2939 = vpack.c.b16 %v2879, %v2878
  %v2940 = vpack.c.b16 %v2881, %v2880
  %v2941 = vpack.c.b16 %v2883, %v2882
  %v2942 = vpack.c.b16 %v2885, %v2884
  %v2943 = vpack.c.b16 %v2887, %v2886
  %v2944 = vpack.c.b16 %v2889, %v2888
  %v2945 = vpack.c.b16 %v2891, %v2890
  %v2946 = vpack.c.b16 %v2893, %v2892
  %v2947 = vpack.c.b16 %v2895, %v2894
  %v2948 = vpack.c.b16 %v2897, %v2896
  %v2949 = vpack.c.b16 %v2899, %v2898
  %v2950 = vpack.c.b16 %v2901, %v2900
  %v2951 = vpack.c.b16 %v2903, %v2902
  %v2952 = vpack.c.b16 %v2905, %v2904
  %v2953 = vpack.c.b16 %v2907, %v2906
  %v2954 = vpack.c.b16 %v2909, %v2908
  %v2955 = vpack.c.b16 %v2911, %v2910
  %v2956 = vpack.c.b16 %v2913, %v2912
  %v2957 = vpack.c.b16 %v2915, %v2914
  %v2958 = vpack.c.b16 %v2917, %v2916
  %v2959 = vpack.c.b16 %v2919, %v2918
  %v2960 = vpack.c.b16 %v2921, %v2920
  %v2961 = vpack.c.b16 %v2923, %v2922
  %v2962 = vpack.c.b16 %v2925, %v2924
  %v2963 = vpack.c.b16 %v2927, %v2926
  %v2964 = vpack.c.b16 %v2929, %v2928
  %v2965 = vpack.c.b16 %v2931, %v2930
  %v2966 = vpack.c.b16 %v2933, %v2932
  %v2967 = vpack.c.b16 %v2935, %v2934
  %3000 = vst [vmem:[%s4] sm:$0xff] %v2936
  %3001 = vst [vmem:[%s4 + $0x8] sm:$0xff] %v2937
  %3002 = vst [vmem:[%s4 + $0x10] sm:$0xff] %v2938
  %3003 = vst [vmem:[%s4 + $0x18] sm:$0xff] %v2939
  %3004 = vst [vmem:[%s4 + $0x20] sm:$0xff] %v2940
  %3005 = vst [vmem:[%s4 + $0x28] sm:$0xff] %v2941
  %3006 = vst [vmem:[%s4 + $0x30] sm:$0xff] %v2942
  %3007 = vst [vmem:[%s4 + $0x38] sm:$0xff] %v2943
  %3008 = vst [vmem:[%s4 + $0x40] sm:$0xff] %v2944
  %3009 = vst [vmem:[%s4 + $0x48] sm:$0xff] %v2945
  %3010 = vst [vmem:[%s4 + $0x50] sm:$0xff] %v2946
  %3011 = vst [vmem:[%s4 + $0x58] sm:$0xff] %v2947
  %3012 = vst [vmem:[%s4 + $0x60] sm:$0xff] %v2948
  %3013 = vst [vmem:[%s4 + $0x68] sm:$0xff] %v2949
  %3014 = vst [vmem:[%s4 + $0x70] sm:$0xff] %v2950
  %3015 = vst [vmem:[%s4 + $0x78] sm:$0xff] %v2951
  %3016 = vst [vmem:[%s4 + $0x80] sm:$0xff] %v2952
  %3017 = vst [vmem:[%s4 + $0x88] sm:$0xff] %v2953
  %3018 = vst [vmem:[%s4 + $0x90] sm:$0xff] %v2954
  %3019 = vst [vmem:[%s4 + $0x98] sm:$0xff] %v2955
  %3020 = vst [vmem:[%s4 + $0xa0] sm:$0xff] %v2956
  %3021 = vst [vmem:[%s4 + $0xa8] sm:$0xff] %v2957
  %3022 = vst [vmem:[%s4 + $0xb0] sm:$0xff] %v2958
  %3023 = vst [vmem:[%s4 + $0xb8] sm:$0xff] %v2959
  %3024 = vst [vmem:[%s4 + $0xc0] sm:$0xff] %v2960
  %3025 = vst [vmem:[%s4 + $0xc8] sm:$0xff] %v2961
  %3026 = vst [vmem:[%s4 + $0xd0] sm:$0xff] %v2962
  %3027 = vst [vmem:[%s4 + $0xd8] sm:$0xff] %v2963
  %3028 = vst [vmem:[%s4 + $0xe0] sm:$0xff] %v2964
  %3029 = vst [vmem:[%s4 + $0xe8] sm:$0xff] %v2965
  %3030 = vst [vmem:[%s4 + $0xf0] sm:$0xff] %v2966
  %3031 = vst [vmem:[%s4 + $0xf8] sm:$0xff] %v2967
  // Predicated region
  $region18: #{content_encoder_forward.7} parent=0 // pred_check
    _
  $region19: #{content_encoder_forward.7} parent=0 // pred_check_branch
    %3033 = sbr.rel (0) target = $region21
  $region20: #{content_encoder_forward.7} parent=0 // pred_region
    _
  $region21: #{content_encoder_forward.7} parent=0 // pred_fallthru
    _
  // Predicated region
  $region22: #{content_encoder_forward.7} parent=0 // pred_check
    _
  $region23: #{content_encoder_forward.7} parent=0 // pred_check_branch
    %3035 = sbr.rel (0) target = $region25
  $region24: #{content_encoder_forward.7} parent=0 // pred_region
    _
  $region25: #{content_encoder_forward.7} parent=0 // pred_fallthru
    _

// kernel: content_encoder_forward.8
$region0: #{content_encoder_forward.8}
  #allocation0 [shape = 'u32[]', space=smem, size = 0x4, offset = 0x4, fixed_abs, tag = 'smem constant byte address 0x4 - core index']
  #allocation1 [shape = 'u32[144,128]{1,0:T(1,128)}', space=vmem, size = 0x12000, scoped, tag = 'internal scratch']
  %s0 = inlined_call_operand.vmem [shape: bf16[256,1024], index: 0, kind: input, shape index: {}]
  %s1 = inlined_call_operand.vmem [shape: bf16[32,256], index: 1, kind: input, shape index: {}]
  %s2 = inlined_call_operand.vmem [shape: f32[32,1], index: 2, kind: input, shape index: {}]
  %s3 = inlined_call_operand.vmem [shape: f32[32,1], index: 3, kind: input, shape index: {}]
  %s4 = inlined_call_operand.vmem [shape: bf16[32,1024], index: 4, kind: output, shape index: {}]
  %s5 = sld [smem:[#allocation0]]
  $region26: #{content_encoder_forward.8} parent=0
    _
  %s7 = ssub.s32 1, %s5
  %s8 = scalar_select 0, %s7, %s5
  // Predicated region
  $region2: #{content_encoder_forward.8} parent=0 // pred_check
    _
  $region3: #{content_encoder_forward.8} parent=0 // pred_check_branch
    %10 = sbr.rel (0) target = $region5
  $region4: #{content_encoder_forward.8} parent=0 // pred_region
    _
  $region5: #{content_encoder_forward.8} parent=0 // pred_fallthru
    _
  // Predicated region
  $region6: #{content_encoder_forward.8} parent=0 // pred_check
    _
  $region7: #{content_encoder_forward.8} parent=0 // pred_check_branch
    %12 = sbr.rel (0) target = $region9
  $region8: #{content_encoder_forward.8} parent=0 // pred_region
    _
  $region9: #{content_encoder_forward.8} parent=0 // pred_fallthru
    _
  // Predicated region
  $region10: #{content_encoder_forward.8} parent=0 // pred_check
    _
  $region11: #{content_encoder_forward.8} parent=0 // pred_check_branch
    %14 = sbr.rel (0) target = $region13
  $region12: #{content_encoder_forward.8} parent=0 // pred_region
    _
  $region13: #{content_encoder_forward.8} parent=0 // pred_fallthru
    _
  // Predicated region
  $region14: #{content_encoder_forward.8} parent=0 // pred_check
    _
  $region15: #{content_encoder_forward.8} parent=0 // pred_check_branch
    %16 = sbr.rel (0) target = $region17
  $region16: #{content_encoder_forward.8} parent=0 // pred_region
    _
  $region17: #{content_encoder_forward.8} parent=0 // pred_fallthru
    _
  %v17 = vld [vmem:[%s1] sm:$0xff]
  %v18 = vld [vmem:[%s1 + $0x8] sm:$0xff]
  %v19 = vld [vmem:[%s1 + $0x10] sm:$0xff]
  %v20 = vld [vmem:[%s1 + $0x18] sm:$0xff]
  %v21 = vld [vmem:[%s0] sm:$0xff]
  %v22 = vld [vmem:[%s0 + $0x8] sm:$0xff]
  %v23 = vld [vmem:[%s0 + $0x10] sm:$0xff]
  %v24 = vld [vmem:[%s0 + $0x18] sm:$0xff]
  %v25 = vld [vmem:[%s0 + $0x20] sm:$0xff]
  %v26 = vld [vmem:[%s0 + $0x28] sm:$0xff]
  %v27 = vld [vmem:[%s0 + $0x30] sm:$0xff]
  %v28 = vld [vmem:[%s0 + $0x38] sm:$0xff]
  %v29 = vld [vmem:[%s0 + $0x40] sm:$0xff]
  %v30 = vld [vmem:[%s0 + $0x48] sm:$0xff]
  %v31 = vld [vmem:[%s0 + $0x50] sm:$0xff]
  %v32 = vld [vmem:[%s0 + $0x58] sm:$0xff]
  %v33 = vld [vmem:[%s0 + $0x60] sm:$0xff]
  %v34 = vld [vmem:[%s0 + $0x68] sm:$0xff]
  %v35 = vld [vmem:[%s0 + $0x70] sm:$0xff]
  %v36 = vld [vmem:[%s0 + $0x78] sm:$0xff]
  %v37 = vld [vmem:[%s0 + $0x80] sm:$0xff]
  %v38 = vld [vmem:[%s0 + $0x88] sm:$0xff]
  %v39 = vld [vmem:[%s0 + $0x90] sm:$0xff]
  %v40 = vld [vmem:[%s0 + $0x98] sm:$0xff]
  %v41 = vld [vmem:[%s0 + $0xa0] sm:$0xff]
  %v42 = vld [vmem:[%s0 + $0xa8] sm:$0xff]
  %v43 = vld [vmem:[%s0 + $0xb0] sm:$0xff]
  %v44 = vld [vmem:[%s0 + $0xb8] sm:$0xff]
  %v45 = vld [vmem:[%s0 + $0xc0] sm:$0xff]
  %v46 = vld [vmem:[%s0 + $0xc8] sm:$0xff]
  %v47 = vld [vmem:[%s0 + $0xd0] sm:$0xff]
  %v48 = vld [vmem:[%s0 + $0xd8] sm:$0xff]
  %v49 = vld [vmem:[%s0 + $0xe0] sm:$0xff]
  %v50 = vld [vmem:[%s0 + $0xe8] sm:$0xff]
  %v51 = vld [vmem:[%s0 + $0xf0] sm:$0xff]
  %v52 = vld [vmem:[%s0 + $0xf8] sm:$0xff]
  %v53 = vld [vmem:[%s0 + $0x100] sm:$0xff]
  %v54 = vld [vmem:[%s0 + $0x108] sm:$0xff]
  %v55 = vld [vmem:[%s0 + $0x110] sm:$0xff]
  %v56 = vld [vmem:[%s0 + $0x118] sm:$0xff]
  %v57 = vld [vmem:[%s0 + $0x120] sm:$0xff]
  %v58 = vld [vmem:[%s0 + $0x128] sm:$0xff]
  %v59 = vld [vmem:[%s0 + $0x130] sm:$0xff]
  %v60 = vld [vmem:[%s0 + $0x138] sm:$0xff]
  %v61 = vld [vmem:[%s0 + $0x140] sm:$0xff]
  %v62 = vld [vmem:[%s0 + $0x148] sm:$0xff]
  %v63 = vld [vmem:[%s0 + $0x150] sm:$0xff]
  %v64 = vld [vmem:[%s0 + $0x158] sm:$0xff]
  %v65 = vld [vmem:[%s0 + $0x160] sm:$0xff]
  %v66 = vld [vmem:[%s0 + $0x168] sm:$0xff]
  %v67 = vld [vmem:[%s0 + $0x170] sm:$0xff]
  %v68 = vld [vmem:[%s0 + $0x178] sm:$0xff]
  %v69 = vld [vmem:[%s0 + $0x180] sm:$0xff]
  %v70 = vld [vmem:[%s0 + $0x188] sm:$0xff]
  %v71 = vld [vmem:[%s0 + $0x190] sm:$0xff]
  %v72 = vld [vmem:[%s0 + $0x198] sm:$0xff]
  %v73 = vld [vmem:[%s0 + $0x1a0] sm:$0xff]
  %v74 = vld [vmem:[%s0 + $0x1a8] sm:$0xff]
  %v75 = vld [vmem:[%s0 + $0x1b0] sm:$0xff]
  %v76 = vld [vmem:[%s0 + $0x1b8] sm:$0xff]
  %v77 = vld [vmem:[%s0 + $0x1c0] sm:$0xff]
  %v78 = vld [vmem:[%s0 + $0x1c8] sm:$0xff]
  %v79 = vld [vmem:[%s0 + $0x1d0] sm:$0xff]
  %v80 = vld [vmem:[%s0 + $0x1d8] sm:$0xff]
  %v81 = vld [vmem:[%s0 + $0x1e0] sm:$0xff]
  %v82 = vld [vmem:[%s0 + $0x1e8] sm:$0xff]
  %v83 = vld [vmem:[%s0 + $0x1f0] sm:$0xff]
  %v84 = vld [vmem:[%s0 + $0x1f8] sm:$0xff]
  %v85 = vld [vmem:[%s0 + $0x200] sm:$0xff]
  %v86 = vld [vmem:[%s0 + $0x208] sm:$0xff]
  %v87 = vld [vmem:[%s0 + $0x210] sm:$0xff]
  %v88 = vld [vmem:[%s0 + $0x218] sm:$0xff]
  %v89 = vld [vmem:[%s0 + $0x220] sm:$0xff]
  %v90 = vld [vmem:[%s0 + $0x228] sm:$0xff]
  %v91 = vld [vmem:[%s0 + $0x230] sm:$0xff]
  %v92 = vld [vmem:[%s0 + $0x238] sm:$0xff]
  %v93 = vld [vmem:[%s0 + $0x240] sm:$0xff]
  %v94 = vld [vmem:[%s0 + $0x248] sm:$0xff]
  %v95 = vld [vmem:[%s0 + $0x250] sm:$0xff]
  %v96 = vld [vmem:[%s0 + $0x258] sm:$0xff]
  %v97 = vld [vmem:[%s0 + $0x260] sm:$0xff]
  %v98 = vld [vmem:[%s0 + $0x268] sm:$0xff]
  %v99 = vld [vmem:[%s0 + $0x270] sm:$0xff]
  %v100 = vld [vmem:[%s0 + $0x278] sm:$0xff]
  %v101 = vld [vmem:[%s0 + $0x280] sm:$0xff]
  %v102 = vld [vmem:[%s0 + $0x288] sm:$0xff]
  %v103 = vld [vmem:[%s0 + $0x290] sm:$0xff]
  %v104 = vld [vmem:[%s0 + $0x298] sm:$0xff]
  %v105 = vld [vmem:[%s0 + $0x2a0] sm:$0xff]
  %v106 = vld [vmem:[%s0 + $0x2a8] sm:$0xff]
  %v107 = vld [vmem:[%s0 + $0x2b0] sm:$0xff]
  %v108 = vld [vmem:[%s0 + $0x2b8] sm:$0xff]
  %v109 = vld [vmem:[%s0 + $0x2c0] sm:$0xff]
  %v110 = vld [vmem:[%s0 + $0x2c8] sm:$0xff]
  %v111 = vld [vmem:[%s0 + $0x2d0] sm:$0xff]
  %v112 = vld [vmem:[%s0 + $0x2d8] sm:$0xff]
  %v113 = vld [vmem:[%s0 + $0x2e0] sm:$0xff]
  %v114 = vld [vmem:[%s0 + $0x2e8] sm:$0xff]
  %v115 = vld [vmem:[%s0 + $0x2f0] sm:$0xff]
  %v116 = vld [vmem:[%s0 + $0x2f8] sm:$0xff]
  %v117 = vld [vmem:[%s0 + $0x300] sm:$0xff]
  %v118 = vld [vmem:[%s0 + $0x308] sm:$0xff]
  %v119 = vld [vmem:[%s0 + $0x310] sm:$0xff]
  %v120 = vld [vmem:[%s0 + $0x318] sm:$0xff]
  %v121 = vld [vmem:[%s0 + $0x320] sm:$0xff]
  %v122 = vld [vmem:[%s0 + $0x328] sm:$0xff]
  %v123 = vld [vmem:[%s0 + $0x330] sm:$0xff]
  %v124 = vld [vmem:[%s0 + $0x338] sm:$0xff]
  %v125 = vld [vmem:[%s0 + $0x340] sm:$0xff]
  %v126 = vld [vmem:[%s0 + $0x348] sm:$0xff]
  %v127 = vld [vmem:[%s0 + $0x350] sm:$0xff]
  %v128 = vld [vmem:[%s0 + $0x358] sm:$0xff]
  %v129 = vld [vmem:[%s0 + $0x360] sm:$0xff]
  %v130 = vld [vmem:[%s0 + $0x368] sm:$0xff]
  %v131 = vld [vmem:[%s0 + $0x370] sm:$0xff]
  %v132 = vld [vmem:[%s0 + $0x378] sm:$0xff]
  %v133 = vld [vmem:[%s0 + $0x380] sm:$0xff]
  %v134 = vld [vmem:[%s0 + $0x388] sm:$0xff]
  %v135 = vld [vmem:[%s0 + $0x390] sm:$0xff]
  %v136 = vld [vmem:[%s0 + $0x398] sm:$0xff]
  %v137 = vld [vmem:[%s0 + $0x3a0] sm:$0xff]
  %v138 = vld [vmem:[%s0 + $0x3a8] sm:$0xff]
  %v139 = vld [vmem:[%s0 + $0x3b0] sm:$0xff]
  %v140 = vld [vmem:[%s0 + $0x3b8] sm:$0xff]
  %v141 = vld [vmem:[%s0 + $0x3c0] sm:$0xff]
  %v142 = vld [vmem:[%s0 + $0x3c8] sm:$0xff]
  %v143 = vld [vmem:[%s0 + $0x3d0] sm:$0xff]
  %v144 = vld [vmem:[%s0 + $0x3d8] sm:$0xff]
  %v145 = vld [vmem:[%s0 + $0x3e0] sm:$0xff]
  %v146 = vld [vmem:[%s0 + $0x3e8] sm:$0xff]
  %v147 = vld [vmem:[%s0 + $0x3f0] sm:$0xff]
  %v148 = vld [vmem:[%s0 + $0x3f8] sm:$0xff]
  %v153 = vunpack.c.l.b16 %v17
  %v154 = vunpack.c.h.b16 %v17
  %v155 = vunpack.c.l.b16 %v18
  %v156 = vunpack.c.h.b16 %v18
  %v157 = vunpack.c.l.b16 %v19
  %v158 = vunpack.c.h.b16 %v19
  %v159 = vunpack.c.l.b16 %v20
  %v160 = vunpack.c.h.b16 %v20
  %v161 = vpack.c.b16 %v155, %v153
  %v162 = vpack.c.b16 %v156, %v154
  %v163 = vpack.c.b16 %v159, %v157
  %v164 = vpack.c.b16 %v160, %v158
  %v297 = vunpack.c.l.b16 %v21
  %v298 = vunpack.c.h.b16 %v21
  %v299 = vunpack.c.l.b16 %v22
  %v300 = vunpack.c.h.b16 %v22
  %v301 = vunpack.c.l.b16 %v23
  %v302 = vunpack.c.h.b16 %v23
  %v303 = vunpack.c.l.b16 %v24
  %v304 = vunpack.c.h.b16 %v24
  %v305 = vunpack.c.l.b16 %v25
  %v306 = vunpack.c.h.b16 %v25
  %v307 = vunpack.c.l.b16 %v26
  %v308 = vunpack.c.h.b16 %v26
  %v309 = vunpack.c.l.b16 %v27
  %v310 = vunpack.c.h.b16 %v27
  %v311 = vunpack.c.l.b16 %v28
  %v312 = vunpack.c.h.b16 %v28
  %v313 = vunpack.c.l.b16 %v29
  %v314 = vunpack.c.h.b16 %v29
  %v315 = vunpack.c.l.b16 %v30
  %v316 = vunpack.c.h.b16 %v30
  %v317 = vunpack.c.l.b16 %v31
  %v318 = vunpack.c.h.b16 %v31
  %v319 = vunpack.c.l.b16 %v32
  %v320 = vunpack.c.h.b16 %v32
  %v321 = vunpack.c.l.b16 %v33
  %v322 = vunpack.c.h.b16 %v33
  %v323 = vunpack.c.l.b16 %v34
  %v324 = vunpack.c.h.b16 %v34
  %v325 = vunpack.c.l.b16 %v35
  %v326 = vunpack.c.h.b16 %v35
  %v327 = vunpack.c.l.b16 %v36
  %v328 = vunpack.c.h.b16 %v36
  %v329 = vunpack.c.l.b16 %v37
  %v330 = vunpack.c.h.b16 %v37
  %v331 = vunpack.c.l.b16 %v38
  %v332 = vunpack.c.h.b16 %v38
  %v333 = vunpack.c.l.b16 %v39
  %v334 = vunpack.c.h.b16 %v39
  %v335 = vunpack.c.l.b16 %v40
  %v336 = vunpack.c.h.b16 %v40
  %v337 = vunpack.c.l.b16 %v41
  %v338 = vunpack.c.h.b16 %v41
  %v339 = vunpack.c.l.b16 %v42
  %v340 = vunpack.c.h.b16 %v42
  %v341 = vunpack.c.l.b16 %v43
  %v342 = vunpack.c.h.b16 %v43
  %v343 = vunpack.c.l.b16 %v44
  %v344 = vunpack.c.h.b16 %v44
  %v345 = vunpack.c.l.b16 %v45
  %v346 = vunpack.c.h.b16 %v45
  %v347 = vunpack.c.l.b16 %v46
  %v348 = vunpack.c.h.b16 %v46
  %v349 = vunpack.c.l.b16 %v47
  %v350 = vunpack.c.h.b16 %v47
  %v351 = vunpack.c.l.b16 %v48
  %v352 = vunpack.c.h.b16 %v48
  %v353 = vunpack.c.l.b16 %v49
  %v354 = vunpack.c.h.b16 %v49
  %v355 = vunpack.c.l.b16 %v50
  %v356 = vunpack.c.h.b16 %v50
  %v357 = vunpack.c.l.b16 %v51
  %v358 = vunpack.c.h.b16 %v51
  %v359 = vunpack.c.l.b16 %v52
  %v360 = vunpack.c.h.b16 %v52
  %v361 = vunpack.c.l.b16 %v53
  %v362 = vunpack.c.h.b16 %v53
  %v363 = vunpack.c.l.b16 %v54
  %v364 = vunpack.c.h.b16 %v54
  %v365 = vunpack.c.l.b16 %v55
  %v366 = vunpack.c.h.b16 %v55
  %v367 = vunpack.c.l.b16 %v56
  %v368 = vunpack.c.h.b16 %v56
  %v369 = vunpack.c.l.b16 %v57
  %v370 = vunpack.c.h.b16 %v57
  %v371 = vunpack.c.l.b16 %v58
  %v372 = vunpack.c.h.b16 %v58
  %v373 = vunpack.c.l.b16 %v59
  %v374 = vunpack.c.h.b16 %v59
  %v375 = vunpack.c.l.b16 %v60
  %v376 = vunpack.c.h.b16 %v60
  %v377 = vunpack.c.l.b16 %v61
  %v378 = vunpack.c.h.b16 %v61
  %v379 = vunpack.c.l.b16 %v62
  %v380 = vunpack.c.h.b16 %v62
  %v381 = vunpack.c.l.b16 %v63
  %v382 = vunpack.c.h.b16 %v63
  %v383 = vunpack.c.l.b16 %v64
  %v384 = vunpack.c.h.b16 %v64
  %v385 = vunpack.c.l.b16 %v65
  %v386 = vunpack.c.h.b16 %v65
  %v387 = vunpack.c.l.b16 %v66
  %v388 = vunpack.c.h.b16 %v66
  %v389 = vunpack.c.l.b16 %v67
  %v390 = vunpack.c.h.b16 %v67
  %v391 = vunpack.c.l.b16 %v68
  %v392 = vunpack.c.h.b16 %v68
  %v393 = vunpack.c.l.b16 %v69
  %v394 = vunpack.c.h.b16 %v69
  %v395 = vunpack.c.l.b16 %v70
  %v396 = vunpack.c.h.b16 %v70
  %v397 = vunpack.c.l.b16 %v71
  %v398 = vunpack.c.h.b16 %v71
  %v399 = vunpack.c.l.b16 %v72
  %v400 = vunpack.c.h.b16 %v72
  %v401 = vunpack.c.l.b16 %v73
  %v402 = vunpack.c.h.b16 %v73
  %v403 = vunpack.c.l.b16 %v74
  %v404 = vunpack.c.h.b16 %v74
  %v405 = vunpack.c.l.b16 %v75
  %v406 = vunpack.c.h.b16 %v75
  %v407 = vunpack.c.l.b16 %v76
  %v408 = vunpack.c.h.b16 %v76
  %v409 = vunpack.c.l.b16 %v77
  %v410 = vunpack.c.h.b16 %v77
  %v411 = vunpack.c.l.b16 %v78
  %v412 = vunpack.c.h.b16 %v78
  %v413 = vunpack.c.l.b16 %v79
  %v414 = vunpack.c.h.b16 %v79
  %v415 = vunpack.c.l.b16 %v80
  %v416 = vunpack.c.h.b16 %v80
  %v417 = vunpack.c.l.b16 %v81
  %v418 = vunpack.c.h.b16 %v81
  %v419 = vunpack.c.l.b16 %v82
  %v420 = vunpack.c.h.b16 %v82
  %v421 = vunpack.c.l.b16 %v83
  %v422 = vunpack.c.h.b16 %v83
  %v423 = vunpack.c.l.b16 %v84
  %v424 = vunpack.c.h.b16 %v84
  %v425 = vunpack.c.l.b16 %v85
  %v426 = vunpack.c.h.b16 %v85
  %v427 = vunpack.c.l.b16 %v86
  %v428 = vunpack.c.h.b16 %v86
  %v429 = vunpack.c.l.b16 %v87
  %v430 = vunpack.c.h.b16 %v87
  %v431 = vunpack.c.l.b16 %v88
  %v432 = vunpack.c.h.b16 %v88
  %v433 = vunpack.c.l.b16 %v89
  %v434 = vunpack.c.h.b16 %v89
  %v435 = vunpack.c.l.b16 %v90
  %v436 = vunpack.c.h.b16 %v90
  %v437 = vunpack.c.l.b16 %v91
  %v438 = vunpack.c.h.b16 %v91
  %v439 = vunpack.c.l.b16 %v92
  %v440 = vunpack.c.h.b16 %v92
  %v441 = vunpack.c.l.b16 %v93
  %v442 = vunpack.c.h.b16 %v93
  %v443 = vunpack.c.l.b16 %v94
  %v444 = vunpack.c.h.b16 %v94
  %v445 = vunpack.c.l.b16 %v95
  %v446 = vunpack.c.h.b16 %v95
  %v447 = vunpack.c.l.b16 %v96
  %v448 = vunpack.c.h.b16 %v96
  %v449 = vunpack.c.l.b16 %v97
  %v450 = vunpack.c.h.b16 %v97
  %v451 = vunpack.c.l.b16 %v98
  %v452 = vunpack.c.h.b16 %v98
  %v453 = vunpack.c.l.b16 %v99
  %v454 = vunpack.c.h.b16 %v99
  %v455 = vunpack.c.l.b16 %v100
  %v456 = vunpack.c.h.b16 %v100
  %v457 = vunpack.c.l.b16 %v101
  %v458 = vunpack.c.h.b16 %v101
  %v459 = vunpack.c.l.b16 %v102
  %v460 = vunpack.c.h.b16 %v102
  %v461 = vunpack.c.l.b16 %v103
  %v462 = vunpack.c.h.b16 %v103
  %v463 = vunpack.c.l.b16 %v104
  %v464 = vunpack.c.h.b16 %v104
  %v465 = vunpack.c.l.b16 %v105
  %v466 = vunpack.c.h.b16 %v105
  %v467 = vunpack.c.l.b16 %v106
  %v468 = vunpack.c.h.b16 %v106
  %v469 = vunpack.c.l.b16 %v107
  %v470 = vunpack.c.h.b16 %v107
  %v471 = vunpack.c.l.b16 %v108
  %v472 = vunpack.c.h.b16 %v108
  %v473 = vunpack.c.l.b16 %v109
  %v474 = vunpack.c.h.b16 %v109
  %v475 = vunpack.c.l.b16 %v110
  %v476 = vunpack.c.h.b16 %v110
  %v477 = vunpack.c.l.b16 %v111
  %v478 = vunpack.c.h.b16 %v111
  %v479 = vunpack.c.l.b16 %v112
  %v480 = vunpack.c.h.b16 %v112
  %v481 = vunpack.c.l.b16 %v113
  %v482 = vunpack.c.h.b16 %v113
  %v483 = vunpack.c.l.b16 %v114
  %v484 = vunpack.c.h.b16 %v114
  %v485 = vunpack.c.l.b16 %v115
  %v486 = vunpack.c.h.b16 %v115
  %v487 = vunpack.c.l.b16 %v116
  %v488 = vunpack.c.h.b16 %v116
  %v489 = vunpack.c.l.b16 %v117
  %v490 = vunpack.c.h.b16 %v117
  %v491 = vunpack.c.l.b16 %v118
  %v492 = vunpack.c.h.b16 %v118
  %v493 = vunpack.c.l.b16 %v119
  %v494 = vunpack.c.h.b16 %v119
  %v495 = vunpack.c.l.b16 %v120
  %v496 = vunpack.c.h.b16 %v120
  %v497 = vunpack.c.l.b16 %v121
  %v498 = vunpack.c.h.b16 %v121
  %v499 = vunpack.c.l.b16 %v122
  %v500 = vunpack.c.h.b16 %v122
  %v501 = vunpack.c.l.b16 %v123
  %v502 = vunpack.c.h.b16 %v123
  %v503 = vunpack.c.l.b16 %v124
  %v504 = vunpack.c.h.b16 %v124
  %v505 = vunpack.c.l.b16 %v125
  %v506 = vunpack.c.h.b16 %v125
  %v507 = vunpack.c.l.b16 %v126
  %v508 = vunpack.c.h.b16 %v126
  %v509 = vunpack.c.l.b16 %v127
  %v510 = vunpack.c.h.b16 %v127
  %v511 = vunpack.c.l.b16 %v128
  %v512 = vunpack.c.h.b16 %v128
  %v513 = vunpack.c.l.b16 %v129
  %v514 = vunpack.c.h.b16 %v129
  %v515 = vunpack.c.l.b16 %v130
  %v516 = vunpack.c.h.b16 %v130
  %v517 = vunpack.c.l.b16 %v131
  %v518 = vunpack.c.h.b16 %v131
  %v519 = vunpack.c.l.b16 %v132
  %v520 = vunpack.c.h.b16 %v132
  %v521 = vunpack.c.l.b16 %v133
  %v522 = vunpack.c.h.b16 %v133
  %v523 = vunpack.c.l.b16 %v134
  %v524 = vunpack.c.h.b16 %v134
  %v525 = vunpack.c.l.b16 %v135
  %v526 = vunpack.c.h.b16 %v135
  %v527 = vunpack.c.l.b16 %v136
  %v528 = vunpack.c.h.b16 %v136
  %v529 = vunpack.c.l.b16 %v137
  %v530 = vunpack.c.h.b16 %v137
  %v531 = vunpack.c.l.b16 %v138
  %v532 = vunpack.c.h.b16 %v138
  %v533 = vunpack.c.l.b16 %v139
  %v534 = vunpack.c.h.b16 %v139
  %v535 = vunpack.c.l.b16 %v140
  %v536 = vunpack.c.h.b16 %v140
  %v537 = vunpack.c.l.b16 %v141
  %v538 = vunpack.c.h.b16 %v141
  %v539 = vunpack.c.l.b16 %v142
  %v540 = vunpack.c.h.b16 %v142
  %v541 = vunpack.c.l.b16 %v143
  %v542 = vunpack.c.h.b16 %v143
  %v543 = vunpack.c.l.b16 %v144
  %v544 = vunpack.c.h.b16 %v144
  %v545 = vunpack.c.l.b16 %v145
  %v546 = vunpack.c.h.b16 %v145
  %v547 = vunpack.c.l.b16 %v146
  %v548 = vunpack.c.h.b16 %v146
  %v549 = vunpack.c.l.b16 %v147
  %v550 = vunpack.c.h.b16 %v147
  %v551 = vunpack.c.l.b16 %v148
  %v552 = vunpack.c.h.b16 %v148
  %v553 = vpack.c.b16 %v305, %v297
  %v554 = vpack.c.b16 %v306, %v298
  %v555 = vpack.c.b16 %v307, %v299
  %v556 = vpack.c.b16 %v308, %v300
  %v557 = vpack.c.b16 %v309, %v301
  %v558 = vpack.c.b16 %v310, %v302
  %v559 = vpack.c.b16 %v311, %v303
  %v560 = vpack.c.b16 %v312, %v304
  %v561 = vpack.c.b16 %v321, %v313
  %v562 = vpack.c.b16 %v322, %v314
  %v563 = vpack.c.b16 %v323, %v315
  %v564 = vpack.c.b16 %v324, %v316
  %v565 = vpack.c.b16 %v325, %v317
  %v566 = vpack.c.b16 %v326, %v318
  %v567 = vpack.c.b16 %v327, %v319
  %v568 = vpack.c.b16 %v328, %v320
  %v569 = vpack.c.b16 %v337, %v329
  %v570 = vpack.c.b16 %v338, %v330
  %v571 = vpack.c.b16 %v339, %v331
  %v572 = vpack.c.b16 %v340, %v332
  %v573 = vpack.c.b16 %v341, %v333
  %v574 = vpack.c.b16 %v342, %v334
  %v575 = vpack.c.b16 %v343, %v335
  %v576 = vpack.c.b16 %v344, %v336
  %v577 = vpack.c.b16 %v353, %v345
  %v578 = vpack.c.b16 %v354, %v346
  %v579 = vpack.c.b16 %v355, %v347
  %v580 = vpack.c.b16 %v356, %v348
  %v581 = vpack.c.b16 %v357, %v349
  %v582 = vpack.c.b16 %v358, %v350
  %v583 = vpack.c.b16 %v359, %v351
  %v584 = vpack.c.b16 %v360, %v352
  %v585 = vpack.c.b16 %v369, %v361
  %v586 = vpack.c.b16 %v370, %v362
  %v587 = vpack.c.b16 %v371, %v363
  %v588 = vpack.c.b16 %v372, %v364
  %v589 = vpack.c.b16 %v373, %v365
  %v590 = vpack.c.b16 %v374, %v366
  %v591 = vpack.c.b16 %v375, %v367
  %v592 = vpack.c.b16 %v376, %v368
  %v593 = vpack.c.b16 %v385, %v377
  %v594 = vpack.c.b16 %v386, %v378
  %v595 = vpack.c.b16 %v387, %v379
  %v596 = vpack.c.b16 %v388, %v380
  %v597 = vpack.c.b16 %v389, %v381
  %v598 = vpack.c.b16 %v390, %v382
  %v599 = vpack.c.b16 %v391, %v383
  %v600 = vpack.c.b16 %v392, %v384
  %v601 = vpack.c.b16 %v401, %v393
  %v602 = vpack.c.b16 %v402, %v394
  %v603 = vpack.c.b16 %v403, %v395
  %v604 = vpack.c.b16 %v404, %v396
  %v605 = vpack.c.b16 %v405, %v397
  %v606 = vpack.c.b16 %v406, %v398
  %v607 = vpack.c.b16 %v407, %v399
  %v608 = vpack.c.b16 %v408, %v400
  %v609 = vpack.c.b16 %v417, %v409
  %v610 = vpack.c.b16 %v418, %v410
  %v611 = vpack.c.b16 %v419, %v411
  %v612 = vpack.c.b16 %v420, %v412
  %v613 = vpack.c.b16 %v421, %v413
  %v614 = vpack.c.b16 %v422, %v414
  %v615 = vpack.c.b16 %v423, %v415
  %v616 = vpack.c.b16 %v424, %v416
  %v617 = vpack.c.b16 %v433, %v425
  %v618 = vpack.c.b16 %v434, %v426
  %v619 = vpack.c.b16 %v435, %v427
  %v620 = vpack.c.b16 %v436, %v428
  %v621 = vpack.c.b16 %v437, %v429
  %v622 = vpack.c.b16 %v438, %v430
  %v623 = vpack.c.b16 %v439, %v431
  %v624 = vpack.c.b16 %v440, %v432
  %v625 = vpack.c.b16 %v449, %v441
  %v626 = vpack.c.b16 %v450, %v442
  %v627 = vpack.c.b16 %v451, %v443
  %v628 = vpack.c.b16 %v452, %v444
  %v629 = vpack.c.b16 %v453, %v445
  %v630 = vpack.c.b16 %v454, %v446
  %v631 = vpack.c.b16 %v455, %v447
  %v632 = vpack.c.b16 %v456, %v448
  %v633 = vpack.c.b16 %v465, %v457
  %v634 = vpack.c.b16 %v466, %v458
  %v635 = vpack.c.b16 %v467, %v459
  %v636 = vpack.c.b16 %v468, %v460
  %v637 = vpack.c.b16 %v469, %v461
  %v638 = vpack.c.b16 %v470, %v462
  %v639 = vpack.c.b16 %v471, %v463
  %v640 = vpack.c.b16 %v472, %v464
  %v641 = vpack.c.b16 %v481, %v473
  %v642 = vpack.c.b16 %v482, %v474
  %v643 = vpack.c.b16 %v483, %v475
  %v644 = vpack.c.b16 %v484, %v476
  %v645 = vpack.c.b16 %v485, %v477
  %v646 = vpack.c.b16 %v486, %v478
  %v647 = vpack.c.b16 %v487, %v479
  %v648 = vpack.c.b16 %v488, %v480
  %v649 = vpack.c.b16 %v497, %v489
  %v650 = vpack.c.b16 %v498, %v490
  %v651 = vpack.c.b16 %v499, %v491
  %v652 = vpack.c.b16 %v500, %v492
  %v653 = vpack.c.b16 %v501, %v493
  %v654 = vpack.c.b16 %v502, %v494
  %v655 = vpack.c.b16 %v503, %v495
  %v656 = vpack.c.b16 %v504, %v496
  %v657 = vpack.c.b16 %v513, %v505
  %v658 = vpack.c.b16 %v514, %v506
  %v659 = vpack.c.b16 %v515, %v507
  %v660 = vpack.c.b16 %v516, %v508
  %v661 = vpack.c.b16 %v517, %v509
  %v662 = vpack.c.b16 %v518, %v510
  %v663 = vpack.c.b16 %v519, %v511
  %v664 = vpack.c.b16 %v520, %v512
  %v665 = vpack.c.b16 %v529, %v521
  %v666 = vpack.c.b16 %v530, %v522
  %v667 = vpack.c.b16 %v531, %v523
  %v668 = vpack.c.b16 %v532, %v524
  %v669 = vpack.c.b16 %v533, %v525
  %v670 = vpack.c.b16 %v534, %v526
  %v671 = vpack.c.b16 %v535, %v527
  %v672 = vpack.c.b16 %v536, %v528
  %v673 = vpack.c.b16 %v545, %v537
  %v674 = vpack.c.b16 %v546, %v538
  %v675 = vpack.c.b16 %v547, %v539
  %v676 = vpack.c.b16 %v548, %v540
  %v677 = vpack.c.b16 %v549, %v541
  %v678 = vpack.c.b16 %v550, %v542
  %v679 = vpack.c.b16 %v551, %v543
  %v680 = vpack.c.b16 %v552, %v544
  %809 = vmatprep.subr.bf16.mxu0 %v554
  %810 = vmatpush1.bf16.msra.mxu0 %v553
  %811 = vmatprep.subr.bf16.mxu0 %v562
  %812 = vmatpush1.bf16.msra.mxu0 %v561
  %813 = vmatprep.subr.bf16.mxu0 %v570
  %814 = vmatpush1.bf16.msra.mxu0 %v569
  %815 = vmatprep.subr.bf16.mxu0 %v578
  %816 = vmatpush1.bf16.msra.mxu0 %v577
  %817 = vmatprep.subr.bf16.mxu0 %v586
  %818 = vmatpush1.bf16.msra.mxu0 %v585
  %819 = vmatprep.subr.bf16.mxu0 %v594
  %820 = vmatpush1.bf16.msra.mxu0 %v593
  %821 = vmatprep.subr.bf16.mxu0 %v602
  %822 = vmatpush1.bf16.msra.mxu0 %v601
  %823 = vmatprep.subr.bf16.mxu0 %v610
  %824 = vmatpush1.bf16.msra.mxu0 %v609
  %825 = vmatprep.subr.bf16.mxu0 %v618
  %826 = vmatpush1.bf16.msra.mxu0 %v617
  %827 = vmatprep.subr.bf16.mxu0 %v626
  %828 = vmatpush1.bf16.msra.mxu0 %v625
  %829 = vmatprep.subr.bf16.mxu0 %v634
  %830 = vmatpush1.bf16.msra.mxu0 %v633
  %831 = vmatprep.subr.bf16.mxu0 %v642
  %832 = vmatpush1.bf16.msra.mxu0 %v641
  %833 = vmatprep.subr.bf16.mxu0 %v650
  %834 = vmatpush1.bf16.msra.mxu0 %v649
  %835 = vmatprep.subr.bf16.mxu0 %v658
  %836 = vmatpush1.bf16.msra.mxu0 %v657
  %837 = vmatprep.subr.bf16.mxu0 %v666
  %838 = vmatpush1.bf16.msra.mxu0 %v665
  %839 = vmatprep.subr.bf16.mxu0 %v674
  %840 = vmatpush1.bf16.msra.mxu0 %v673
  %841 = vmatprep.mubr.bf16.mxu0 %v162
  %842 = vmatmul.mubr.bf16.gmra.mrb[0].mxu0 %v161
  %v843 = vpop.f32.mrb[0].mxu0
  %v844 = vadd.f32 0.0, %v843
  %v845 = vpop.f32.mrb[0].mxu0
  %v846 = vadd.f32 0.0, %v845
  %v847 = vpop.f32.mrb[0].mxu0
  %v848 = vadd.f32 0.0, %v847
  %v849 = vpop.f32.mrb[0].mxu0
  %v850 = vadd.f32 0.0, %v849
  %851 = vmatprep.mubr.bf16.mxu0 %v164
  %852 = vmatmul.mubr.bf16.gmra.mrb[0].mxu0 %v163
  %v853 = vpop.f32.mrb[0].mxu0
  %v854 = vadd.f32 0.0, %v853
  %v855 = vpop.f32.mrb[0].mxu0
  %v856 = vadd.f32 0.0, %v855
  %v857 = vpop.f32.mrb[0].mxu0
  %v858 = vadd.f32 0.0, %v857
  %v859 = vpop.f32.mrb[0].mxu0
  %v860 = vadd.f32 0.0, %v859
  %861 = vdwg.mxu0
  %862 = vmatprep.subr.bf16.mxu0 %v556
  %863 = vmatpush1.bf16.msra.mxu0 %v555
  %864 = vmatprep.subr.bf16.mxu0 %v564
  %865 = vmatpush1.bf16.msra.mxu0 %v563
  %866 = vmatprep.subr.bf16.mxu0 %v572
  %867 = vmatpush1.bf16.msra.mxu0 %v571
  %868 = vmatprep.subr.bf16.mxu0 %v580
  %869 = vmatpush1.bf16.msra.mxu0 %v579
  %870 = vmatprep.subr.bf16.mxu0 %v588
  %871 = vmatpush1.bf16.msra.mxu0 %v587
  %872 = vmatprep.subr.bf16.mxu0 %v596
  %873 = vmatpush1.bf16.msra.mxu0 %v595
  %874 = vmatprep.subr.bf16.mxu0 %v604
  %875 = vmatpush1.bf16.msra.mxu0 %v603
  %876 = vmatprep.subr.bf16.mxu0 %v612
  %877 = vmatpush1.bf16.msra.mxu0 %v611
  %878 = vmatprep.subr.bf16.mxu0 %v620
  %879 = vmatpush1.bf16.msra.mxu0 %v619
  %880 = vmatprep.subr.bf16.mxu0 %v628
  %881 = vmatpush1.bf16.msra.mxu0 %v627
  %882 = vmatprep.subr.bf16.mxu0 %v636
  %883 = vmatpush1.bf16.msra.mxu0 %v635
  %884 = vmatprep.subr.bf16.mxu0 %v644
  %885 = vmatpush1.bf16.msra.mxu0 %v643
  %886 = vmatprep.subr.bf16.mxu0 %v652
  %887 = vmatpush1.bf16.msra.mxu0 %v651
  %888 = vmatprep.subr.bf16.mxu0 %v660
  %889 = vmatpush1.bf16.msra.mxu0 %v659
  %890 = vmatprep.subr.bf16.mxu0 %v668
  %891 = vmatpush1.bf16.msra.mxu0 %v667
  %892 = vmatprep.subr.bf16.mxu0 %v676
  %893 = vmatpush1.bf16.msra.mxu0 %v675
  %894 = vmatprep.mubr.bf16.mxu0 %v162
  %895 = vmatmul.mubr.bf16.gmra.mrb[0].mxu0 %v161
  %v896 = vpop.f32.mrb[0].mxu0
  %v897 = vadd.f32 0.0, %v896
  %v898 = vpop.f32.mrb[0].mxu0
  %v899 = vadd.f32 0.0, %v898
  %v900 = vpop.f32.mrb[0].mxu0
  %v901 = vadd.f32 0.0, %v900
  %v902 = vpop.f32.mrb[0].mxu0
  %v903 = vadd.f32 0.0, %v902
  %904 = vmatprep.mubr.bf16.mxu0 %v164
  %905 = vmatmul.mubr.bf16.gmra.mrb[0].mxu0 %v163
  %v906 = vpop.f32.mrb[0].mxu0
  %v907 = vadd.f32 0.0, %v906
  %v908 = vpop.f32.mrb[0].mxu0
  %v909 = vadd.f32 0.0, %v908
  %v910 = vpop.f32.mrb[0].mxu0
  %v911 = vadd.f32 0.0, %v910
  %v912 = vpop.f32.mrb[0].mxu0
  %v913 = vadd.f32 0.0, %v912
  %914 = vdwg.mxu0
  %915 = vmatprep.subr.bf16.mxu0 %v558
  %916 = vmatpush1.bf16.msra.mxu0 %v557
  %917 = vmatprep.subr.bf16.mxu0 %v566
  %918 = vmatpush1.bf16.msra.mxu0 %v565
  %919 = vmatprep.subr.bf16.mxu0 %v574
  %920 = vmatpush1.bf16.msra.mxu0 %v573
  %921 = vmatprep.subr.bf16.mxu0 %v582
  %922 = vmatpush1.bf16.msra.mxu0 %v581
  %923 = vmatprep.subr.bf16.mxu0 %v590
  %924 = vmatpush1.bf16.msra.mxu0 %v589
  %925 = vmatprep.subr.bf16.mxu0 %v598
  %926 = vmatpush1.bf16.msra.mxu0 %v597
  %927 = vmatprep.subr.bf16.mxu0 %v606
  %928 = vmatpush1.bf16.msra.mxu0 %v605
  %929 = vmatprep.subr.bf16.mxu0 %v614
  %930 = vmatpush1.bf16.msra.mxu0 %v613
  %931 = vmatprep.subr.bf16.mxu0 %v622
  %932 = vmatpush1.bf16.msra.mxu0 %v621
  %933 = vmatprep.subr.bf16.mxu0 %v630
  %934 = vmatpush1.bf16.msra.mxu0 %v629
  %935 = vmatprep.subr.bf16.mxu0 %v638
  %936 = vmatpush1.bf16.msra.mxu0 %v637
  %937 = vmatprep.subr.bf16.mxu0 %v646
  %938 = vmatpush1.bf16.msra.mxu0 %v645
  %939 = vmatprep.subr.bf16.mxu0 %v654
  %940 = vmatpush1.bf16.msra.mxu0 %v653
  %941 = vmatprep.subr.bf16.mxu0 %v662
  %942 = vmatpush1.bf16.msra.mxu0 %v661
  %943 = vmatprep.subr.bf16.mxu0 %v670
  %944 = vmatpush1.bf16.msra.mxu0 %v669
  %945 = vmatprep.subr.bf16.mxu0 %v678
  %946 = vmatpush1.bf16.msra.mxu0 %v677
  %947 = vmatprep.mubr.bf16.mxu0 %v162
  %948 = vmatmul.mubr.bf16.gmra.mrb[0].mxu0 %v161
  %v949 = vpop.f32.mrb[0].mxu0
  %v950 = vadd.f32 0.0, %v949
  %v951 = vpop.f32.mrb[0].mxu0
  %v952 = vadd.f32 0.0, %v951
  %v953 = vpop.f32.mrb[0].mxu0
  %v954 = vadd.f32 0.0, %v953
  %v955 = vpop.f32.mrb[0].mxu0
  %v956 = vadd.f32 0.0, %v955
  %957 = vmatprep.mubr.bf16.mxu0 %v164
  %958 = vmatmul.mubr.bf16.gmra.mrb[0].mxu0 %v163
  %v959 = vpop.f32.mrb[0].mxu0
  %v960 = vadd.f32 0.0, %v959
  %v961 = vpop.f32.mrb[0].mxu0
  %v962 = vadd.f32 0.0, %v961
  %v963 = vpop.f32.mrb[0].mxu0
  %v964 = vadd.f32 0.0, %v963
  %v965 = vpop.f32.mrb[0].mxu0
  %v966 = vadd.f32 0.0, %v965
  %967 = vdwg.mxu0
  %968 = vmatprep.subr.bf16.mxu0 %v560
  %969 = vmatpush1.bf16.msra.mxu0 %v559
  %970 = vmatprep.subr.bf16.mxu0 %v568
  %971 = vmatpush1.bf16.msra.mxu0 %v567
  %972 = vmatprep.subr.bf16.mxu0 %v576
  %973 = vmatpush1.bf16.msra.mxu0 %v575
  %974 = vmatprep.subr.bf16.mxu0 %v584
  %975 = vmatpush1.bf16.msra.mxu0 %v583
  %976 = vmatprep.subr.bf16.mxu0 %v592
  %977 = vmatpush1.bf16.msra.mxu0 %v591
  %978 = vmatprep.subr.bf16.mxu0 %v600
  %979 = vmatpush1.bf16.msra.mxu0 %v599
  %980 = vmatprep.subr.bf16.mxu0 %v608
  %981 = vmatpush1.bf16.msra.mxu0 %v607
  %982 = vmatprep.subr.bf16.mxu0 %v616
  %983 = vmatpush1.bf16.msra.mxu0 %v615
  %984 = vmatprep.subr.bf16.mxu0 %v624
  %985 = vmatpush1.bf16.msra.mxu0 %v623
  %986 = vmatprep.subr.bf16.mxu0 %v632
  %987 = vmatpush1.bf16.msra.mxu0 %v631
  %988 = vmatprep.subr.bf16.mxu0 %v640
  %989 = vmatpush1.bf16.msra.mxu0 %v639
  %990 = vmatprep.subr.bf16.mxu0 %v648
  %991 = vmatpush1.bf16.msra.mxu0 %v647
  %992 = vmatprep.subr.bf16.mxu0 %v656
  %993 = vmatpush1.bf16.msra.mxu0 %v655
  %994 = vmatprep.subr.bf16.mxu0 %v664
  %995 = vmatpush1.bf16.msra.mxu0 %v663
  %996 = vmatprep.subr.bf16.mxu0 %v672
  %997 = vmatpush1.bf16.msra.mxu0 %v671
  %998 = vmatprep.subr.bf16.mxu0 %v680
  %999 = vmatpush1.bf16.msra.mxu0 %v679
  %1000 = vmatprep.mubr.bf16.mxu0 %v162
  %1001 = vmatmul.mubr.bf16.gmra.mrb[0].mxu0 %v161
  %v1002 = vpop.f32.mrb[0].mxu0
  %v1003 = vadd.f32 0.0, %v1002
  %v1004 = vpop.f32.mrb[0].mxu0
  %v1005 = vadd.f32 0.0, %v1004
  %v1006 = vpop.f32.mrb[0].mxu0
  %v1007 = vadd.f32 0.0, %v1006
  %v1008 = vpop.f32.mrb[0].mxu0
  %v1009 = vadd.f32 0.0, %v1008
  %1010 = vmatprep.mubr.bf16.mxu0 %v164
  %1011 = vmatmul.mubr.bf16.gmra.mrb[0].mxu0 %v163
  %v1012 = vpop.f32.mrb[0].mxu0
  %v1013 = vadd.f32 0.0, %v1012
  %v1014 = vpop.f32.mrb[0].mxu0
  %v1015 = vadd.f32 0.0, %v1014
  %v1016 = vpop.f32.mrb[0].mxu0
  %v1017 = vadd.f32 0.0, %v1016
  %v1018 = vpop.f32.mrb[0].mxu0
  %v1019 = vadd.f32 0.0, %v1018
  %1020 = vdwg.mxu0
  %v1021 = vadd.f32 %v844, %v846
  %v1022 = vadd.f32 %v1021, %v897
  %v1023 = vadd.f32 %v1022, %v899
  %v1024 = vadd.f32 %v1023, %v950
  %v1025 = vadd.f32 %v1024, %v952
  %v1026 = vadd.f32 %v1025, %v1003
  %v1027 = vadd.f32 %v1026, %v1005
  %1028 = vadd.xlane.f32.xlu0 %v1027
  %v1029 = vpop.xlane.xlu0 %1028
  %v1030 = vadd.f32 %v848, %v850
  %v1031 = vadd.f32 %v1030, %v901
  %v1032 = vadd.f32 %v1031, %v903
  %v1033 = vadd.f32 %v1032, %v954
  %v1034 = vadd.f32 %v1033, %v956
  %v1035 = vadd.f32 %v1034, %v1007
  %v1036 = vadd.f32 %v1035, %v1009
  %1037 = vadd.xlane.f32.xlu0 %v1036
  %v1038 = vpop.xlane.xlu0 %1037
  %v1039 = vadd.f32 %v854, %v856
  %v1040 = vadd.f32 %v1039, %v907
  %v1041 = vadd.f32 %v1040, %v909
  %v1042 = vadd.f32 %v1041, %v960
  %v1043 = vadd.f32 %v1042, %v962
  %v1044 = vadd.f32 %v1043, %v1013
  %v1045 = vadd.f32 %v1044, %v1015
  %1046 = vadd.xlane.f32.xlu0 %v1045
  %v1047 = vpop.xlane.xlu0 %1046
  %v1048 = vadd.f32 %v858, %v860
  %v1049 = vadd.f32 %v1048, %v911
  %v1050 = vadd.f32 %v1049, %v913
  %v1051 = vadd.f32 %v1050, %v964
  %v1052 = vadd.f32 %v1051, %v966
  %v1053 = vadd.f32 %v1052, %v1017
  %v1054 = vadd.f32 %v1053, %v1019
  %1055 = vadd.xlane.f32.xlu0 %v1054
  %v1056 = vpop.xlane.xlu0 %1055
  %v1057 = vmul.f32 %v1029, 0.0009765625
  %v1058 = vmul.f32 %v1038, 0.0009765625
  %v1059 = vmul.f32 %v1047, 0.0009765625
  %v1060 = vmul.f32 %v1056, 0.0009765625
  %v1061 = vmul.f32 %v844, %v844
  %v1062 = vmul.f32 %v846, %v846
  %v1063 = vmul.f32 %v897, %v897
  %v1064 = vmul.f32 %v899, %v899
  %v1065 = vmul.f32 %v950, %v950
  %v1066 = vmul.f32 %v952, %v952
  %v1067 = vmul.f32 %v1003, %v1003
  %v1068 = vmul.f32 %v1005, %v1005
  %v1069 = vmul.f32 %v848, %v848
  %v1070 = vmul.f32 %v850, %v850
  %v1071 = vmul.f32 %v901, %v901
  %v1072 = vmul.f32 %v903, %v903
  %v1073 = vmul.f32 %v954, %v954
  %v1074 = vmul.f32 %v956, %v956
  %v1075 = vmul.f32 %v1007, %v1007
  %v1076 = vmul.f32 %v1009, %v1009
  %v1077 = vmul.f32 %v854, %v854
  %v1078 = vmul.f32 %v856, %v856
  %v1079 = vmul.f32 %v907, %v907
  %v1080 = vmul.f32 %v909, %v909
  %v1081 = vmul.f32 %v960, %v960
  %v1082 = vmul.f32 %v962, %v962
  %v1083 = vmul.f32 %v1013, %v1013
  %v1084 = vmul.f32 %v1015, %v1015
  %v1085 = vmul.f32 %v858, %v858
  %v1086 = vmul.f32 %v860, %v860
  %v1087 = vmul.f32 %v911, %v911
  %v1088 = vmul.f32 %v913, %v913
  %v1089 = vmul.f32 %v964, %v964
  %v1090 = vmul.f32 %v966, %v966
  %v1091 = vmul.f32 %v1017, %v1017
  %v1092 = vmul.f32 %v1019, %v1019
  %v1093 = vadd.f32 %v1061, %v1062
  %v1094 = vadd.f32 %v1093, %v1063
  %v1095 = vadd.f32 %v1094, %v1064
  %v1096 = vadd.f32 %v1095, %v1065
  %v1097 = vadd.f32 %v1096, %v1066
  %v1098 = vadd.f32 %v1097, %v1067
  %v1099 = vadd.f32 %v1098, %v1068
  %1100 = vadd.xlane.f32.xlu0 %v1099
  %v1101 = vpop.xlane.xlu0 %1100
  %v1102 = vadd.f32 %v1069, %v1070
  %v1103 = vadd.f32 %v1102, %v1071
  %v1104 = vadd.f32 %v1103, %v1072
  %v1105 = vadd.f32 %v1104, %v1073
  %v1106 = vadd.f32 %v1105, %v1074
  %v1107 = vadd.f32 %v1106, %v1075
  %v1108 = vadd.f32 %v1107, %v1076
  %1109 = vadd.xlane.f32.xlu0 %v1108
  %v1110 = vpop.xlane.xlu0 %1109
  %v1111 = vadd.f32 %v1077, %v1078
  %v1112 = vadd.f32 %v1111, %v1079
  %v1113 = vadd.f32 %v1112, %v1080
  %v1114 = vadd.f32 %v1113, %v1081
  %v1115 = vadd.f32 %v1114, %v1082
  %v1116 = vadd.f32 %v1115, %v1083
  %v1117 = vadd.f32 %v1116, %v1084
  %1118 = vadd.xlane.f32.xlu0 %v1117
  %v1119 = vpop.xlane.xlu0 %1118
  %v1120 = vadd.f32 %v1085, %v1086
  %v1121 = vadd.f32 %v1120, %v1087
  %v1122 = vadd.f32 %v1121, %v1088
  %v1123 = vadd.f32 %v1122, %v1089
  %v1124 = vadd.f32 %v1123, %v1090
  %v1125 = vadd.f32 %v1124, %v1091
  %v1126 = vadd.f32 %v1125, %v1092
  %1127 = vadd.xlane.f32.xlu0 %v1126
  %v1128 = vpop.xlane.xlu0 %1127
  %v1129 = vmul.f32 %v1101, 0.0009765625
  %v1130 = vmul.f32 %v1110, 0.0009765625
  %v1131 = vmul.f32 %v1119, 0.0009765625
  %v1132 = vmul.f32 %v1128, 0.0009765625
  %v1133 = vmul.f32 %v1057, %v1057
  %v1134 = vmul.f32 %v1058, %v1058
  %v1135 = vmul.f32 %v1059, %v1059
  %v1136 = vmul.f32 %v1060, %v1060
  %v1137 = vsub.f32 %v1129, %v1133
  %v1138 = vsub.f32 %v1130, %v1134
  %v1139 = vsub.f32 %v1131, %v1135
  %v1140 = vsub.f32 %v1132, %v1136
  %v1141 = vld [vmem:[%s2] sm:$0xff]
  %v1142 = vld [vmem:[%s2 + $0x8] sm:$0xff]
  %v1143 = vld [vmem:[%s2 + $0x10] sm:$0xff]
  %v1144 = vld [vmem:[%s2 + $0x18] sm:$0xff]
  %v1145 = vadd.f32 %v1137, 1e-05
  %v1146 = vadd.f32 %v1138, 1e-05
  %v1147 = vadd.f32 %v1139, 1e-05
  %v1148 = vadd.f32 %v1140, 1e-05
  %v1149 = vrsqrt.pop %v1145
  %v1150 = vrsqrt.pop %v1146
  %v1151 = vrsqrt.pop %v1147
  %v1152 = vrsqrt.pop %v1148
  %v1153 = vmul.f32 %v1141, %v1149
  %v1154 = vmul.f32 %v1142, %v1150
  %v1155 = vmul.f32 %v1143, %v1151
  %v1156 = vmul.f32 %v1144, %v1152
  %v1157 = vld [vmem:[%s3] sm:$0xff]
  %v1158 = vld [vmem:[%s3 + $0x8] sm:$0xff]
  %v1159 = vld [vmem:[%s3 + $0x10] sm:$0xff]
  %v1160 = vld [vmem:[%s3 + $0x18] sm:$0xff]
  %v1161 = vmul.f32 %v1057, %v1153
  %v1162 = vmul.f32 %v1058, %v1154
  %v1163 = vmul.f32 %v1059, %v1155
  %v1164 = vmul.f32 %v1060, %v1156
  %v1165 = vsub.f32 %v1157, %v1161
  %v1166 = vsub.f32 %v1158, %v1162
  %v1167 = vsub.f32 %v1159, %v1163
  %v1168 = vsub.f32 %v1160, %v1164
  %1170 = vset.pattern.permute.xlu0 0
  %1171 = vperm.xlu0 %1170, %v1153
  %v1172 = vpop.permute.xlu0 %1171
  %1175 = vset.pattern.permute.xlu0 0
  %1176 = vperm.xlu0 %1175, %v1154
  %v1177 = vpop.permute.xlu0 %1176
  %1180 = vset.pattern.permute.xlu0 0
  %1181 = vperm.xlu0 %1180, %v1155
  %v1182 = vpop.permute.xlu0 %1181
  %1185 = vset.pattern.permute.xlu0 0
  %1186 = vperm.xlu0 %1185, %v1156
  %v1187 = vpop.permute.xlu0 %1186
  %v1189 = vmul.f32 %v844, %v1172
  %v1190 = vmul.f32 %v846, %v1172
  %v1191 = vmul.f32 %v897, %v1172
  %v1192 = vmul.f32 %v899, %v1172
  %v1193 = vmul.f32 %v950, %v1172
  %v1194 = vmul.f32 %v952, %v1172
  %v1195 = vmul.f32 %v1003, %v1172
  %v1196 = vmul.f32 %v1005, %v1172
  %v1197 = vmul.f32 %v848, %v1177
  %v1198 = vmul.f32 %v850, %v1177
  %v1199 = vmul.f32 %v901, %v1177
  %v1200 = vmul.f32 %v903, %v1177
  %v1201 = vmul.f32 %v954, %v1177
  %v1202 = vmul.f32 %v956, %v1177
  %v1203 = vmul.f32 %v1007, %v1177
  %v1204 = vmul.f32 %v1009, %v1177
  %v1205 = vmul.f32 %v854, %v1182
  %v1206 = vmul.f32 %v856, %v1182
  %v1207 = vmul.f32 %v907, %v1182
  %v1208 = vmul.f32 %v909, %v1182
  %v1209 = vmul.f32 %v960, %v1182
  %v1210 = vmul.f32 %v962, %v1182
  %v1211 = vmul.f32 %v1013, %v1182
  %v1212 = vmul.f32 %v1015, %v1182
  %v1213 = vmul.f32 %v858, %v1187
  %v1214 = vmul.f32 %v860, %v1187
  %v1215 = vmul.f32 %v911, %v1187
  %v1216 = vmul.f32 %v913, %v1187
  %v1217 = vmul.f32 %v964, %v1187
  %v1218 = vmul.f32 %v966, %v1187
  %v1219 = vmul.f32 %v1017, %v1187
  %v1220 = vmul.f32 %v1019, %v1187
  %1222 = vset.pattern.permute.xlu0 0
  %1223 = vperm.xlu0 %1222, %v1165
  %v1224 = vpop.permute.xlu0 %1223
  %1227 = vset.pattern.permute.xlu0 0
  %1228 = vperm.xlu0 %1227, %v1166
  %v1229 = vpop.permute.xlu0 %1228
  %1232 = vset.pattern.permute.xlu0 0
  %1233 = vperm.xlu0 %1232, %v1167
  %v1234 = vpop.permute.xlu0 %1233
  %1237 = vset.pattern.permute.xlu0 0
  %1238 = vperm.xlu0 %1237, %v1168
  %v1239 = vpop.permute.xlu0 %1238
  %v1241 = vadd.f32 %v1189, %v1224
  %v1242 = vadd.f32 %v1190, %v1224
  %v1243 = vadd.f32 %v1191, %v1224
  %v1244 = vadd.f32 %v1192, %v1224
  %v1245 = vadd.f32 %v1193, %v1224
  %v1246 = vadd.f32 %v1194, %v1224
  %v1247 = vadd.f32 %v1195, %v1224
  %v1248 = vadd.f32 %v1196, %v1224
  %v1249 = vadd.f32 %v1197, %v1229
  %v1250 = vadd.f32 %v1198, %v1229
  %v1251 = vadd.f32 %v1199, %v1229
  %v1252 = vadd.f32 %v1200, %v1229
  %v1253 = vadd.f32 %v1201, %v1229
  %v1254 = vadd.f32 %v1202, %v1229
  %v1255 = vadd.f32 %v1203, %v1229
  %v1256 = vadd.f32 %v1204, %v1229
  %v1257 = vadd.f32 %v1205, %v1234
  %v1258 = vadd.f32 %v1206, %v1234
  %v1259 = vadd.f32 %v1207, %v1234
  %v1260 = vadd.f32 %v1208, %v1234
  %v1261 = vadd.f32 %v1209, %v1234
  %v1262 = vadd.f32 %v1210, %v1234
  %v1263 = vadd.f32 %v1211, %v1234
  %v1264 = vadd.f32 %v1212, %v1234
  %v1265 = vadd.f32 %v1213, %v1239
  %v1266 = vadd.f32 %v1214, %v1239
  %v1267 = vadd.f32 %v1215, %v1239
  %v1268 = vadd.f32 %v1216, %v1239
  %v1269 = vadd.f32 %v1217, %v1239
  %v1270 = vadd.f32 %v1218, %v1239
  %v1271 = vadd.f32 %v1219, %v1239
  %v1272 = vadd.f32 %v1220, %v1239
  %vm1273 = vcmp.gt.f32.partialorder %v1241, 0.0
  %vm1274 = vcmp.gt.f32.partialorder %v1242, 0.0
  %vm1275 = vcmp.gt.f32.partialorder %v1243, 0.0
  %vm1276 = vcmp.gt.f32.partialorder %v1244, 0.0
  %vm1277 = vcmp.gt.f32.partialorder %v1245, 0.0
  %vm1278 = vcmp.gt.f32.partialorder %v1246, 0.0
  %vm1279 = vcmp.gt.f32.partialorder %v1247, 0.0
  %vm1280 = vcmp.gt.f32.partialorder %v1248, 0.0
  %vm1281 = vcmp.gt.f32.partialorder %v1249, 0.0
  %vm1282 = vcmp.gt.f32.partialorder %v1250, 0.0
  %vm1283 = vcmp.gt.f32.partialorder %v1251, 0.0
  %vm1284 = vcmp.gt.f32.partialorder %v1252, 0.0
  %vm1285 = vcmp.gt.f32.partialorder %v1253, 0.0
  %vm1286 = vcmp.gt.f32.partialorder %v1254, 0.0
  %vm1287 = vcmp.gt.f32.partialorder %v1255, 0.0
  %vm1288 = vcmp.gt.f32.partialorder %v1256, 0.0
  %vm1289 = vcmp.gt.f32.partialorder %v1257, 0.0
  %vm1290 = vcmp.gt.f32.partialorder %v1258, 0.0
  %vm1291 = vcmp.gt.f32.partialorder %v1259, 0.0
  %vm1292 = vcmp.gt.f32.partialorder %v1260, 0.0
  %vm1293 = vcmp.gt.f32.partialorder %v1261, 0.0
  %vm1294 = vcmp.gt.f32.partialorder %v1262, 0.0
  %vm1295 = vcmp.gt.f32.partialorder %v1263, 0.0
  %vm1296 = vcmp.gt.f32.partialorder %v1264, 0.0
  %vm1297 = vcmp.gt.f32.partialorder %v1265, 0.0
  %vm1298 = vcmp.gt.f32.partialorder %v1266, 0.0
  %vm1299 = vcmp.gt.f32.partialorder %v1267, 0.0
  %vm1300 = vcmp.gt.f32.partialorder %v1268, 0.0
  %vm1301 = vcmp.gt.f32.partialorder %v1269, 0.0
  %vm1302 = vcmp.gt.f32.partialorder %v1270, 0.0
  %vm1303 = vcmp.gt.f32.partialorder %v1271, 0.0
  %vm1304 = vcmp.gt.f32.partialorder %v1272, 0.0
  %v1305 = vmul.f32 %v1241, 0.2
  %v1306 = vmul.f32 %v1242, 0.2
  %v1307 = vmul.f32 %v1243, 0.2
  %v1308 = vmul.f32 %v1244, 0.2
  %v1309 = vmul.f32 %v1245, 0.2
  %v1310 = vmul.f32 %v1246, 0.2
  %v1311 = vmul.f32 %v1247, 0.2
  %v1312 = vmul.f32 %v1248, 0.2
  %v1313 = vmul.f32 %v1249, 0.2
  %v1314 = vmul.f32 %v1250, 0.2
  %v1315 = vmul.f32 %v1251, 0.2
  %v1316 = vmul.f32 %v1252, 0.2
  %v1317 = vmul.f32 %v1253, 0.2
  %v1318 = vmul.f32 %v1254, 0.2
  %v1319 = vmul.f32 %v1255, 0.2
  %v1320 = vmul.f32 %v1256, 0.2
  %v1321 = vmul.f32 %v1257, 0.2
  %v1322 = vmul.f32 %v1258, 0.2
  %v1323 = vmul.f32 %v1259, 0.2
  %v1324 = vmul.f32 %v1260, 0.2
  %v1325 = vmul.f32 %v1261, 0.2
  %v1326 = vmul.f32 %v1262, 0.2
  %v1327 = vmul.f32 %v1263, 0.2
  %v1328 = vmul.f32 %v1264, 0.2
  %v1329 = vmul.f32 %v1265, 0.2
  %v1330 = vmul.f32 %v1266, 0.2
  %v1331 = vmul.f32 %v1267, 0.2
  %v1332 = vmul.f32 %v1268, 0.2
  %v1333 = vmul.f32 %v1269, 0.2
  %v1334 = vmul.f32 %v1270, 0.2
  %v1335 = vmul.f32 %v1271, 0.2
  %v1336 = vmul.f32 %v1272, 0.2
  %v1337 = vsel %vm1273, %v1241, %v1305
  %v1338 = vsel %vm1274, %v1242, %v1306
  %v1339 = vsel %vm1275, %v1243, %v1307
  %v1340 = vsel %vm1276, %v1244, %v1308
  %v1341 = vsel %vm1277, %v1245, %v1309
  %v1342 = vsel %vm1278, %v1246, %v1310
  %v1343 = vsel %vm1279, %v1247, %v1311
  %v1344 = vsel %vm1280, %v1248, %v1312
  %v1345 = vsel %vm1281, %v1249, %v1313
  %v1346 = vsel %vm1282, %v1250, %v1314
  %v1347 = vsel %vm1283, %v1251, %v1315
  %v1348 = vsel %vm1284, %v1252, %v1316
  %v1349 = vsel %vm1285, %v1253, %v1317
  %v1350 = vsel %vm1286, %v1254, %v1318
  %v1351 = vsel %vm1287, %v1255, %v1319
  %v1352 = vsel %vm1288, %v1256, %v1320
  %v1353 = vsel %vm1289, %v1257, %v1321
  %v1354 = vsel %vm1290, %v1258, %v1322
  %v1355 = vsel %vm1291, %v1259, %v1323
  %v1356 = vsel %vm1292, %v1260, %v1324
  %v1357 = vsel %vm1293, %v1261, %v1325
  %v1358 = vsel %vm1294, %v1262, %v1326
  %v1359 = vsel %vm1295, %v1263, %v1327
  %v1360 = vsel %vm1296, %v1264, %v1328
  %v1361 = vsel %vm1297, %v1265, %v1329
  %v1362 = vsel %vm1298, %v1266, %v1330
  %v1363 = vsel %vm1299, %v1267, %v1331
  %v1364 = vsel %vm1300, %v1268, %v1332
  %v1365 = vsel %vm1301, %v1269, %v1333
  %v1366 = vsel %vm1302, %v1270, %v1334
  %v1367 = vsel %vm1303, %v1271, %v1335
  %v1368 = vsel %vm1304, %v1272, %v1336
  %v1369 = vpack.c.bf16 %v1345, %v1337
  %v1370 = vpack.c.bf16 %v1346, %v1338
  %v1371 = vpack.c.bf16 %v1347, %v1339
  %v1372 = vpack.c.bf16 %v1348, %v1340
  %v1373 = vpack.c.bf16 %v1349, %v1341
  %v1374 = vpack.c.bf16 %v1350, %v1342
  %v1375 = vpack.c.bf16 %v1351, %v1343
  %v1376 = vpack.c.bf16 %v1352, %v1344
  %v1377 = vpack.c.bf16 %v1361, %v1353
  %v1378 = vpack.c.bf16 %v1362, %v1354
  %v1379 = vpack.c.bf16 %v1363, %v1355
  %v1380 = vpack.c.bf16 %v1364, %v1356
  %v1381 = vpack.c.bf16 %v1365, %v1357
  %v1382 = vpack.c.bf16 %v1366, %v1358
  %v1383 = vpack.c.bf16 %v1367, %v1359
  %v1384 = vpack.c.bf16 %v1368, %v1360
  %v1401 = vunpack.c.l.b16 %v1369
  %v1402 = vunpack.c.l.b16 %v1370
  %v1403 = vunpack.c.l.b16 %v1371
  %v1404 = vunpack.c.l.b16 %v1372
  %v1405 = vunpack.c.l.b16 %v1373
  %v1406 = vunpack.c.l.b16 %v1374
  %v1407 = vunpack.c.l.b16 %v1375
  %v1408 = vunpack.c.l.b16 %v1376
  %v1409 = vunpack.c.h.b16 %v1369
  %v1410 = vunpack.c.h.b16 %v1370
  %v1411 = vunpack.c.h.b16 %v1371
  %v1412 = vunpack.c.h.b16 %v1372
  %v1413 = vunpack.c.h.b16 %v1373
  %v1414 = vunpack.c.h.b16 %v1374
  %v1415 = vunpack.c.h.b16 %v1375
  %v1416 = vunpack.c.h.b16 %v1376
  %v1417 = vunpack.c.l.b16 %v1377
  %v1418 = vunpack.c.l.b16 %v1378
  %v1419 = vunpack.c.l.b16 %v1379
  %v1420 = vunpack.c.l.b16 %v1380
  %v1421 = vunpack.c.l.b16 %v1381
  %v1422 = vunpack.c.l.b16 %v1382
  %v1423 = vunpack.c.l.b16 %v1383
  %v1424 = vunpack.c.l.b16 %v1384
  %v1425 = vunpack.c.h.b16 %v1377
  %v1426 = vunpack.c.h.b16 %v1378
  %v1427 = vunpack.c.h.b16 %v1379
  %v1428 = vunpack.c.h.b16 %v1380
  %v1429 = vunpack.c.h.b16 %v1381
  %v1430 = vunpack.c.h.b16 %v1382
  %v1431 = vunpack.c.h.b16 %v1383
  %v1432 = vunpack.c.h.b16 %v1384
  %v1433 = vpack.c.b16 %v1402, %v1401
  %v1434 = vpack.c.b16 %v1404, %v1403
  %v1435 = vpack.c.b16 %v1406, %v1405
  %v1436 = vpack.c.b16 %v1408, %v1407
  %v1437 = vpack.c.b16 %v1410, %v1409
  %v1438 = vpack.c.b16 %v1412, %v1411
  %v1439 = vpack.c.b16 %v1414, %v1413
  %v1440 = vpack.c.b16 %v1416, %v1415
  %v1441 = vpack.c.b16 %v1418, %v1417
  %v1442 = vpack.c.b16 %v1420, %v1419
  %v1443 = vpack.c.b16 %v1422, %v1421
  %v1444 = vpack.c.b16 %v1424, %v1423
  %v1445 = vpack.c.b16 %v1426, %v1425
  %v1446 = vpack.c.b16 %v1428, %v1427
  %v1447 = vpack.c.b16 %v1430, %v1429
  %v1448 = vpack.c.b16 %v1432, %v1431
  %1465 = vst [vmem:[%s4] sm:$0xff] %v1433
  %1466 = vst [vmem:[%s4 + $0x8] sm:$0xff] %v1434
  %1467 = vst [vmem:[%s4 + $0x10] sm:$0xff] %v1435
  %1468 = vst [vmem:[%s4 + $0x18] sm:$0xff] %v1436
  %1469 = vst [vmem:[%s4 + $0x20] sm:$0xff] %v1437
  %1470 = vst [vmem:[%s4 + $0x28] sm:$0xff] %v1438
  %1471 = vst [vmem:[%s4 + $0x30] sm:$0xff] %v1439
  %1472 = vst [vmem:[%s4 + $0x38] sm:$0xff] %v1440
  %1473 = vst [vmem:[%s4 + $0x40] sm:$0xff] %v1441
  %1474 = vst [vmem:[%s4 + $0x48] sm:$0xff] %v1442
  %1475 = vst [vmem:[%s4 + $0x50] sm:$0xff] %v1443
  %1476 = vst [vmem:[%s4 + $0x58] sm:$0xff] %v1444
  %1477 = vst [vmem:[%s4 + $0x60] sm:$0xff] %v1445
  %1478 = vst [vmem:[%s4 + $0x68] sm:$0xff] %v1446
  %1479 = vst [vmem:[%s4 + $0x70] sm:$0xff] %v1447
  %1480 = vst [vmem:[%s4 + $0x78] sm:$0xff] %v1448
  // Predicated region
  $region18: #{content_encoder_forward.8} parent=0 // pred_check
    _
  $region19: #{content_encoder_forward.8} parent=0 // pred_check_branch
    %1482 = sbr.rel (0) target = $region21
  $region20: #{content_encoder_forward.8} parent=0 // pred_region
    _
  $region21: #{content_encoder_forward.8} parent=0 // pred_fallthru
    _
  // Predicated region
  $region22: #{content_encoder_forward.8} parent=0 // pred_check
    _
  $region23: #{content_encoder_forward.8} parent=0 // pred_check_branch
    %1484 = sbr.rel (0) target = $region25
  $region24: #{content_encoder_forward.8} parent=0 // pred_region
    _
  $region25: #{content_encoder_forward.8} parent=0 // pred_fallthru
    _

// kernel: content_encoder_forward.9
$region0: #{content_encoder_forward.9}
  #allocation0 [shape = 'u32[]', space=smem, size = 0x4, offset = 0x4, fixed_abs, tag = 'smem constant byte address 0x4 - core index']
  #allocation1 [shape = 'u32[144,128]{1,0:T(1,128)}', space=vmem, size = 0x12000, scoped, tag = 'internal scratch']
  %s0 = inlined_call_operand.vmem [shape: bf16[512,256], index: 0, kind: input, shape index: {}]
  %s1 = inlined_call_operand.vmem [shape: bf16[64,512], index: 1, kind: input, shape index: {}]
  %s2 = inlined_call_operand.vmem [shape: f32[64,1], index: 2, kind: input, shape index: {}]
  %s3 = inlined_call_operand.vmem [shape: f32[64,1], index: 3, kind: input, shape index: {}]
  %s4 = inlined_call_operand.vmem [shape: bf16[64,256], index: 4, kind: output, shape index: {}]
  %s5 = sld [smem:[#allocation0]]
  $region26: #{content_encoder_forward.9} parent=0
    _
  %s7 = ssub.s32 1, %s5
  %s8 = scalar_select 0, %s7, %s5
  // Predicated region
  $region2: #{content_encoder_forward.9} parent=0 // pred_check
    _
  $region3: #{content_encoder_forward.9} parent=0 // pred_check_branch
    %10 = sbr.rel (0) target = $region5
  $region4: #{content_encoder_forward.9} parent=0 // pred_region
    _
  $region5: #{content_encoder_forward.9} parent=0 // pred_fallthru
    _
  // Predicated region
  $region6: #{content_encoder_forward.9} parent=0 // pred_check
    _
  $region7: #{content_encoder_forward.9} parent=0 // pred_check_branch
    %12 = sbr.rel (0) target = $region9
  $region8: #{content_encoder_forward.9} parent=0 // pred_region
    _
  $region9: #{content_encoder_forward.9} parent=0 // pred_fallthru
    _
  // Predicated region
  $region10: #{content_encoder_forward.9} parent=0 // pred_check
    _
  $region11: #{content_encoder_forward.9} parent=0 // pred_check_branch
    %14 = sbr.rel (0) target = $region13
  $region12: #{content_encoder_forward.9} parent=0 // pred_region
    _
  $region13: #{content_encoder_forward.9} parent=0 // pred_fallthru
    _
  // Predicated region
  $region14: #{content_encoder_forward.9} parent=0 // pred_check
    _
  $region15: #{content_encoder_forward.9} parent=0 // pred_check_branch
    %16 = sbr.rel (0) target = $region17
  $region16: #{content_encoder_forward.9} parent=0 // pred_region
    _
  $region17: #{content_encoder_forward.9} parent=0 // pred_fallthru
    _
  %v17 = vld [vmem:[%s1] sm:$0xff]
  %v18 = vld [vmem:[%s1 + $0x8] sm:$0xff]
  %v19 = vld [vmem:[%s1 + $0x10] sm:$0xff]
  %v20 = vld [vmem:[%s1 + $0x18] sm:$0xff]
  %v21 = vld [vmem:[%s1 + $0x20] sm:$0xff]
  %v22 = vld [vmem:[%s1 + $0x28] sm:$0xff]
  %v23 = vld [vmem:[%s1 + $0x30] sm:$0xff]
  %v24 = vld [vmem:[%s1 + $0x38] sm:$0xff]
  %v25 = vld [vmem:[%s1 + $0x40] sm:$0xff]
  %v26 = vld [vmem:[%s1 + $0x48] sm:$0xff]
  %v27 = vld [vmem:[%s1 + $0x50] sm:$0xff]
  %v28 = vld [vmem:[%s1 + $0x58] sm:$0xff]
  %v29 = vld [vmem:[%s1 + $0x60] sm:$0xff]
  %v30 = vld [vmem:[%s1 + $0x68] sm:$0xff]
  %v31 = vld [vmem:[%s1 + $0x70] sm:$0xff]
  %v32 = vld [vmem:[%s1 + $0x78] sm:$0xff]
  %v33 = vld [vmem:[%s0] sm:$0xff]
  %v34 = vld [vmem:[%s0 + $0x8] sm:$0xff]
  %v35 = vld [vmem:[%s0 + $0x10] sm:$0xff]
  %v36 = vld [vmem:[%s0 + $0x18] sm:$0xff]
  %v37 = vld [vmem:[%s0 + $0x20] sm:$0xff]
  %v38 = vld [vmem:[%s0 + $0x28] sm:$0xff]
  %v39 = vld [vmem:[%s0 + $0x30] sm:$0xff]
  %v40 = vld [vmem:[%s0 + $0x38] sm:$0xff]
  %v41 = vld [vmem:[%s0 + $0x40] sm:$0xff]
  %v42 = vld [vmem:[%s0 + $0x48] sm:$0xff]
  %v43 = vld [vmem:[%s0 + $0x50] sm:$0xff]
  %v44 = vld [vmem:[%s0 + $0x58] sm:$0xff]
  %v45 = vld [vmem:[%s0 + $0x60] sm:$0xff]
  %v46 = vld [vmem:[%s0 + $0x68] sm:$0xff]
  %v47 = vld [vmem:[%s0 + $0x70] sm:$0xff]
  %v48 = vld [vmem:[%s0 + $0x78] sm:$0xff]
  %v49 = vld [vmem:[%s0 + $0x80] sm:$0xff]
  %v50 = vld [vmem:[%s0 + $0x88] sm:$0xff]
  %v51 = vld [vmem:[%s0 + $0x90] sm:$0xff]
  %v52 = vld [vmem:[%s0 + $0x98] sm:$0xff]
  %v53 = vld [vmem:[%s0 + $0xa0] sm:$0xff]
  %v54 = vld [vmem:[%s0 + $0xa8] sm:$0xff]
  %v55 = vld [vmem:[%s0 + $0xb0] sm:$0xff]
  %v56 = vld [vmem:[%s0 + $0xb8] sm:$0xff]
  %v57 = vld [vmem:[%s0 + $0xc0] sm:$0xff]
  %v58 = vld [vmem:[%s0 + $0xc8] sm:$0xff]
  %v59 = vld [vmem:[%s0 + $0xd0] sm:$0xff]
  %v60 = vld [vmem:[%s0 + $0xd8] sm:$0xff]
  %v61 = vld [vmem:[%s0 + $0xe0] sm:$0xff]
  %v62 = vld [vmem:[%s0 + $0xe8] sm:$0xff]
  %v63 = vld [vmem:[%s0 + $0xf0] sm:$0xff]
  %v64 = vld [vmem:[%s0 + $0xf8] sm:$0xff]
  %v65 = vld [vmem:[%s0 + $0x100] sm:$0xff]
  %v66 = vld [vmem:[%s0 + $0x108] sm:$0xff]
  %v67 = vld [vmem:[%s0 + $0x110] sm:$0xff]
  %v68 = vld [vmem:[%s0 + $0x118] sm:$0xff]
  %v69 = vld [vmem:[%s0 + $0x120] sm:$0xff]
  %v70 = vld [vmem:[%s0 + $0x128] sm:$0xff]
  %v71 = vld [vmem:[%s0 + $0x130] sm:$0xff]
  %v72 = vld [vmem:[%s0 + $0x138] sm:$0xff]
  %v73 = vld [vmem:[%s0 + $0x140] sm:$0xff]
  %v74 = vld [vmem:[%s0 + $0x148] sm:$0xff]
  %v75 = vld [vmem:[%s0 + $0x150] sm:$0xff]
  %v76 = vld [vmem:[%s0 + $0x158] sm:$0xff]
  %v77 = vld [vmem:[%s0 + $0x160] sm:$0xff]
  %v78 = vld [vmem:[%s0 + $0x168] sm:$0xff]
  %v79 = vld [vmem:[%s0 + $0x170] sm:$0xff]
  %v80 = vld [vmem:[%s0 + $0x178] sm:$0xff]
  %v81 = vld [vmem:[%s0 + $0x180] sm:$0xff]
  %v82 = vld [vmem:[%s0 + $0x188] sm:$0xff]
  %v83 = vld [vmem:[%s0 + $0x190] sm:$0xff]
  %v84 = vld [vmem:[%s0 + $0x198] sm:$0xff]
  %v85 = vld [vmem:[%s0 + $0x1a0] sm:$0xff]
  %v86 = vld [vmem:[%s0 + $0x1a8] sm:$0xff]
  %v87 = vld [vmem:[%s0 + $0x1b0] sm:$0xff]
  %v88 = vld [vmem:[%s0 + $0x1b8] sm:$0xff]
  %v89 = vld [vmem:[%s0 + $0x1c0] sm:$0xff]
  %v90 = vld [vmem:[%s0 + $0x1c8] sm:$0xff]
  %v91 = vld [vmem:[%s0 + $0x1d0] sm:$0xff]
  %v92 = vld [vmem:[%s0 + $0x1d8] sm:$0xff]
  %v93 = vld [vmem:[%s0 + $0x1e0] sm:$0xff]
  %v94 = vld [vmem:[%s0 + $0x1e8] sm:$0xff]
  %v95 = vld [vmem:[%s0 + $0x1f0] sm:$0xff]
  %v96 = vld [vmem:[%s0 + $0x1f8] sm:$0xff]
  %v113 = vunpack.c.l.b16 %v17
  %v114 = vunpack.c.h.b16 %v17
  %v115 = vunpack.c.l.b16 %v18
  %v116 = vunpack.c.h.b16 %v18
  %v117 = vunpack.c.l.b16 %v19
  %v118 = vunpack.c.h.b16 %v19
  %v119 = vunpack.c.l.b16 %v20
  %v120 = vunpack.c.h.b16 %v20
  %v121 = vunpack.c.l.b16 %v21
  %v122 = vunpack.c.h.b16 %v21
  %v123 = vunpack.c.l.b16 %v22
  %v124 = vunpack.c.h.b16 %v22
  %v125 = vunpack.c.l.b16 %v23
  %v126 = vunpack.c.h.b16 %v23
  %v127 = vunpack.c.l.b16 %v24
  %v128 = vunpack.c.h.b16 %v24
  %v129 = vunpack.c.l.b16 %v25
  %v130 = vunpack.c.h.b16 %v25
  %v131 = vunpack.c.l.b16 %v26
  %v132 = vunpack.c.h.b16 %v26
  %v133 = vunpack.c.l.b16 %v27
  %v134 = vunpack.c.h.b16 %v27
  %v135 = vunpack.c.l.b16 %v28
  %v136 = vunpack.c.h.b16 %v28
  %v137 = vunpack.c.l.b16 %v29
  %v138 = vunpack.c.h.b16 %v29
  %v139 = vunpack.c.l.b16 %v30
  %v140 = vunpack.c.h.b16 %v30
  %v141 = vunpack.c.l.b16 %v31
  %v142 = vunpack.c.h.b16 %v31
  %v143 = vunpack.c.l.b16 %v32
  %v144 = vunpack.c.h.b16 %v32
  %v145 = vpack.c.b16 %v117, %v113
  %v146 = vpack.c.b16 %v118, %v114
  %v147 = vpack.c.b16 %v119, %v115
  %v148 = vpack.c.b16 %v120, %v116
  %v149 = vpack.c.b16 %v125, %v121
  %v150 = vpack.c.b16 %v126, %v122
  %v151 = vpack.c.b16 %v127, %v123
  %v152 = vpack.c.b16 %v128, %v124
  %v153 = vpack.c.b16 %v133, %v129
  %v154 = vpack.c.b16 %v134, %v130
  %v155 = vpack.c.b16 %v135, %v131
  %v156 = vpack.c.b16 %v136, %v132
  %v157 = vpack.c.b16 %v141, %v137
  %v158 = vpack.c.b16 %v142, %v138
  %v159 = vpack.c.b16 %v143, %v139
  %v160 = vpack.c.b16 %v144, %v140
  %v241 = vunpack.c.l.b16 %v33
  %v242 = vunpack.c.h.b16 %v33
  %v243 = vunpack.c.l.b16 %v34
  %v244 = vunpack.c.h.b16 %v34
  %v245 = vunpack.c.l.b16 %v35
  %v246 = vunpack.c.h.b16 %v35
  %v247 = vunpack.c.l.b16 %v36
  %v248 = vunpack.c.h.b16 %v36
  %v249 = vunpack.c.l.b16 %v37
  %v250 = vunpack.c.h.b16 %v37
  %v251 = vunpack.c.l.b16 %v38
  %v252 = vunpack.c.h.b16 %v38
  %v253 = vunpack.c.l.b16 %v39
  %v254 = vunpack.c.h.b16 %v39
  %v255 = vunpack.c.l.b16 %v40
  %v256 = vunpack.c.h.b16 %v40
  %v257 = vunpack.c.l.b16 %v41
  %v258 = vunpack.c.h.b16 %v41
  %v259 = vunpack.c.l.b16 %v42
  %v260 = vunpack.c.h.b16 %v42
  %v261 = vunpack.c.l.b16 %v43
  %v262 = vunpack.c.h.b16 %v43
  %v263 = vunpack.c.l.b16 %v44
  %v264 = vunpack.c.h.b16 %v44
  %v265 = vunpack.c.l.b16 %v45
  %v266 = vunpack.c.h.b16 %v45
  %v267 = vunpack.c.l.b16 %v46
  %v268 = vunpack.c.h.b16 %v46
  %v269 = vunpack.c.l.b16 %v47
  %v270 = vunpack.c.h.b16 %v47
  %v271 = vunpack.c.l.b16 %v48
  %v272 = vunpack.c.h.b16 %v48
  %v273 = vunpack.c.l.b16 %v49
  %v274 = vunpack.c.h.b16 %v49
  %v275 = vunpack.c.l.b16 %v50
  %v276 = vunpack.c.h.b16 %v50
  %v277 = vunpack.c.l.b16 %v51
  %v278 = vunpack.c.h.b16 %v51
  %v279 = vunpack.c.l.b16 %v52
  %v280 = vunpack.c.h.b16 %v52
  %v281 = vunpack.c.l.b16 %v53
  %v282 = vunpack.c.h.b16 %v53
  %v283 = vunpack.c.l.b16 %v54
  %v284 = vunpack.c.h.b16 %v54
  %v285 = vunpack.c.l.b16 %v55
  %v286 = vunpack.c.h.b16 %v55
  %v287 = vunpack.c.l.b16 %v56
  %v288 = vunpack.c.h.b16 %v56
  %v289 = vunpack.c.l.b16 %v57
  %v290 = vunpack.c.h.b16 %v57
  %v291 = vunpack.c.l.b16 %v58
  %v292 = vunpack.c.h.b16 %v58
  %v293 = vunpack.c.l.b16 %v59
  %v294 = vunpack.c.h.b16 %v59
  %v295 = vunpack.c.l.b16 %v60
  %v296 = vunpack.c.h.b16 %v60
  %v297 = vunpack.c.l.b16 %v61
  %v298 = vunpack.c.h.b16 %v61
  %v299 = vunpack.c.l.b16 %v62
  %v300 = vunpack.c.h.b16 %v62
  %v301 = vunpack.c.l.b16 %v63
  %v302 = vunpack.c.h.b16 %v63
  %v303 = vunpack.c.l.b16 %v64
  %v304 = vunpack.c.h.b16 %v64
  %v305 = vunpack.c.l.b16 %v65
  %v306 = vunpack.c.h.b16 %v65
  %v307 = vunpack.c.l.b16 %v66
  %v308 = vunpack.c.h.b16 %v66
  %v309 = vunpack.c.l.b16 %v67
  %v310 = vunpack.c.h.b16 %v67
  %v311 = vunpack.c.l.b16 %v68
  %v312 = vunpack.c.h.b16 %v68
  %v313 = vunpack.c.l.b16 %v69
  %v314 = vunpack.c.h.b16 %v69
  %v315 = vunpack.c.l.b16 %v70
  %v316 = vunpack.c.h.b16 %v70
  %v317 = vunpack.c.l.b16 %v71
  %v318 = vunpack.c.h.b16 %v71
  %v319 = vunpack.c.l.b16 %v72
  %v320 = vunpack.c.h.b16 %v72
  %v321 = vunpack.c.l.b16 %v73
  %v322 = vunpack.c.h.b16 %v73
  %v323 = vunpack.c.l.b16 %v74
  %v324 = vunpack.c.h.b16 %v74
  %v325 = vunpack.c.l.b16 %v75
  %v326 = vunpack.c.h.b16 %v75
  %v327 = vunpack.c.l.b16 %v76
  %v328 = vunpack.c.h.b16 %v76
  %v329 = vunpack.c.l.b16 %v77
  %v330 = vunpack.c.h.b16 %v77
  %v331 = vunpack.c.l.b16 %v78
  %v332 = vunpack.c.h.b16 %v78
  %v333 = vunpack.c.l.b16 %v79
  %v334 = vunpack.c.h.b16 %v79
  %v335 = vunpack.c.l.b16 %v80
  %v336 = vunpack.c.h.b16 %v80
  %v337 = vunpack.c.l.b16 %v81
  %v338 = vunpack.c.h.b16 %v81
  %v339 = vunpack.c.l.b16 %v82
  %v340 = vunpack.c.h.b16 %v82
  %v341 = vunpack.c.l.b16 %v83
  %v342 = vunpack.c.h.b16 %v83
  %v343 = vunpack.c.l.b16 %v84
  %v344 = vunpack.c.h.b16 %v84
  %v345 = vunpack.c.l.b16 %v85
  %v346 = vunpack.c.h.b16 %v85
  %v347 = vunpack.c.l.b16 %v86
  %v348 = vunpack.c.h.b16 %v86
  %v349 = vunpack.c.l.b16 %v87
  %v350 = vunpack.c.h.b16 %v87
  %v351 = vunpack.c.l.b16 %v88
  %v352 = vunpack.c.h.b16 %v88
  %v353 = vunpack.c.l.b16 %v89
  %v354 = vunpack.c.h.b16 %v89
  %v355 = vunpack.c.l.b16 %v90
  %v356 = vunpack.c.h.b16 %v90
  %v357 = vunpack.c.l.b16 %v91
  %v358 = vunpack.c.h.b16 %v91
  %v359 = vunpack.c.l.b16 %v92
  %v360 = vunpack.c.h.b16 %v92
  %v361 = vunpack.c.l.b16 %v93
  %v362 = vunpack.c.h.b16 %v93
  %v363 = vunpack.c.l.b16 %v94
  %v364 = vunpack.c.h.b16 %v94
  %v365 = vunpack.c.l.b16 %v95
  %v366 = vunpack.c.h.b16 %v95
  %v367 = vunpack.c.l.b16 %v96
  %v368 = vunpack.c.h.b16 %v96
  %v369 = vpack.c.b16 %v243, %v241
  %v370 = vpack.c.b16 %v244, %v242
  %v371 = vpack.c.b16 %v247, %v245
  %v372 = vpack.c.b16 %v248, %v246
  %v373 = vpack.c.b16 %v251, %v249
  %v374 = vpack.c.b16 %v252, %v250
  %v375 = vpack.c.b16 %v255, %v253
  %v376 = vpack.c.b16 %v256, %v254
  %v377 = vpack.c.b16 %v259, %v257
  %v378 = vpack.c.b16 %v260, %v258
  %v379 = vpack.c.b16 %v263, %v261
  %v380 = vpack.c.b16 %v264, %v262
  %v381 = vpack.c.b16 %v267, %v265
  %v382 = vpack.c.b16 %v268, %v266
  %v383 = vpack.c.b16 %v271, %v269
  %v384 = vpack.c.b16 %v272, %v270
  %v385 = vpack.c.b16 %v275, %v273
  %v386 = vpack.c.b16 %v276, %v274
  %v387 = vpack.c.b16 %v279, %v277
  %v388 = vpack.c.b16 %v280, %v278
  %v389 = vpack.c.b16 %v283, %v281
  %v390 = vpack.c.b16 %v284, %v282
  %v391 = vpack.c.b16 %v287, %v285
  %v392 = vpack.c.b16 %v288, %v286
  %v393 = vpack.c.b16 %v291, %v289
  %v394 = vpack.c.b16 %v292, %v290
  %v395 = vpack.c.b16 %v295, %v293
  %v396 = vpack.c.b16 %v296, %v294
  %v397 = vpack.c.b16 %v299, %v297
  %v398 = vpack.c.b16 %v300, %v298
  %v399 = vpack.c.b16 %v303, %v301
  %v400 = vpack.c.b16 %v304, %v302
  %v401 = vpack.c.b16 %v307, %v305
  %v402 = vpack.c.b16 %v308, %v306
  %v403 = vpack.c.b16 %v311, %v309
  %v404 = vpack.c.b16 %v312, %v310
  %v405 = vpack.c.b16 %v315, %v313
  %v406 = vpack.c.b16 %v316, %v314
  %v407 = vpack.c.b16 %v319, %v317
  %v408 = vpack.c.b16 %v320, %v318
  %v409 = vpack.c.b16 %v323, %v321
  %v410 = vpack.c.b16 %v324, %v322
  %v411 = vpack.c.b16 %v327, %v325
  %v412 = vpack.c.b16 %v328, %v326
  %v413 = vpack.c.b16 %v331, %v329
  %v414 = vpack.c.b16 %v332, %v330
  %v415 = vpack.c.b16 %v335, %v333
  %v416 = vpack.c.b16 %v336, %v334
  %v417 = vpack.c.b16 %v339, %v337
  %v418 = vpack.c.b16 %v340, %v338
  %v419 = vpack.c.b16 %v343, %v341
  %v420 = vpack.c.b16 %v344, %v342
  %v421 = vpack.c.b16 %v347, %v345
  %v422 = vpack.c.b16 %v348, %v346
  %v423 = vpack.c.b16 %v351, %v349
  %v424 = vpack.c.b16 %v352, %v350
  %v425 = vpack.c.b16 %v355, %v353
  %v426 = vpack.c.b16 %v356, %v354
  %v427 = vpack.c.b16 %v359, %v357
  %v428 = vpack.c.b16 %v360, %v358
  %v429 = vpack.c.b16 %v363, %v361
  %v430 = vpack.c.b16 %v364, %v362
  %v431 = vpack.c.b16 %v367, %v365
  %v432 = vpack.c.b16 %v368, %v366
  %497 = vmatprep.subr.bf16.mxu0 %v370
  %498 = vmatpush1.bf16.msra.mxu0 %v369
  %499 = vmatprep.subr.bf16.mxu0 %v372
  %500 = vmatpush1.bf16.msra.mxu0 %v371
  %501 = vmatprep.subr.bf16.mxu0 %v374
  %502 = vmatpush1.bf16.msra.mxu0 %v373
  %503 = vmatprep.subr.bf16.mxu0 %v376
  %504 = vmatpush1.bf16.msra.mxu0 %v375
  %505 = vmatprep.subr.bf16.mxu0 %v378
  %506 = vmatpush1.bf16.msra.mxu0 %v377
  %507 = vmatprep.subr.bf16.mxu0 %v380
  %508 = vmatpush1.bf16.msra.mxu0 %v379
  %509 = vmatprep.subr.bf16.mxu0 %v382
  %510 = vmatpush1.bf16.msra.mxu0 %v381
  %511 = vmatprep.subr.bf16.mxu0 %v384
  %512 = vmatpush1.bf16.msra.mxu0 %v383
  %513 = vmatprep.subr.bf16.mxu0 %v386
  %514 = vmatpush1.bf16.msra.mxu0 %v385
  %515 = vmatprep.subr.bf16.mxu0 %v388
  %516 = vmatpush1.bf16.msra.mxu0 %v387
  %517 = vmatprep.subr.bf16.mxu0 %v390
  %518 = vmatpush1.bf16.msra.mxu0 %v389
  %519 = vmatprep.subr.bf16.mxu0 %v392
  %520 = vmatpush1.bf16.msra.mxu0 %v391
  %521 = vmatprep.subr.bf16.mxu0 %v394
  %522 = vmatpush1.bf16.msra.mxu0 %v393
  %523 = vmatprep.subr.bf16.mxu0 %v396
  %524 = vmatpush1.bf16.msra.mxu0 %v395
  %525 = vmatprep.subr.bf16.mxu0 %v398
  %526 = vmatpush1.bf16.msra.mxu0 %v397
  %527 = vmatprep.subr.bf16.mxu0 %v400
  %528 = vmatpush1.bf16.msra.mxu0 %v399
  %529 = vmatprep.mubr.bf16.mxu0 %v146
  %530 = vmatmul.mubr.bf16.gmra.mrb[0].mxu0 %v145
  %v531 = vpop.f32.mrb[0].mxu0
  %v532 = vadd.f32 0.0, %v531
  %v533 = vpop.f32.mrb[0].mxu0
  %v534 = vadd.f32 0.0, %v533
  %v535 = vpop.f32.mrb[0].mxu0
  %v536 = vadd.f32 0.0, %v535
  %v537 = vpop.f32.mrb[0].mxu0
  %v538 = vadd.f32 0.0, %v537
  %539 = vmatprep.mubr.bf16.mxu0 %v150
  %540 = vmatmul.mubr.bf16.gmra.mrb[0].mxu0 %v149
  %v541 = vpop.f32.mrb[0].mxu0
  %v542 = vadd.f32 0.0, %v541
  %v543 = vpop.f32.mrb[0].mxu0
  %v544 = vadd.f32 0.0, %v543
  %v545 = vpop.f32.mrb[0].mxu0
  %v546 = vadd.f32 0.0, %v545
  %v547 = vpop.f32.mrb[0].mxu0
  %v548 = vadd.f32 0.0, %v547
  %549 = vmatprep.mubr.bf16.mxu0 %v154
  %550 = vmatmul.mubr.bf16.gmra.mrb[0].mxu0 %v153
  %v551 = vpop.f32.mrb[0].mxu0
  %v552 = vadd.f32 0.0, %v551
  %v553 = vpop.f32.mrb[0].mxu0
  %v554 = vadd.f32 0.0, %v553
  %v555 = vpop.f32.mrb[0].mxu0
  %v556 = vadd.f32 0.0, %v555
  %v557 = vpop.f32.mrb[0].mxu0
  %v558 = vadd.f32 0.0, %v557
  %559 = vmatprep.mubr.bf16.mxu0 %v158
  %560 = vmatmul.mubr.bf16.gmra.mrb[0].mxu0 %v157
  %v561 = vpop.f32.mrb[0].mxu0
  %v562 = vadd.f32 0.0, %v561
  %v563 = vpop.f32.mrb[0].mxu0
  %v564 = vadd.f32 0.0, %v563
  %v565 = vpop.f32.mrb[0].mxu0
  %v566 = vadd.f32 0.0, %v565
  %v567 = vpop.f32.mrb[0].mxu0
  %v568 = vadd.f32 0.0, %v567
  %569 = vdwg.mxu0
  %570 = vmatprep.subr.bf16.mxu0 %v402
  %571 = vmatpush1.bf16.msra.mxu0 %v401
  %572 = vmatprep.subr.bf16.mxu0 %v404
  %573 = vmatpush1.bf16.msra.mxu0 %v403
  %574 = vmatprep.subr.bf16.mxu0 %v406
  %575 = vmatpush1.bf16.msra.mxu0 %v405
  %576 = vmatprep.subr.bf16.mxu0 %v408
  %577 = vmatpush1.bf16.msra.mxu0 %v407
  %578 = vmatprep.subr.bf16.mxu0 %v410
  %579 = vmatpush1.bf16.msra.mxu0 %v409
  %580 = vmatprep.subr.bf16.mxu0 %v412
  %581 = vmatpush1.bf16.msra.mxu0 %v411
  %582 = vmatprep.subr.bf16.mxu0 %v414
  %583 = vmatpush1.bf16.msra.mxu0 %v413
  %584 = vmatprep.subr.bf16.mxu0 %v416
  %585 = vmatpush1.bf16.msra.mxu0 %v415
  %586 = vmatprep.subr.bf16.mxu0 %v418
  %587 = vmatpush1.bf16.msra.mxu0 %v417
  %588 = vmatprep.subr.bf16.mxu0 %v420
  %589 = vmatpush1.bf16.msra.mxu0 %v419
  %590 = vmatprep.subr.bf16.mxu0 %v422
  %591 = vmatpush1.bf16.msra.mxu0 %v421
  %592 = vmatprep.subr.bf16.mxu0 %v424
  %593 = vmatpush1.bf16.msra.mxu0 %v423
  %594 = vmatprep.subr.bf16.mxu0 %v426
  %595 = vmatpush1.bf16.msra.mxu0 %v425
  %596 = vmatprep.subr.bf16.mxu0 %v428
  %597 = vmatpush1.bf16.msra.mxu0 %v427
  %598 = vmatprep.subr.bf16.mxu0 %v430
  %599 = vmatpush1.bf16.msra.mxu0 %v429
  %600 = vmatprep.subr.bf16.mxu0 %v432
  %601 = vmatpush1.bf16.msra.mxu0 %v431
  %602 = vmatprep.mubr.bf16.mxu0 %v148
  %603 = vmatmul.mubr.bf16.gmra.mrb[0].mxu0 %v147
  %v604 = vpop.f32.mrb[0].mxu0
  %v605 = vadd.f32 %v532, %v604
  %v606 = vpop.f32.mrb[0].mxu0
  %v607 = vadd.f32 %v534, %v606
  %v608 = vpop.f32.mrb[0].mxu0
  %v609 = vadd.f32 %v536, %v608
  %v610 = vpop.f32.mrb[0].mxu0
  %v611 = vadd.f32 %v538, %v610
  %612 = vmatprep.mubr.bf16.mxu0 %v152
  %613 = vmatmul.mubr.bf16.gmra.mrb[0].mxu0 %v151
  %v614 = vpop.f32.mrb[0].mxu0
  %v615 = vadd.f32 %v542, %v614
  %v616 = vpop.f32.mrb[0].mxu0
  %v617 = vadd.f32 %v544, %v616
  %v618 = vpop.f32.mrb[0].mxu0
  %v619 = vadd.f32 %v546, %v618
  %v620 = vpop.f32.mrb[0].mxu0
  %v621 = vadd.f32 %v548, %v620
  %622 = vmatprep.mubr.bf16.mxu0 %v156
  %623 = vmatmul.mubr.bf16.gmra.mrb[0].mxu0 %v155
  %v624 = vpop.f32.mrb[0].mxu0
  %v625 = vadd.f32 %v552, %v624
  %v626 = vpop.f32.mrb[0].mxu0
  %v627 = vadd.f32 %v554, %v626
  %v628 = vpop.f32.mrb[0].mxu0
  %v629 = vadd.f32 %v556, %v628
  %v630 = vpop.f32.mrb[0].mxu0
  %v631 = vadd.f32 %v558, %v630
  %632 = vmatprep.mubr.bf16.mxu0 %v160
  %633 = vmatmul.mubr.bf16.gmra.mrb[0].mxu0 %v159
  %v634 = vpop.f32.mrb[0].mxu0
  %v635 = vadd.f32 %v562, %v634
  %v636 = vpop.f32.mrb[0].mxu0
  %v637 = vadd.f32 %v564, %v636
  %v638 = vpop.f32.mrb[0].mxu0
  %v639 = vadd.f32 %v566, %v638
  %v640 = vpop.f32.mrb[0].mxu0
  %v641 = vadd.f32 %v568, %v640
  %642 = vdwg.mxu0
  %v643 = vadd.f32 %v605, %v607
  %644 = vadd.xlane.f32.xlu0 %v643
  %v645 = vpop.xlane.xlu0 %644
  %v646 = vadd.f32 %v609, %v611
  %647 = vadd.xlane.f32.xlu0 %v646
  %v648 = vpop.xlane.xlu0 %647
  %v649 = vadd.f32 %v615, %v617
  %650 = vadd.xlane.f32.xlu0 %v649
  %v651 = vpop.xlane.xlu0 %650
  %v652 = vadd.f32 %v619, %v621
  %653 = vadd.xlane.f32.xlu0 %v652
  %v654 = vpop.xlane.xlu0 %653
  %v655 = vadd.f32 %v625, %v627
  %656 = vadd.xlane.f32.xlu0 %v655
  %v657 = vpop.xlane.xlu0 %656
  %v658 = vadd.f32 %v629, %v631
  %659 = vadd.xlane.f32.xlu0 %v658
  %v660 = vpop.xlane.xlu0 %659
  %v661 = vadd.f32 %v635, %v637
  %662 = vadd.xlane.f32.xlu0 %v661
  %v663 = vpop.xlane.xlu0 %662
  %v664 = vadd.f32 %v639, %v641
  %665 = vadd.xlane.f32.xlu0 %v664
  %v666 = vpop.xlane.xlu0 %665
  %v667 = vmul.f32 %v645, 0.00390625
  %v668 = vmul.f32 %v648, 0.00390625
  %v669 = vmul.f32 %v651, 0.00390625
  %v670 = vmul.f32 %v654, 0.00390625
  %v671 = vmul.f32 %v657, 0.00390625
  %v672 = vmul.f32 %v660, 0.00390625
  %v673 = vmul.f32 %v663, 0.00390625
  %v674 = vmul.f32 %v666, 0.00390625
  %v675 = vmul.f32 %v605, %v605
  %v676 = vmul.f32 %v607, %v607
  %v677 = vmul.f32 %v609, %v609
  %v678 = vmul.f32 %v611, %v611
  %v679 = vmul.f32 %v615, %v615
  %v680 = vmul.f32 %v617, %v617
  %v681 = vmul.f32 %v619, %v619
  %v682 = vmul.f32 %v621, %v621
  %v683 = vmul.f32 %v625, %v625
  %v684 = vmul.f32 %v627, %v627
  %v685 = vmul.f32 %v629, %v629
  %v686 = vmul.f32 %v631, %v631
  %v687 = vmul.f32 %v635, %v635
  %v688 = vmul.f32 %v637, %v637
  %v689 = vmul.f32 %v639, %v639
  %v690 = vmul.f32 %v641, %v641
  %v691 = vadd.f32 %v675, %v676
  %692 = vadd.xlane.f32.xlu0 %v691
  %v693 = vpop.xlane.xlu0 %692
  %v694 = vadd.f32 %v677, %v678
  %695 = vadd.xlane.f32.xlu0 %v694
  %v696 = vpop.xlane.xlu0 %695
  %v697 = vadd.f32 %v679, %v680
  %698 = vadd.xlane.f32.xlu0 %v697
  %v699 = vpop.xlane.xlu0 %698
  %v700 = vadd.f32 %v681, %v682
  %701 = vadd.xlane.f32.xlu0 %v700
  %v702 = vpop.xlane.xlu0 %701
  %v703 = vadd.f32 %v683, %v684
  %704 = vadd.xlane.f32.xlu0 %v703
  %v705 = vpop.xlane.xlu0 %704
  %v706 = vadd.f32 %v685, %v686
  %707 = vadd.xlane.f32.xlu0 %v706
  %v708 = vpop.xlane.xlu0 %707
  %v709 = vadd.f32 %v687, %v688
  %710 = vadd.xlane.f32.xlu0 %v709
  %v711 = vpop.xlane.xlu0 %710
  %v712 = vadd.f32 %v689, %v690
  %713 = vadd.xlane.f32.xlu0 %v712
  %v714 = vpop.xlane.xlu0 %713
  %v715 = vmul.f32 %v693, 0.00390625
  %v716 = vmul.f32 %v696, 0.00390625
  %v717 = vmul.f32 %v699, 0.00390625
  %v718 = vmul.f32 %v702, 0.00390625
  %v719 = vmul.f32 %v705, 0.00390625
  %v720 = vmul.f32 %v708, 0.00390625
  %v721 = vmul.f32 %v711, 0.00390625
  %v722 = vmul.f32 %v714, 0.00390625
  %v723 = vmul.f32 %v667, %v667
  %v724 = vmul.f32 %v668, %v668
  %v725 = vmul.f32 %v669, %v669
  %v726 = vmul.f32 %v670, %v670
  %v727 = vmul.f32 %v671, %v671
  %v728 = vmul.f32 %v672, %v672
  %v729 = vmul.f32 %v673, %v673
  %v730 = vmul.f32 %v674, %v674
  %v731 = vsub.f32 %v715, %v723
  %v732 = vsub.f32 %v716, %v724
  %v733 = vsub.f32 %v717, %v725
  %v734 = vsub.f32 %v718, %v726
  %v735 = vsub.f32 %v719, %v727
  %v736 = vsub.f32 %v720, %v728
  %v737 = vsub.f32 %v721, %v729
  %v738 = vsub.f32 %v722, %v730
  %v739 = vld [vmem:[%s2] sm:$0xff]
  %v740 = vld [vmem:[%s2 + $0x8] sm:$0xff]
  %v741 = vld [vmem:[%s2 + $0x10] sm:$0xff]
  %v742 = vld [vmem:[%s2 + $0x18] sm:$0xff]
  %v743 = vld [vmem:[%s2 + $0x20] sm:$0xff]
  %v744 = vld [vmem:[%s2 + $0x28] sm:$0xff]
  %v745 = vld [vmem:[%s2 + $0x30] sm:$0xff]
  %v746 = vld [vmem:[%s2 + $0x38] sm:$0xff]
  %v747 = vadd.f32 %v731, 1e-05
  %v748 = vadd.f32 %v732, 1e-05
  %v749 = vadd.f32 %v733, 1e-05
  %v750 = vadd.f32 %v734, 1e-05
  %v751 = vadd.f32 %v735, 1e-05
  %v752 = vadd.f32 %v736, 1e-05
  %v753 = vadd.f32 %v737, 1e-05
  %v754 = vadd.f32 %v738, 1e-05
  %v755 = vrsqrt.pop %v747
  %v756 = vrsqrt.pop %v748
  %v757 = vrsqrt.pop %v749
  %v758 = vrsqrt.pop %v750
  %v759 = vrsqrt.pop %v751
  %v760 = vrsqrt.pop %v752
  %v761 = vrsqrt.pop %v753
  %v762 = vrsqrt.pop %v754
  %v763 = vmul.f32 %v739, %v755
  %v764 = vmul.f32 %v740, %v756
  %v765 = vmul.f32 %v741, %v757
  %v766 = vmul.f32 %v742, %v758
  %v767 = vmul.f32 %v743, %v759
  %v768 = vmul.f32 %v744, %v760
  %v769 = vmul.f32 %v745, %v761
  %v770 = vmul.f32 %v746, %v762
  %v771 = vld [vmem:[%s3] sm:$0xff]
  %v772 = vld [vmem:[%s3 + $0x8] sm:$0xff]
  %v773 = vld [vmem:[%s3 + $0x10] sm:$0xff]
  %v774 = vld [vmem:[%s3 + $0x18] sm:$0xff]
  %v775 = vld [vmem:[%s3 + $0x20] sm:$0xff]
  %v776 = vld [vmem:[%s3 + $0x28] sm:$0xff]
  %v777 = vld [vmem:[%s3 + $0x30] sm:$0xff]
  %v778 = vld [vmem:[%s3 + $0x38] sm:$0xff]
  %v779 = vmul.f32 %v667, %v763
  %v780 = vmul.f32 %v668, %v764
  %v781 = vmul.f32 %v669, %v765
  %v782 = vmul.f32 %v670, %v766
  %v783 = vmul.f32 %v671, %v767
  %v784 = vmul.f32 %v672, %v768
  %v785 = vmul.f32 %v673, %v769
  %v786 = vmul.f32 %v674, %v770
  %v787 = vsub.f32 %v771, %v779
  %v788 = vsub.f32 %v772, %v780
  %v789 = vsub.f32 %v773, %v781
  %v790 = vsub.f32 %v774, %v782
  %v791 = vsub.f32 %v775, %v783
  %v792 = vsub.f32 %v776, %v784
  %v793 = vsub.f32 %v777, %v785
  %v794 = vsub.f32 %v778, %v786
  %796 = vset.pattern.permute.xlu0 0
  %797 = vperm.xlu0 %796, %v763
  %v798 = vpop.permute.xlu0 %797
  %801 = vset.pattern.permute.xlu0 0
  %802 = vperm.xlu0 %801, %v764
  %v803 = vpop.permute.xlu0 %802
  %806 = vset.pattern.permute.xlu0 0
  %807 = vperm.xlu0 %806, %v765
  %v808 = vpop.permute.xlu0 %807
  %811 = vset.pattern.permute.xlu0 0
  %812 = vperm.xlu0 %811, %v766
  %v813 = vpop.permute.xlu0 %812
  %816 = vset.pattern.permute.xlu0 0
  %817 = vperm.xlu0 %816, %v767
  %v818 = vpop.permute.xlu0 %817
  %821 = vset.pattern.permute.xlu0 0
  %822 = vperm.xlu0 %821, %v768
  %v823 = vpop.permute.xlu0 %822
  %826 = vset.pattern.permute.xlu0 0
  %827 = vperm.xlu0 %826, %v769
  %v828 = vpop.permute.xlu0 %827
  %831 = vset.pattern.permute.xlu0 0
  %832 = vperm.xlu0 %831, %v770
  %v833 = vpop.permute.xlu0 %832
  %v835 = vmul.f32 %v605, %v798
  %v836 = vmul.f32 %v607, %v798
  %v837 = vmul.f32 %v609, %v803
  %v838 = vmul.f32 %v611, %v803
  %v839 = vmul.f32 %v615, %v808
  %v840 = vmul.f32 %v617, %v808
  %v841 = vmul.f32 %v619, %v813
  %v842 = vmul.f32 %v621, %v813
  %v843 = vmul.f32 %v625, %v818
  %v844 = vmul.f32 %v627, %v818
  %v845 = vmul.f32 %v629, %v823
  %v846 = vmul.f32 %v631, %v823
  %v847 = vmul.f32 %v635, %v828
  %v848 = vmul.f32 %v637, %v828
  %v849 = vmul.f32 %v639, %v833
  %v850 = vmul.f32 %v641, %v833
  %852 = vset.pattern.permute.xlu0 0
  %853 = vperm.xlu0 %852, %v787
  %v854 = vpop.permute.xlu0 %853
  %857 = vset.pattern.permute.xlu0 0
  %858 = vperm.xlu0 %857, %v788
  %v859 = vpop.permute.xlu0 %858
  %862 = vset.pattern.permute.xlu0 0
  %863 = vperm.xlu0 %862, %v789
  %v864 = vpop.permute.xlu0 %863
  %867 = vset.pattern.permute.xlu0 0
  %868 = vperm.xlu0 %867, %v790
  %v869 = vpop.permute.xlu0 %868
  %872 = vset.pattern.permute.xlu0 0
  %873 = vperm.xlu0 %872, %v791
  %v874 = vpop.permute.xlu0 %873
  %877 = vset.pattern.permute.xlu0 0
  %878 = vperm.xlu0 %877, %v792
  %v879 = vpop.permute.xlu0 %878
  %882 = vset.pattern.permute.xlu0 0
  %883 = vperm.xlu0 %882, %v793
  %v884 = vpop.permute.xlu0 %883
  %887 = vset.pattern.permute.xlu0 0
  %888 = vperm.xlu0 %887, %v794
  %v889 = vpop.permute.xlu0 %888
  %v891 = vadd.f32 %v835, %v854
  %v892 = vadd.f32 %v836, %v854
  %v893 = vadd.f32 %v837, %v859
  %v894 = vadd.f32 %v838, %v859
  %v895 = vadd.f32 %v839, %v864
  %v896 = vadd.f32 %v840, %v864
  %v897 = vadd.f32 %v841, %v869
  %v898 = vadd.f32 %v842, %v869
  %v899 = vadd.f32 %v843, %v874
  %v900 = vadd.f32 %v844, %v874
  %v901 = vadd.f32 %v845, %v879
  %v902 = vadd.f32 %v846, %v879
  %v903 = vadd.f32 %v847, %v884
  %v904 = vadd.f32 %v848, %v884
  %v905 = vadd.f32 %v849, %v889
  %v906 = vadd.f32 %v850, %v889
  %vm907 = vcmp.gt.f32.partialorder %v891, 0.0
  %vm908 = vcmp.gt.f32.partialorder %v892, 0.0
  %vm909 = vcmp.gt.f32.partialorder %v893, 0.0
  %vm910 = vcmp.gt.f32.partialorder %v894, 0.0
  %vm911 = vcmp.gt.f32.partialorder %v895, 0.0
  %vm912 = vcmp.gt.f32.partialorder %v896, 0.0
  %vm913 = vcmp.gt.f32.partialorder %v897, 0.0
  %vm914 = vcmp.gt.f32.partialorder %v898, 0.0
  %vm915 = vcmp.gt.f32.partialorder %v899, 0.0
  %vm916 = vcmp.gt.f32.partialorder %v900, 0.0
  %vm917 = vcmp.gt.f32.partialorder %v901, 0.0
  %vm918 = vcmp.gt.f32.partialorder %v902, 0.0
  %vm919 = vcmp.gt.f32.partialorder %v903, 0.0
  %vm920 = vcmp.gt.f32.partialorder %v904, 0.0
  %vm921 = vcmp.gt.f32.partialorder %v905, 0.0
  %vm922 = vcmp.gt.f32.partialorder %v906, 0.0
  %v923 = vmul.f32 %v891, 0.2
  %v924 = vmul.f32 %v892, 0.2
  %v925 = vmul.f32 %v893, 0.2
  %v926 = vmul.f32 %v894, 0.2
  %v927 = vmul.f32 %v895, 0.2
  %v928 = vmul.f32 %v896, 0.2
  %v929 = vmul.f32 %v897, 0.2
  %v930 = vmul.f32 %v898, 0.2
  %v931 = vmul.f32 %v899, 0.2
  %v932 = vmul.f32 %v900, 0.2
  %v933 = vmul.f32 %v901, 0.2
  %v934 = vmul.f32 %v902, 0.2
  %v935 = vmul.f32 %v903, 0.2
  %v936 = vmul.f32 %v904, 0.2
  %v937 = vmul.f32 %v905, 0.2
  %v938 = vmul.f32 %v906, 0.2
  %v939 = vsel %vm907, %v891, %v923
  %v940 = vsel %vm908, %v892, %v924
  %v941 = vsel %vm909, %v893, %v925
  %v942 = vsel %vm910, %v894, %v926
  %v943 = vsel %vm911, %v895, %v927
  %v944 = vsel %vm912, %v896, %v928
  %v945 = vsel %vm913, %v897, %v929
  %v946 = vsel %vm914, %v898, %v930
  %v947 = vsel %vm915, %v899, %v931
  %v948 = vsel %vm916, %v900, %v932
  %v949 = vsel %vm917, %v901, %v933
  %v950 = vsel %vm918, %v902, %v934
  %v951 = vsel %vm919, %v903, %v935
  %v952 = vsel %vm920, %v904, %v936
  %v953 = vsel %vm921, %v905, %v937
  %v954 = vsel %vm922, %v906, %v938
  %v955 = vpack.c.bf16 %v941, %v939
  %v956 = vpack.c.bf16 %v942, %v940
  %v957 = vpack.c.bf16 %v945, %v943
  %v958 = vpack.c.bf16 %v946, %v944
  %v959 = vpack.c.bf16 %v949, %v947
  %v960 = vpack.c.bf16 %v950, %v948
  %v961 = vpack.c.bf16 %v953, %v951
  %v962 = vpack.c.bf16 %v954, %v952
  %v971 = vunpack.c.l.b16 %v955
  %v972 = vunpack.c.l.b16 %v956
  %v973 = vunpack.c.h.b16 %v955
  %v974 = vunpack.c.h.b16 %v956
  %v975 = vunpack.c.l.b16 %v957
  %v976 = vunpack.c.l.b16 %v958
  %v977 = vunpack.c.h.b16 %v957
  %v978 = vunpack.c.h.b16 %v958
  %v979 = vunpack.c.l.b16 %v959
  %v980 = vunpack.c.l.b16 %v960
  %v981 = vunpack.c.h.b16 %v959
  %v982 = vunpack.c.h.b16 %v960
  %v983 = vunpack.c.l.b16 %v961
  %v984 = vunpack.c.l.b16 %v962
  %v985 = vunpack.c.h.b16 %v961
  %v986 = vunpack.c.h.b16 %v962
  %v987 = vpack.c.b16 %v972, %v971
  %v988 = vpack.c.b16 %v974, %v973
  %v989 = vpack.c.b16 %v976, %v975
  %v990 = vpack.c.b16 %v978, %v977
  %v991 = vpack.c.b16 %v980, %v979
  %v992 = vpack.c.b16 %v982, %v981
  %v993 = vpack.c.b16 %v984, %v983
  %v994 = vpack.c.b16 %v986, %v985
  %1003 = vst [vmem:[%s4] sm:$0xff] %v987
  %1004 = vst [vmem:[%s4 + $0x8] sm:$0xff] %v988
  %1005 = vst [vmem:[%s4 + $0x10] sm:$0xff] %v989
  %1006 = vst [vmem:[%s4 + $0x18] sm:$0xff] %v990
  %1007 = vst [vmem:[%s4 + $0x20] sm:$0xff] %v991
  %1008 = vst [vmem:[%s4 + $0x28] sm:$0xff] %v992
  %1009 = vst [vmem:[%s4 + $0x30] sm:$0xff] %v993
  %1010 = vst [vmem:[%s4 + $0x38] sm:$0xff] %v994
  // Predicated region
  $region18: #{content_encoder_forward.9} parent=0 // pred_check
    _
  $region19: #{content_encoder_forward.9} parent=0 // pred_check_branch
    %1012 = sbr.rel (0) target = $region21
  $region20: #{content_encoder_forward.9} parent=0 // pred_region
    _
  $region21: #{content_encoder_forward.9} parent=0 // pred_fallthru
    _
  // Predicated region
  $region22: #{content_encoder_forward.9} parent=0 // pred_check
    _
  $region23: #{content_encoder_forward.9} parent=0 // pred_check_branch
    %1014 = sbr.rel (0) target = $region25
  $region24: #{content_encoder_forward.9} parent=0 // pred_region
    _
  $region25: #{content_encoder_forward.9} parent=0 // pred_fallthru
    _

// kernel: content_encoder_forward.10
$region0: #{content_encoder_forward.10}
  #allocation0 [shape = 'u32[]', space=smem, size = 0x4, offset = 0x4, fixed_abs, tag = 'smem constant byte address 0x4 - core index']
  #allocation1 [shape = 'u32[144,128]{1,0:T(1,128)}', space=vmem, size = 0x12000, scoped, tag = 'internal scratch']
  %s0 = inlined_call_operand.vmem [shape: bf16[1024,64], index: 0, kind: input, shape index: {}]
  %s1 = inlined_call_operand.vmem [shape: bf16[64,1024], index: 1, kind: input, shape index: {}]
  %s2 = inlined_call_operand.vmem [shape: f32[64,1], index: 2, kind: input, shape index: {}]
  %s3 = inlined_call_operand.vmem [shape: f32[64,1], index: 3, kind: input, shape index: {}]
  %s4 = inlined_call_operand.vmem [shape: bf16[64,64], index: 4, kind: output, shape index: {}]
  %s5 = sld [smem:[#allocation0]]
  $region26: #{content_encoder_forward.10} parent=0
    _
  %s7 = ssub.s32 1, %s5
  %s8 = scalar_select 0, %s7, %s5
  // Predicated region
  $region2: #{content_encoder_forward.10} parent=0 // pred_check
    _
  $region3: #{content_encoder_forward.10} parent=0 // pred_check_branch
    %10 = sbr.rel (0) target = $region5
  $region4: #{content_encoder_forward.10} parent=0 // pred_region
    _
  $region5: #{content_encoder_forward.10} parent=0 // pred_fallthru
    _
  // Predicated region
  $region6: #{content_encoder_forward.10} parent=0 // pred_check
    _
  $region7: #{content_encoder_forward.10} parent=0 // pred_check_branch
    %12 = sbr.rel (0) target = $region9
  $region8: #{content_encoder_forward.10} parent=0 // pred_region
    _
  $region9: #{content_encoder_forward.10} parent=0 // pred_fallthru
    _
  // Predicated region
  $region10: #{content_encoder_forward.10} parent=0 // pred_check
    _
  $region11: #{content_encoder_forward.10} parent=0 // pred_check_branch
    %14 = sbr.rel (0) target = $region13
  $region12: #{content_encoder_forward.10} parent=0 // pred_region
    _
  $region13: #{content_encoder_forward.10} parent=0 // pred_fallthru
    _
  // Predicated region
  $region14: #{content_encoder_forward.10} parent=0 // pred_check
    _
  $region15: #{content_encoder_forward.10} parent=0 // pred_check_branch
    %16 = sbr.rel (0) target = $region17
  $region16: #{content_encoder_forward.10} parent=0 // pred_region
    _
  $region17: #{content_encoder_forward.10} parent=0 // pred_fallthru
    _
  %v18 = vld [vmem:[%s1] sm:$0xff]
  %v19 = vld [vmem:[%s1 + $0x8] sm:$0xff]
  %v20 = vld [vmem:[%s1 + $0x10] sm:$0xff]
  %v21 = vld [vmem:[%s1 + $0x18] sm:$0xff]
  %v22 = vld [vmem:[%s1 + $0x20] sm:$0xff]
  %v23 = vld [vmem:[%s1 + $0x28] sm:$0xff]
  %v24 = vld [vmem:[%s1 + $0x30] sm:$0xff]
  %v25 = vld [vmem:[%s1 + $0x38] sm:$0xff]
  %v26 = vld [vmem:[%s1 + $0x40] sm:$0xff]
  %v27 = vld [vmem:[%s1 + $0x48] sm:$0xff]
  %v28 = vld [vmem:[%s1 + $0x50] sm:$0xff]
  %v29 = vld [vmem:[%s1 + $0x58] sm:$0xff]
  %v30 = vld [vmem:[%s1 + $0x60] sm:$0xff]
  %v31 = vld [vmem:[%s1 + $0x68] sm:$0xff]
  %v32 = vld [vmem:[%s1 + $0x70] sm:$0xff]
  %v33 = vld [vmem:[%s1 + $0x78] sm:$0xff]
  %v34 = vld [vmem:[%s1 + $0x80] sm:$0xff]
  %v35 = vld [vmem:[%s1 + $0x88] sm:$0xff]
  %v36 = vld [vmem:[%s1 + $0x90] sm:$0xff]
  %v37 = vld [vmem:[%s1 + $0x98] sm:$0xff]
  %v38 = vld [vmem:[%s1 + $0xa0] sm:$0xff]
  %v39 = vld [vmem:[%s1 + $0xa8] sm:$0xff]
  %v40 = vld [vmem:[%s1 + $0xb0] sm:$0xff]
  %v41 = vld [vmem:[%s1 + $0xb8] sm:$0xff]
  %v42 = vld [vmem:[%s1 + $0xc0] sm:$0xff]
  %v43 = vld [vmem:[%s1 + $0xc8] sm:$0xff]
  %v44 = vld [vmem:[%s1 + $0xd0] sm:$0xff]
  %v45 = vld [vmem:[%s1 + $0xd8] sm:$0xff]
  %v46 = vld [vmem:[%s1 + $0xe0] sm:$0xff]
  %v47 = vld [vmem:[%s1 + $0xe8] sm:$0xff]
  %v48 = vld [vmem:[%s1 + $0xf0] sm:$0xff]
  %v49 = vld [vmem:[%s1 + $0xf8] sm:$0xff]
  %v50 = vld [vmem:[%s0] sm:$0xf]
  %v51 = vld [vmem:[%s0 + $0x4] sm:$0xf]
  %v52 = vld [vmem:[%s0 + $0x8] sm:$0xf]
  %v53 = vld [vmem:[%s0 + $0xc] sm:$0xf]
  %v54 = vld [vmem:[%s0 + $0x10] sm:$0xf]
  %v55 = vld [vmem:[%s0 + $0x14] sm:$0xf]
  %v56 = vld [vmem:[%s0 + $0x18] sm:$0xf]
  %v57 = vld [vmem:[%s0 + $0x1c] sm:$0xf]
  %v58 = vld [vmem:[%s0 + $0x20] sm:$0xf]
  %v59 = vld [vmem:[%s0 + $0x24] sm:$0xf]
  %v60 = vld [vmem:[%s0 + $0x28] sm:$0xf]
  %v61 = vld [vmem:[%s0 + $0x2c] sm:$0xf]
  %v62 = vld [vmem:[%s0 + $0x30] sm:$0xf]
  %v63 = vld [vmem:[%s0 + $0x34] sm:$0xf]
  %v64 = vld [vmem:[%s0 + $0x38] sm:$0xf]
  %v65 = vld [vmem:[%s0 + $0x3c] sm:$0xf]
  %v66 = vld [vmem:[%s0 + $0x40] sm:$0xf]
  %v67 = vld [vmem:[%s0 + $0x44] sm:$0xf]
  %v68 = vld [vmem:[%s0 + $0x48] sm:$0xf]
  %v69 = vld [vmem:[%s0 + $0x4c] sm:$0xf]
  %v70 = vld [vmem:[%s0 + $0x50] sm:$0xf]
  %v71 = vld [vmem:[%s0 + $0x54] sm:$0xf]
  %v72 = vld [vmem:[%s0 + $0x58] sm:$0xf]
  %v73 = vld [vmem:[%s0 + $0x5c] sm:$0xf]
  %v74 = vld [vmem:[%s0 + $0x60] sm:$0xf]
  %v75 = vld [vmem:[%s0 + $0x64] sm:$0xf]
  %v76 = vld [vmem:[%s0 + $0x68] sm:$0xf]
  %v77 = vld [vmem:[%s0 + $0x6c] sm:$0xf]
  %v78 = vld [vmem:[%s0 + $0x70] sm:$0xf]
  %v79 = vld [vmem:[%s0 + $0x74] sm:$0xf]
  %v80 = vld [vmem:[%s0 + $0x78] sm:$0xf]
  %v81 = vld [vmem:[%s0 + $0x7c] sm:$0xf]
  %v82 = vld [vmem:[%s0 + $0x80] sm:$0xf]
  %v83 = vld [vmem:[%s0 + $0x84] sm:$0xf]
  %v84 = vld [vmem:[%s0 + $0x88] sm:$0xf]
  %v85 = vld [vmem:[%s0 + $0x8c] sm:$0xf]
  %v86 = vld [vmem:[%s0 + $0x90] sm:$0xf]
  %v87 = vld [vmem:[%s0 + $0x94] sm:$0xf]
  %v88 = vld [vmem:[%s0 + $0x98] sm:$0xf]
  %v89 = vld [vmem:[%s0 + $0x9c] sm:$0xf]
  %v90 = vld [vmem:[%s0 + $0xa0] sm:$0xf]
  %v91 = vld [vmem:[%s0 + $0xa4] sm:$0xf]
  %v92 = vld [vmem:[%s0 + $0xa8] sm:$0xf]
  %v93 = vld [vmem:[%s0 + $0xac] sm:$0xf]
  %v94 = vld [vmem:[%s0 + $0xb0] sm:$0xf]
  %v95 = vld [vmem:[%s0 + $0xb4] sm:$0xf]
  %v96 = vld [vmem:[%s0 + $0xb8] sm:$0xf]
  %v97 = vld [vmem:[%s0 + $0xbc] sm:$0xf]
  %v98 = vld [vmem:[%s0 + $0xc0] sm:$0xf]
  %v99 = vld [vmem:[%s0 + $0xc4] sm:$0xf]
  %v100 = vld [vmem:[%s0 + $0xc8] sm:$0xf]
  %v101 = vld [vmem:[%s0 + $0xcc] sm:$0xf]
  %v102 = vld [vmem:[%s0 + $0xd0] sm:$0xf]
  %v103 = vld [vmem:[%s0 + $0xd4] sm:$0xf]
  %v104 = vld [vmem:[%s0 + $0xd8] sm:$0xf]
  %v105 = vld [vmem:[%s0 + $0xdc] sm:$0xf]
  %v106 = vld [vmem:[%s0 + $0xe0] sm:$0xf]
  %v107 = vld [vmem:[%s0 + $0xe4] sm:$0xf]
  %v108 = vld [vmem:[%s0 + $0xe8] sm:$0xf]
  %v109 = vld [vmem:[%s0 + $0xec] sm:$0xf]
  %v110 = vld [vmem:[%s0 + $0xf0] sm:$0xf]
  %v111 = vld [vmem:[%s0 + $0xf4] sm:$0xf]
  %v112 = vld [vmem:[%s0 + $0xf8] sm:$0xf]
  %v113 = vld [vmem:[%s0 + $0xfc] sm:$0xf]
  %v114 = vld [vmem:[%s0 + $0x100] sm:$0xf]
  %v115 = vld [vmem:[%s0 + $0x104] sm:$0xf]
  %v116 = vld [vmem:[%s0 + $0x108] sm:$0xf]
  %v117 = vld [vmem:[%s0 + $0x10c] sm:$0xf]
  %v118 = vld [vmem:[%s0 + $0x110] sm:$0xf]
  %v119 = vld [vmem:[%s0 + $0x114] sm:$0xf]
  %v120 = vld [vmem:[%s0 + $0x118] sm:$0xf]
  %v121 = vld [vmem:[%s0 + $0x11c] sm:$0xf]
  %v122 = vld [vmem:[%s0 + $0x120] sm:$0xf]
  %v123 = vld [vmem:[%s0 + $0x124] sm:$0xf]
  %v124 = vld [vmem:[%s0 + $0x128] sm:$0xf]
  %v125 = vld [vmem:[%s0 + $0x12c] sm:$0xf]
  %v126 = vld [vmem:[%s0 + $0x130] sm:$0xf]
  %v127 = vld [vmem:[%s0 + $0x134] sm:$0xf]
  %v128 = vld [vmem:[%s0 + $0x138] sm:$0xf]
  %v129 = vld [vmem:[%s0 + $0x13c] sm:$0xf]
  %v130 = vld [vmem:[%s0 + $0x140] sm:$0xf]
  %v131 = vld [vmem:[%s0 + $0x144] sm:$0xf]
  %v132 = vld [vmem:[%s0 + $0x148] sm:$0xf]
  %v133 = vld [vmem:[%s0 + $0x14c] sm:$0xf]
  %v134 = vld [vmem:[%s0 + $0x150] sm:$0xf]
  %v135 = vld [vmem:[%s0 + $0x154] sm:$0xf]
  %v136 = vld [vmem:[%s0 + $0x158] sm:$0xf]
  %v137 = vld [vmem:[%s0 + $0x15c] sm:$0xf]
  %v138 = vld [vmem:[%s0 + $0x160] sm:$0xf]
  %v139 = vld [vmem:[%s0 + $0x164] sm:$0xf]
  %v140 = vld [vmem:[%s0 + $0x168] sm:$0xf]
  %v141 = vld [vmem:[%s0 + $0x16c] sm:$0xf]
  %v142 = vld [vmem:[%s0 + $0x170] sm:$0xf]
  %v143 = vld [vmem:[%s0 + $0x174] sm:$0xf]
  %v144 = vld [vmem:[%s0 + $0x178] sm:$0xf]
  %v145 = vld [vmem:[%s0 + $0x17c] sm:$0xf]
  %v146 = vld [vmem:[%s0 + $0x180] sm:$0xf]
  %v147 = vld [vmem:[%s0 + $0x184] sm:$0xf]
  %v148 = vld [vmem:[%s0 + $0x188] sm:$0xf]
  %v149 = vld [vmem:[%s0 + $0x18c] sm:$0xf]
  %v150 = vld [vmem:[%s0 + $0x190] sm:$0xf]
  %v151 = vld [vmem:[%s0 + $0x194] sm:$0xf]
  %v152 = vld [vmem:[%s0 + $0x198] sm:$0xf]
  %v153 = vld [vmem:[%s0 + $0x19c] sm:$0xf]
  %v154 = vld [vmem:[%s0 + $0x1a0] sm:$0xf]
  %v155 = vld [vmem:[%s0 + $0x1a4] sm:$0xf]
  %v156 = vld [vmem:[%s0 + $0x1a8] sm:$0xf]
  %v157 = vld [vmem:[%s0 + $0x1ac] sm:$0xf]
  %v158 = vld [vmem:[%s0 + $0x1b0] sm:$0xf]
  %v159 = vld [vmem:[%s0 + $0x1b4] sm:$0xf]
  %v160 = vld [vmem:[%s0 + $0x1b8] sm:$0xf]
  %v161 = vld [vmem:[%s0 + $0x1bc] sm:$0xf]
  %v162 = vld [vmem:[%s0 + $0x1c0] sm:$0xf]
  %v163 = vld [vmem:[%s0 + $0x1c4] sm:$0xf]
  %v164 = vld [vmem:[%s0 + $0x1c8] sm:$0xf]
  %v165 = vld [vmem:[%s0 + $0x1cc] sm:$0xf]
  %v166 = vld [vmem:[%s0 + $0x1d0] sm:$0xf]
  %v167 = vld [vmem:[%s0 + $0x1d4] sm:$0xf]
  %v168 = vld [vmem:[%s0 + $0x1d8] sm:$0xf]
  %v169 = vld [vmem:[%s0 + $0x1dc] sm:$0xf]
  %v170 = vld [vmem:[%s0 + $0x1e0] sm:$0xf]
  %v171 = vld [vmem:[%s0 + $0x1e4] sm:$0xf]
  %v172 = vld [vmem:[%s0 + $0x1e8] sm:$0xf]
  %v173 = vld [vmem:[%s0 + $0x1ec] sm:$0xf]
  %v174 = vld [vmem:[%s0 + $0x1f0] sm:$0xf]
  %v175 = vld [vmem:[%s0 + $0x1f4] sm:$0xf]
  %v176 = vld [vmem:[%s0 + $0x1f8] sm:$0xf]
  %v177 = vld [vmem:[%s0 + $0x1fc] sm:$0xf]
  %v210 = vunpack.c.l.b16 %v18
  %v211 = vunpack.c.h.b16 %v18
  %v212 = vunpack.c.l.b16 %v19
  %v213 = vunpack.c.h.b16 %v19
  %v214 = vunpack.c.l.b16 %v20
  %v215 = vunpack.c.h.b16 %v20
  %v216 = vunpack.c.l.b16 %v21
  %v217 = vunpack.c.h.b16 %v21
  %v218 = vunpack.c.l.b16 %v22
  %v219 = vunpack.c.h.b16 %v22
  %v220 = vunpack.c.l.b16 %v23
  %v221 = vunpack.c.h.b16 %v23
  %v222 = vunpack.c.l.b16 %v24
  %v223 = vunpack.c.h.b16 %v24
  %v224 = vunpack.c.l.b16 %v25
  %v225 = vunpack.c.h.b16 %v25
  %v226 = vunpack.c.l.b16 %v26
  %v227 = vunpack.c.h.b16 %v26
  %v228 = vunpack.c.l.b16 %v27
  %v229 = vunpack.c.h.b16 %v27
  %v230 = vunpack.c.l.b16 %v28
  %v231 = vunpack.c.h.b16 %v28
  %v232 = vunpack.c.l.b16 %v29
  %v233 = vunpack.c.h.b16 %v29
  %v234 = vunpack.c.l.b16 %v30
  %v235 = vunpack.c.h.b16 %v30
  %v236 = vunpack.c.l.b16 %v31
  %v237 = vunpack.c.h.b16 %v31
  %v238 = vunpack.c.l.b16 %v32
  %v239 = vunpack.c.h.b16 %v32
  %v240 = vunpack.c.l.b16 %v33
  %v241 = vunpack.c.h.b16 %v33
  %v242 = vunpack.c.l.b16 %v34
  %v243 = vunpack.c.h.b16 %v34
  %v244 = vunpack.c.l.b16 %v35
  %v245 = vunpack.c.h.b16 %v35
  %v246 = vunpack.c.l.b16 %v36
  %v247 = vunpack.c.h.b16 %v36
  %v248 = vunpack.c.l.b16 %v37
  %v249 = vunpack.c.h.b16 %v37
  %v250 = vunpack.c.l.b16 %v38
  %v251 = vunpack.c.h.b16 %v38
  %v252 = vunpack.c.l.b16 %v39
  %v253 = vunpack.c.h.b16 %v39
  %v254 = vunpack.c.l.b16 %v40
  %v255 = vunpack.c.h.b16 %v40
  %v256 = vunpack.c.l.b16 %v41
  %v257 = vunpack.c.h.b16 %v41
  %v258 = vunpack.c.l.b16 %v42
  %v259 = vunpack.c.h.b16 %v42
  %v260 = vunpack.c.l.b16 %v43
  %v261 = vunpack.c.h.b16 %v43
  %v262 = vunpack.c.l.b16 %v44
  %v263 = vunpack.c.h.b16 %v44
  %v264 = vunpack.c.l.b16 %v45
  %v265 = vunpack.c.h.b16 %v45
  %v266 = vunpack.c.l.b16 %v46
  %v267 = vunpack.c.h.b16 %v46
  %v268 = vunpack.c.l.b16 %v47
  %v269 = vunpack.c.h.b16 %v47
  %v270 = vunpack.c.l.b16 %v48
  %v271 = vunpack.c.h.b16 %v48
  %v272 = vunpack.c.l.b16 %v49
  %v273 = vunpack.c.h.b16 %v49
  %v274 = vpack.c.b16 %v218, %v210
  %v275 = vpack.c.b16 %v219, %v211
  %v276 = vpack.c.b16 %v220, %v212
  %v277 = vpack.c.b16 %v221, %v213
  %v278 = vpack.c.b16 %v222, %v214
  %v279 = vpack.c.b16 %v223, %v215
  %v280 = vpack.c.b16 %v224, %v216
  %v281 = vpack.c.b16 %v225, %v217
  %v282 = vpack.c.b16 %v234, %v226
  %v283 = vpack.c.b16 %v235, %v227
  %v284 = vpack.c.b16 %v236, %v228
  %v285 = vpack.c.b16 %v237, %v229
  %v286 = vpack.c.b16 %v238, %v230
  %v287 = vpack.c.b16 %v239, %v231
  %v288 = vpack.c.b16 %v240, %v232
  %v289 = vpack.c.b16 %v241, %v233
  %v290 = vpack.c.b16 %v250, %v242
  %v291 = vpack.c.b16 %v251, %v243
  %v292 = vpack.c.b16 %v252, %v244
  %v293 = vpack.c.b16 %v253, %v245
  %v294 = vpack.c.b16 %v254, %v246
  %v295 = vpack.c.b16 %v255, %v247
  %v296 = vpack.c.b16 %v256, %v248
  %v297 = vpack.c.b16 %v257, %v249
  %v298 = vpack.c.b16 %v266, %v258
  %v299 = vpack.c.b16 %v267, %v259
  %v300 = vpack.c.b16 %v268, %v260
  %v301 = vpack.c.b16 %v269, %v261
  %v302 = vpack.c.b16 %v270, %v262
  %v303 = vpack.c.b16 %v271, %v263
  %v304 = vpack.c.b16 %v272, %v264
  %v305 = vpack.c.b16 %v273, %v265
  %v466 = vunpack.c.l.b16 %v50
  %v467 = vunpack.c.l.b16 %v51
  %v468 = vunpack.c.l.b16 %v52
  %v469 = vunpack.c.l.b16 %v53
  %v470 = vunpack.c.l.b16 %v54
  %v471 = vunpack.c.l.b16 %v55
  %v472 = vunpack.c.l.b16 %v56
  %v473 = vunpack.c.l.b16 %v57
  %v474 = vunpack.c.l.b16 %v58
  %v475 = vunpack.c.l.b16 %v59
  %v476 = vunpack.c.l.b16 %v60
  %v477 = vunpack.c.l.b16 %v61
  %v478 = vunpack.c.l.b16 %v62
  %v479 = vunpack.c.l.b16 %v63
  %v480 = vunpack.c.l.b16 %v64
  %v481 = vunpack.c.l.b16 %v65
  %v482 = vunpack.c.l.b16 %v66
  %v483 = vunpack.c.l.b16 %v67
  %v484 = vunpack.c.l.b16 %v68
  %v485 = vunpack.c.l.b16 %v69
  %v486 = vunpack.c.l.b16 %v70
  %v487 = vunpack.c.l.b16 %v71
  %v488 = vunpack.c.l.b16 %v72
  %v489 = vunpack.c.l.b16 %v73
  %v490 = vunpack.c.l.b16 %v74
  %v491 = vunpack.c.l.b16 %v75
  %v492 = vunpack.c.l.b16 %v76
  %v493 = vunpack.c.l.b16 %v77
  %v494 = vunpack.c.l.b16 %v78
  %v495 = vunpack.c.l.b16 %v79
  %v496 = vunpack.c.l.b16 %v80
  %v497 = vunpack.c.l.b16 %v81
  %v498 = vunpack.c.l.b16 %v82
  %v499 = vunpack.c.l.b16 %v83
  %v500 = vunpack.c.l.b16 %v84
  %v501 = vunpack.c.l.b16 %v85
  %v502 = vunpack.c.l.b16 %v86
  %v503 = vunpack.c.l.b16 %v87
  %v504 = vunpack.c.l.b16 %v88
  %v505 = vunpack.c.l.b16 %v89
  %v506 = vunpack.c.l.b16 %v90
  %v507 = vunpack.c.l.b16 %v91
  %v508 = vunpack.c.l.b16 %v92
  %v509 = vunpack.c.l.b16 %v93
  %v510 = vunpack.c.l.b16 %v94
  %v511 = vunpack.c.l.b16 %v95
  %v512 = vunpack.c.l.b16 %v96
  %v513 = vunpack.c.l.b16 %v97
  %v514 = vunpack.c.l.b16 %v98
  %v515 = vunpack.c.l.b16 %v99
  %v516 = vunpack.c.l.b16 %v100
  %v517 = vunpack.c.l.b16 %v101
  %v518 = vunpack.c.l.b16 %v102
  %v519 = vunpack.c.l.b16 %v103
  %v520 = vunpack.c.l.b16 %v104
  %v521 = vunpack.c.l.b16 %v105
  %v522 = vunpack.c.l.b16 %v106
  %v523 = vunpack.c.l.b16 %v107
  %v524 = vunpack.c.l.b16 %v108
  %v525 = vunpack.c.l.b16 %v109
  %v526 = vunpack.c.l.b16 %v110
  %v527 = vunpack.c.l.b16 %v111
  %v528 = vunpack.c.l.b16 %v112
  %v529 = vunpack.c.l.b16 %v113
  %v530 = vunpack.c.l.b16 %v114
  %v531 = vunpack.c.l.b16 %v115
  %v532 = vunpack.c.l.b16 %v116
  %v533 = vunpack.c.l.b16 %v117
  %v534 = vunpack.c.l.b16 %v118
  %v535 = vunpack.c.l.b16 %v119
  %v536 = vunpack.c.l.b16 %v120
  %v537 = vunpack.c.l.b16 %v121
  %v538 = vunpack.c.l.b16 %v122
  %v539 = vunpack.c.l.b16 %v123
  %v540 = vunpack.c.l.b16 %v124
  %v541 = vunpack.c.l.b16 %v125
  %v542 = vunpack.c.l.b16 %v126
  %v543 = vunpack.c.l.b16 %v127
  %v544 = vunpack.c.l.b16 %v128
  %v545 = vunpack.c.l.b16 %v129
  %v546 = vunpack.c.l.b16 %v130
  %v547 = vunpack.c.l.b16 %v131
  %v548 = vunpack.c.l.b16 %v132
  %v549 = vunpack.c.l.b16 %v133
  %v550 = vunpack.c.l.b16 %v134
  %v551 = vunpack.c.l.b16 %v135
  %v552 = vunpack.c.l.b16 %v136
  %v553 = vunpack.c.l.b16 %v137
  %v554 = vunpack.c.l.b16 %v138
  %v555 = vunpack.c.l.b16 %v139
  %v556 = vunpack.c.l.b16 %v140
  %v557 = vunpack.c.l.b16 %v141
  %v558 = vunpack.c.l.b16 %v142
  %v559 = vunpack.c.l.b16 %v143
  %v560 = vunpack.c.l.b16 %v144
  %v561 = vunpack.c.l.b16 %v145
  %v562 = vunpack.c.l.b16 %v146
  %v563 = vunpack.c.l.b16 %v147
  %v564 = vunpack.c.l.b16 %v148
  %v565 = vunpack.c.l.b16 %v149
  %v566 = vunpack.c.l.b16 %v150
  %v567 = vunpack.c.l.b16 %v151
  %v568 = vunpack.c.l.b16 %v152
  %v569 = vunpack.c.l.b16 %v153
  %v570 = vunpack.c.l.b16 %v154
  %v571 = vunpack.c.l.b16 %v155
  %v572 = vunpack.c.l.b16 %v156
  %v573 = vunpack.c.l.b16 %v157
  %v574 = vunpack.c.l.b16 %v158
  %v575 = vunpack.c.l.b16 %v159
  %v576 = vunpack.c.l.b16 %v160
  %v577 = vunpack.c.l.b16 %v161
  %v578 = vunpack.c.l.b16 %v162
  %v579 = vunpack.c.l.b16 %v163
  %v580 = vunpack.c.l.b16 %v164
  %v581 = vunpack.c.l.b16 %v165
  %v582 = vunpack.c.l.b16 %v166
  %v583 = vunpack.c.l.b16 %v167
  %v584 = vunpack.c.l.b16 %v168
  %v585 = vunpack.c.l.b16 %v169
  %v586 = vunpack.c.l.b16 %v170
  %v587 = vunpack.c.l.b16 %v171
  %v588 = vunpack.c.l.b16 %v172
  %v589 = vunpack.c.l.b16 %v173
  %v590 = vunpack.c.l.b16 %v174
  %v591 = vunpack.c.l.b16 %v175
  %v592 = vunpack.c.l.b16 %v176
  %v593 = vunpack.c.l.b16 %v177
  %v594 = vpack.c.b16 %v467, %v466
  %v595 = vpack.c.b16 %v469, %v468
  %v596 = vpack.c.b16 %v471, %v470
  %v597 = vpack.c.b16 %v473, %v472
  %v598 = vpack.c.b16 %v475, %v474
  %v599 = vpack.c.b16 %v477, %v476
  %v600 = vpack.c.b16 %v479, %v478
  %v601 = vpack.c.b16 %v481, %v480
  %v602 = vpack.c.b16 %v483, %v482
  %v603 = vpack.c.b16 %v485, %v484
  %v604 = vpack.c.b16 %v487, %v486
  %v605 = vpack.c.b16 %v489, %v488
  %v606 = vpack.c.b16 %v491, %v490
  %v607 = vpack.c.b16 %v493, %v492
  %v608 = vpack.c.b16 %v495, %v494
  %v609 = vpack.c.b16 %v497, %v496
  %v610 = vpack.c.b16 %v499, %v498
  %v611 = vpack.c.b16 %v501, %v500
  %v612 = vpack.c.b16 %v503, %v502
  %v613 = vpack.c.b16 %v505, %v504
  %v614 = vpack.c.b16 %v507, %v506
  %v615 = vpack.c.b16 %v509, %v508
  %v616 = vpack.c.b16 %v511, %v510
  %v617 = vpack.c.b16 %v513, %v512
  %v618 = vpack.c.b16 %v515, %v514
  %v619 = vpack.c.b16 %v517, %v516
  %v620 = vpack.c.b16 %v519, %v518
  %v621 = vpack.c.b16 %v521, %v520
  %v622 = vpack.c.b16 %v523, %v522
  %v623 = vpack.c.b16 %v525, %v524
  %v624 = vpack.c.b16 %v527, %v526
  %v625 = vpack.c.b16 %v529, %v528
  %v626 = vpack.c.b16 %v531, %v530
  %v627 = vpack.c.b16 %v533, %v532
  %v628 = vpack.c.b16 %v535, %v534
  %v629 = vpack.c.b16 %v537, %v536
  %v630 = vpack.c.b16 %v539, %v538
  %v631 = vpack.c.b16 %v541, %v540
  %v632 = vpack.c.b16 %v543, %v542
  %v633 = vpack.c.b16 %v545, %v544
  %v634 = vpack.c.b16 %v547, %v546
  %v635 = vpack.c.b16 %v549, %v548
  %v636 = vpack.c.b16 %v551, %v550
  %v637 = vpack.c.b16 %v553, %v552
  %v638 = vpack.c.b16 %v555, %v554
  %v639 = vpack.c.b16 %v557, %v556
  %v640 = vpack.c.b16 %v559, %v558
  %v641 = vpack.c.b16 %v561, %v560
  %v642 = vpack.c.b16 %v563, %v562
  %v643 = vpack.c.b16 %v565, %v564
  %v644 = vpack.c.b16 %v567, %v566
  %v645 = vpack.c.b16 %v569, %v568
  %v646 = vpack.c.b16 %v571, %v570
  %v647 = vpack.c.b16 %v573, %v572
  %v648 = vpack.c.b16 %v575, %v574
  %v649 = vpack.c.b16 %v577, %v576
  %v650 = vpack.c.b16 %v579, %v578
  %v651 = vpack.c.b16 %v581, %v580
  %v652 = vpack.c.b16 %v583, %v582
  %v653 = vpack.c.b16 %v585, %v584
  %v654 = vpack.c.b16 %v587, %v586
  %v655 = vpack.c.b16 %v589, %v588
  %v656 = vpack.c.b16 %v591, %v590
  %v657 = vpack.c.b16 %v593, %v592
  %722 = vmatprep.subr.bf16.mxu0 0
  %723 = vmatpush1.bf16.msra.mxu0 %v594
  %724 = vmatprep.subr.bf16.mxu0 0
  %725 = vmatpush1.bf16.msra.mxu0 %v595
  %726 = vmatprep.subr.bf16.mxu0 0
  %727 = vmatpush1.bf16.msra.mxu0 %v596
  %728 = vmatprep.subr.bf16.mxu0 0
  %729 = vmatpush1.bf16.msra.mxu0 %v597
  %730 = vmatprep.subr.bf16.mxu0 0
  %731 = vmatpush1.bf16.msra.mxu0 %v598
  %732 = vmatprep.subr.bf16.mxu0 0
  %733 = vmatpush1.bf16.msra.mxu0 %v599
  %734 = vmatprep.subr.bf16.mxu0 0
  %735 = vmatpush1.bf16.msra.mxu0 %v600
  %736 = vmatprep.subr.bf16.mxu0 0
  %737 = vmatpush1.bf16.msra.mxu0 %v601
  %738 = vmatprep.subr.bf16.mxu0 0
  %739 = vmatpush1.bf16.msra.mxu0 %v602
  %740 = vmatprep.subr.bf16.mxu0 0
  %741 = vmatpush1.bf16.msra.mxu0 %v603
  %742 = vmatprep.subr.bf16.mxu0 0
  %743 = vmatpush1.bf16.msra.mxu0 %v604
  %744 = vmatprep.subr.bf16.mxu0 0
  %745 = vmatpush1.bf16.msra.mxu0 %v605
  %746 = vmatprep.subr.bf16.mxu0 0
  %747 = vmatpush1.bf16.msra.mxu0 %v606
  %748 = vmatprep.subr.bf16.mxu0 0
  %749 = vmatpush1.bf16.msra.mxu0 %v607
  %750 = vmatprep.subr.bf16.mxu0 0
  %751 = vmatpush1.bf16.msra.mxu0 %v608
  %752 = vmatprep.subr.bf16.mxu0 0
  %753 = vmatpush1.bf16.msra.mxu0 %v609
  %754 = vmatprep.mubr.bf16.mxu0 %v275
  %755 = vmatmul.mubr.bf16.gmra.mrb[0].mxu0 %v274
  %v756 = vpop.f32.mrb[0].mxu0
  %v757 = vadd.f32 0.0, %v756
  %v758 = vpop.f32.mrb[0].mxu0
  %v759 = vpop.f32.mrb[0].mxu0
  %v760 = vadd.f32 0.0, %v759
  %v761 = vpop.f32.mrb[0].mxu0
  %762 = vmatprep.mubr.bf16.mxu0 %v283
  %763 = vmatmul.mubr.bf16.gmra.mrb[0].mxu0 %v282
  %v764 = vpop.f32.mrb[0].mxu0
  %v765 = vadd.f32 0.0, %v764
  %v766 = vpop.f32.mrb[0].mxu0
  %v767 = vpop.f32.mrb[0].mxu0
  %v768 = vadd.f32 0.0, %v767
  %v769 = vpop.f32.mrb[0].mxu0
  %770 = vmatprep.mubr.bf16.mxu0 %v291
  %771 = vmatmul.mubr.bf16.gmra.mrb[0].mxu0 %v290
  %v772 = vpop.f32.mrb[0].mxu0
  %v773 = vadd.f32 0.0, %v772
  %v774 = vpop.f32.mrb[0].mxu0
  %v775 = vpop.f32.mrb[0].mxu0
  %v776 = vadd.f32 0.0, %v775
  %v777 = vpop.f32.mrb[0].mxu0
  %778 = vmatprep.mubr.bf16.mxu0 %v299
  %779 = vmatmul.mubr.bf16.gmra.mrb[0].mxu0 %v298
  %v780 = vpop.f32.mrb[0].mxu0
  %v781 = vadd.f32 0.0, %v780
  %v782 = vpop.f32.mrb[0].mxu0
  %v783 = vpop.f32.mrb[0].mxu0
  %v784 = vadd.f32 0.0, %v783
  %v785 = vpop.f32.mrb[0].mxu0
  %786 = vdwg.mxu0
  %787 = vmatprep.subr.bf16.mxu0 0
  %788 = vmatpush1.bf16.msra.mxu0 %v610
  %789 = vmatprep.subr.bf16.mxu0 0
  %790 = vmatpush1.bf16.msra.mxu0 %v611
  %791 = vmatprep.subr.bf16.mxu0 0
  %792 = vmatpush1.bf16.msra.mxu0 %v612
  %793 = vmatprep.subr.bf16.mxu0 0
  %794 = vmatpush1.bf16.msra.mxu0 %v613
  %795 = vmatprep.subr.bf16.mxu0 0
  %796 = vmatpush1.bf16.msra.mxu0 %v614
  %797 = vmatprep.subr.bf16.mxu0 0
  %798 = vmatpush1.bf16.msra.mxu0 %v615
  %799 = vmatprep.subr.bf16.mxu0 0
  %800 = vmatpush1.bf16.msra.mxu0 %v616
  %801 = vmatprep.subr.bf16.mxu0 0
  %802 = vmatpush1.bf16.msra.mxu0 %v617
  %803 = vmatprep.subr.bf16.mxu0 0
  %804 = vmatpush1.bf16.msra.mxu0 %v618
  %805 = vmatprep.subr.bf16.mxu0 0
  %806 = vmatpush1.bf16.msra.mxu0 %v619
  %807 = vmatprep.subr.bf16.mxu0 0
  %808 = vmatpush1.bf16.msra.mxu0 %v620
  %809 = vmatprep.subr.bf16.mxu0 0
  %810 = vmatpush1.bf16.msra.mxu0 %v621
  %811 = vmatprep.subr.bf16.mxu0 0
  %812 = vmatpush1.bf16.msra.mxu0 %v622
  %813 = vmatprep.subr.bf16.mxu0 0
  %814 = vmatpush1.bf16.msra.mxu0 %v623
  %815 = vmatprep.subr.bf16.mxu0 0
  %816 = vmatpush1.bf16.msra.mxu0 %v624
  %817 = vmatprep.subr.bf16.mxu0 0
  %818 = vmatpush1.bf16.msra.mxu0 %v625
  %819 = vmatprep.mubr.bf16.mxu0 %v277
  %820 = vmatmul.mubr.bf16.gmra.mrb[0].mxu0 %v276
  %v821 = vpop.f32.mrb[0].mxu0
  %v822 = vadd.f32 %v757, %v821
  %v823 = vpop.f32.mrb[0].mxu0
  %v824 = vpop.f32.mrb[0].mxu0
  %v825 = vadd.f32 %v760, %v824
  %v826 = vpop.f32.mrb[0].mxu0
  %827 = vmatprep.mubr.bf16.mxu0 %v285
  %828 = vmatmul.mubr.bf16.gmra.mrb[0].mxu0 %v284
  %v829 = vpop.f32.mrb[0].mxu0
  %v830 = vadd.f32 %v765, %v829
  %v831 = vpop.f32.mrb[0].mxu0
  %v832 = vpop.f32.mrb[0].mxu0
  %v833 = vadd.f32 %v768, %v832
  %v834 = vpop.f32.mrb[0].mxu0
  %835 = vmatprep.mubr.bf16.mxu0 %v293
  %836 = vmatmul.mubr.bf16.gmra.mrb[0].mxu0 %v292
  %v837 = vpop.f32.mrb[0].mxu0
  %v838 = vadd.f32 %v773, %v837
  %v839 = vpop.f32.mrb[0].mxu0
  %v840 = vpop.f32.mrb[0].mxu0
  %v841 = vadd.f32 %v776, %v840
  %v842 = vpop.f32.mrb[0].mxu0
  %843 = vmatprep.mubr.bf16.mxu0 %v301
  %844 = vmatmul.mubr.bf16.gmra.mrb[0].mxu0 %v300
  %v845 = vpop.f32.mrb[0].mxu0
  %v846 = vadd.f32 %v781, %v845
  %v847 = vpop.f32.mrb[0].mxu0
  %v848 = vpop.f32.mrb[0].mxu0
  %v849 = vadd.f32 %v784, %v848
  %v850 = vpop.f32.mrb[0].mxu0
  %851 = vdwg.mxu0
  %852 = vmatprep.subr.bf16.mxu0 0
  %853 = vmatpush1.bf16.msra.mxu0 %v626
  %854 = vmatprep.subr.bf16.mxu0 0
  %855 = vmatpush1.bf16.msra.mxu0 %v627
  %856 = vmatprep.subr.bf16.mxu0 0
  %857 = vmatpush1.bf16.msra.mxu0 %v628
  %858 = vmatprep.subr.bf16.mxu0 0
  %859 = vmatpush1.bf16.msra.mxu0 %v629
  %860 = vmatprep.subr.bf16.mxu0 0
  %861 = vmatpush1.bf16.msra.mxu0 %v630
  %862 = vmatprep.subr.bf16.mxu0 0
  %863 = vmatpush1.bf16.msra.mxu0 %v631
  %864 = vmatprep.subr.bf16.mxu0 0
  %865 = vmatpush1.bf16.msra.mxu0 %v632
  %866 = vmatprep.subr.bf16.mxu0 0
  %867 = vmatpush1.bf16.msra.mxu0 %v633
  %868 = vmatprep.subr.bf16.mxu0 0
  %869 = vmatpush1.bf16.msra.mxu0 %v634
  %870 = vmatprep.subr.bf16.mxu0 0
  %871 = vmatpush1.bf16.msra.mxu0 %v635
  %872 = vmatprep.subr.bf16.mxu0 0
  %873 = vmatpush1.bf16.msra.mxu0 %v636
  %874 = vmatprep.subr.bf16.mxu0 0
  %875 = vmatpush1.bf16.msra.mxu0 %v637
  %876 = vmatprep.subr.bf16.mxu0 0
  %877 = vmatpush1.bf16.msra.mxu0 %v638
  %878 = vmatprep.subr.bf16.mxu0 0
  %879 = vmatpush1.bf16.msra.mxu0 %v639
  %880 = vmatprep.subr.bf16.mxu0 0
  %881 = vmatpush1.bf16.msra.mxu0 %v640
  %882 = vmatprep.subr.bf16.mxu0 0
  %883 = vmatpush1.bf16.msra.mxu0 %v641
  %884 = vmatprep.mubr.bf16.mxu0 %v279
  %885 = vmatmul.mubr.bf16.gmra.mrb[0].mxu0 %v278
  %v886 = vpop.f32.mrb[0].mxu0
  %v887 = vadd.f32 %v822, %v886
  %v888 = vpop.f32.mrb[0].mxu0
  %v889 = vpop.f32.mrb[0].mxu0
  %v890 = vadd.f32 %v825, %v889
  %v891 = vpop.f32.mrb[0].mxu0
  %892 = vmatprep.mubr.bf16.mxu0 %v287
  %893 = vmatmul.mubr.bf16.gmra.mrb[0].mxu0 %v286
  %v894 = vpop.f32.mrb[0].mxu0
  %v895 = vadd.f32 %v830, %v894
  %v896 = vpop.f32.mrb[0].mxu0
  %v897 = vpop.f32.mrb[0].mxu0
  %v898 = vadd.f32 %v833, %v897
  %v899 = vpop.f32.mrb[0].mxu0
  %900 = vmatprep.mubr.bf16.mxu0 %v295
  %901 = vmatmul.mubr.bf16.gmra.mrb[0].mxu0 %v294
  %v902 = vpop.f32.mrb[0].mxu0
  %v903 = vadd.f32 %v838, %v902
  %v904 = vpop.f32.mrb[0].mxu0
  %v905 = vpop.f32.mrb[0].mxu0
  %v906 = vadd.f32 %v841, %v905
  %v907 = vpop.f32.mrb[0].mxu0
  %908 = vmatprep.mubr.bf16.mxu0 %v303
  %909 = vmatmul.mubr.bf16.gmra.mrb[0].mxu0 %v302
  %v910 = vpop.f32.mrb[0].mxu0
  %v911 = vadd.f32 %v846, %v910
  %v912 = vpop.f32.mrb[0].mxu0
  %v913 = vpop.f32.mrb[0].mxu0
  %v914 = vadd.f32 %v849, %v913
  %v915 = vpop.f32.mrb[0].mxu0
  %916 = vdwg.mxu0
  %917 = vmatprep.subr.bf16.mxu0 0
  %918 = vmatpush1.bf16.msra.mxu0 %v642
  %919 = vmatprep.subr.bf16.mxu0 0
  %920 = vmatpush1.bf16.msra.mxu0 %v643
  %921 = vmatprep.subr.bf16.mxu0 0
  %922 = vmatpush1.bf16.msra.mxu0 %v644
  %923 = vmatprep.subr.bf16.mxu0 0
  %924 = vmatpush1.bf16.msra.mxu0 %v645
  %925 = vmatprep.subr.bf16.mxu0 0
  %926 = vmatpush1.bf16.msra.mxu0 %v646
  %927 = vmatprep.subr.bf16.mxu0 0
  %928 = vmatpush1.bf16.msra.mxu0 %v647
  %929 = vmatprep.subr.bf16.mxu0 0
  %930 = vmatpush1.bf16.msra.mxu0 %v648
  %931 = vmatprep.subr.bf16.mxu0 0
  %932 = vmatpush1.bf16.msra.mxu0 %v649
  %933 = vmatprep.subr.bf16.mxu0 0
  %934 = vmatpush1.bf16.msra.mxu0 %v650
  %935 = vmatprep.subr.bf16.mxu0 0
  %936 = vmatpush1.bf16.msra.mxu0 %v651
  %937 = vmatprep.subr.bf16.mxu0 0
  %938 = vmatpush1.bf16.msra.mxu0 %v652
  %939 = vmatprep.subr.bf16.mxu0 0
  %940 = vmatpush1.bf16.msra.mxu0 %v653
  %941 = vmatprep.subr.bf16.mxu0 0
  %942 = vmatpush1.bf16.msra.mxu0 %v654
  %943 = vmatprep.subr.bf16.mxu0 0
  %944 = vmatpush1.bf16.msra.mxu0 %v655
  %945 = vmatprep.subr.bf16.mxu0 0
  %946 = vmatpush1.bf16.msra.mxu0 %v656
  %947 = vmatprep.subr.bf16.mxu0 0
  %948 = vmatpush1.bf16.msra.mxu0 %v657
  %949 = vmatprep.mubr.bf16.mxu0 %v281
  %950 = vmatmul.mubr.bf16.gmra.mrb[0].mxu0 %v280
  %v951 = vpop.f32.mrb[0].mxu0
  %v952 = vadd.f32 %v887, %v951
  %v953 = vpop.f32.mrb[0].mxu0
  %v954 = vpop.f32.mrb[0].mxu0
  %v955 = vadd.f32 %v890, %v954
  %v956 = vpop.f32.mrb[0].mxu0
  %957 = vmatprep.mubr.bf16.mxu0 %v289
  %958 = vmatmul.mubr.bf16.gmra.mrb[0].mxu0 %v288
  %v959 = vpop.f32.mrb[0].mxu0
  %v960 = vadd.f32 %v895, %v959
  %v961 = vpop.f32.mrb[0].mxu0
  %v962 = vpop.f32.mrb[0].mxu0
  %v963 = vadd.f32 %v898, %v962
  %v964 = vpop.f32.mrb[0].mxu0
  %965 = vmatprep.mubr.bf16.mxu0 %v297
  %966 = vmatmul.mubr.bf16.gmra.mrb[0].mxu0 %v296
  %v967 = vpop.f32.mrb[0].mxu0
  %v968 = vadd.f32 %v903, %v967
  %v969 = vpop.f32.mrb[0].mxu0
  %v970 = vpop.f32.mrb[0].mxu0
  %v971 = vadd.f32 %v906, %v970
  %v972 = vpop.f32.mrb[0].mxu0
  %973 = vmatprep.mubr.bf16.mxu0 %v305
  %974 = vmatmul.mubr.bf16.gmra.mrb[0].mxu0 %v304
  %v975 = vpop.f32.mrb[0].mxu0
  %v976 = vadd.f32 %v911, %v975
  %v977 = vpop.f32.mrb[0].mxu0
  %v978 = vpop.f32.mrb[0].mxu0
  %v979 = vadd.f32 %v914, %v978
  %v980 = vpop.f32.mrb[0].mxu0
  %981 = vdwg.mxu0
  %vm982 = vcmask 523264
  %v983 = vsel %vm982, %v952, 0.0
  %984 = vadd.xlane.f32.xlu0 %v983
  %v985 = vpop.xlane.xlu0 %984
  %v986 = vsel %vm982, %v955, 0.0
  %987 = vadd.xlane.f32.xlu0 %v986
  %v988 = vpop.xlane.xlu0 %987
  %v989 = vsel %vm982, %v960, 0.0
  %990 = vadd.xlane.f32.xlu0 %v989
  %v991 = vpop.xlane.xlu0 %990
  %v992 = vsel %vm982, %v963, 0.0
  %993 = vadd.xlane.f32.xlu0 %v992
  %v994 = vpop.xlane.xlu0 %993
  %v995 = vsel %vm982, %v968, 0.0
  %996 = vadd.xlane.f32.xlu0 %v995
  %v997 = vpop.xlane.xlu0 %996
  %v998 = vsel %vm982, %v971, 0.0
  %999 = vadd.xlane.f32.xlu0 %v998
  %v1000 = vpop.xlane.xlu0 %999
  %v1001 = vsel %vm982, %v976, 0.0
  %1002 = vadd.xlane.f32.xlu0 %v1001
  %v1003 = vpop.xlane.xlu0 %1002
  %v1004 = vsel %vm982, %v979, 0.0
  %1005 = vadd.xlane.f32.xlu0 %v1004
  %v1006 = vpop.xlane.xlu0 %1005
  %v1007 = vmul.f32 %v985, 0.015625
  %v1008 = vmul.f32 %v988, 0.015625
  %v1009 = vmul.f32 %v991, 0.015625
  %v1010 = vmul.f32 %v994, 0.015625
  %v1011 = vmul.f32 %v997, 0.015625
  %v1012 = vmul.f32 %v1000, 0.015625
  %v1013 = vmul.f32 %v1003, 0.015625
  %v1014 = vmul.f32 %v1006, 0.015625
  %v1015 = vmul.f32 %v952, %v952
  %v1016 = vmul.f32 %v955, %v955
  %v1017 = vmul.f32 %v960, %v960
  %v1018 = vmul.f32 %v963, %v963
  %v1019 = vmul.f32 %v968, %v968
  %v1020 = vmul.f32 %v971, %v971
  %v1021 = vmul.f32 %v976, %v976
  %v1022 = vmul.f32 %v979, %v979
  %v1023 = vsel %vm982, %v1015, 0.0
  %1024 = vadd.xlane.f32.xlu0 %v1023
  %v1025 = vpop.xlane.xlu0 %1024
  %v1026 = vsel %vm982, %v1016, 0.0
  %1027 = vadd.xlane.f32.xlu0 %v1026
  %v1028 = vpop.xlane.xlu0 %1027
  %v1029 = vsel %vm982, %v1017, 0.0
  %1030 = vadd.xlane.f32.xlu0 %v1029
  %v1031 = vpop.xlane.xlu0 %1030
  %v1032 = vsel %vm982, %v1018, 0.0
  %1033 = vadd.xlane.f32.xlu0 %v1032
  %v1034 = vpop.xlane.xlu0 %1033
  %v1035 = vsel %vm982, %v1019, 0.0
  %1036 = vadd.xlane.f32.xlu0 %v1035
  %v1037 = vpop.xlane.xlu0 %1036
  %v1038 = vsel %vm982, %v1020, 0.0
  %1039 = vadd.xlane.f32.xlu0 %v1038
  %v1040 = vpop.xlane.xlu0 %1039
  %v1041 = vsel %vm982, %v1021, 0.0
  %1042 = vadd.xlane.f32.xlu0 %v1041
  %v1043 = vpop.xlane.xlu0 %1042
  %v1044 = vsel %vm982, %v1022, 0.0
  %1045 = vadd.xlane.f32.xlu0 %v1044
  %v1046 = vpop.xlane.xlu0 %1045
  %v1047 = vmul.f32 %v1025, 0.015625
  %v1048 = vmul.f32 %v1028, 0.015625
  %v1049 = vmul.f32 %v1031, 0.015625
  %v1050 = vmul.f32 %v1034, 0.015625
  %v1051 = vmul.f32 %v1037, 0.015625
  %v1052 = vmul.f32 %v1040, 0.015625
  %v1053 = vmul.f32 %v1043, 0.015625
  %v1054 = vmul.f32 %v1046, 0.015625
  %v1055 = vmul.f32 %v1007, %v1007
  %v1056 = vmul.f32 %v1008, %v1008
  %v1057 = vmul.f32 %v1009, %v1009
  %v1058 = vmul.f32 %v1010, %v1010
  %v1059 = vmul.f32 %v1011, %v1011
  %v1060 = vmul.f32 %v1012, %v1012
  %v1061 = vmul.f32 %v1013, %v1013
  %v1062 = vmul.f32 %v1014, %v1014
  %v1063 = vsub.f32 %v1047, %v1055
  %v1064 = vsub.f32 %v1048, %v1056
  %v1065 = vsub.f32 %v1049, %v1057
  %v1066 = vsub.f32 %v1050, %v1058
  %v1067 = vsub.f32 %v1051, %v1059
  %v1068 = vsub.f32 %v1052, %v1060
  %v1069 = vsub.f32 %v1053, %v1061
  %v1070 = vsub.f32 %v1054, %v1062
  %v1071 = vld [vmem:[%s2] sm:$0xff]
  %v1072 = vld [vmem:[%s2 + $0x8] sm:$0xff]
  %v1073 = vld [vmem:[%s2 + $0x10] sm:$0xff]
  %v1074 = vld [vmem:[%s2 + $0x18] sm:$0xff]
  %v1075 = vld [vmem:[%s2 + $0x20] sm:$0xff]
  %v1076 = vld [vmem:[%s2 + $0x28] sm:$0xff]
  %v1077 = vld [vmem:[%s2 + $0x30] sm:$0xff]
  %v1078 = vld [vmem:[%s2 + $0x38] sm:$0xff]
  %v1079 = vadd.f32 %v1063, 1e-05
  %v1080 = vadd.f32 %v1064, 1e-05
  %v1081 = vadd.f32 %v1065, 1e-05
  %v1082 = vadd.f32 %v1066, 1e-05
  %v1083 = vadd.f32 %v1067, 1e-05
  %v1084 = vadd.f32 %v1068, 1e-05
  %v1085 = vadd.f32 %v1069, 1e-05
  %v1086 = vadd.f32 %v1070, 1e-05
  %v1087 = vrsqrt.pop %v1079
  %v1088 = vrsqrt.pop %v1080
  %v1089 = vrsqrt.pop %v1081
  %v1090 = vrsqrt.pop %v1082
  %v1091 = vrsqrt.pop %v1083
  %v1092 = vrsqrt.pop %v1084
  %v1093 = vrsqrt.pop %v1085
  %v1094 = vrsqrt.pop %v1086
  %v1095 = vmul.f32 %v1071, %v1087
  %v1096 = vmul.f32 %v1072, %v1088
  %v1097 = vmul.f32 %v1073, %v1089
  %v1098 = vmul.f32 %v1074, %v1090
  %v1099 = vmul.f32 %v1075, %v1091
  %v1100 = vmul.f32 %v1076, %v1092
  %v1101 = vmul.f32 %v1077, %v1093
  %v1102 = vmul.f32 %v1078, %v1094
  %v1103 = vld [vmem:[%s3] sm:$0xff]
  %v1104 = vld [vmem:[%s3 + $0x8] sm:$0xff]
  %v1105 = vld [vmem:[%s3 + $0x10] sm:$0xff]
  %v1106 = vld [vmem:[%s3 + $0x18] sm:$0xff]
  %v1107 = vld [vmem:[%s3 + $0x20] sm:$0xff]
  %v1108 = vld [vmem:[%s3 + $0x28] sm:$0xff]
  %v1109 = vld [vmem:[%s3 + $0x30] sm:$0xff]
  %v1110 = vld [vmem:[%s3 + $0x38] sm:$0xff]
  %v1111 = vmul.f32 %v1007, %v1095
  %v1112 = vmul.f32 %v1008, %v1096
  %v1113 = vmul.f32 %v1009, %v1097
  %v1114 = vmul.f32 %v1010, %v1098
  %v1115 = vmul.f32 %v1011, %v1099
  %v1116 = vmul.f32 %v1012, %v1100
  %v1117 = vmul.f32 %v1013, %v1101
  %v1118 = vmul.f32 %v1014, %v1102
  %v1119 = vsub.f32 %v1103, %v1111
  %v1120 = vsub.f32 %v1104, %v1112
  %v1121 = vsub.f32 %v1105, %v1113
  %v1122 = vsub.f32 %v1106, %v1114
  %v1123 = vsub.f32 %v1107, %v1115
  %v1124 = vsub.f32 %v1108, %v1116
  %v1125 = vsub.f32 %v1109, %v1117
  %v1126 = vsub.f32 %v1110, %v1118
  %1128 = vset.pattern.permute.xlu0 0
  %1129 = vperm.xlu0 %1128, %v1095
  %v1130 = vpop.permute.xlu0 %1129
  %1133 = vset.pattern.permute.xlu0 0
  %1134 = vperm.xlu0 %1133, %v1096
  %v1135 = vpop.permute.xlu0 %1134
  %1138 = vset.pattern.permute.xlu0 0
  %1139 = vperm.xlu0 %1138, %v1097
  %v1140 = vpop.permute.xlu0 %1139
  %1143 = vset.pattern.permute.xlu0 0
  %1144 = vperm.xlu0 %1143, %v1098
  %v1145 = vpop.permute.xlu0 %1144
  %1148 = vset.pattern.permute.xlu0 0
  %1149 = vperm.xlu0 %1148, %v1099
  %v1150 = vpop.permute.xlu0 %1149
  %1153 = vset.pattern.permute.xlu0 0
  %1154 = vperm.xlu0 %1153, %v1100
  %v1155 = vpop.permute.xlu0 %1154
  %1158 = vset.pattern.permute.xlu0 0
  %1159 = vperm.xlu0 %1158, %v1101
  %v1160 = vpop.permute.xlu0 %1159
  %1163 = vset.pattern.permute.xlu0 0
  %1164 = vperm.xlu0 %1163, %v1102
  %v1165 = vpop.permute.xlu0 %1164
  %v1167 = vmul.f32 %v952, %v1130
  %v1168 = vmul.f32 %v955, %v1135
  %v1169 = vmul.f32 %v960, %v1140
  %v1170 = vmul.f32 %v963, %v1145
  %v1171 = vmul.f32 %v968, %v1150
  %v1172 = vmul.f32 %v971, %v1155
  %v1173 = vmul.f32 %v976, %v1160
  %v1174 = vmul.f32 %v979, %v1165
  %1176 = vset.pattern.permute.xlu0 0
  %1177 = vperm.xlu0 %1176, %v1119
  %v1178 = vpop.permute.xlu0 %1177
  %1181 = vset.pattern.permute.xlu0 0
  %1182 = vperm.xlu0 %1181, %v1120
  %v1183 = vpop.permute.xlu0 %1182
  %1186 = vset.pattern.permute.xlu0 0
  %1187 = vperm.xlu0 %1186, %v1121
  %v1188 = vpop.permute.xlu0 %1187
  %1191 = vset.pattern.permute.xlu0 0
  %1192 = vperm.xlu0 %1191, %v1122
  %v1193 = vpop.permute.xlu0 %1192
  %1196 = vset.pattern.permute.xlu0 0
  %1197 = vperm.xlu0 %1196, %v1123
  %v1198 = vpop.permute.xlu0 %1197
  %1201 = vset.pattern.permute.xlu0 0
  %1202 = vperm.xlu0 %1201, %v1124
  %v1203 = vpop.permute.xlu0 %1202
  %1206 = vset.pattern.permute.xlu0 0
  %1207 = vperm.xlu0 %1206, %v1125
  %v1208 = vpop.permute.xlu0 %1207
  %1211 = vset.pattern.permute.xlu0 0
  %1212 = vperm.xlu0 %1211, %v1126
  %v1213 = vpop.permute.xlu0 %1212
  %v1215 = vadd.f32 %v1167, %v1178
  %v1216 = vadd.f32 %v1168, %v1183
  %v1217 = vadd.f32 %v1169, %v1188
  %v1218 = vadd.f32 %v1170, %v1193
  %v1219 = vadd.f32 %v1171, %v1198
  %v1220 = vadd.f32 %v1172, %v1203
  %v1221 = vadd.f32 %v1173, %v1208
  %v1222 = vadd.f32 %v1174, %v1213
  %vm1223 = vcmp.gt.f32.partialorder %v1215, 0.0
  %vm1224 = vcmp.gt.f32.partialorder %v1216, 0.0
  %vm1225 = vcmp.gt.f32.partialorder %v1217, 0.0
  %vm1226 = vcmp.gt.f32.partialorder %v1218, 0.0
  %vm1227 = vcmp.gt.f32.partialorder %v1219, 0.0
  %vm1228 = vcmp.gt.f32.partialorder %v1220, 0.0
  %vm1229 = vcmp.gt.f32.partialorder %v1221, 0.0
  %vm1230 = vcmp.gt.f32.partialorder %v1222, 0.0
  %v1231 = vmul.f32 %v1215, 0.2
  %v1232 = vmul.f32 %v1216, 0.2
  %v1233 = vmul.f32 %v1217, 0.2
  %v1234 = vmul.f32 %v1218, 0.2
  %v1235 = vmul.f32 %v1219, 0.2
  %v1236 = vmul.f32 %v1220, 0.2
  %v1237 = vmul.f32 %v1221, 0.2
  %v1238 = vmul.f32 %v1222, 0.2
  %v1239 = vsel %vm1223, %v1215, %v1231
  %v1240 = vsel %vm1224, %v1216, %v1232
  %v1241 = vsel %vm1225, %v1217, %v1233
  %v1242 = vsel %vm1226, %v1218, %v1234
  %v1243 = vsel %vm1227, %v1219, %v1235
  %v1244 = vsel %vm1228, %v1220, %v1236
  %v1245 = vsel %vm1229, %v1221, %v1237
  %v1246 = vsel %vm1230, %v1222, %v1238
  %v1247 = vpack.c.bf16 %v1240, %v1239
  %v1248 = vpack.c.bf16 %v1242, %v1241
  %v1249 = vpack.c.bf16 %v1244, %v1243
  %v1250 = vpack.c.bf16 %v1246, %v1245
  %v1255 = vunpack.c.l.b16 %v1247
  %v1256 = vunpack.c.h.b16 %v1247
  %v1257 = vunpack.c.l.b16 %v1248
  %v1258 = vunpack.c.h.b16 %v1248
  %v1259 = vunpack.c.l.b16 %v1249
  %v1260 = vunpack.c.h.b16 %v1249
  %v1261 = vunpack.c.l.b16 %v1250
  %v1262 = vunpack.c.h.b16 %v1250
  %v1263 = vpack.c.b16 %v1255, %v1255
  %v1264 = vpack.c.b16 %v1256, %v1256
  %v1265 = vpack.c.b16 %v1257, %v1257
  %v1266 = vpack.c.b16 %v1258, %v1258
  %v1267 = vpack.c.b16 %v1259, %v1259
  %v1268 = vpack.c.b16 %v1260, %v1260
  %v1269 = vpack.c.b16 %v1261, %v1261
  %v1270 = vpack.c.b16 %v1262, %v1262
  %vm1279 = vcmask 519168
  %1280 = vst.msk [vmem:[%s4] sm:$0xf] %vm1279, %v1263
  %1281 = vst.msk [vmem:[%s4 + $0x4] sm:$0xf] %vm1279, %v1264
  %1282 = vst.msk [vmem:[%s4 + $0x8] sm:$0xf] %vm1279, %v1265
  %1283 = vst.msk [vmem:[%s4 + $0xc] sm:$0xf] %vm1279, %v1266
  %1284 = vst.msk [vmem:[%s4 + $0x10] sm:$0xf] %vm1279, %v1267
  %1285 = vst.msk [vmem:[%s4 + $0x14] sm:$0xf] %vm1279, %v1268
  %1286 = vst.msk [vmem:[%s4 + $0x18] sm:$0xf] %vm1279, %v1269
  %1287 = vst.msk [vmem:[%s4 + $0x1c] sm:$0xf] %vm1279, %v1270
  // Predicated region
  $region18: #{content_encoder_forward.10} parent=0 // pred_check
    _
  $region19: #{content_encoder_forward.10} parent=0 // pred_check_branch
    %1289 = sbr.rel (0) target = $region21
  $region20: #{content_encoder_forward.10} parent=0 // pred_region
    _
  $region21: #{content_encoder_forward.10} parent=0 // pred_fallthru
    _
  // Predicated region
  $region22: #{content_encoder_forward.10} parent=0 // pred_check
    _
  $region23: #{content_encoder_forward.10} parent=0 // pred_check_branch
    %1291 = sbr.rel (0) target = $region25
  $region24: #{content_encoder_forward.10} parent=0 // pred_region
    _
  $region25: #{content_encoder_forward.10} parent=0 // pred_fallthru
    _

// kernel: content_encoder_forward.11
$region0: #{content_encoder_forward.11}
  #allocation0 [shape = 'u32[]', space=smem, size = 0x4, offset = 0x4, fixed_abs, tag = 'smem constant byte address 0x4 - core index']
  #allocation1 [shape = 'u32[144,128]{1,0:T(1,128)}', space=vmem, size = 0x12000, scoped, tag = 'internal scratch']
  %s0 = inlined_call_operand.vmem [shape: bf16[1024,4], index: 0, kind: input, shape index: {}]
  %s1 = inlined_call_operand.vmem [shape: bf16[16,1024], index: 1, kind: input, shape index: {}]
  %s2 = inlined_call_operand.vmem [shape: f32[16,1], index: 2, kind: input, shape index: {}]
  %s3 = inlined_call_operand.vmem [shape: f32[16,1], index: 3, kind: input, shape index: {}]
  %s4 = inlined_call_operand.vmem [shape: f32[16,4], index: 4, kind: output, shape index: {}]
  %s5 = sld [smem:[#allocation0]]
  $region26: #{content_encoder_forward.11} parent=0
    _
  %s7 = ssub.s32 1, %s5
  %s8 = scalar_select 0, %s7, %s5
  // Predicated region
  $region2: #{content_encoder_forward.11} parent=0 // pred_check
    _
  $region3: #{content_encoder_forward.11} parent=0 // pred_check_branch
    %10 = sbr.rel (0) target = $region5
  $region4: #{content_encoder_forward.11} parent=0 // pred_region
    _
  $region5: #{content_encoder_forward.11} parent=0 // pred_fallthru
    _
  // Predicated region
  $region6: #{content_encoder_forward.11} parent=0 // pred_check
    _
  $region7: #{content_encoder_forward.11} parent=0 // pred_check_branch
    %12 = sbr.rel (0) target = $region9
  $region8: #{content_encoder_forward.11} parent=0 // pred_region
    _
  $region9: #{content_encoder_forward.11} parent=0 // pred_fallthru
    _
  // Predicated region
  $region10: #{content_encoder_forward.11} parent=0 // pred_check
    _
  $region11: #{content_encoder_forward.11} parent=0 // pred_check_branch
    %14 = sbr.rel (0) target = $region13
  $region12: #{content_encoder_forward.11} parent=0 // pred_region
    _
  $region13: #{content_encoder_forward.11} parent=0 // pred_fallthru
    _
  // Predicated region
  $region14: #{content_encoder_forward.11} parent=0 // pred_check
    _
  $region15: #{content_encoder_forward.11} parent=0 // pred_check_branch
    %16 = sbr.rel (0) target = $region17
  $region16: #{content_encoder_forward.11} parent=0 // pred_region
    _
  $region17: #{content_encoder_forward.11} parent=0 // pred_fallthru
    _
  %v18 = vld [vmem:[%s1] sm:$0xff]
  %v19 = vld [vmem:[%s1 + $0x8] sm:$0xff]
  %v20 = vld [vmem:[%s1 + $0x10] sm:$0xff]
  %v21 = vld [vmem:[%s1 + $0x18] sm:$0xff]
  %v22 = vld [vmem:[%s1 + $0x20] sm:$0xff]
  %v23 = vld [vmem:[%s1 + $0x28] sm:$0xff]
  %v24 = vld [vmem:[%s1 + $0x30] sm:$0xff]
  %v25 = vld [vmem:[%s1 + $0x38] sm:$0xff]
  %v26 = vld [vmem:[%s0] sm:$0xf]
  %v27 = vld [vmem:[%s0 + $0x4] sm:$0xf]
  %v28 = vld [vmem:[%s0 + $0x8] sm:$0xf]
  %v29 = vld [vmem:[%s0 + $0xc] sm:$0xf]
  %v30 = vld [vmem:[%s0 + $0x10] sm:$0xf]
  %v31 = vld [vmem:[%s0 + $0x14] sm:$0xf]
  %v32 = vld [vmem:[%s0 + $0x18] sm:$0xf]
  %v33 = vld [vmem:[%s0 + $0x1c] sm:$0xf]
  %v34 = vld [vmem:[%s0 + $0x20] sm:$0xf]
  %v35 = vld [vmem:[%s0 + $0x24] sm:$0xf]
  %v36 = vld [vmem:[%s0 + $0x28] sm:$0xf]
  %v37 = vld [vmem:[%s0 + $0x2c] sm:$0xf]
  %v38 = vld [vmem:[%s0 + $0x30] sm:$0xf]
  %v39 = vld [vmem:[%s0 + $0x34] sm:$0xf]
  %v40 = vld [vmem:[%s0 + $0x38] sm:$0xf]
  %v41 = vld [vmem:[%s0 + $0x3c] sm:$0xf]
  %v42 = vld [vmem:[%s0 + $0x40] sm:$0xf]
  %v43 = vld [vmem:[%s0 + $0x44] sm:$0xf]
  %v44 = vld [vmem:[%s0 + $0x48] sm:$0xf]
  %v45 = vld [vmem:[%s0 + $0x4c] sm:$0xf]
  %v46 = vld [vmem:[%s0 + $0x50] sm:$0xf]
  %v47 = vld [vmem:[%s0 + $0x54] sm:$0xf]
  %v48 = vld [vmem:[%s0 + $0x58] sm:$0xf]
  %v49 = vld [vmem:[%s0 + $0x5c] sm:$0xf]
  %v50 = vld [vmem:[%s0 + $0x60] sm:$0xf]
  %v51 = vld [vmem:[%s0 + $0x64] sm:$0xf]
  %v52 = vld [vmem:[%s0 + $0x68] sm:$0xf]
  %v53 = vld [vmem:[%s0 + $0x6c] sm:$0xf]
  %v54 = vld [vmem:[%s0 + $0x70] sm:$0xf]
  %v55 = vld [vmem:[%s0 + $0x74] sm:$0xf]
  %v56 = vld [vmem:[%s0 + $0x78] sm:$0xf]
  %v57 = vld [vmem:[%s0 + $0x7c] sm:$0xf]
  %v58 = vld [vmem:[%s0 + $0x80] sm:$0xf]
  %v59 = vld [vmem:[%s0 + $0x84] sm:$0xf]
  %v60 = vld [vmem:[%s0 + $0x88] sm:$0xf]
  %v61 = vld [vmem:[%s0 + $0x8c] sm:$0xf]
  %v62 = vld [vmem:[%s0 + $0x90] sm:$0xf]
  %v63 = vld [vmem:[%s0 + $0x94] sm:$0xf]
  %v64 = vld [vmem:[%s0 + $0x98] sm:$0xf]
  %v65 = vld [vmem:[%s0 + $0x9c] sm:$0xf]
  %v66 = vld [vmem:[%s0 + $0xa0] sm:$0xf]
  %v67 = vld [vmem:[%s0 + $0xa4] sm:$0xf]
  %v68 = vld [vmem:[%s0 + $0xa8] sm:$0xf]
  %v69 = vld [vmem:[%s0 + $0xac] sm:$0xf]
  %v70 = vld [vmem:[%s0 + $0xb0] sm:$0xf]
  %v71 = vld [vmem:[%s0 + $0xb4] sm:$0xf]
  %v72 = vld [vmem:[%s0 + $0xb8] sm:$0xf]
  %v73 = vld [vmem:[%s0 + $0xbc] sm:$0xf]
  %v74 = vld [vmem:[%s0 + $0xc0] sm:$0xf]
  %v75 = vld [vmem:[%s0 + $0xc4] sm:$0xf]
  %v76 = vld [vmem:[%s0 + $0xc8] sm:$0xf]
  %v77 = vld [vmem:[%s0 + $0xcc] sm:$0xf]
  %v78 = vld [vmem:[%s0 + $0xd0] sm:$0xf]
  %v79 = vld [vmem:[%s0 + $0xd4] sm:$0xf]
  %v80 = vld [vmem:[%s0 + $0xd8] sm:$0xf]
  %v81 = vld [vmem:[%s0 + $0xdc] sm:$0xf]
  %v82 = vld [vmem:[%s0 + $0xe0] sm:$0xf]
  %v83 = vld [vmem:[%s0 + $0xe4] sm:$0xf]
  %v84 = vld [vmem:[%s0 + $0xe8] sm:$0xf]
  %v85 = vld [vmem:[%s0 + $0xec] sm:$0xf]
  %v86 = vld [vmem:[%s0 + $0xf0] sm:$0xf]
  %v87 = vld [vmem:[%s0 + $0xf4] sm:$0xf]
  %v88 = vld [vmem:[%s0 + $0xf8] sm:$0xf]
  %v89 = vld [vmem:[%s0 + $0xfc] sm:$0xf]
  %v90 = vld [vmem:[%s0 + $0x100] sm:$0xf]
  %v91 = vld [vmem:[%s0 + $0x104] sm:$0xf]
  %v92 = vld [vmem:[%s0 + $0x108] sm:$0xf]
  %v93 = vld [vmem:[%s0 + $0x10c] sm:$0xf]
  %v94 = vld [vmem:[%s0 + $0x110] sm:$0xf]
  %v95 = vld [vmem:[%s0 + $0x114] sm:$0xf]
  %v96 = vld [vmem:[%s0 + $0x118] sm:$0xf]
  %v97 = vld [vmem:[%s0 + $0x11c] sm:$0xf]
  %v98 = vld [vmem:[%s0 + $0x120] sm:$0xf]
  %v99 = vld [vmem:[%s0 + $0x124] sm:$0xf]
  %v100 = vld [vmem:[%s0 + $0x128] sm:$0xf]
  %v101 = vld [vmem:[%s0 + $0x12c] sm:$0xf]
  %v102 = vld [vmem:[%s0 + $0x130] sm:$0xf]
  %v103 = vld [vmem:[%s0 + $0x134] sm:$0xf]
  %v104 = vld [vmem:[%s0 + $0x138] sm:$0xf]
  %v105 = vld [vmem:[%s0 + $0x13c] sm:$0xf]
  %v106 = vld [vmem:[%s0 + $0x140] sm:$0xf]
  %v107 = vld [vmem:[%s0 + $0x144] sm:$0xf]
  %v108 = vld [vmem:[%s0 + $0x148] sm:$0xf]
  %v109 = vld [vmem:[%s0 + $0x14c] sm:$0xf]
  %v110 = vld [vmem:[%s0 + $0x150] sm:$0xf]
  %v111 = vld [vmem:[%s0 + $0x154] sm:$0xf]
  %v112 = vld [vmem:[%s0 + $0x158] sm:$0xf]
  %v113 = vld [vmem:[%s0 + $0x15c] sm:$0xf]
  %v114 = vld [vmem:[%s0 + $0x160] sm:$0xf]
  %v115 = vld [vmem:[%s0 + $0x164] sm:$0xf]
  %v116 = vld [vmem:[%s0 + $0x168] sm:$0xf]
  %v117 = vld [vmem:[%s0 + $0x16c] sm:$0xf]
  %v118 = vld [vmem:[%s0 + $0x170] sm:$0xf]
  %v119 = vld [vmem:[%s0 + $0x174] sm:$0xf]
  %v120 = vld [vmem:[%s0 + $0x178] sm:$0xf]
  %v121 = vld [vmem:[%s0 + $0x17c] sm:$0xf]
  %v122 = vld [vmem:[%s0 + $0x180] sm:$0xf]
  %v123 = vld [vmem:[%s0 + $0x184] sm:$0xf]
  %v124 = vld [vmem:[%s0 + $0x188] sm:$0xf]
  %v125 = vld [vmem:[%s0 + $0x18c] sm:$0xf]
  %v126 = vld [vmem:[%s0 + $0x190] sm:$0xf]
  %v127 = vld [vmem:[%s0 + $0x194] sm:$0xf]
  %v128 = vld [vmem:[%s0 + $0x198] sm:$0xf]
  %v129 = vld [vmem:[%s0 + $0x19c] sm:$0xf]
  %v130 = vld [vmem:[%s0 + $0x1a0] sm:$0xf]
  %v131 = vld [vmem:[%s0 + $0x1a4] sm:$0xf]
  %v132 = vld [vmem:[%s0 + $0x1a8] sm:$0xf]
  %v133 = vld [vmem:[%s0 + $0x1ac] sm:$0xf]
  %v134 = vld [vmem:[%s0 + $0x1b0] sm:$0xf]
  %v135 = vld [vmem:[%s0 + $0x1b4] sm:$0xf]
  %v136 = vld [vmem:[%s0 + $0x1b8] sm:$0xf]
  %v137 = vld [vmem:[%s0 + $0x1bc] sm:$0xf]
  %v138 = vld [vmem:[%s0 + $0x1c0] sm:$0xf]
  %v139 = vld [vmem:[%s0 + $0x1c4] sm:$0xf]
  %v140 = vld [vmem:[%s0 + $0x1c8] sm:$0xf]
  %v141 = vld [vmem:[%s0 + $0x1cc] sm:$0xf]
  %v142 = vld [vmem:[%s0 + $0x1d0] sm:$0xf]
  %v143 = vld [vmem:[%s0 + $0x1d4] sm:$0xf]
  %v144 = vld [vmem:[%s0 + $0x1d8] sm:$0xf]
  %v145 = vld [vmem:[%s0 + $0x1dc] sm:$0xf]
  %v146 = vld [vmem:[%s0 + $0x1e0] sm:$0xf]
  %v147 = vld [vmem:[%s0 + $0x1e4] sm:$0xf]
  %v148 = vld [vmem:[%s0 + $0x1e8] sm:$0xf]
  %v149 = vld [vmem:[%s0 + $0x1ec] sm:$0xf]
  %v150 = vld [vmem:[%s0 + $0x1f0] sm:$0xf]
  %v151 = vld [vmem:[%s0 + $0x1f4] sm:$0xf]
  %v152 = vld [vmem:[%s0 + $0x1f8] sm:$0xf]
  %v153 = vld [vmem:[%s0 + $0x1fc] sm:$0xf]
  %v162 = vunpack.c.l.b16 %v18
  %v163 = vunpack.c.h.b16 %v18
  %v164 = vunpack.c.l.b16 %v19
  %v165 = vunpack.c.h.b16 %v19
  %v166 = vunpack.c.l.b16 %v20
  %v167 = vunpack.c.h.b16 %v20
  %v168 = vunpack.c.l.b16 %v21
  %v169 = vunpack.c.h.b16 %v21
  %v170 = vunpack.c.l.b16 %v22
  %v171 = vunpack.c.h.b16 %v22
  %v172 = vunpack.c.l.b16 %v23
  %v173 = vunpack.c.h.b16 %v23
  %v174 = vunpack.c.l.b16 %v24
  %v175 = vunpack.c.h.b16 %v24
  %v176 = vunpack.c.l.b16 %v25
  %v177 = vunpack.c.h.b16 %v25
  %v178 = vpack.c.b16 %v170, %v162
  %v179 = vpack.c.b16 %v171, %v163
  %v180 = vpack.c.b16 %v172, %v164
  %v181 = vpack.c.b16 %v173, %v165
  %v182 = vpack.c.b16 %v174, %v166
  %v183 = vpack.c.b16 %v175, %v167
  %v184 = vpack.c.b16 %v176, %v168
  %v185 = vpack.c.b16 %v177, %v169
  %v322 = vunpack.c.l.b16 %v26
  %v323 = vunpack.c.l.b16 %v27
  %v324 = vunpack.c.l.b16 %v28
  %v325 = vunpack.c.l.b16 %v29
  %v326 = vunpack.c.l.b16 %v30
  %v327 = vunpack.c.l.b16 %v31
  %v328 = vunpack.c.l.b16 %v32
  %v329 = vunpack.c.l.b16 %v33
  %v330 = vunpack.c.l.b16 %v34
  %v331 = vunpack.c.l.b16 %v35
  %v332 = vunpack.c.l.b16 %v36
  %v333 = vunpack.c.l.b16 %v37
  %v334 = vunpack.c.l.b16 %v38
  %v335 = vunpack.c.l.b16 %v39
  %v336 = vunpack.c.l.b16 %v40
  %v337 = vunpack.c.l.b16 %v41
  %v338 = vunpack.c.l.b16 %v42
  %v339 = vunpack.c.l.b16 %v43
  %v340 = vunpack.c.l.b16 %v44
  %v341 = vunpack.c.l.b16 %v45
  %v342 = vunpack.c.l.b16 %v46
  %v343 = vunpack.c.l.b16 %v47
  %v344 = vunpack.c.l.b16 %v48
  %v345 = vunpack.c.l.b16 %v49
  %v346 = vunpack.c.l.b16 %v50
  %v347 = vunpack.c.l.b16 %v51
  %v348 = vunpack.c.l.b16 %v52
  %v349 = vunpack.c.l.b16 %v53
  %v350 = vunpack.c.l.b16 %v54
  %v351 = vunpack.c.l.b16 %v55
  %v352 = vunpack.c.l.b16 %v56
  %v353 = vunpack.c.l.b16 %v57
  %v354 = vunpack.c.l.b16 %v58
  %v355 = vunpack.c.l.b16 %v59
  %v356 = vunpack.c.l.b16 %v60
  %v357 = vunpack.c.l.b16 %v61
  %v358 = vunpack.c.l.b16 %v62
  %v359 = vunpack.c.l.b16 %v63
  %v360 = vunpack.c.l.b16 %v64
  %v361 = vunpack.c.l.b16 %v65
  %v362 = vunpack.c.l.b16 %v66
  %v363 = vunpack.c.l.b16 %v67
  %v364 = vunpack.c.l.b16 %v68
  %v365 = vunpack.c.l.b16 %v69
  %v366 = vunpack.c.l.b16 %v70
  %v367 = vunpack.c.l.b16 %v71
  %v368 = vunpack.c.l.b16 %v72
  %v369 = vunpack.c.l.b16 %v73
  %v370 = vunpack.c.l.b16 %v74
  %v371 = vunpack.c.l.b16 %v75
  %v372 = vunpack.c.l.b16 %v76
  %v373 = vunpack.c.l.b16 %v77
  %v374 = vunpack.c.l.b16 %v78
  %v375 = vunpack.c.l.b16 %v79
  %v376 = vunpack.c.l.b16 %v80
  %v377 = vunpack.c.l.b16 %v81
  %v378 = vunpack.c.l.b16 %v82
  %v379 = vunpack.c.l.b16 %v83
  %v380 = vunpack.c.l.b16 %v84
  %v381 = vunpack.c.l.b16 %v85
  %v382 = vunpack.c.l.b16 %v86
  %v383 = vunpack.c.l.b16 %v87
  %v384 = vunpack.c.l.b16 %v88
  %v385 = vunpack.c.l.b16 %v89
  %v386 = vunpack.c.l.b16 %v90
  %v387 = vunpack.c.l.b16 %v91
  %v388 = vunpack.c.l.b16 %v92
  %v389 = vunpack.c.l.b16 %v93
  %v390 = vunpack.c.l.b16 %v94
  %v391 = vunpack.c.l.b16 %v95
  %v392 = vunpack.c.l.b16 %v96
  %v393 = vunpack.c.l.b16 %v97
  %v394 = vunpack.c.l.b16 %v98
  %v395 = vunpack.c.l.b16 %v99
  %v396 = vunpack.c.l.b16 %v100
  %v397 = vunpack.c.l.b16 %v101
  %v398 = vunpack.c.l.b16 %v102
  %v399 = vunpack.c.l.b16 %v103
  %v400 = vunpack.c.l.b16 %v104
  %v401 = vunpack.c.l.b16 %v105
  %v402 = vunpack.c.l.b16 %v106
  %v403 = vunpack.c.l.b16 %v107
  %v404 = vunpack.c.l.b16 %v108
  %v405 = vunpack.c.l.b16 %v109
  %v406 = vunpack.c.l.b16 %v110
  %v407 = vunpack.c.l.b16 %v111
  %v408 = vunpack.c.l.b16 %v112
  %v409 = vunpack.c.l.b16 %v113
  %v410 = vunpack.c.l.b16 %v114
  %v411 = vunpack.c.l.b16 %v115
  %v412 = vunpack.c.l.b16 %v116
  %v413 = vunpack.c.l.b16 %v117
  %v414 = vunpack.c.l.b16 %v118
  %v415 = vunpack.c.l.b16 %v119
  %v416 = vunpack.c.l.b16 %v120
  %v417 = vunpack.c.l.b16 %v121
  %v418 = vunpack.c.l.b16 %v122
  %v419 = vunpack.c.l.b16 %v123
  %v420 = vunpack.c.l.b16 %v124
  %v421 = vunpack.c.l.b16 %v125
  %v422 = vunpack.c.l.b16 %v126
  %v423 = vunpack.c.l.b16 %v127
  %v424 = vunpack.c.l.b16 %v128
  %v425 = vunpack.c.l.b16 %v129
  %v426 = vunpack.c.l.b16 %v130
  %v427 = vunpack.c.l.b16 %v131
  %v428 = vunpack.c.l.b16 %v132
  %v429 = vunpack.c.l.b16 %v133
  %v430 = vunpack.c.l.b16 %v134
  %v431 = vunpack.c.l.b16 %v135
  %v432 = vunpack.c.l.b16 %v136
  %v433 = vunpack.c.l.b16 %v137
  %v434 = vunpack.c.l.b16 %v138
  %v435 = vunpack.c.l.b16 %v139
  %v436 = vunpack.c.l.b16 %v140
  %v437 = vunpack.c.l.b16 %v141
  %v438 = vunpack.c.l.b16 %v142
  %v439 = vunpack.c.l.b16 %v143
  %v440 = vunpack.c.l.b16 %v144
  %v441 = vunpack.c.l.b16 %v145
  %v442 = vunpack.c.l.b16 %v146
  %v443 = vunpack.c.l.b16 %v147
  %v444 = vunpack.c.l.b16 %v148
  %v445 = vunpack.c.l.b16 %v149
  %v446 = vunpack.c.l.b16 %v150
  %v447 = vunpack.c.l.b16 %v151
  %v448 = vunpack.c.l.b16 %v152
  %v449 = vunpack.c.l.b16 %v153
  %v450 = vpack.c.b16 %v323, %v322
  %v451 = vpack.c.b16 %v325, %v324
  %v452 = vpack.c.b16 %v327, %v326
  %v453 = vpack.c.b16 %v329, %v328
  %v454 = vpack.c.b16 %v331, %v330
  %v455 = vpack.c.b16 %v333, %v332
  %v456 = vpack.c.b16 %v335, %v334
  %v457 = vpack.c.b16 %v337, %v336
  %v458 = vpack.c.b16 %v339, %v338
  %v459 = vpack.c.b16 %v341, %v340
  %v460 = vpack.c.b16 %v343, %v342
  %v461 = vpack.c.b16 %v345, %v344
  %v462 = vpack.c.b16 %v347, %v346
  %v463 = vpack.c.b16 %v349, %v348
  %v464 = vpack.c.b16 %v351, %v350
  %v465 = vpack.c.b16 %v353, %v352
  %v466 = vpack.c.b16 %v355, %v354
  %v467 = vpack.c.b16 %v357, %v356
  %v468 = vpack.c.b16 %v359, %v358
  %v469 = vpack.c.b16 %v361, %v360
  %v470 = vpack.c.b16 %v363, %v362
  %v471 = vpack.c.b16 %v365, %v364
  %v472 = vpack.c.b16 %v367, %v366
  %v473 = vpack.c.b16 %v369, %v368
  %v474 = vpack.c.b16 %v371, %v370
  %v475 = vpack.c.b16 %v373, %v372
  %v476 = vpack.c.b16 %v375, %v374
  %v477 = vpack.c.b16 %v377, %v376
  %v478 = vpack.c.b16 %v379, %v378
  %v479 = vpack.c.b16 %v381, %v380
  %v480 = vpack.c.b16 %v383, %v382
  %v481 = vpack.c.b16 %v385, %v384
  %v482 = vpack.c.b16 %v387, %v386
  %v483 = vpack.c.b16 %v389, %v388
  %v484 = vpack.c.b16 %v391, %v390
  %v485 = vpack.c.b16 %v393, %v392
  %v486 = vpack.c.b16 %v395, %v394
  %v487 = vpack.c.b16 %v397, %v396
  %v488 = vpack.c.b16 %v399, %v398
  %v489 = vpack.c.b16 %v401, %v400
  %v490 = vpack.c.b16 %v403, %v402
  %v491 = vpack.c.b16 %v405, %v404
  %v492 = vpack.c.b16 %v407, %v406
  %v493 = vpack.c.b16 %v409, %v408
  %v494 = vpack.c.b16 %v411, %v410
  %v495 = vpack.c.b16 %v413, %v412
  %v496 = vpack.c.b16 %v415, %v414
  %v497 = vpack.c.b16 %v417, %v416
  %v498 = vpack.c.b16 %v419, %v418
  %v499 = vpack.c.b16 %v421, %v420
  %v500 = vpack.c.b16 %v423, %v422
  %v501 = vpack.c.b16 %v425, %v424
  %v502 = vpack.c.b16 %v427, %v426
  %v503 = vpack.c.b16 %v429, %v428
  %v504 = vpack.c.b16 %v431, %v430
  %v505 = vpack.c.b16 %v433, %v432
  %v506 = vpack.c.b16 %v435, %v434
  %v507 = vpack.c.b16 %v437, %v436
  %v508 = vpack.c.b16 %v439, %v438
  %v509 = vpack.c.b16 %v441, %v440
  %v510 = vpack.c.b16 %v443, %v442
  %v511 = vpack.c.b16 %v445, %v444
  %v512 = vpack.c.b16 %v447, %v446
  %v513 = vpack.c.b16 %v449, %v448
  %578 = vmatprep.subr.bf16.mxu0 0
  %579 = vmatpush1.bf16.msra.mxu0 %v450
  %580 = vmatprep.subr.bf16.mxu0 0
  %581 = vmatpush1.bf16.msra.mxu0 %v451
  %582 = vmatprep.subr.bf16.mxu0 0
  %583 = vmatpush1.bf16.msra.mxu0 %v452
  %584 = vmatprep.subr.bf16.mxu0 0
  %585 = vmatpush1.bf16.msra.mxu0 %v453
  %586 = vmatprep.subr.bf16.mxu0 0
  %587 = vmatpush1.bf16.msra.mxu0 %v454
  %588 = vmatprep.subr.bf16.mxu0 0
  %589 = vmatpush1.bf16.msra.mxu0 %v455
  %590 = vmatprep.subr.bf16.mxu0 0
  %591 = vmatpush1.bf16.msra.mxu0 %v456
  %592 = vmatprep.subr.bf16.mxu0 0
  %593 = vmatpush1.bf16.msra.mxu0 %v457
  %594 = vmatprep.subr.bf16.mxu0 0
  %595 = vmatpush1.bf16.msra.mxu0 %v458
  %596 = vmatprep.subr.bf16.mxu0 0
  %597 = vmatpush1.bf16.msra.mxu0 %v459
  %598 = vmatprep.subr.bf16.mxu0 0
  %599 = vmatpush1.bf16.msra.mxu0 %v460
  %600 = vmatprep.subr.bf16.mxu0 0
  %601 = vmatpush1.bf16.msra.mxu0 %v461
  %602 = vmatprep.subr.bf16.mxu0 0
  %603 = vmatpush1.bf16.msra.mxu0 %v462
  %604 = vmatprep.subr.bf16.mxu0 0
  %605 = vmatpush1.bf16.msra.mxu0 %v463
  %606 = vmatprep.subr.bf16.mxu0 0
  %607 = vmatpush1.bf16.msra.mxu0 %v464
  %608 = vmatprep.subr.bf16.mxu0 0
  %609 = vmatpush1.bf16.msra.mxu0 %v465
  %610 = vmatprep.mubr.bf16.mxu0 %v179
  %611 = vmatmul.mubr.bf16.gmra.mrb[0].mxu0 %v178
  %v612 = vpop.f32.mrb[0].mxu0
  %v613 = vadd.f32 0.0, %v612
  %v614 = vpop.f32.mrb[0].mxu0
  %v615 = vpop.f32.mrb[0].mxu0
  %v616 = vadd.f32 0.0, %v615
  %v617 = vpop.f32.mrb[0].mxu0
  %618 = vdwg.mxu0
  %619 = vmatprep.subr.bf16.mxu0 0
  %620 = vmatpush1.bf16.msra.mxu0 %v466
  %621 = vmatprep.subr.bf16.mxu0 0
  %622 = vmatpush1.bf16.msra.mxu0 %v467
  %623 = vmatprep.subr.bf16.mxu0 0
  %624 = vmatpush1.bf16.msra.mxu0 %v468
  %625 = vmatprep.subr.bf16.mxu0 0
  %626 = vmatpush1.bf16.msra.mxu0 %v469
  %627 = vmatprep.subr.bf16.mxu0 0
  %628 = vmatpush1.bf16.msra.mxu0 %v470
  %629 = vmatprep.subr.bf16.mxu0 0
  %630 = vmatpush1.bf16.msra.mxu0 %v471
  %631 = vmatprep.subr.bf16.mxu0 0
  %632 = vmatpush1.bf16.msra.mxu0 %v472
  %633 = vmatprep.subr.bf16.mxu0 0
  %634 = vmatpush1.bf16.msra.mxu0 %v473
  %635 = vmatprep.subr.bf16.mxu0 0
  %636 = vmatpush1.bf16.msra.mxu0 %v474
  %637 = vmatprep.subr.bf16.mxu0 0
  %638 = vmatpush1.bf16.msra.mxu0 %v475
  %639 = vmatprep.subr.bf16.mxu0 0
  %640 = vmatpush1.bf16.msra.mxu0 %v476
  %641 = vmatprep.subr.bf16.mxu0 0
  %642 = vmatpush1.bf16.msra.mxu0 %v477
  %643 = vmatprep.subr.bf16.mxu0 0
  %644 = vmatpush1.bf16.msra.mxu0 %v478
  %645 = vmatprep.subr.bf16.mxu0 0
  %646 = vmatpush1.bf16.msra.mxu0 %v479
  %647 = vmatprep.subr.bf16.mxu0 0
  %648 = vmatpush1.bf16.msra.mxu0 %v480
  %649 = vmatprep.subr.bf16.mxu0 0
  %650 = vmatpush1.bf16.msra.mxu0 %v481
  %651 = vmatprep.mubr.bf16.mxu0 %v181
  %652 = vmatmul.mubr.bf16.gmra.mrb[0].mxu0 %v180
  %v653 = vpop.f32.mrb[0].mxu0
  %v654 = vadd.f32 %v613, %v653
  %v655 = vpop.f32.mrb[0].mxu0
  %v656 = vpop.f32.mrb[0].mxu0
  %v657 = vadd.f32 %v616, %v656
  %v658 = vpop.f32.mrb[0].mxu0
  %659 = vdwg.mxu0
  %660 = vmatprep.subr.bf16.mxu0 0
  %661 = vmatpush1.bf16.msra.mxu0 %v482
  %662 = vmatprep.subr.bf16.mxu0 0
  %663 = vmatpush1.bf16.msra.mxu0 %v483
  %664 = vmatprep.subr.bf16.mxu0 0
  %665 = vmatpush1.bf16.msra.mxu0 %v484
  %666 = vmatprep.subr.bf16.mxu0 0
  %667 = vmatpush1.bf16.msra.mxu0 %v485
  %668 = vmatprep.subr.bf16.mxu0 0
  %669 = vmatpush1.bf16.msra.mxu0 %v486
  %670 = vmatprep.subr.bf16.mxu0 0
  %671 = vmatpush1.bf16.msra.mxu0 %v487
  %672 = vmatprep.subr.bf16.mxu0 0
  %673 = vmatpush1.bf16.msra.mxu0 %v488
  %674 = vmatprep.subr.bf16.mxu0 0
  %675 = vmatpush1.bf16.msra.mxu0 %v489
  %676 = vmatprep.subr.bf16.mxu0 0
  %677 = vmatpush1.bf16.msra.mxu0 %v490
  %678 = vmatprep.subr.bf16.mxu0 0
  %679 = vmatpush1.bf16.msra.mxu0 %v491
  %680 = vmatprep.subr.bf16.mxu0 0
  %681 = vmatpush1.bf16.msra.mxu0 %v492
  %682 = vmatprep.subr.bf16.mxu0 0
  %683 = vmatpush1.bf16.msra.mxu0 %v493
  %684 = vmatprep.subr.bf16.mxu0 0
  %685 = vmatpush1.bf16.msra.mxu0 %v494
  %686 = vmatprep.subr.bf16.mxu0 0
  %687 = vmatpush1.bf16.msra.mxu0 %v495
  %688 = vmatprep.subr.bf16.mxu0 0
  %689 = vmatpush1.bf16.msra.mxu0 %v496
  %690 = vmatprep.subr.bf16.mxu0 0
  %691 = vmatpush1.bf16.msra.mxu0 %v497
  %692 = vmatprep.mubr.bf16.mxu0 %v183
  %693 = vmatmul.mubr.bf16.gmra.mrb[0].mxu0 %v182
  %v694 = vpop.f32.mrb[0].mxu0
  %v695 = vadd.f32 %v654, %v694
  %v696 = vpop.f32.mrb[0].mxu0
  %v697 = vpop.f32.mrb[0].mxu0
  %v698 = vadd.f32 %v657, %v697
  %v699 = vpop.f32.mrb[0].mxu0
  %700 = vdwg.mxu0
  %701 = vmatprep.subr.bf16.mxu0 0
  %702 = vmatpush1.bf16.msra.mxu0 %v498
  %703 = vmatprep.subr.bf16.mxu0 0
  %704 = vmatpush1.bf16.msra.mxu0 %v499
  %705 = vmatprep.subr.bf16.mxu0 0
  %706 = vmatpush1.bf16.msra.mxu0 %v500
  %707 = vmatprep.subr.bf16.mxu0 0
  %708 = vmatpush1.bf16.msra.mxu0 %v501
  %709 = vmatprep.subr.bf16.mxu0 0
  %710 = vmatpush1.bf16.msra.mxu0 %v502
  %711 = vmatprep.subr.bf16.mxu0 0
  %712 = vmatpush1.bf16.msra.mxu0 %v503
  %713 = vmatprep.subr.bf16.mxu0 0
  %714 = vmatpush1.bf16.msra.mxu0 %v504
  %715 = vmatprep.subr.bf16.mxu0 0
  %716 = vmatpush1.bf16.msra.mxu0 %v505
  %717 = vmatprep.subr.bf16.mxu0 0
  %718 = vmatpush1.bf16.msra.mxu0 %v506
  %719 = vmatprep.subr.bf16.mxu0 0
  %720 = vmatpush1.bf16.msra.mxu0 %v507
  %721 = vmatprep.subr.bf16.mxu0 0
  %722 = vmatpush1.bf16.msra.mxu0 %v508
  %723 = vmatprep.subr.bf16.mxu0 0
  %724 = vmatpush1.bf16.msra.mxu0 %v509
  %725 = vmatprep.subr.bf16.mxu0 0
  %726 = vmatpush1.bf16.msra.mxu0 %v510
  %727 = vmatprep.subr.bf16.mxu0 0
  %728 = vmatpush1.bf16.msra.mxu0 %v511
  %729 = vmatprep.subr.bf16.mxu0 0
  %730 = vmatpush1.bf16.msra.mxu0 %v512
  %731 = vmatprep.subr.bf16.mxu0 0
  %732 = vmatpush1.bf16.msra.mxu0 %v513
  %733 = vmatprep.mubr.bf16.mxu0 %v185
  %734 = vmatmul.mubr.bf16.gmra.mrb[0].mxu0 %v184
  %v735 = vpop.f32.mrb[0].mxu0
  %v736 = vadd.f32 %v695, %v735
  %v737 = vpop.f32.mrb[0].mxu0
  %v738 = vpop.f32.mrb[0].mxu0
  %v739 = vadd.f32 %v698, %v738
  %v740 = vpop.f32.mrb[0].mxu0
  %741 = vdwg.mxu0
  %vm742 = vcmask 31744
  %v743 = vsel %vm742, %v736, 0.0
  %744 = vadd.xlane.f32.xlu0 %v743
  %v745 = vpop.xlane.xlu0 %744
  %v746 = vsel %vm742, %v739, 0.0
  %747 = vadd.xlane.f32.xlu0 %v746
  %v748 = vpop.xlane.xlu0 %747
  %v749 = vmul.f32 %v745, 0.25
  %v750 = vmul.f32 %v748, 0.25
  %v751 = vmul.f32 %v736, %v736
  %v752 = vmul.f32 %v739, %v739
  %v753 = vsel %vm742, %v751, 0.0
  %754 = vadd.xlane.f32.xlu0 %v753
  %v755 = vpop.xlane.xlu0 %754
  %v756 = vsel %vm742, %v752, 0.0
  %757 = vadd.xlane.f32.xlu0 %v756
  %v758 = vpop.xlane.xlu0 %757
  %v759 = vmul.f32 %v755, 0.25
  %v760 = vmul.f32 %v758, 0.25
  %v761 = vmul.f32 %v749, %v749
  %v762 = vmul.f32 %v750, %v750
  %v763 = vsub.f32 %v759, %v761
  %v764 = vsub.f32 %v760, %v762
  %v765 = vld [vmem:[%s2] sm:$0xff]
  %v766 = vld [vmem:[%s2 + $0x8] sm:$0xff]
  %v767 = vadd.f32 %v763, 1e-05
  %v768 = vadd.f32 %v764, 1e-05
  %v769 = vrsqrt.pop %v767
  %v770 = vrsqrt.pop %v768
  %v771 = vmul.f32 %v765, %v769
  %v772 = vmul.f32 %v766, %v770
  %v773 = vld [vmem:[%s3] sm:$0xff]
  %v774 = vld [vmem:[%s3 + $0x8] sm:$0xff]
  %v775 = vmul.f32 %v749, %v771
  %v776 = vmul.f32 %v750, %v772
  %v777 = vsub.f32 %v773, %v775
  %v778 = vsub.f32 %v774, %v776
  %780 = vset.pattern.permute.xlu0 0
  %781 = vperm.xlu0 %780, %v771
  %v782 = vpop.permute.xlu0 %781
  %785 = vset.pattern.permute.xlu0 0
  %786 = vperm.xlu0 %785, %v772
  %v787 = vpop.permute.xlu0 %786
  %v789 = vmul.f32 %v736, %v782
  %v790 = vmul.f32 %v739, %v787
  %792 = vset.pattern.permute.xlu0 0
  %793 = vperm.xlu0 %792, %v777
  %v794 = vpop.permute.xlu0 %793
  %797 = vset.pattern.permute.xlu0 0
  %798 = vperm.xlu0 %797, %v778
  %v799 = vpop.permute.xlu0 %798
  %v801 = vadd.f32 %v789, %v794
  %v802 = vadd.f32 %v790, %v799
  %v803 = vtanh.pop %v801
  %v804 = vtanh.pop %v802
  %805 = vst.msk [vmem:[%s4] sm:$0xff] %vm742, %v803
  %806 = vst.msk [vmem:[%s4 + $0x8] sm:$0xff] %vm742, %v804
  // Predicated region
  $region18: #{content_encoder_forward.11} parent=0 // pred_check
    _
  $region19: #{content_encoder_forward.11} parent=0 // pred_check_branch
    %808 = sbr.rel (0) target = $region21
  $region20: #{content_encoder_forward.11} parent=0 // pred_region
    _
  $region21: #{content_encoder_forward.11} parent=0 // pred_fallthru
    _
  // Predicated region
  $region22: #{content_encoder_forward.11} parent=0 // pred_check
    _
  $region23: #{content_encoder_forward.11} parent=0 // pred_check_branch
    %810 = sbr.rel (0) target = $region25
  $region24: #{content_encoder_forward.11} parent=0 // pred_region
    _
  $region25: #{content_encoder_forward.11} parent=0 // pred_fallthru
    _

</llo_original>
